<compile_context>
chip_gen: v7x
topology: tpu7x:2x2x1
jax: 0.10.0
libtpu: 0.0.40
codegen_flags: <defaults>
</compile_context>

<pallas_src>
import functools
import math

import jax
import jax.numpy as jnp
from jax import lax
from jax.experimental import pallas as pl
from jax.experimental.pallas import tpu as pltpu

# ----------------------------- model hyper-params (small, synthetic) -----------
D_MODEL = 128          # lane-dense last dim (multiple of 128)
D_FF = 512             # lane-dense last dim
H = 4
DK = D_MODEL // H
N_LAYERS = 1
SRC_VOCAB = 11
TGT_VOCAB = 11
LN_EPS = 1e-6
NEG_INF = -1e9


# ----------------------------- in-kernel helpers -------------------------------
def _ln(x, g, b):
    """Annotated-transformer LayerNorm on a [L, D] f32 tile (unbiased std, eps on std)."""
    d = x.shape[-1]
    mean = jnp.mean(x, axis=-1, keepdims=True)
    var = jnp.sum((x - mean) ** 2, axis=-1, keepdims=True) * (1.0 / (d - 1))
    inv = pl.reciprocal(jnp.sqrt(var) + LN_EPS, approx=True)
    return g * (x - mean) * inv + b


def _mm(x_f32, w_bf16):
    """bf16 x bf16 matmul on the MXU with f32 accumulation."""
    return jnp.dot(x_f32.astype(jnp.bfloat16), w_bf16,
                   preferred_element_type=jnp.float32)


# ----------------------------- fused MHA sublayer kernel -----------------------
def _mha_kernel(x_ref, kv_ref, mask_ref, g_ref, b_ref,
                wq_ref, bq_ref, wk_ref, bk_ref, wv_ref, bv_ref, wo_ref, bo_ref,
                o_ref, *, self_attention: bool):
    x = x_ref[0]                              # [Lq, D] f32 (residual input)
    xn = _ln(x, g_ref[...], b_ref[...])       # LayerNorm(x)
    kv = xn if self_attention else kv_ref[0]  # self-attn: K/V from normed x; cross: from memory

    q = _mm(xn, wq_ref[...]) + bq_ref[...]    # [Lq, D] f32
    k = _mm(kv, wk_ref[...]) + bk_ref[...]    # [Lk, D] f32
    v = _mm(kv, wv_ref[...]) + bv_ref[...]    # [Lk, D] f32

    m = mask_ref[0]                           # [1 or Lq, Lk] f32 (broadcast in-kernel)
    scale = 1.0 / math.sqrt(DK)

    heads = []
    for hd in range(H):                       # all heads in one kernel body
        sl = slice(hd * DK, (hd + 1) * DK)
        qh = q[:, sl].astype(jnp.bfloat16)
        kh = k[:, sl].astype(jnp.bfloat16)
        vh = v[:, sl].astype(jnp.bfloat16)
        # logits / softmax in f32
        s = lax.dot_general(qh, kh, (((1,), (1,)), ((), ())),
                            preferred_element_type=jnp.float32) * scale
        s = jnp.where(m == 0.0, jnp.float32(NEG_INF), s)
        s = s - jnp.max(s, axis=-1, keepdims=True)
        p = jnp.exp(s)
        p = p * pl.reciprocal(jnp.sum(p, axis=-1, keepdims=True), approx=True)
        heads.append(jnp.dot(p.astype(jnp.bfloat16), vh,
                             preferred_element_type=jnp.float32))
    attn = jnp.concatenate(heads, axis=-1)    # [Lq, D]

    # output projection + residual folded into the epilogue
    o_ref[0] = x + _mm(attn, wo_ref[...]) + bo_ref[...]


def mha_block(x, kv, mask_f, ln, att, *, self_attention):
    """x: [B, Lq, D]; kv: [B, Lk, D]; mask_f: [B, 1 or Lq, Lk] float32."""
    B, Lq, D = x.shape
    Lk = kv.shape[1]
    Lm = mask_f.shape[1]
    kernel = functools.partial(_mha_kernel, self_attention=self_attention)
    wspec = pl.BlockSpec((D, D), lambda i: (0, 0))
    bspec = pl.BlockSpec((1, D), lambda i: (0, 0))
    return pl.pallas_call(
        kernel,
        grid=(B,),
        in_specs=[
            pl.BlockSpec((1, Lq, D), lambda i: (i, 0, 0)),
            pl.BlockSpec((1, Lk, D), lambda i: (i, 0, 0)),
            pl.BlockSpec((1, Lm, Lk), lambda i: (i, 0, 0)),
            bspec, bspec,                      # LN gamma / beta
            wspec, bspec,                      # Wq, bq
            wspec, bspec,                      # Wk, bk
            wspec, bspec,                      # Wv, bv
            wspec, bspec,                      # Wo, bo
        ],
        out_specs=pl.BlockSpec((1, Lq, D), lambda i: (i, 0, 0)),
        out_shape=jax.ShapeDtypeStruct((B, Lq, D), jnp.float32),
        compiler_params=pltpu.CompilerParams(dimension_semantics=("parallel",)),
    )(x, kv, mask_f,
      ln["g"], ln["b"],
      att["q"]["w"], att["q"]["b"],
      att["k"]["w"], att["k"]["b"],
      att["v"]["w"], att["v"]["b"],
      att["o"]["w"], att["o"]["b"])


# ----------------------------- fused LN + FFN + residual kernel ----------------
def _ffn_kernel(x_ref, g_ref, b_ref, w1_ref, b1_ref, w2_ref, b2_ref, o_ref):
    x = x_ref[0]                               # [L, D] f32
    xn = _ln(x, g_ref[...], b_ref[...])
    h = _mm(xn, w1_ref[...]) + b1_ref[...]     # [L, Dff] f32
    h = jnp.maximum(h, 0.0)
    o_ref[0] = x + _mm(h, w2_ref[...]) + b2_ref[...]


def ffn_block(x, ln, ff):
    B, L, D = x.shape
    Dff = ff["w1"]["w"].shape[1]
    return pl.pallas_call(
        _ffn_kernel,
        grid=(B,),
        in_specs=[
            pl.BlockSpec((1, L, D), lambda i: (i, 0, 0)),
            pl.BlockSpec((1, D), lambda i: (0, 0)),
            pl.BlockSpec((1, D), lambda i: (0, 0)),
            pl.BlockSpec((D, Dff), lambda i: (0, 0)),
            pl.BlockSpec((1, Dff), lambda i: (0, 0)),
            pl.BlockSpec((Dff, D), lambda i: (0, 0)),
            pl.BlockSpec((1, D), lambda i: (0, 0)),
        ],
        out_specs=pl.BlockSpec((1, L, D), lambda i: (i, 0, 0)),
        out_shape=jax.ShapeDtypeStruct((B, L, D), jnp.float32),
        compiler_params=pltpu.CompilerParams(dimension_semantics=("parallel",)),
    )(x, ln["g"], ln["b"],
      ff["w1"]["w"], ff["w1"]["b"],
      ff["w2"]["w"], ff["w2"]["b"])


# ----------------------------- standalone LayerNorm kernel (final norms) -------
def _ln_kernel(x_ref, g_ref, b_ref, o_ref):
    o_ref[0] = _ln(x_ref[0], g_ref[...], b_ref[...])


def layer_norm(x, ln):
    B, L, D = x.shape
    return pl.pallas_call(
        _ln_kernel,
        grid=(B,),
        in_specs=[
            pl.BlockSpec((1, L, D), lambda i: (i, 0, 0)),
            pl.BlockSpec((1, D), lambda i: (0, 0)),
            pl.BlockSpec((1, D), lambda i: (0, 0)),
        ],
        out_specs=pl.BlockSpec((1, L, D), lambda i: (i, 0, 0)),
        out_shape=jax.ShapeDtypeStruct((B, L, D), jnp.float32),
        compiler_params=pltpu.CompilerParams(dimension_semantics=("parallel",)),
    )(x, ln["g"], ln["b"])


# ----------------------------- parameter init (deterministic, synthetic) -------
def _xavier(key, shape):
    fan_in, fan_out = shape
    limit = math.sqrt(6.0 / (fan_in + fan_out))
    return jax.random.uniform(key, shape, jnp.float32, -limit, limit)


class _KeyGen:
    def __init__(self, key):
        self._key = key

    def __call__(self):
        self._key, sub = jax.random.split(self._key)
        return sub


def init_params(key):
    kg = _KeyGen(key)

    def linear_p(din, dout):
        # matmul weights stored bf16 (MXU-native); biases stay f32
        return {"w": _xavier(kg(), (din, dout)).astype(jnp.bfloat16),
                "b": jnp.zeros((1, dout), jnp.float32)}

    def ln_p():
        return {"g": jnp.ones((1, D_MODEL), jnp.float32),
                "b": jnp.zeros((1, D_MODEL), jnp.float32)}

    def mha_p():
        return {"q": linear_p(D_MODEL, D_MODEL),
                "k": linear_p(D_MODEL, D_MODEL),
                "v": linear_p(D_MODEL, D_MODEL),
                "o": linear_p(D_MODEL, D_MODEL)}

    def ff_p():
        return {"w1": linear_p(D_MODEL, D_FF), "w2": linear_p(D_FF, D_MODEL)}

    def enc_layer():
        return {"self_attn": mha_p(), "ff": ff_p(), "ln1": ln_p(), "ln2": ln_p()}

    def dec_layer():
        return {"self_attn": mha_p(), "src_attn": mha_p(), "ff": ff_p(),
                "ln1": ln_p(), "ln2": ln_p(), "ln3": ln_p()}

    return {
        "src_emb": _xavier(kg(), (SRC_VOCAB, D_MODEL)),
        "tgt_emb": _xavier(kg(), (TGT_VOCAB, D_MODEL)),
        "enc_layers": [enc_layer() for _ in range(N_LAYERS)],
        "enc_norm": ln_p(),
        "dec_layers": [dec_layer() for _ in range(N_LAYERS)],
        "dec_norm": ln_p(),
    }


def make_positional_encoding(max_len, d_model):
    pos = jnp.arange(max_len, dtype=jnp.float32)[:, None]
    div = jnp.exp(
        jnp.arange(0, d_model, 2, dtype=jnp.float32) * (-math.log(10000.0) / d_model)
    )
    pe = jnp.zeros((max_len, d_model), jnp.float32)
    pe = pe.at[:, 0::2].set(jnp.sin(pos * div))
    pe = pe.at[:, 1::2].set(jnp.cos(pos * div))
    return pe


# ----------------------------- model glue (plain JAX around Pallas kernels) ----
def embed(table, tokens, pe):
    # TODO(synk): token gather + positional add kept as plain XLA ops (cheap, data-dependent gather).
    d = table.shape[1]
    x = jnp.take(table, tokens, axis=0) * math.sqrt(d)
    return x + pe[None, :tokens.shape[1], :]


def encode(params, pe, src, src_mask_f):
    x = embed(params["src_emb"], src, pe)
    for lp in params["enc_layers"]:
        x = mha_block(x, x, src_mask_f, lp["ln1"], lp["self_attn"], self_attention=True)
        x = ffn_block(x, lp["ln2"], lp["ff"])
    return layer_norm(x, params["enc_norm"])


def decode(params, pe, memory, src_mask_f, tgt, tgt_mask_f):
    y = embed(params["tgt_emb"], tgt, pe)
    for lp in params["dec_layers"]:
        y = mha_block(y, y, tgt_mask_f, lp["ln1"], lp["self_attn"], self_attention=True)
        y = mha_block(y, memory, src_mask_f, lp["ln2"], lp["src_attn"], self_attention=False)
        y = ffn_block(y, lp["ln3"], lp["ff"])
    return layer_norm(y, params["dec_norm"])


def atnet_forward(params, pe, src, tgt, src_mask, tgt_mask):
    src_mask_f = src_mask.astype(jnp.float32)
    tgt_mask_f = tgt_mask.astype(jnp.float32)
    memory = encode(params, pe, src, src_mask_f)
    return decode(params, pe, memory, src_mask_f, tgt, tgt_mask_f)


# ----------------------------- demo --------------------------------------------
if __name__ == "__main__":
    key = jax.random.PRNGKey(0)
    k_params, k_src, k_tgt = jax.random.split(key, 3)

    B, LS, LT = 2, 8, 8
    params = init_params(k_params)
    pe = make_positional_encoding(64, D_MODEL)

    src = jax.random.randint(k_src, (B, LS), 1, SRC_VOCAB, dtype=jnp.int32)
    tgt = jax.random.randint(k_tgt, (B, LT), 1, TGT_VOCAB, dtype=jnp.int32)
    src_mask = jnp.ones((B, 1, LS), dtype=jnp.int32)                    # [B, 1, Ls]
    tgt_mask = jnp.broadcast_to(                                        # [B, Lt, Lt]
        jnp.tril(jnp.ones((LT, LT), dtype=jnp.int32))[None], (B, LT, LT)
    )

    fwd = jax.jit(atnet_forward)
    out = fwd(params, pe, src, tgt, src_mask, tgt_mask)
    jax.block_until_ready(out)

    assert out.shape == (B, LT, D_MODEL) and out.dtype == jnp.float32
    assert bool(jnp.all(jnp.isfinite(out)))
    print("KERNEL_OK")
</pallas_src>

<mosaic_0001>
module attributes {stable_mosaic.version = 11 : i64} {
  func.func @_mha_kernel(%arg0: i32, %arg1: memref<1x8x128xf32, #tpu.memory_space<vmem>>, %arg2: memref<1x8x128xf32, #tpu.memory_space<vmem>>, %arg3: memref<1x8x8xf32, #tpu.memory_space<vmem>>, %arg4: memref<1x128xf32, #tpu.memory_space<vmem>>, %arg5: memref<1x128xf32, #tpu.memory_space<vmem>>, %arg6: memref<128x128xbf16, #tpu.memory_space<vmem>>, %arg7: memref<1x128xf32, #tpu.memory_space<vmem>>, %arg8: memref<128x128xbf16, #tpu.memory_space<vmem>>, %arg9: memref<1x128xf32, #tpu.memory_space<vmem>>, %arg10: memref<128x128xbf16, #tpu.memory_space<vmem>>, %arg11: memref<1x128xf32, #tpu.memory_space<vmem>>, %arg12: memref<128x128xbf16, #tpu.memory_space<vmem>>, %arg13: memref<1x128xf32, #tpu.memory_space<vmem>>, %arg14: memref<1x8x128xf32, #tpu.memory_space<vmem>>) attributes {dimension_semantics = [#tpu.dimension_semantics<parallel>], iteration_bounds = array<i64: 2>, scalar_prefetch = 0 : i64, scratch_operands = 0 : i64, tpu.core_type = #tpu.core_type<tc>, window_params = [{transform_indices = @transform_0, window_bounds = array<i64: 1, 8, 128>}, {transform_indices = @transform_1, window_bounds = array<i64: 1, 8, 128>}, {transform_indices = @transform_2, window_bounds = array<i64: 1, 8, 8>}, {pipeline_mode = #tpu.pipeline_mode<synchronous>, transform_indices = @transform_3, window_bounds = array<i64: 1, 128>}, {pipeline_mode = #tpu.pipeline_mode<synchronous>, transform_indices = @transform_4, window_bounds = array<i64: 1, 128>}, {pipeline_mode = #tpu.pipeline_mode<synchronous>, transform_indices = @transform_5, window_bounds = array<i64: 128, 128>}, {pipeline_mode = #tpu.pipeline_mode<synchronous>, transform_indices = @transform_6, window_bounds = array<i64: 1, 128>}, {pipeline_mode = #tpu.pipeline_mode<synchronous>, transform_indices = @transform_7, window_bounds = array<i64: 128, 128>}, {pipeline_mode = #tpu.pipeline_mode<synchronous>, transform_indices = @transform_8, window_bounds = array<i64: 1, 128>}, {pipeline_mode = #tpu.pipeline_mode<synchronous>, transform_indices = @transform_9, window_bounds = array<i64: 128, 128>}, {pipeline_mode = #tpu.pipeline_mode<synchronous>, transform_indices = @transform_10, window_bounds = array<i64: 1, 128>}, {pipeline_mode = #tpu.pipeline_mode<synchronous>, transform_indices = @transform_11, window_bounds = array<i64: 128, 128>}, {pipeline_mode = #tpu.pipeline_mode<synchronous>, transform_indices = @transform_12, window_bounds = array<i64: 1, 128>}, {transform_indices = @transform_13, window_bounds = array<i64: 1, 8, 128>}]} {
    %c0 = arith.constant 0 : index
    %c0_0 = arith.constant 0 : index
    %c0_1 = arith.constant 0 : index
    %0 = vector.load %arg1[%c0, %c0_0, %c0_1] : memref<1x8x128xf32, #tpu.memory_space<vmem>>, vector<1x8x128xf32>
    %1 = vector.shape_cast %0 : vector<1x8x128xf32> to vector<8x128xf32>
    %c0_2 = arith.constant 0 : index
    %c0_3 = arith.constant 0 : index
    %2 = vector.load %arg4[%c0_2, %c0_3] : memref<1x128xf32, #tpu.memory_space<vmem>>, vector<1x128xf32>
    %c0_4 = arith.constant 0 : index
    %c0_5 = arith.constant 0 : index
    %3 = vector.load %arg5[%c0_4, %c0_5] : memref<1x128xf32, #tpu.memory_space<vmem>>, vector<1x128xf32>
    %cst = arith.constant dense<0.000000e+00> : vector<8xf32>
    %4 = vector.multi_reduction <add>, %1, %cst [1] : vector<8x128xf32> to vector<8xf32>
    %5 = vector.shape_cast %4 : vector<8xf32> to vector<8x1xf32>
    %cst_6 = arith.constant 1.280000e+02 : f32
    %6 = vector.broadcast %cst_6 : f32 to vector<8x1xf32>
    %7 = arith.divf %5, %6 : vector<8x1xf32>
    %8 = vector.broadcast %7 : vector<8x1xf32> to vector<8x128xf32>
    %9 = arith.subf %1, %8 : vector<8x128xf32>
    %10 = arith.mulf %9, %9 : vector<8x128xf32>
    %cst_7 = arith.constant dense<0.000000e+00> : vector<8xf32>
    %11 = vector.multi_reduction <add>, %10, %cst_7 [1] : vector<8x128xf32> to vector<8xf32>
    %12 = vector.shape_cast %11 : vector<8xf32> to vector<8x1xf32>
    %cst_8 = arith.constant 0.00787401571 : f32
    %13 = vector.broadcast %cst_8 : f32 to vector<8x1xf32>
    %14 = arith.mulf %12, %13 : vector<8x1xf32>
    %15 = math.sqrt %14 : vector<8x1xf32>
    %cst_9 = arith.constant 9.99999997E-7 : f32
    %16 = vector.broadcast %cst_9 : f32 to vector<8x1xf32>
    %17 = arith.addf %15, %16 : vector<8x1xf32>
    %18 = tpu.reciprocal %17 {approx = true} : vector<8x1xf32> -> vector<8x1xf32>
    %19 = vector.broadcast %7 : vector<8x1xf32> to vector<8x128xf32>
    %20 = arith.subf %1, %19 : vector<8x128xf32>
    %21 = vector.broadcast %2 : vector<1x128xf32> to vector<8x128xf32>
    %22 = arith.mulf %21, %20 : vector<8x128xf32>
    %23 = vector.broadcast %18 : vector<8x1xf32> to vector<8x128xf32>
    %24 = arith.mulf %22, %23 : vector<8x128xf32>
    %25 = vector.broadcast %3 : vector<1x128xf32> to vector<8x128xf32>
    %26 = arith.addf %24, %25 : vector<8x128xf32>
    %c0_10 = arith.constant 0 : index
    %c0_11 = arith.constant 0 : index
    %27 = vector.load %arg6[%c0_10, %c0_11] : memref<128x128xbf16, #tpu.memory_space<vmem>>, vector<128x128xbf16>
    %28 = arith.truncf %26 : vector<8x128xf32> to vector<8x128xbf16>
    %cst_12 = arith.constant dense<0.000000e+00> : vector<8x128xf32>
    %29 = tpu.matmul %28, %27, %cst_12 {dimension_numbers = #tpu.dot_dimension_numbers<[1], [0], [0], [1], [0, 0, 1, 1], [], []>} : vector<8x128xbf16>, vector<128x128xbf16>, vector<8x128xf32> -> vector<8x128xf32>
    %c0_13 = arith.constant 0 : index
    %c0_14 = arith.constant 0 : index
    %30 = vector.load %arg7[%c0_13, %c0_14] : memref<1x128xf32, #tpu.memory_space<vmem>>, vector<1x128xf32>
    %31 = vector.broadcast %30 : vector<1x128xf32> to vector<8x128xf32>
    %32 = arith.addf %29, %31 : vector<8x128xf32>
    %c0_15 = arith.constant 0 : index
    %c0_16 = arith.constant 0 : index
    %33 = vector.load %arg8[%c0_15, %c0_16] : memref<128x128xbf16, #tpu.memory_space<vmem>>, vector<128x128xbf16>
    %34 = arith.truncf %26 : vector<8x128xf32> to vector<8x128xbf16>
    %cst_17 = arith.constant dense<0.000000e+00> : vector<8x128xf32>
    %35 = tpu.matmul %34, %33, %cst_17 {dimension_numbers = #tpu.dot_dimension_numbers<[1], [0], [0], [1], [0, 0, 1, 1], [], []>} : vector<8x128xbf16>, vector<128x128xbf16>, vector<8x128xf32> -> vector<8x128xf32>
    %c0_18 = arith.constant 0 : index
    %c0_19 = arith.constant 0 : index
    %36 = vector.load %arg9[%c0_18, %c0_19] : memref<1x128xf32, #tpu.memory_space<vmem>>, vector<1x128xf32>
    %37 = vector.broadcast %36 : vector<1x128xf32> to vector<8x128xf32>
    %38 = arith.addf %35, %37 : vector<8x128xf32>
    %c0_20 = arith.constant 0 : index
    %c0_21 = arith.constant 0 : index
    %39 = vector.load %arg10[%c0_20, %c0_21] : memref<128x128xbf16, #tpu.memory_space<vmem>>, vector<128x128xbf16>
    %40 = arith.truncf %26 : vector<8x128xf32> to vector<8x128xbf16>
    %cst_22 = arith.constant dense<0.000000e+00> : vector<8x128xf32>
    %41 = tpu.matmul %40, %39, %cst_22 {dimension_numbers = #tpu.dot_dimension_numbers<[1], [0], [0], [1], [0, 0, 1, 1], [], []>} : vector<8x128xbf16>, vector<128x128xbf16>, vector<8x128xf32> -> vector<8x128xf32>
    %c0_23 = arith.constant 0 : index
    %c0_24 = arith.constant 0 : index
    %42 = vector.load %arg11[%c0_23, %c0_24] : memref<1x128xf32, #tpu.memory_space<vmem>>, vector<1x128xf32>
    %43 = vector.broadcast %42 : vector<1x128xf32> to vector<8x128xf32>
    %44 = arith.addf %41, %43 : vector<8x128xf32>
    %c0_25 = arith.constant 0 : index
    %c0_26 = arith.constant 0 : index
    %c0_27 = arith.constant 0 : index
    %45 = vector.load %arg3[%c0_25, %c0_26, %c0_27] : memref<1x8x8xf32, #tpu.memory_space<vmem>>, vector<1x8x8xf32>
    %46 = vector.shape_cast %45 : vector<1x8x8xf32> to vector<8x8xf32>
    %47 = vector.extract_strided_slice %32 {offsets = [0, 0], sizes = [8, 32], strides = [1, 1]} : vector<8x128xf32> to vector<8x32xf32>
    %48 = arith.truncf %47 : vector<8x32xf32> to vector<8x32xbf16>
    %49 = vector.extract_strided_slice %38 {offsets = [0, 0], sizes = [8, 32], strides = [1, 1]} : vector<8x128xf32> to vector<8x32xf32>
    %50 = arith.truncf %49 : vector<8x32xf32> to vector<8x32xbf16>
    %51 = vector.extract_strided_slice %44 {offsets = [0, 0], sizes = [8, 32], strides = [1, 1]} : vector<8x128xf32> to vector<8x32xf32>
    %52 = arith.truncf %51 : vector<8x32xf32> to vector<8x32xbf16>
    %cst_28 = arith.constant dense<0.000000e+00> : vector<8x8xf32>
    %53 = tpu.matmul %48, %50, %cst_28 {dimension_numbers = #tpu.dot_dimension_numbers<[1], [1], [0], [0], [0, 0, 1, 0], [], []>} : vector<8x32xbf16>, vector<8x32xbf16>, vector<8x8xf32> -> vector<8x8xf32>
    %cst_29 = arith.constant 0.176776692 : f32
    %54 = vector.broadcast %cst_29 : f32 to vector<8x8xf32>
    %55 = arith.mulf %53, %54 : vector<8x8xf32>
    %cst_30 = arith.constant 0.000000e+00 : f32
    %56 = vector.broadcast %cst_30 : f32 to vector<8x8xf32>
    %57 = arith.cmpf oeq, %46, %56 : vector<8x8xf32>
    %cst_31 = arith.constant -1.000000e+09 : f32
    %58 = vector.broadcast %cst_31 : f32 to vector<8x8xf32>
    %59 = arith.select %57, %58, %55 : vector<8x8xi1>, vector<8x8xf32>
    %cst_32 = arith.constant dense<0xFF800000> : vector<8xf32>
    %60 = vector.multi_reduction <maximumf>, %59, %cst_32 [1] : vector<8x8xf32> to vector<8xf32>
    %61 = vector.shape_cast %60 : vector<8xf32> to vector<8x1xf32>
    %62 = vector.broadcast %61 : vector<8x1xf32> to vector<8x8xf32>
    %63 = arith.subf %59, %62 : vector<8x8xf32>
    %64 = math.exp %63 : vector<8x8xf32>
    %cst_33 = arith.constant dense<0.000000e+00> : vector<8xf32>
    %65 = vector.multi_reduction <add>, %64, %cst_33 [1] : vector<8x8xf32> to vector<8xf32>
    %66 = vector.shape_cast %65 : vector<8xf32> to vector<8x1xf32>
    %67 = tpu.reciprocal %66 {approx = true} : vector<8x1xf32> -> vector<8x1xf32>
    %68 = vector.broadcast %67 : vector<8x1xf32> to vector<8x8xf32>
    %69 = arith.mulf %64, %68 : vector<8x8xf32>
    %70 = arith.truncf %69 : vector<8x8xf32> to vector<8x8xbf16>
    %cst_34 = arith.constant dense<0.000000e+00> : vector<8x32xf32>
    %71 = tpu.matmul %70, %52, %cst_34 {dimension_numbers = #tpu.dot_dimension_numbers<[1], [0], [0], [1], [0, 0, 1, 1], [], []>} : vector<8x8xbf16>, vector<8x32xbf16>, vector<8x32xf32> -> vector<8x32xf32>
    %72 = vector.extract_strided_slice %32 {offsets = [0, 32], sizes = [8, 32], strides = [1, 1]} : vector<8x128xf32> to vector<8x32xf32>
    %73 = arith.truncf %72 : vector<8x32xf32> to vector<8x32xbf16>
    %74 = vector.extract_strided_slice %38 {offsets = [0, 32], sizes = [8, 32], strides = [1, 1]} : vector<8x128xf32> to vector<8x32xf32>
    %75 = arith.truncf %74 : vector<8x32xf32> to vector<8x32xbf16>
    %76 = vector.extract_strided_slice %44 {offsets = [0, 32], sizes = [8, 32], strides = [1, 1]} : vector<8x128xf32> to vector<8x32xf32>
    %77 = arith.truncf %76 : vector<8x32xf32> to vector<8x32xbf16>
    %cst_35 = arith.constant dense<0.000000e+00> : vector<8x8xf32>
    %78 = tpu.matmul %73, %75, %cst_35 {dimension_numbers = #tpu.dot_dimension_numbers<[1], [1], [0], [0], [0, 0, 1, 0], [], []>} : vector<8x32xbf16>, vector<8x32xbf16>, vector<8x8xf32> -> vector<8x8xf32>
    %cst_36 = arith.constant 0.176776692 : f32
    %79 = vector.broadcast %cst_36 : f32 to vector<8x8xf32>
    %80 = arith.mulf %78, %79 : vector<8x8xf32>
    %cst_37 = arith.constant 0.000000e+00 : f32
    %81 = vector.broadcast %cst_37 : f32 to vector<8x8xf32>
    %82 = arith.cmpf oeq, %46, %81 : vector<8x8xf32>
    %cst_38 = arith.constant -1.000000e+09 : f32
    %83 = vector.broadcast %cst_38 : f32 to vector<8x8xf32>
    %84 = arith.select %82, %83, %80 : vector<8x8xi1>, vector<8x8xf32>
    %cst_39 = arith.constant dense<0xFF800000> : vector<8xf32>
    %85 = vector.multi_reduction <maximumf>, %84, %cst_39 [1] : vector<8x8xf32> to vector<8xf32>
    %86 = vector.shape_cast %85 : vector<8xf32> to vector<8x1xf32>
    %87 = vector.broadcast %86 : vector<8x1xf32> to vector<8x8xf32>
    %88 = arith.subf %84, %87 : vector<8x8xf32>
    %89 = math.exp %88 : vector<8x8xf32>
    %cst_40 = arith.constant dense<0.000000e+00> : vector<8xf32>
    %90 = vector.multi_reduction <add>, %89, %cst_40 [1] : vector<8x8xf32> to vector<8xf32>
    %91 = vector.shape_cast %90 : vector<8xf32> to vector<8x1xf32>
    %92 = tpu.reciprocal %91 {approx = true} : vector<8x1xf32> -> vector<8x1xf32>
    %93 = vector.broadcast %92 : vector<8x1xf32> to vector<8x8xf32>
    %94 = arith.mulf %89, %93 : vector<8x8xf32>
    %95 = arith.truncf %94 : vector<8x8xf32> to vector<8x8xbf16>
    %cst_41 = arith.constant dense<0.000000e+00> : vector<8x32xf32>
    %96 = tpu.matmul %95, %77, %cst_41 {dimension_numbers = #tpu.dot_dimension_numbers<[1], [0], [0], [1], [0, 0, 1, 1], [], []>} : vector<8x8xbf16>, vector<8x32xbf16>, vector<8x32xf32> -> vector<8x32xf32>
    %97 = vector.extract_strided_slice %32 {offsets = [0, 64], sizes = [8, 32], strides = [1, 1]} : vector<8x128xf32> to vector<8x32xf32>
    %98 = arith.truncf %97 : vector<8x32xf32> to vector<8x32xbf16>
    %99 = vector.extract_strided_slice %38 {offsets = [0, 64], sizes = [8, 32], strides = [1, 1]} : vector<8x128xf32> to vector<8x32xf32>
    %100 = arith.truncf %99 : vector<8x32xf32> to vector<8x32xbf16>
    %101 = vector.extract_strided_slice %44 {offsets = [0, 64], sizes = [8, 32], strides = [1, 1]} : vector<8x128xf32> to vector<8x32xf32>
    %102 = arith.truncf %101 : vector<8x32xf32> to vector<8x32xbf16>
    %cst_42 = arith.constant dense<0.000000e+00> : vector<8x8xf32>
    %103 = tpu.matmul %98, %100, %cst_42 {dimension_numbers = #tpu.dot_dimension_numbers<[1], [1], [0], [0], [0, 0, 1, 0], [], []>} : vector<8x32xbf16>, vector<8x32xbf16>, vector<8x8xf32> -> vector<8x8xf32>
    %cst_43 = arith.constant 0.176776692 : f32
    %104 = vector.broadcast %cst_43 : f32 to vector<8x8xf32>
    %105 = arith.mulf %103, %104 : vector<8x8xf32>
    %cst_44 = arith.constant 0.000000e+00 : f32
    %106 = vector.broadcast %cst_44 : f32 to vector<8x8xf32>
    %107 = arith.cmpf oeq, %46, %106 : vector<8x8xf32>
    %cst_45 = arith.constant -1.000000e+09 : f32
    %108 = vector.broadcast %cst_45 : f32 to vector<8x8xf32>
    %109 = arith.select %107, %108, %105 : vector<8x8xi1>, vector<8x8xf32>
    %cst_46 = arith.constant dense<0xFF800000> : vector<8xf32>
    %110 = vector.multi_reduction <maximumf>, %109, %cst_46 [1] : vector<8x8xf32> to vector<8xf32>
    %111 = vector.shape_cast %110 : vector<8xf32> to vector<8x1xf32>
    %112 = vector.broadcast %111 : vector<8x1xf32> to vector<8x8xf32>
    %113 = arith.subf %109, %112 : vector<8x8xf32>
    %114 = math.exp %113 : vector<8x8xf32>
    %cst_47 = arith.constant dense<0.000000e+00> : vector<8xf32>
    %115 = vector.multi_reduction <add>, %114, %cst_47 [1] : vector<8x8xf32> to vector<8xf32>
    %116 = vector.shape_cast %115 : vector<8xf32> to vector<8x1xf32>
    %117 = tpu.reciprocal %116 {approx = true} : vector<8x1xf32> -> vector<8x1xf32>
    %118 = vector.broadcast %117 : vector<8x1xf32> to vector<8x8xf32>
    %119 = arith.mulf %114, %118 : vector<8x8xf32>
    %120 = arith.truncf %119 : vector<8x8xf32> to vector<8x8xbf16>
    %cst_48 = arith.constant dense<0.000000e+00> : vector<8x32xf32>
    %121 = tpu.matmul %120, %102, %cst_48 {dimension_numbers = #tpu.dot_dimension_numbers<[1], [0], [0], [1], [0, 0, 1, 1], [], []>} : vector<8x8xbf16>, vector<8x32xbf16>, vector<8x32xf32> -> vector<8x32xf32>
    %122 = vector.extract_strided_slice %32 {offsets = [0, 96], sizes = [8, 32], strides = [1, 1]} : vector<8x128xf32> to vector<8x32xf32>
    %123 = arith.truncf %122 : vector<8x32xf32> to vector<8x32xbf16>
    %124 = vector.extract_strided_slice %38 {offsets = [0, 96], sizes = [8, 32], strides = [1, 1]} : vector<8x128xf32> to vector<8x32xf32>
    %125 = arith.truncf %124 : vector<8x32xf32> to vector<8x32xbf16>
    %126 = vector.extract_strided_slice %44 {offsets = [0, 96], sizes = [8, 32], strides = [1, 1]} : vector<8x128xf32> to vector<8x32xf32>
    %127 = arith.truncf %126 : vector<8x32xf32> to vector<8x32xbf16>
    %cst_49 = arith.constant dense<0.000000e+00> : vector<8x8xf32>
    %128 = tpu.matmul %123, %125, %cst_49 {dimension_numbers = #tpu.dot_dimension_numbers<[1], [1], [0], [0], [0, 0, 1, 0], [], []>} : vector<8x32xbf16>, vector<8x32xbf16>, vector<8x8xf32> -> vector<8x8xf32>
    %cst_50 = arith.constant 0.176776692 : f32
    %129 = vector.broadcast %cst_50 : f32 to vector<8x8xf32>
    %130 = arith.mulf %128, %129 : vector<8x8xf32>
    %cst_51 = arith.constant 0.000000e+00 : f32
    %131 = vector.broadcast %cst_51 : f32 to vector<8x8xf32>
    %132 = arith.cmpf oeq, %46, %131 : vector<8x8xf32>
    %cst_52 = arith.constant -1.000000e+09 : f32
    %133 = vector.broadcast %cst_52 : f32 to vector<8x8xf32>
    %134 = arith.select %132, %133, %130 : vector<8x8xi1>, vector<8x8xf32>
    %cst_53 = arith.constant dense<0xFF800000> : vector<8xf32>
    %135 = vector.multi_reduction <maximumf>, %134, %cst_53 [1] : vector<8x8xf32> to vector<8xf32>
    %136 = vector.shape_cast %135 : vector<8xf32> to vector<8x1xf32>
    %137 = vector.broadcast %136 : vector<8x1xf32> to vector<8x8xf32>
    %138 = arith.subf %134, %137 : vector<8x8xf32>
    %139 = math.exp %138 : vector<8x8xf32>
    %cst_54 = arith.constant dense<0.000000e+00> : vector<8xf32>
    %140 = vector.multi_reduction <add>, %139, %cst_54 [1] : vector<8x8xf32> to vector<8xf32>
    %141 = vector.shape_cast %140 : vector<8xf32> to vector<8x1xf32>
    %142 = tpu.reciprocal %141 {approx = true} : vector<8x1xf32> -> vector<8x1xf32>
    %143 = vector.broadcast %142 : vector<8x1xf32> to vector<8x8xf32>
    %144 = arith.mulf %139, %143 : vector<8x8xf32>
    %145 = arith.truncf %144 : vector<8x8xf32> to vector<8x8xbf16>
    %cst_55 = arith.constant dense<0.000000e+00> : vector<8x32xf32>
    %146 = tpu.matmul %145, %127, %cst_55 {dimension_numbers = #tpu.dot_dimension_numbers<[1], [0], [0], [1], [0, 0, 1, 1], [], []>} : vector<8x8xbf16>, vector<8x32xbf16>, vector<8x32xf32> -> vector<8x32xf32>
    %147 = tpu.concatenate %71, %96, %121, %146 in 1 : vector<8x32xf32>, vector<8x32xf32>, vector<8x32xf32>, vector<8x32xf32> -> vector<8x128xf32>
    %c0_56 = arith.constant 0 : index
    %c0_57 = arith.constant 0 : index
    %148 = vector.load %arg12[%c0_56, %c0_57] : memref<128x128xbf16, #tpu.memory_space<vmem>>, vector<128x128xbf16>
    %149 = arith.truncf %147 : vector<8x128xf32> to vector<8x128xbf16>
    %cst_58 = arith.constant dense<0.000000e+00> : vector<8x128xf32>
    %150 = tpu.matmul %149, %148, %cst_58 {dimension_numbers = #tpu.dot_dimension_numbers<[1], [0], [0], [1], [0, 0, 1, 1], [], []>} : vector<8x128xbf16>, vector<128x128xbf16>, vector<8x128xf32> -> vector<8x128xf32>
    %151 = arith.addf %1, %150 : vector<8x128xf32>
    %c0_59 = arith.constant 0 : index
    %c0_60 = arith.constant 0 : index
    %152 = vector.load %arg13[%c0_59, %c0_60] : memref<1x128xf32, #tpu.memory_space<vmem>>, vector<1x128xf32>
    %153 = vector.broadcast %152 : vector<1x128xf32> to vector<8x128xf32>
    %154 = arith.addf %151, %153 : vector<8x128xf32>
    %c0_61 = arith.constant 0 : index
    %c0_62 = arith.constant 0 : index
    %c0_63 = arith.constant 0 : index
    %155 = vector.load %arg14[%c0_61, %c0_62, %c0_63] : memref<1x8x128xf32, #tpu.memory_space<vmem>>, vector<1x8x128xf32>
    %156 = vector.shape_cast %155 : vector<1x8x128xf32> to vector<8x128xf32>
    %157 = vector.shape_cast %154 : vector<8x128xf32> to vector<1x8x128xf32>
    tpu.vector_store %arg14[%c0_61, %c0_62, %c0_63], %157 {strides = array<i32>} : memref<1x8x128xf32, #tpu.memory_space<vmem>>, vector<1x8x128xf32>,
    return
  }
  func.func @transform_0(%arg0: i32) -> (i32, i32, i32) {
    %c0_i32 = arith.constant 0 : i32
    %c0_i32_0 = arith.constant 0 : i32
    %c0_i32_1 = arith.constant 0 : i32
    return %arg0, %c0_i32, %c0_i32_0 : i32, i32, i32
  }
  func.func @transform_1(%arg0: i32) -> (i32, i32, i32) {
    %c0_i32 = arith.constant 0 : i32
    %c0_i32_0 = arith.constant 0 : i32
    %c0_i32_1 = arith.constant 0 : i32
    return %arg0, %c0_i32, %c0_i32_0 : i32, i32, i32
  }
  func.func @transform_2(%arg0: i32) -> (i32, i32, i32) {
    %c0_i32 = arith.constant 0 : i32
    %c0_i32_0 = arith.constant 0 : i32
    %c0_i32_1 = arith.constant 0 : i32
    return %arg0, %c0_i32, %c0_i32_0 : i32, i32, i32
  }
  func.func @transform_3(%arg0: i32) -> (i32, i32) {
    %c0_i32 = arith.constant 0 : i32
    %c0_i32_0 = arith.constant 0 : i32
    %c0_i32_1 = arith.constant 0 : i32
    return %c0_i32, %c0_i32_0 : i32, i32
  }
  func.func @transform_4(%arg0: i32) -> (i32, i32) {
    %c0_i32 = arith.constant 0 : i32
    %c0_i32_0 = arith.constant 0 : i32
    %c0_i32_1 = arith.constant 0 : i32
    return %c0_i32, %c0_i32_0 : i32, i32
  }
  func.func @transform_5(%arg0: i32) -> (i32, i32) {
    %c0_i32 = arith.constant 0 : i32
    %c0_i32_0 = arith.constant 0 : i32
    %c0_i32_1 = arith.constant 0 : i32
    return %c0_i32, %c0_i32_0 : i32, i32
  }
  func.func @transform_6(%arg0: i32) -> (i32, i32) {
    %c0_i32 = arith.constant 0 : i32
    %c0_i32_0 = arith.constant 0 : i32
    %c0_i32_1 = arith.constant 0 : i32
    return %c0_i32, %c0_i32_0 : i32, i32
  }
  func.func @transform_7(%arg0: i32) -> (i32, i32) {
    %c0_i32 = arith.constant 0 : i32
    %c0_i32_0 = arith.constant 0 : i32
    %c0_i32_1 = arith.constant 0 : i32
    return %c0_i32, %c0_i32_0 : i32, i32
  }
  func.func @transform_8(%arg0: i32) -> (i32, i32) {
    %c0_i32 = arith.constant 0 : i32
    %c0_i32_0 = arith.constant 0 : i32
    %c0_i32_1 = arith.constant 0 : i32
    return %c0_i32, %c0_i32_0 : i32, i32
  }
  func.func @transform_9(%arg0: i32) -> (i32, i32) {
    %c0_i32 = arith.constant 0 : i32
    %c0_i32_0 = arith.constant 0 : i32
    %c0_i32_1 = arith.constant 0 : i32
    return %c0_i32, %c0_i32_0 : i32, i32
  }
  func.func @transform_10(%arg0: i32) -> (i32, i32) {
    %c0_i32 = arith.constant 0 : i32
    %c0_i32_0 = arith.constant 0 : i32
    %c0_i32_1 = arith.constant 0 : i32
    return %c0_i32, %c0_i32_0 : i32, i32
  }
  func.func @transform_11(%arg0: i32) -> (i32, i32) {
    %c0_i32 = arith.constant 0 : i32
    %c0_i32_0 = arith.constant 0 : i32
    %c0_i32_1 = arith.constant 0 : i32
    return %c0_i32, %c0_i32_0 : i32, i32
  }
  func.func @transform_12(%arg0: i32) -> (i32, i32) {
    %c0_i32 = arith.constant 0 : i32
    %c0_i32_0 = arith.constant 0 : i32
    %c0_i32_1 = arith.constant 0 : i32
    return %c0_i32, %c0_i32_0 : i32, i32
  }
  func.func @transform_13(%arg0: i32) -> (i32, i32, i32) {
    %c0_i32 = arith.constant 0 : i32
    %c0_i32_0 = arith.constant 0 : i32
    %c0_i32_1 = arith.constant 0 : i32
    return %arg0, %c0_i32, %c0_i32_0 : i32, i32, i32
  }
}

module attributes {stable_mosaic.version = 11 : i64} {
  func.func @_ln_kernel(%arg0: i32, %arg1: memref<1x8x128xf32, #tpu.memory_space<vmem>>, %arg2: memref<1x128xf32, #tpu.memory_space<vmem>>, %arg3: memref<1x128xf32, #tpu.memory_space<vmem>>, %arg4: memref<1x8x128xf32, #tpu.memory_space<vmem>>) attributes {dimension_semantics = [#tpu.dimension_semantics<parallel>], iteration_bounds = array<i64: 2>, scalar_prefetch = 0 : i64, scratch_operands = 0 : i64, tpu.core_type = #tpu.core_type<tc>, window_params = [{transform_indices = @transform_0, window_bounds = array<i64: 1, 8, 128>}, {pipeline_mode = #tpu.pipeline_mode<synchronous>, transform_indices = @transform_1, window_bounds = array<i64: 1, 128>}, {pipeline_mode = #tpu.pipeline_mode<synchronous>, transform_indices = @transform_2, window_bounds = array<i64: 1, 128>}, {transform_indices = @transform_3, window_bounds = array<i64: 1, 8, 128>}]} {
    %c0 = arith.constant 0 : index
    %c0_0 = arith.constant 0 : index
    %c0_1 = arith.constant 0 : index
    %0 = vector.load %arg1[%c0, %c0_0, %c0_1] : memref<1x8x128xf32, #tpu.memory_space<vmem>>, vector<1x8x128xf32>
    %1 = vector.shape_cast %0 : vector<1x8x128xf32> to vector<8x128xf32>
    %c0_2 = arith.constant 0 : index
    %c0_3 = arith.constant 0 : index
    %2 = vector.load %arg2[%c0_2, %c0_3] : memref<1x128xf32, #tpu.memory_space<vmem>>, vector<1x128xf32>
    %c0_4 = arith.constant 0 : index
    %c0_5 = arith.constant 0 : index
    %3 = vector.load %arg3[%c0_4, %c0_5] : memref<1x128xf32, #tpu.memory_space<vmem>>, vector<1x128xf32>
    %cst = arith.constant dense<0.000000e+00> : vector<8xf32>
    %4 = vector.multi_reduction <add>, %1, %cst [1] : vector<8x128xf32> to vector<8xf32>
    %5 = vector.shape_cast %4 : vector<8xf32> to vector<8x1xf32>
    %cst_6 = arith.constant 1.280000e+02 : f32
    %6 = vector.broadcast %cst_6 : f32 to vector<8x1xf32>
    %7 = arith.divf %5, %6 : vector<8x1xf32>
    %8 = vector.broadcast %7 : vector<8x1xf32> to vector<8x128xf32>
    %9 = arith.subf %1, %8 : vector<8x128xf32>
    %10 = arith.mulf %9, %9 : vector<8x128xf32>
    %cst_7 = arith.constant dense<0.000000e+00> : vector<8xf32>
    %11 = vector.multi_reduction <add>, %10, %cst_7 [1] : vector<8x128xf32> to vector<8xf32>
    %12 = vector.shape_cast %11 : vector<8xf32> to vector<8x1xf32>
    %cst_8 = arith.constant 0.00787401571 : f32
    %13 = vector.broadcast %cst_8 : f32 to vector<8x1xf32>
    %14 = arith.mulf %12, %13 : vector<8x1xf32>
    %15 = math.sqrt %14 : vector<8x1xf32>
    %cst_9 = arith.constant 9.99999997E-7 : f32
    %16 = vector.broadcast %cst_9 : f32 to vector<8x1xf32>
    %17 = arith.addf %15, %16 : vector<8x1xf32>
    %18 = tpu.reciprocal %17 {approx = true} : vector<8x1xf32> -> vector<8x1xf32>
    %19 = vector.broadcast %7 : vector<8x1xf32> to vector<8x128xf32>
    %20 = arith.subf %1, %19 : vector<8x128xf32>
    %21 = vector.broadcast %2 : vector<1x128xf32> to vector<8x128xf32>
    %22 = arith.mulf %21, %20 : vector<8x128xf32>
    %23 = vector.broadcast %18 : vector<8x1xf32> to vector<8x128xf32>
    %24 = arith.mulf %22, %23 : vector<8x128xf32>
    %25 = vector.broadcast %3 : vector<1x128xf32> to vector<8x128xf32>
    %26 = arith.addf %24, %25 : vector<8x128xf32>
    %c0_10 = arith.constant 0 : index
    %c0_11 = arith.constant 0 : index
    %c0_12 = arith.constant 0 : index
    %27 = vector.load %arg4[%c0_10, %c0_11, %c0_12] : memref<1x8x128xf32, #tpu.memory_space<vmem>>, vector<1x8x128xf32>
    %28 = vector.shape_cast %27 : vector<1x8x128xf32> to vector<8x128xf32>
    %29 = vector.shape_cast %26 : vector<8x128xf32> to vector<1x8x128xf32>
    tpu.vector_store %arg4[%c0_10, %c0_11, %c0_12], %29 {strides = array<i32>} : memref<1x8x128xf32, #tpu.memory_space<vmem>>, vector<1x8x128xf32>,
    return
  }
  func.func @transform_0(%arg0: i32) -> (i32, i32, i32) {
    %c0_i32 = arith.constant 0 : i32
    %c0_i32_0 = arith.constant 0 : i32
    %c0_i32_1 = arith.constant 0 : i32
    return %arg0, %c0_i32, %c0_i32_0 : i32, i32, i32
  }
  func.func @transform_1(%arg0: i32) -> (i32, i32) {
    %c0_i32 = arith.constant 0 : i32
    %c0_i32_0 = arith.constant 0 : i32
    %c0_i32_1 = arith.constant 0 : i32
    return %c0_i32, %c0_i32_0 : i32, i32
  }
  func.func @transform_2(%arg0: i32) -> (i32, i32) {
    %c0_i32 = arith.constant 0 : i32
    %c0_i32_0 = arith.constant 0 : i32
    %c0_i32_1 = arith.constant 0 : i32
    return %c0_i32, %c0_i32_0 : i32, i32
  }
  func.func @transform_3(%arg0: i32) -> (i32, i32, i32) {
    %c0_i32 = arith.constant 0 : i32
    %c0_i32_0 = arith.constant 0 : i32
    %c0_i32_1 = arith.constant 0 : i32
    return %arg0, %c0_i32, %c0_i32_0 : i32, i32, i32
  }
}

module attributes {stable_mosaic.version = 11 : i64} {
  func.func @_mha_kernel(%arg0: i32, %arg1: memref<1x8x128xf32, #tpu.memory_space<vmem>>, %arg2: memref<1x8x128xf32, #tpu.memory_space<vmem>>, %arg3: memref<1x1x8xf32, #tpu.memory_space<vmem>>, %arg4: memref<1x128xf32, #tpu.memory_space<vmem>>, %arg5: memref<1x128xf32, #tpu.memory_space<vmem>>, %arg6: memref<128x128xbf16, #tpu.memory_space<vmem>>, %arg7: memref<1x128xf32, #tpu.memory_space<vmem>>, %arg8: memref<128x128xbf16, #tpu.memory_space<vmem>>, %arg9: memref<1x128xf32, #tpu.memory_space<vmem>>, %arg10: memref<128x128xbf16, #tpu.memory_space<vmem>>, %arg11: memref<1x128xf32, #tpu.memory_space<vmem>>, %arg12: memref<128x128xbf16, #tpu.memory_space<vmem>>, %arg13: memref<1x128xf32, #tpu.memory_space<vmem>>, %arg14: memref<1x8x128xf32, #tpu.memory_space<vmem>>) attributes {dimension_semantics = [#tpu.dimension_semantics<parallel>], iteration_bounds = array<i64: 2>, scalar_prefetch = 0 : i64, scratch_operands = 0 : i64, tpu.core_type = #tpu.core_type<tc>, window_params = [{transform_indices = @transform_0, window_bounds = array<i64: 1, 8, 128>}, {transform_indices = @transform_1, window_bounds = array<i64: 1, 8, 128>}, {transform_indices = @transform_2, window_bounds = array<i64: 1, 1, 8>}, {pipeline_mode = #tpu.pipeline_mode<synchronous>, transform_indices = @transform_3, window_bounds = array<i64: 1, 128>}, {pipeline_mode = #tpu.pipeline_mode<synchronous>, transform_indices = @transform_4, window_bounds = array<i64: 1, 128>}, {pipeline_mode = #tpu.pipeline_mode<synchronous>, transform_indices = @transform_5, window_bounds = array<i64: 128, 128>}, {pipeline_mode = #tpu.pipeline_mode<synchronous>, transform_indices = @transform_6, window_bounds = array<i64: 1, 128>}, {pipeline_mode = #tpu.pipeline_mode<synchronous>, transform_indices = @transform_7, window_bounds = array<i64: 128, 128>}, {pipeline_mode = #tpu.pipeline_mode<synchronous>, transform_indices = @transform_8, window_bounds = array<i64: 1, 128>}, {pipeline_mode = #tpu.pipeline_mode<synchronous>, transform_indices = @transform_9, window_bounds = array<i64: 128, 128>}, {pipeline_mode = #tpu.pipeline_mode<synchronous>, transform_indices = @transform_10, window_bounds = array<i64: 1, 128>}, {pipeline_mode = #tpu.pipeline_mode<synchronous>, transform_indices = @transform_11, window_bounds = array<i64: 128, 128>}, {pipeline_mode = #tpu.pipeline_mode<synchronous>, transform_indices = @transform_12, window_bounds = array<i64: 1, 128>}, {transform_indices = @transform_13, window_bounds = array<i64: 1, 8, 128>}]} {
    %c0 = arith.constant 0 : index
    %c0_0 = arith.constant 0 : index
    %c0_1 = arith.constant 0 : index
    %0 = vector.load %arg1[%c0, %c0_0, %c0_1] : memref<1x8x128xf32, #tpu.memory_space<vmem>>, vector<1x8x128xf32>
    %1 = vector.shape_cast %0 : vector<1x8x128xf32> to vector<8x128xf32>
    %c0_2 = arith.constant 0 : index
    %c0_3 = arith.constant 0 : index
    %2 = vector.load %arg4[%c0_2, %c0_3] : memref<1x128xf32, #tpu.memory_space<vmem>>, vector<1x128xf32>
    %c0_4 = arith.constant 0 : index
    %c0_5 = arith.constant 0 : index
    %3 = vector.load %arg5[%c0_4, %c0_5] : memref<1x128xf32, #tpu.memory_space<vmem>>, vector<1x128xf32>
    %cst = arith.constant dense<0.000000e+00> : vector<8xf32>
    %4 = vector.multi_reduction <add>, %1, %cst [1] : vector<8x128xf32> to vector<8xf32>
    %5 = vector.shape_cast %4 : vector<8xf32> to vector<8x1xf32>
    %cst_6 = arith.constant 1.280000e+02 : f32
    %6 = vector.broadcast %cst_6 : f32 to vector<8x1xf32>
    %7 = arith.divf %5, %6 : vector<8x1xf32>
    %8 = vector.broadcast %7 : vector<8x1xf32> to vector<8x128xf32>
    %9 = arith.subf %1, %8 : vector<8x128xf32>
    %10 = arith.mulf %9, %9 : vector<8x128xf32>
    %cst_7 = arith.constant dense<0.000000e+00> : vector<8xf32>
    %11 = vector.multi_reduction <add>, %10, %cst_7 [1] : vector<8x128xf32> to vector<8xf32>
    %12 = vector.shape_cast %11 : vector<8xf32> to vector<8x1xf32>
    %cst_8 = arith.constant 0.00787401571 : f32
    %13 = vector.broadcast %cst_8 : f32 to vector<8x1xf32>
    %14 = arith.mulf %12, %13 : vector<8x1xf32>
    %15 = math.sqrt %14 : vector<8x1xf32>
    %cst_9 = arith.constant 9.99999997E-7 : f32
    %16 = vector.broadcast %cst_9 : f32 to vector<8x1xf32>
    %17 = arith.addf %15, %16 : vector<8x1xf32>
    %18 = tpu.reciprocal %17 {approx = true} : vector<8x1xf32> -> vector<8x1xf32>
    %19 = vector.broadcast %7 : vector<8x1xf32> to vector<8x128xf32>
    %20 = arith.subf %1, %19 : vector<8x128xf32>
    %21 = vector.broadcast %2 : vector<1x128xf32> to vector<8x128xf32>
    %22 = arith.mulf %21, %20 : vector<8x128xf32>
    %23 = vector.broadcast %18 : vector<8x1xf32> to vector<8x128xf32>
    %24 = arith.mulf %22, %23 : vector<8x128xf32>
    %25 = vector.broadcast %3 : vector<1x128xf32> to vector<8x128xf32>
    %26 = arith.addf %24, %25 : vector<8x128xf32>
    %c0_10 = arith.constant 0 : index
    %c0_11 = arith.constant 0 : index
    %27 = vector.load %arg6[%c0_10, %c0_11] : memref<128x128xbf16, #tpu.memory_space<vmem>>, vector<128x128xbf16>
    %28 = arith.truncf %26 : vector<8x128xf32> to vector<8x128xbf16>
    %cst_12 = arith.constant dense<0.000000e+00> : vector<8x128xf32>
    %29 = tpu.matmul %28, %27, %cst_12 {dimension_numbers = #tpu.dot_dimension_numbers<[1], [0], [0], [1], [0, 0, 1, 1], [], []>} : vector<8x128xbf16>, vector<128x128xbf16>, vector<8x128xf32> -> vector<8x128xf32>
    %c0_13 = arith.constant 0 : index
    %c0_14 = arith.constant 0 : index
    %30 = vector.load %arg7[%c0_13, %c0_14] : memref<1x128xf32, #tpu.memory_space<vmem>>, vector<1x128xf32>
    %31 = vector.broadcast %30 : vector<1x128xf32> to vector<8x128xf32>
    %32 = arith.addf %29, %31 : vector<8x128xf32>
    %c0_15 = arith.constant 0 : index
    %c0_16 = arith.constant 0 : index
    %33 = vector.load %arg8[%c0_15, %c0_16] : memref<128x128xbf16, #tpu.memory_space<vmem>>, vector<128x128xbf16>
    %34 = arith.truncf %26 : vector<8x128xf32> to vector<8x128xbf16>
    %cst_17 = arith.constant dense<0.000000e+00> : vector<8x128xf32>
    %35 = tpu.matmul %34, %33, %cst_17 {dimension_numbers = #tpu.dot_dimension_numbers<[1], [0], [0], [1], [0, 0, 1, 1], [], []>} : vector<8x128xbf16>, vector<128x128xbf16>, vector<8x128xf32> -> vector<8x128xf32>
    %c0_18 = arith.constant 0 : index
    %c0_19 = arith.constant 0 : index
    %36 = vector.load %arg9[%c0_18, %c0_19] : memref<1x128xf32, #tpu.memory_space<vmem>>, vector<1x128xf32>
    %37 = vector.broadcast %36 : vector<1x128xf32> to vector<8x128xf32>
    %38 = arith.addf %35, %37 : vector<8x128xf32>
    %c0_20 = arith.constant 0 : index
    %c0_21 = arith.constant 0 : index
    %39 = vector.load %arg10[%c0_20, %c0_21] : memref<128x128xbf16, #tpu.memory_space<vmem>>, vector<128x128xbf16>
    %40 = arith.truncf %26 : vector<8x128xf32> to vector<8x128xbf16>
    %cst_22 = arith.constant dense<0.000000e+00> : vector<8x128xf32>
    %41 = tpu.matmul %40, %39, %cst_22 {dimension_numbers = #tpu.dot_dimension_numbers<[1], [0], [0], [1], [0, 0, 1, 1], [], []>} : vector<8x128xbf16>, vector<128x128xbf16>, vector<8x128xf32> -> vector<8x128xf32>
    %c0_23 = arith.constant 0 : index
    %c0_24 = arith.constant 0 : index
    %42 = vector.load %arg11[%c0_23, %c0_24] : memref<1x128xf32, #tpu.memory_space<vmem>>, vector<1x128xf32>
    %43 = vector.broadcast %42 : vector<1x128xf32> to vector<8x128xf32>
    %44 = arith.addf %41, %43 : vector<8x128xf32>
    %c0_25 = arith.constant 0 : index
    %c0_26 = arith.constant 0 : index
    %c0_27 = arith.constant 0 : index
    %45 = vector.load %arg3[%c0_25, %c0_26, %c0_27] : memref<1x1x8xf32, #tpu.memory_space<vmem>>, vector<1x1x8xf32>
    %46 = vector.shape_cast %45 : vector<1x1x8xf32> to vector<1x8xf32>
    %47 = vector.extract_strided_slice %32 {offsets = [0, 0], sizes = [8, 32], strides = [1, 1]} : vector<8x128xf32> to vector<8x32xf32>
    %48 = arith.truncf %47 : vector<8x32xf32> to vector<8x32xbf16>
    %49 = vector.extract_strided_slice %38 {offsets = [0, 0], sizes = [8, 32], strides = [1, 1]} : vector<8x128xf32> to vector<8x32xf32>
    %50 = arith.truncf %49 : vector<8x32xf32> to vector<8x32xbf16>
    %51 = vector.extract_strided_slice %44 {offsets = [0, 0], sizes = [8, 32], strides = [1, 1]} : vector<8x128xf32> to vector<8x32xf32>
    %52 = arith.truncf %51 : vector<8x32xf32> to vector<8x32xbf16>
    %cst_28 = arith.constant dense<0.000000e+00> : vector<8x8xf32>
    %53 = tpu.matmul %48, %50, %cst_28 {dimension_numbers = #tpu.dot_dimension_numbers<[1], [1], [0], [0], [0, 0, 1, 0], [], []>} : vector<8x32xbf16>, vector<8x32xbf16>, vector<8x8xf32> -> vector<8x8xf32>
    %cst_29 = arith.constant 0.176776692 : f32
    %54 = vector.broadcast %cst_29 : f32 to vector<8x8xf32>
    %55 = arith.mulf %53, %54 : vector<8x8xf32>
    %cst_30 = arith.constant 0.000000e+00 : f32
    %56 = vector.broadcast %cst_30 : f32 to vector<1x8xf32>
    %57 = arith.cmpf oeq, %46, %56 : vector<1x8xf32>
    %cst_31 = arith.constant -1.000000e+09 : f32
    %58 = vector.shape_cast %57 : vector<1x8xi1> to vector<1x8xi1>
    %59 = vector.broadcast %58 : vector<1x8xi1> to vector<8x8xi1>
    %60 = vector.broadcast %cst_31 : f32 to vector<8x8xf32>
    %61 = arith.select %59, %60, %55 : vector<8x8xi1>, vector<8x8xf32>
    %cst_32 = arith.constant dense<0xFF800000> : vector<8xf32>
    %62 = vector.multi_reduction <maximumf>, %61, %cst_32 [1] : vector<8x8xf32> to vector<8xf32>
    %63 = vector.shape_cast %62 : vector<8xf32> to vector<8x1xf32>
    %64 = vector.broadcast %63 : vector<8x1xf32> to vector<8x8xf32>
    %65 = arith.subf %61, %64 : vector<8x8xf32>
    %66 = math.exp %65 : vector<8x8xf32>
    %cst_33 = arith.constant dense<0.000000e+00> : vector<8xf32>
    %67 = vector.multi_reduction <add>, %66, %cst_33 [1] : vector<8x8xf32> to vector<8xf32>
    %68 = vector.shape_cast %67 : vector<8xf32> to vector<8x1xf32>
    %69 = tpu.reciprocal %68 {approx = true} : vector<8x1xf32> -> vector<8x1xf32>
    %70 = vector.broadcast %69 : vector<8x1xf32> to vector<8x8xf32>
    %71 = arith.mulf %66, %70 : vector<8x8xf32>
    %72 = arith.truncf %71 : vector<8x8xf32> to vector<8x8xbf16>
    %cst_34 = arith.constant dense<0.000000e+00> : vector<8x32xf32>
    %73 = tpu.matmul %72, %52, %cst_34 {dimension_numbers = #tpu.dot_dimension_numbers<[1], [0], [0], [1], [0, 0, 1, 1], [], []>} : vector<8x8xbf16>, vector<8x32xbf16>, vector<8x32xf32> -> vector<8x32xf32>
    %74 = vector.extract_strided_slice %32 {offsets = [0, 32], sizes = [8, 32], strides = [1, 1]} : vector<8x128xf32> to vector<8x32xf32>
    %75 = arith.truncf %74 : vector<8x32xf32> to vector<8x32xbf16>
    %76 = vector.extract_strided_slice %38 {offsets = [0, 32], sizes = [8, 32], strides = [1, 1]} : vector<8x128xf32> to vector<8x32xf32>
    %77 = arith.truncf %76 : vector<8x32xf32> to vector<8x32xbf16>
    %78 = vector.extract_strided_slice %44 {offsets = [0, 32], sizes = [8, 32], strides = [1, 1]} : vector<8x128xf32> to vector<8x32xf32>
    %79 = arith.truncf %78 : vector<8x32xf32> to vector<8x32xbf16>
    %cst_35 = arith.constant dense<0.000000e+00> : vector<8x8xf32>
    %80 = tpu.matmul %75, %77, %cst_35 {dimension_numbers = #tpu.dot_dimension_numbers<[1], [1], [0], [0], [0, 0, 1, 0], [], []>} : vector<8x32xbf16>, vector<8x32xbf16>, vector<8x8xf32> -> vector<8x8xf32>
    %cst_36 = arith.constant 0.176776692 : f32
    %81 = vector.broadcast %cst_36 : f32 to vector<8x8xf32>
    %82 = arith.mulf %80, %81 : vector<8x8xf32>
    %cst_37 = arith.constant 0.000000e+00 : f32
    %83 = vector.broadcast %cst_37 : f32 to vector<1x8xf32>
    %84 = arith.cmpf oeq, %46, %83 : vector<1x8xf32>
    %cst_38 = arith.constant -1.000000e+09 : f32
    %85 = vector.shape_cast %84 : vector<1x8xi1> to vector<1x8xi1>
    %86 = vector.broadcast %85 : vector<1x8xi1> to vector<8x8xi1>
    %87 = vector.broadcast %cst_38 : f32 to vector<8x8xf32>
    %88 = arith.select %86, %87, %82 : vector<8x8xi1>, vector<8x8xf32>
    %cst_39 = arith.constant dense<0xFF800000> : vector<8xf32>
    %89 = vector.multi_reduction <maximumf>, %88, %cst_39 [1] : vector<8x8xf32> to vector<8xf32>
    %90 = vector.shape_cast %89 : vector<8xf32> to vector<8x1xf32>
    %91 = vector.broadcast %90 : vector<8x1xf32> to vector<8x8xf32>
    %92 = arith.subf %88, %91 : vector<8x8xf32>
    %93 = math.exp %92 : vector<8x8xf32>
    %cst_40 = arith.constant dense<0.000000e+00> : vector<8xf32>
    %94 = vector.multi_reduction <add>, %93, %cst_40 [1] : vector<8x8xf32> to vector<8xf32>
    %95 = vector.shape_cast %94 : vector<8xf32> to vector<8x1xf32>
    %96 = tpu.reciprocal %95 {approx = true} : vector<8x1xf32> -> vector<8x1xf32>
    %97 = vector.broadcast %96 : vector<8x1xf32> to vector<8x8xf32>
    %98 = arith.mulf %93, %97 : vector<8x8xf32>
    %99 = arith.truncf %98 : vector<8x8xf32> to vector<8x8xbf16>
    %cst_41 = arith.constant dense<0.000000e+00> : vector<8x32xf32>
    %100 = tpu.matmul %99, %79, %cst_41 {dimension_numbers = #tpu.dot_dimension_numbers<[1], [0], [0], [1], [0, 0, 1, 1], [], []>} : vector<8x8xbf16>, vector<8x32xbf16>, vector<8x32xf32> -> vector<8x32xf32>
    %101 = vector.extract_strided_slice %32 {offsets = [0, 64], sizes = [8, 32], strides = [1, 1]} : vector<8x128xf32> to vector<8x32xf32>
    %102 = arith.truncf %101 : vector<8x32xf32> to vector<8x32xbf16>
    %103 = vector.extract_strided_slice %38 {offsets = [0, 64], sizes = [8, 32], strides = [1, 1]} : vector<8x128xf32> to vector<8x32xf32>
    %104 = arith.truncf %103 : vector<8x32xf32> to vector<8x32xbf16>
    %105 = vector.extract_strided_slice %44 {offsets = [0, 64], sizes = [8, 32], strides = [1, 1]} : vector<8x128xf32> to vector<8x32xf32>
    %106 = arith.truncf %105 : vector<8x32xf32> to vector<8x32xbf16>
    %cst_42 = arith.constant dense<0.000000e+00> : vector<8x8xf32>
    %107 = tpu.matmul %102, %104, %cst_42 {dimension_numbers = #tpu.dot_dimension_numbers<[1], [1], [0], [0], [0, 0, 1, 0], [], []>} : vector<8x32xbf16>, vector<8x32xbf16>, vector<8x8xf32> -> vector<8x8xf32>
    %cst_43 = arith.constant 0.176776692 : f32
    %108 = vector.broadcast %cst_43 : f32 to vector<8x8xf32>
    %109 = arith.mulf %107, %108 : vector<8x8xf32>
    %cst_44 = arith.constant 0.000000e+00 : f32
    %110 = vector.broadcast %cst_44 : f32 to vector<1x8xf32>
    %111 = arith.cmpf oeq, %46, %110 : vector<1x8xf32>
    %cst_45 = arith.constant -1.000000e+09 : f32
    %112 = vector.shape_cast %111 : vector<1x8xi1> to vector<1x8xi1>
    %113 = vector.broadcast %112 : vector<1x8xi1> to vector<8x8xi1>
    %114 = vector.broadcast %cst_45 : f32 to vector<8x8xf32>
    %115 = arith.select %113, %114, %109 : vector<8x8xi1>, vector<8x8xf32>
    %cst_46 = arith.constant dense<0xFF800000> : vector<8xf32>
    %116 = vector.multi_reduction <maximumf>, %115, %cst_46 [1] : vector<8x8xf32> to vector<8xf32>
    %117 = vector.shape_cast %116 : vector<8xf32> to vector<8x1xf32>
    %118 = vector.broadcast %117 : vector<8x1xf32> to vector<8x8xf32>
    %119 = arith.subf %115, %118 : vector<8x8xf32>
    %120 = math.exp %119 : vector<8x8xf32>
    %cst_47 = arith.constant dense<0.000000e+00> : vector<8xf32>
    %121 = vector.multi_reduction <add>, %120, %cst_47 [1] : vector<8x8xf32> to vector<8xf32>
    %122 = vector.shape_cast %121 : vector<8xf32> to vector<8x1xf32>
    %123 = tpu.reciprocal %122 {approx = true} : vector<8x1xf32> -> vector<8x1xf32>
    %124 = vector.broadcast %123 : vector<8x1xf32> to vector<8x8xf32>
    %125 = arith.mulf %120, %124 : vector<8x8xf32>
    %126 = arith.truncf %125 : vector<8x8xf32> to vector<8x8xbf16>
    %cst_48 = arith.constant dense<0.000000e+00> : vector<8x32xf32>
    %127 = tpu.matmul %126, %106, %cst_48 {dimension_numbers = #tpu.dot_dimension_numbers<[1], [0], [0], [1], [0, 0, 1, 1], [], []>} : vector<8x8xbf16>, vector<8x32xbf16>, vector<8x32xf32> -> vector<8x32xf32>
    %128 = vector.extract_strided_slice %32 {offsets = [0, 96], sizes = [8, 32], strides = [1, 1]} : vector<8x128xf32> to vector<8x32xf32>
    %129 = arith.truncf %128 : vector<8x32xf32> to vector<8x32xbf16>
    %130 = vector.extract_strided_slice %38 {offsets = [0, 96], sizes = [8, 32], strides = [1, 1]} : vector<8x128xf32> to vector<8x32xf32>
    %131 = arith.truncf %130 : vector<8x32xf32> to vector<8x32xbf16>
    %132 = vector.extract_strided_slice %44 {offsets = [0, 96], sizes = [8, 32], strides = [1, 1]} : vector<8x128xf32> to vector<8x32xf32>
    %133 = arith.truncf %132 : vector<8x32xf32> to vector<8x32xbf16>
    %cst_49 = arith.constant dense<0.000000e+00> : vector<8x8xf32>
    %134 = tpu.matmul %129, %131, %cst_49 {dimension_numbers = #tpu.dot_dimension_numbers<[1], [1], [0], [0], [0, 0, 1, 0], [], []>} : vector<8x32xbf16>, vector<8x32xbf16>, vector<8x8xf32> -> vector<8x8xf32>
    %cst_50 = arith.constant 0.176776692 : f32
    %135 = vector.broadcast %cst_50 : f32 to vector<8x8xf32>
    %136 = arith.mulf %134, %135 : vector<8x8xf32>
    %cst_51 = arith.constant 0.000000e+00 : f32
    %137 = vector.broadcast %cst_51 : f32 to vector<1x8xf32>
    %138 = arith.cmpf oeq, %46, %137 : vector<1x8xf32>
    %cst_52 = arith.constant -1.000000e+09 : f32
    %139 = vector.shape_cast %138 : vector<1x8xi1> to vector<1x8xi1>
    %140 = vector.broadcast %139 : vector<1x8xi1> to vector<8x8xi1>
    %141 = vector.broadcast %cst_52 : f32 to vector<8x8xf32>
    %142 = arith.select %140, %141, %136 : vector<8x8xi1>, vector<8x8xf32>
    %cst_53 = arith.constant dense<0xFF800000> : vector<8xf32>
    %143 = vector.multi_reduction <maximumf>, %142, %cst_53 [1] : vector<8x8xf32> to vector<8xf32>
    %144 = vector.shape_cast %143 : vector<8xf32> to vector<8x1xf32>
    %145 = vector.broadcast %144 : vector<8x1xf32> to vector<8x8xf32>
    %146 = arith.subf %142, %145 : vector<8x8xf32>
    %147 = math.exp %146 : vector<8x8xf32>
    %cst_54 = arith.constant dense<0.000000e+00> : vector<8xf32>
    %148 = vector.multi_reduction <add>, %147, %cst_54 [1] : vector<8x8xf32> to vector<8xf32>
    %149 = vector.shape_cast %148 : vector<8xf32> to vector<8x1xf32>
    %150 = tpu.reciprocal %149 {approx = true} : vector<8x1xf32> -> vector<8x1xf32>
    %151 = vector.broadcast %150 : vector<8x1xf32> to vector<8x8xf32>
    %152 = arith.mulf %147, %151 : vector<8x8xf32>
    %153 = arith.truncf %152 : vector<8x8xf32> to vector<8x8xbf16>
    %cst_55 = arith.constant dense<0.000000e+00> : vector<8x32xf32>
    %154 = tpu.matmul %153, %133, %cst_55 {dimension_numbers = #tpu.dot_dimension_numbers<[1], [0], [0], [1], [0, 0, 1, 1], [], []>} : vector<8x8xbf16>, vector<8x32xbf16>, vector<8x32xf32> -> vector<8x32xf32>
    %155 = tpu.concatenate %73, %100, %127, %154 in 1 : vector<8x32xf32>, vector<8x32xf32>, vector<8x32xf32>, vector<8x32xf32> -> vector<8x128xf32>
    %c0_56 = arith.constant 0 : index
    %c0_57 = arith.constant 0 : index
    %156 = vector.load %arg12[%c0_56, %c0_57] : memref<128x128xbf16, #tpu.memory_space<vmem>>, vector<128x128xbf16>
    %157 = arith.truncf %155 : vector<8x128xf32> to vector<8x128xbf16>
    %cst_58 = arith.constant dense<0.000000e+00> : vector<8x128xf32>
    %158 = tpu.matmul %157, %156, %cst_58 {dimension_numbers = #tpu.dot_dimension_numbers<[1], [0], [0], [1], [0, 0, 1, 1], [], []>} : vector<8x128xbf16>, vector<128x128xbf16>, vector<8x128xf32> -> vector<8x128xf32>
    %159 = arith.addf %1, %158 : vector<8x128xf32>
    %c0_59 = arith.constant 0 : index
    %c0_60 = arith.constant 0 : index
    %160 = vector.load %arg13[%c0_59, %c0_60] : memref<1x128xf32, #tpu.memory_space<vmem>>, vector<1x128xf32>
    %161 = vector.broadcast %160 : vector<1x128xf32> to vector<8x128xf32>
    %162 = arith.addf %159, %161 : vector<8x128xf32>
    %c0_61 = arith.constant 0 : index
    %c0_62 = arith.constant 0 : index
    %c0_63 = arith.constant 0 : index
    %163 = vector.load %arg14[%c0_61, %c0_62, %c0_63] : memref<1x8x128xf32, #tpu.memory_space<vmem>>, vector<1x8x128xf32>
    %164 = vector.shape_cast %163 : vector<1x8x128xf32> to vector<8x128xf32>
    %165 = vector.shape_cast %162 : vector<8x128xf32> to vector<1x8x128xf32>
    tpu.vector_store %arg14[%c0_61, %c0_62, %c0_63], %165 {strides = array<i32>} : memref<1x8x128xf32, #tpu.memory_space<vmem>>, vector<1x8x128xf32>,
    return
  }
  func.func @transform_0(%arg0: i32) -> (i32, i32, i32) {
    %c0_i32 = arith.constant 0 : i32
    %c0_i32_0 = arith.constant 0 : i32
    %c0_i32_1 = arith.constant 0 : i32
    return %arg0, %c0_i32, %c0_i32_0 : i32, i32, i32
  }
  func.func @transform_1(%arg0: i32) -> (i32, i32, i32) {
    %c0_i32 = arith.constant 0 : i32
    %c0_i32_0 = arith.constant 0 : i32
    %c0_i32_1 = arith.constant 0 : i32
    return %arg0, %c0_i32, %c0_i32_0 : i32, i32, i32
  }
  func.func @transform_2(%arg0: i32) -> (i32, i32, i32) {
    %c0_i32 = arith.constant 0 : i32
    %c0_i32_0 = arith.constant 0 : i32
    %c0_i32_1 = arith.constant 0 : i32
    return %arg0, %c0_i32, %c0_i32_0 : i32, i32, i32
  }
  func.func @transform_3(%arg0: i32) -> (i32, i32) {
    %c0_i32 = arith.constant 0 : i32
    %c0_i32_0 = arith.constant 0 : i32
    %c0_i32_1 = arith.constant 0 : i32
    return %c0_i32, %c0_i32_0 : i32, i32
  }
  func.func @transform_4(%arg0: i32) -> (i32, i32) {
    %c0_i32 = arith.constant 0 : i32
    %c0_i32_0 = arith.constant 0 : i32
    %c0_i32_1 = arith.constant 0 : i32
    return %c0_i32, %c0_i32_0 : i32, i32
  }
  func.func @transform_5(%arg0: i32) -> (i32, i32) {
    %c0_i32 = arith.constant 0 : i32
    %c0_i32_0 = arith.constant 0 : i32
    %c0_i32_1 = arith.constant 0 : i32
    return %c0_i32, %c0_i32_0 : i32, i32
  }
  func.func @transform_6(%arg0: i32) -> (i32, i32) {
    %c0_i32 = arith.constant 0 : i32
    %c0_i32_0 = arith.constant 0 : i32
    %c0_i32_1 = arith.constant 0 : i32
    return %c0_i32, %c0_i32_0 : i32, i32
  }
  func.func @transform_7(%arg0: i32) -> (i32, i32) {
    %c0_i32 = arith.constant 0 : i32
    %c0_i32_0 = arith.constant 0 : i32
    %c0_i32_1 = arith.constant 0 : i32
    return %c0_i32, %c0_i32_0 : i32, i32
  }
  func.func @transform_8(%arg0: i32) -> (i32, i32) {
    %c0_i32 = arith.constant 0 : i32
    %c0_i32_0 = arith.constant 0 : i32
    %c0_i32_1 = arith.constant 0 : i32
    return %c0_i32, %c0_i32_0 : i32, i32
  }
  func.func @transform_9(%arg0: i32) -> (i32, i32) {
    %c0_i32 = arith.constant 0 : i32
    %c0_i32_0 = arith.constant 0 : i32
    %c0_i32_1 = arith.constant 0 : i32
    return %c0_i32, %c0_i32_0 : i32, i32
  }
  func.func @transform_10(%arg0: i32) -> (i32, i32) {
    %c0_i32 = arith.constant 0 : i32
    %c0_i32_0 = arith.constant 0 : i32
    %c0_i32_1 = arith.constant 0 : i32
    return %c0_i32, %c0_i32_0 : i32, i32
  }
  func.func @transform_11(%arg0: i32) -> (i32, i32) {
    %c0_i32 = arith.constant 0 : i32
    %c0_i32_0 = arith.constant 0 : i32
    %c0_i32_1 = arith.constant 0 : i32
    return %c0_i32, %c0_i32_0 : i32, i32
  }
  func.func @transform_12(%arg0: i32) -> (i32, i32) {
    %c0_i32 = arith.constant 0 : i32
    %c0_i32_0 = arith.constant 0 : i32
    %c0_i32_1 = arith.constant 0 : i32
    return %c0_i32, %c0_i32_0 : i32, i32
  }
  func.func @transform_13(%arg0: i32) -> (i32, i32, i32) {
    %c0_i32 = arith.constant 0 : i32
    %c0_i32_0 = arith.constant 0 : i32
    %c0_i32_1 = arith.constant 0 : i32
    return %arg0, %c0_i32, %c0_i32_0 : i32, i32, i32
  }
}

module attributes {stable_mosaic.version = 11 : i64} {
  func.func @_ffn_kernel(%arg0: i32, %arg1: memref<1x8x128xf32, #tpu.memory_space<vmem>>, %arg2: memref<1x128xf32, #tpu.memory_space<vmem>>, %arg3: memref<1x128xf32, #tpu.memory_space<vmem>>, %arg4: memref<128x512xbf16, #tpu.memory_space<vmem>>, %arg5: memref<1x512xf32, #tpu.memory_space<vmem>>, %arg6: memref<512x128xbf16, #tpu.memory_space<vmem>>, %arg7: memref<1x128xf32, #tpu.memory_space<vmem>>, %arg8: memref<1x8x128xf32, #tpu.memory_space<vmem>>) attributes {dimension_semantics = [#tpu.dimension_semantics<parallel>], iteration_bounds = array<i64: 2>, scalar_prefetch = 0 : i64, scratch_operands = 0 : i64, tpu.core_type = #tpu.core_type<tc>, window_params = [{transform_indices = @transform_0, window_bounds = array<i64: 1, 8, 128>}, {pipeline_mode = #tpu.pipeline_mode<synchronous>, transform_indices = @transform_1, window_bounds = array<i64: 1, 128>}, {pipeline_mode = #tpu.pipeline_mode<synchronous>, transform_indices = @transform_2, window_bounds = array<i64: 1, 128>}, {pipeline_mode = #tpu.pipeline_mode<synchronous>, transform_indices = @transform_3, window_bounds = array<i64: 128, 512>}, {pipeline_mode = #tpu.pipeline_mode<synchronous>, transform_indices = @transform_4, window_bounds = array<i64: 1, 512>}, {pipeline_mode = #tpu.pipeline_mode<synchronous>, transform_indices = @transform_5, window_bounds = array<i64: 512, 128>}, {pipeline_mode = #tpu.pipeline_mode<synchronous>, transform_indices = @transform_6, window_bounds = array<i64: 1, 128>}, {transform_indices = @transform_7, window_bounds = array<i64: 1, 8, 128>}]} {
    %c0 = arith.constant 0 : index
    %c0_0 = arith.constant 0 : index
    %c0_1 = arith.constant 0 : index
    %0 = vector.load %arg1[%c0, %c0_0, %c0_1] : memref<1x8x128xf32, #tpu.memory_space<vmem>>, vector<1x8x128xf32>
    %1 = vector.shape_cast %0 : vector<1x8x128xf32> to vector<8x128xf32>
    %c0_2 = arith.constant 0 : index
    %c0_3 = arith.constant 0 : index
    %2 = vector.load %arg2[%c0_2, %c0_3] : memref<1x128xf32, #tpu.memory_space<vmem>>, vector<1x128xf32>
    %c0_4 = arith.constant 0 : index
    %c0_5 = arith.constant 0 : index
    %3 = vector.load %arg3[%c0_4, %c0_5] : memref<1x128xf32, #tpu.memory_space<vmem>>, vector<1x128xf32>
    %cst = arith.constant dense<0.000000e+00> : vector<8xf32>
    %4 = vector.multi_reduction <add>, %1, %cst [1] : vector<8x128xf32> to vector<8xf32>
    %5 = vector.shape_cast %4 : vector<8xf32> to vector<8x1xf32>
    %cst_6 = arith.constant 1.280000e+02 : f32
    %6 = vector.broadcast %cst_6 : f32 to vector<8x1xf32>
    %7 = arith.divf %5, %6 : vector<8x1xf32>
    %8 = vector.broadcast %7 : vector<8x1xf32> to vector<8x128xf32>
    %9 = arith.subf %1, %8 : vector<8x128xf32>
    %10 = arith.mulf %9, %9 : vector<8x128xf32>
    %cst_7 = arith.constant dense<0.000000e+00> : vector<8xf32>
    %11 = vector.multi_reduction <add>, %10, %cst_7 [1] : vector<8x128xf32> to vector<8xf32>
    %12 = vector.shape_cast %11 : vector<8xf32> to vector<8x1xf32>
    %cst_8 = arith.constant 0.00787401571 : f32
    %13 = vector.broadcast %cst_8 : f32 to vector<8x1xf32>
    %14 = arith.mulf %12, %13 : vector<8x1xf32>
    %15 = math.sqrt %14 : vector<8x1xf32>
    %cst_9 = arith.constant 9.99999997E-7 : f32
    %16 = vector.broadcast %cst_9 : f32 to vector<8x1xf32>
    %17 = arith.addf %15, %16 : vector<8x1xf32>
    %18 = tpu.reciprocal %17 {approx = true} : vector<8x1xf32> -> vector<8x1xf32>
    %19 = vector.broadcast %7 : vector<8x1xf32> to vector<8x128xf32>
    %20 = arith.subf %1, %19 : vector<8x128xf32>
    %21 = vector.broadcast %2 : vector<1x128xf32> to vector<8x128xf32>
    %22 = arith.mulf %21, %20 : vector<8x128xf32>
    %23 = vector.broadcast %18 : vector<8x1xf32> to vector<8x128xf32>
    %24 = arith.mulf %22, %23 : vector<8x128xf32>
    %25 = vector.broadcast %3 : vector<1x128xf32> to vector<8x128xf32>
    %26 = arith.addf %24, %25 : vector<8x128xf32>
    %c0_10 = arith.constant 0 : index
    %c0_11 = arith.constant 0 : index
    %27 = vector.load %arg4[%c0_10, %c0_11] : memref<128x512xbf16, #tpu.memory_space<vmem>>, vector<128x512xbf16>
    %28 = arith.truncf %26 : vector<8x128xf32> to vector<8x128xbf16>
    %cst_12 = arith.constant dense<0.000000e+00> : vector<8x512xf32>
    %29 = tpu.matmul %28, %27, %cst_12 {dimension_numbers = #tpu.dot_dimension_numbers<[1], [0], [0], [1], [0, 0, 1, 1], [], []>} : vector<8x128xbf16>, vector<128x512xbf16>, vector<8x512xf32> -> vector<8x512xf32>
    %c0_13 = arith.constant 0 : index
    %c0_14 = arith.constant 0 : index
    %30 = vector.load %arg5[%c0_13, %c0_14] : memref<1x512xf32, #tpu.memory_space<vmem>>, vector<1x512xf32>
    %31 = vector.broadcast %30 : vector<1x512xf32> to vector<8x512xf32>
    %32 = arith.addf %29, %31 : vector<8x512xf32>
    %cst_15 = arith.constant 0.000000e+00 : f32
    %33 = vector.broadcast %cst_15 : f32 to vector<8x512xf32>
    %34 = arith.maximumf %32, %33 : vector<8x512xf32>
    %c0_16 = arith.constant 0 : index
    %c0_17 = arith.constant 0 : index
    %35 = vector.load %arg6[%c0_16, %c0_17] : memref<512x128xbf16, #tpu.memory_space<vmem>>, vector<512x128xbf16>
    %36 = arith.truncf %34 : vector<8x512xf32> to vector<8x512xbf16>
    %cst_18 = arith.constant dense<0.000000e+00> : vector<8x128xf32>
    %37 = tpu.matmul %36, %35, %cst_18 {dimension_numbers = #tpu.dot_dimension_numbers<[1], [0], [0], [1], [0, 0, 1, 1], [], []>} : vector<8x512xbf16>, vector<512x128xbf16>, vector<8x128xf32> -> vector<8x128xf32>
    %38 = arith.addf %1, %37 : vector<8x128xf32>
    %c0_19 = arith.constant 0 : index
    %c0_20 = arith.constant 0 : index
    %39 = vector.load %arg7[%c0_19, %c0_20] : memref<1x128xf32, #tpu.memory_space<vmem>>, vector<1x128xf32>
    %40 = vector.broadcast %39 : vector<1x128xf32> to vector<8x128xf32>
    %41 = arith.addf %38, %40 : vector<8x128xf32>
    %c0_21 = arith.constant 0 : index
    %c0_22 = arith.constant 0 : index
    %c0_23 = arith.constant 0 : index
    %42 = vector.load %arg8[%c0_21, %c0_22, %c0_23] : memref<1x8x128xf32, #tpu.memory_space<vmem>>, vector<1x8x128xf32>
    %43 = vector.shape_cast %42 : vector<1x8x128xf32> to vector<8x128xf32>
    %44 = vector.shape_cast %41 : vector<8x128xf32> to vector<1x8x128xf32>
    tpu.vector_store %arg8[%c0_21, %c0_22, %c0_23], %44 {strides = array<i32>} : memref<1x8x128xf32, #tpu.memory_space<vmem>>, vector<1x8x128xf32>,
    return
  }
  func.func @transform_0(%arg0: i32) -> (i32, i32, i32) {
    %c0_i32 = arith.constant 0 : i32
    %c0_i32_0 = arith.constant 0 : i32
    %c0_i32_1 = arith.constant 0 : i32
    return %arg0, %c0_i32, %c0_i32_0 : i32, i32, i32
  }
  func.func @transform_1(%arg0: i32) -> (i32, i32) {
    %c0_i32 = arith.constant 0 : i32
    %c0_i32_0 = arith.constant 0 : i32
    %c0_i32_1 = arith.constant 0 : i32
    return %c0_i32, %c0_i32_0 : i32, i32
  }
  func.func @transform_2(%arg0: i32) -> (i32, i32) {
    %c0_i32 = arith.constant 0 : i32
    %c0_i32_0 = arith.constant 0 : i32
    %c0_i32_1 = arith.constant 0 : i32
    return %c0_i32, %c0_i32_0 : i32, i32
  }
  func.func @transform_3(%arg0: i32) -> (i32, i32) {
    %c0_i32 = arith.constant 0 : i32
    %c0_i32_0 = arith.constant 0 : i32
    %c0_i32_1 = arith.constant 0 : i32
    return %c0_i32, %c0_i32_0 : i32, i32
  }
  func.func @transform_4(%arg0: i32) -> (i32, i32) {
    %c0_i32 = arith.constant 0 : i32
    %c0_i32_0 = arith.constant 0 : i32
    %c0_i32_1 = arith.constant 0 : i32
    return %c0_i32, %c0_i32_0 : i32, i32
  }
  func.func @transform_5(%arg0: i32) -> (i32, i32) {
    %c0_i32 = arith.constant 0 : i32
    %c0_i32_0 = arith.constant 0 : i32
    %c0_i32_1 = arith.constant 0 : i32
    return %c0_i32, %c0_i32_0 : i32, i32
  }
  func.func @transform_6(%arg0: i32) -> (i32, i32) {
    %c0_i32 = arith.constant 0 : i32
    %c0_i32_0 = arith.constant 0 : i32
    %c0_i32_1 = arith.constant 0 : i32
    return %c0_i32, %c0_i32_0 : i32, i32
  }
  func.func @transform_7(%arg0: i32) -> (i32, i32, i32) {
    %c0_i32 = arith.constant 0 : i32
    %c0_i32_0 = arith.constant 0 : i32
    %c0_i32_1 = arith.constant 0 : i32
    return %arg0, %c0_i32, %c0_i32_0 : i32, i32, i32
  }
}

module attributes {stable_mosaic.version = 11 : i64} {
  func.func @_mha_kernel(%arg0: i32, %arg1: memref<1x8x128xf32, #tpu.memory_space<vmem>>, %arg2: memref<1x8x128xf32, #tpu.memory_space<vmem>>, %arg3: memref<1x1x8xf32, #tpu.memory_space<vmem>>, %arg4: memref<1x128xf32, #tpu.memory_space<vmem>>, %arg5: memref<1x128xf32, #tpu.memory_space<vmem>>, %arg6: memref<128x128xbf16, #tpu.memory_space<vmem>>, %arg7: memref<1x128xf32, #tpu.memory_space<vmem>>, %arg8: memref<128x128xbf16, #tpu.memory_space<vmem>>, %arg9: memref<1x128xf32, #tpu.memory_space<vmem>>, %arg10: memref<128x128xbf16, #tpu.memory_space<vmem>>, %arg11: memref<1x128xf32, #tpu.memory_space<vmem>>, %arg12: memref<128x128xbf16, #tpu.memory_space<vmem>>, %arg13: memref<1x128xf32, #tpu.memory_space<vmem>>, %arg14: memref<1x8x128xf32, #tpu.memory_space<vmem>>) attributes {dimension_semantics = [#tpu.dimension_semantics<parallel>], iteration_bounds = array<i64: 2>, scalar_prefetch = 0 : i64, scratch_operands = 0 : i64, tpu.core_type = #tpu.core_type<tc>, window_params = [{transform_indices = @transform_0, window_bounds = array<i64: 1, 8, 128>}, {transform_indices = @transform_1, window_bounds = array<i64: 1, 8, 128>}, {transform_indices = @transform_2, window_bounds = array<i64: 1, 1, 8>}, {pipeline_mode = #tpu.pipeline_mode<synchronous>, transform_indices = @transform_3, window_bounds = array<i64: 1, 128>}, {pipeline_mode = #tpu.pipeline_mode<synchronous>, transform_indices = @transform_4, window_bounds = array<i64: 1, 128>}, {pipeline_mode = #tpu.pipeline_mode<synchronous>, transform_indices = @transform_5, window_bounds = array<i64: 128, 128>}, {pipeline_mode = #tpu.pipeline_mode<synchronous>, transform_indices = @transform_6, window_bounds = array<i64: 1, 128>}, {pipeline_mode = #tpu.pipeline_mode<synchronous>, transform_indices = @transform_7, window_bounds = array<i64: 128, 128>}, {pipeline_mode = #tpu.pipeline_mode<synchronous>, transform_indices = @transform_8, window_bounds = array<i64: 1, 128>}, {pipeline_mode = #tpu.pipeline_mode<synchronous>, transform_indices = @transform_9, window_bounds = array<i64: 128, 128>}, {pipeline_mode = #tpu.pipeline_mode<synchronous>, transform_indices = @transform_10, window_bounds = array<i64: 1, 128>}, {pipeline_mode = #tpu.pipeline_mode<synchronous>, transform_indices = @transform_11, window_bounds = array<i64: 128, 128>}, {pipeline_mode = #tpu.pipeline_mode<synchronous>, transform_indices = @transform_12, window_bounds = array<i64: 1, 128>}, {transform_indices = @transform_13, window_bounds = array<i64: 1, 8, 128>}]} {
    %c0 = arith.constant 0 : index
    %c0_0 = arith.constant 0 : index
    %c0_1 = arith.constant 0 : index
    %0 = vector.load %arg1[%c0, %c0_0, %c0_1] : memref<1x8x128xf32, #tpu.memory_space<vmem>>, vector<1x8x128xf32>
    %1 = vector.shape_cast %0 : vector<1x8x128xf32> to vector<8x128xf32>
    %c0_2 = arith.constant 0 : index
    %c0_3 = arith.constant 0 : index
    %2 = vector.load %arg4[%c0_2, %c0_3] : memref<1x128xf32, #tpu.memory_space<vmem>>, vector<1x128xf32>
    %c0_4 = arith.constant 0 : index
    %c0_5 = arith.constant 0 : index
    %3 = vector.load %arg5[%c0_4, %c0_5] : memref<1x128xf32, #tpu.memory_space<vmem>>, vector<1x128xf32>
    %cst = arith.constant dense<0.000000e+00> : vector<8xf32>
    %4 = vector.multi_reduction <add>, %1, %cst [1] : vector<8x128xf32> to vector<8xf32>
    %5 = vector.shape_cast %4 : vector<8xf32> to vector<8x1xf32>
    %cst_6 = arith.constant 1.280000e+02 : f32
    %6 = vector.broadcast %cst_6 : f32 to vector<8x1xf32>
    %7 = arith.divf %5, %6 : vector<8x1xf32>
    %8 = vector.broadcast %7 : vector<8x1xf32> to vector<8x128xf32>
    %9 = arith.subf %1, %8 : vector<8x128xf32>
    %10 = arith.mulf %9, %9 : vector<8x128xf32>
    %cst_7 = arith.constant dense<0.000000e+00> : vector<8xf32>
    %11 = vector.multi_reduction <add>, %10, %cst_7 [1] : vector<8x128xf32> to vector<8xf32>
    %12 = vector.shape_cast %11 : vector<8xf32> to vector<8x1xf32>
    %cst_8 = arith.constant 0.00787401571 : f32
    %13 = vector.broadcast %cst_8 : f32 to vector<8x1xf32>
    %14 = arith.mulf %12, %13 : vector<8x1xf32>
    %15 = math.sqrt %14 : vector<8x1xf32>
    %cst_9 = arith.constant 9.99999997E-7 : f32
    %16 = vector.broadcast %cst_9 : f32 to vector<8x1xf32>
    %17 = arith.addf %15, %16 : vector<8x1xf32>
    %18 = tpu.reciprocal %17 {approx = true} : vector<8x1xf32> -> vector<8x1xf32>
    %19 = vector.broadcast %7 : vector<8x1xf32> to vector<8x128xf32>
    %20 = arith.subf %1, %19 : vector<8x128xf32>
    %21 = vector.broadcast %2 : vector<1x128xf32> to vector<8x128xf32>
    %22 = arith.mulf %21, %20 : vector<8x128xf32>
    %23 = vector.broadcast %18 : vector<8x1xf32> to vector<8x128xf32>
    %24 = arith.mulf %22, %23 : vector<8x128xf32>
    %25 = vector.broadcast %3 : vector<1x128xf32> to vector<8x128xf32>
    %26 = arith.addf %24, %25 : vector<8x128xf32>
    %c0_10 = arith.constant 0 : index
    %c0_11 = arith.constant 0 : index
    %c0_12 = arith.constant 0 : index
    %27 = vector.load %arg2[%c0_10, %c0_11, %c0_12] : memref<1x8x128xf32, #tpu.memory_space<vmem>>, vector<1x8x128xf32>
    %28 = vector.shape_cast %27 : vector<1x8x128xf32> to vector<8x128xf32>
    %c0_13 = arith.constant 0 : index
    %c0_14 = arith.constant 0 : index
    %29 = vector.load %arg6[%c0_13, %c0_14] : memref<128x128xbf16, #tpu.memory_space<vmem>>, vector<128x128xbf16>
    %30 = arith.truncf %26 : vector<8x128xf32> to vector<8x128xbf16>
    %cst_15 = arith.constant dense<0.000000e+00> : vector<8x128xf32>
    %31 = tpu.matmul %30, %29, %cst_15 {dimension_numbers = #tpu.dot_dimension_numbers<[1], [0], [0], [1], [0, 0, 1, 1], [], []>} : vector<8x128xbf16>, vector<128x128xbf16>, vector<8x128xf32> -> vector<8x128xf32>
    %c0_16 = arith.constant 0 : index
    %c0_17 = arith.constant 0 : index
    %32 = vector.load %arg7[%c0_16, %c0_17] : memref<1x128xf32, #tpu.memory_space<vmem>>, vector<1x128xf32>
    %33 = vector.broadcast %32 : vector<1x128xf32> to vector<8x128xf32>
    %34 = arith.addf %31, %33 : vector<8x128xf32>
    %c0_18 = arith.constant 0 : index
    %c0_19 = arith.constant 0 : index
    %35 = vector.load %arg8[%c0_18, %c0_19] : memref<128x128xbf16, #tpu.memory_space<vmem>>, vector<128x128xbf16>
    %36 = arith.truncf %28 : vector<8x128xf32> to vector<8x128xbf16>
    %cst_20 = arith.constant dense<0.000000e+00> : vector<8x128xf32>
    %37 = tpu.matmul %36, %35, %cst_20 {dimension_numbers = #tpu.dot_dimension_numbers<[1], [0], [0], [1], [0, 0, 1, 1], [], []>} : vector<8x128xbf16>, vector<128x128xbf16>, vector<8x128xf32> -> vector<8x128xf32>
    %c0_21 = arith.constant 0 : index
    %c0_22 = arith.constant 0 : index
    %38 = vector.load %arg9[%c0_21, %c0_22] : memref<1x128xf32, #tpu.memory_space<vmem>>, vector<1x128xf32>
    %39 = vector.broadcast %38 : vector<1x128xf32> to vector<8x128xf32>
    %40 = arith.addf %37, %39 : vector<8x128xf32>
    %c0_23 = arith.constant 0 : index
    %c0_24 = arith.constant 0 : index
    %41 = vector.load %arg10[%c0_23, %c0_24] : memref<128x128xbf16, #tpu.memory_space<vmem>>, vector<128x128xbf16>
    %42 = arith.truncf %28 : vector<8x128xf32> to vector<8x128xbf16>
    %cst_25 = arith.constant dense<0.000000e+00> : vector<8x128xf32>
    %43 = tpu.matmul %42, %41, %cst_25 {dimension_numbers = #tpu.dot_dimension_numbers<[1], [0], [0], [1], [0, 0, 1, 1], [], []>} : vector<8x128xbf16>, vector<128x128xbf16>, vector<8x128xf32> -> vector<8x128xf32>
    %c0_26 = arith.constant 0 : index
    %c0_27 = arith.constant 0 : index
    %44 = vector.load %arg11[%c0_26, %c0_27] : memref<1x128xf32, #tpu.memory_space<vmem>>, vector<1x128xf32>
    %45 = vector.broadcast %44 : vector<1x128xf32> to vector<8x128xf32>
    %46 = arith.addf %43, %45 : vector<8x128xf32>
    %c0_28 = arith.constant 0 : index
    %c0_29 = arith.constant 0 : index
    %c0_30 = arith.constant 0 : index
    %47 = vector.load %arg3[%c0_28, %c0_29, %c0_30] : memref<1x1x8xf32, #tpu.memory_space<vmem>>, vector<1x1x8xf32>
    %48 = vector.shape_cast %47 : vector<1x1x8xf32> to vector<1x8xf32>
    %49 = vector.extract_strided_slice %34 {offsets = [0, 0], sizes = [8, 32], strides = [1, 1]} : vector<8x128xf32> to vector<8x32xf32>
    %50 = arith.truncf %49 : vector<8x32xf32> to vector<8x32xbf16>
    %51 = vector.extract_strided_slice %40 {offsets = [0, 0], sizes = [8, 32], strides = [1, 1]} : vector<8x128xf32> to vector<8x32xf32>
    %52 = arith.truncf %51 : vector<8x32xf32> to vector<8x32xbf16>
    %53 = vector.extract_strided_slice %46 {offsets = [0, 0], sizes = [8, 32], strides = [1, 1]} : vector<8x128xf32> to vector<8x32xf32>
    %54 = arith.truncf %53 : vector<8x32xf32> to vector<8x32xbf16>
    %cst_31 = arith.constant dense<0.000000e+00> : vector<8x8xf32>
    %55 = tpu.matmul %50, %52, %cst_31 {dimension_numbers = #tpu.dot_dimension_numbers<[1], [1], [0], [0], [0, 0, 1, 0], [], []>} : vector<8x32xbf16>, vector<8x32xbf16>, vector<8x8xf32> -> vector<8x8xf32>
    %cst_32 = arith.constant 0.176776692 : f32
    %56 = vector.broadcast %cst_32 : f32 to vector<8x8xf32>
    %57 = arith.mulf %55, %56 : vector<8x8xf32>
    %cst_33 = arith.constant 0.000000e+00 : f32
    %58 = vector.broadcast %cst_33 : f32 to vector<1x8xf32>
    %59 = arith.cmpf oeq, %48, %58 : vector<1x8xf32>
    %cst_34 = arith.constant -1.000000e+09 : f32
    %60 = vector.shape_cast %59 : vector<1x8xi1> to vector<1x8xi1>
    %61 = vector.broadcast %60 : vector<1x8xi1> to vector<8x8xi1>
    %62 = vector.broadcast %cst_34 : f32 to vector<8x8xf32>
    %63 = arith.select %61, %62, %57 : vector<8x8xi1>, vector<8x8xf32>
    %cst_35 = arith.constant dense<0xFF800000> : vector<8xf32>
    %64 = vector.multi_reduction <maximumf>, %63, %cst_35 [1] : vector<8x8xf32> to vector<8xf32>
    %65 = vector.shape_cast %64 : vector<8xf32> to vector<8x1xf32>
    %66 = vector.broadcast %65 : vector<8x1xf32> to vector<8x8xf32>
    %67 = arith.subf %63, %66 : vector<8x8xf32>
    %68 = math.exp %67 : vector<8x8xf32>
    %cst_36 = arith.constant dense<0.000000e+00> : vector<8xf32>
    %69 = vector.multi_reduction <add>, %68, %cst_36 [1] : vector<8x8xf32> to vector<8xf32>
    %70 = vector.shape_cast %69 : vector<8xf32> to vector<8x1xf32>
    %71 = tpu.reciprocal %70 {approx = true} : vector<8x1xf32> -> vector<8x1xf32>
    %72 = vector.broadcast %71 : vector<8x1xf32> to vector<8x8xf32>
    %73 = arith.mulf %68, %72 : vector<8x8xf32>
    %74 = arith.truncf %73 : vector<8x8xf32> to vector<8x8xbf16>
    %cst_37 = arith.constant dense<0.000000e+00> : vector<8x32xf32>
    %75 = tpu.matmul %74, %54, %cst_37 {dimension_numbers = #tpu.dot_dimension_numbers<[1], [0], [0], [1], [0, 0, 1, 1], [], []>} : vector<8x8xbf16>, vector<8x32xbf16>, vector<8x32xf32> -> vector<8x32xf32>
    %76 = vector.extract_strided_slice %34 {offsets = [0, 32], sizes = [8, 32], strides = [1, 1]} : vector<8x128xf32> to vector<8x32xf32>
    %77 = arith.truncf %76 : vector<8x32xf32> to vector<8x32xbf16>
    %78 = vector.extract_strided_slice %40 {offsets = [0, 32], sizes = [8, 32], strides = [1, 1]} : vector<8x128xf32> to vector<8x32xf32>
    %79 = arith.truncf %78 : vector<8x32xf32> to vector<8x32xbf16>
    %80 = vector.extract_strided_slice %46 {offsets = [0, 32], sizes = [8, 32], strides = [1, 1]} : vector<8x128xf32> to vector<8x32xf32>
    %81 = arith.truncf %80 : vector<8x32xf32> to vector<8x32xbf16>
    %cst_38 = arith.constant dense<0.000000e+00> : vector<8x8xf32>
    %82 = tpu.matmul %77, %79, %cst_38 {dimension_numbers = #tpu.dot_dimension_numbers<[1], [1], [0], [0], [0, 0, 1, 0], [], []>} : vector<8x32xbf16>, vector<8x32xbf16>, vector<8x8xf32> -> vector<8x8xf32>
    %cst_39 = arith.constant 0.176776692 : f32
    %83 = vector.broadcast %cst_39 : f32 to vector<8x8xf32>
    %84 = arith.mulf %82, %83 : vector<8x8xf32>
    %cst_40 = arith.constant 0.000000e+00 : f32
    %85 = vector.broadcast %cst_40 : f32 to vector<1x8xf32>
    %86 = arith.cmpf oeq, %48, %85 : vector<1x8xf32>
    %cst_41 = arith.constant -1.000000e+09 : f32
    %87 = vector.shape_cast %86 : vector<1x8xi1> to vector<1x8xi1>
    %88 = vector.broadcast %87 : vector<1x8xi1> to vector<8x8xi1>
    %89 = vector.broadcast %cst_41 : f32 to vector<8x8xf32>
    %90 = arith.select %88, %89, %84 : vector<8x8xi1>, vector<8x8xf32>
    %cst_42 = arith.constant dense<0xFF800000> : vector<8xf32>
    %91 = vector.multi_reduction <maximumf>, %90, %cst_42 [1] : vector<8x8xf32> to vector<8xf32>
    %92 = vector.shape_cast %91 : vector<8xf32> to vector<8x1xf32>
    %93 = vector.broadcast %92 : vector<8x1xf32> to vector<8x8xf32>
    %94 = arith.subf %90, %93 : vector<8x8xf32>
    %95 = math.exp %94 : vector<8x8xf32>
    %cst_43 = arith.constant dense<0.000000e+00> : vector<8xf32>
    %96 = vector.multi_reduction <add>, %95, %cst_43 [1] : vector<8x8xf32> to vector<8xf32>
    %97 = vector.shape_cast %96 : vector<8xf32> to vector<8x1xf32>
    %98 = tpu.reciprocal %97 {approx = true} : vector<8x1xf32> -> vector<8x1xf32>
    %99 = vector.broadcast %98 : vector<8x1xf32> to vector<8x8xf32>
    %100 = arith.mulf %95, %99 : vector<8x8xf32>
    %101 = arith.truncf %100 : vector<8x8xf32> to vector<8x8xbf16>
    %cst_44 = arith.constant dense<0.000000e+00> : vector<8x32xf32>
    %102 = tpu.matmul %101, %81, %cst_44 {dimension_numbers = #tpu.dot_dimension_numbers<[1], [0], [0], [1], [0, 0, 1, 1], [], []>} : vector<8x8xbf16>, vector<8x32xbf16>, vector<8x32xf32> -> vector<8x32xf32>
    %103 = vector.extract_strided_slice %34 {offsets = [0, 64], sizes = [8, 32], strides = [1, 1]} : vector<8x128xf32> to vector<8x32xf32>
    %104 = arith.truncf %103 : vector<8x32xf32> to vector<8x32xbf16>
    %105 = vector.extract_strided_slice %40 {offsets = [0, 64], sizes = [8, 32], strides = [1, 1]} : vector<8x128xf32> to vector<8x32xf32>
    %106 = arith.truncf %105 : vector<8x32xf32> to vector<8x32xbf16>
    %107 = vector.extract_strided_slice %46 {offsets = [0, 64], sizes = [8, 32], strides = [1, 1]} : vector<8x128xf32> to vector<8x32xf32>
    %108 = arith.truncf %107 : vector<8x32xf32> to vector<8x32xbf16>
    %cst_45 = arith.constant dense<0.000000e+00> : vector<8x8xf32>
    %109 = tpu.matmul %104, %106, %cst_45 {dimension_numbers = #tpu.dot_dimension_numbers<[1], [1], [0], [0], [0, 0, 1, 0], [], []>} : vector<8x32xbf16>, vector<8x32xbf16>, vector<8x8xf32> -> vector<8x8xf32>
    %cst_46 = arith.constant 0.176776692 : f32
    %110 = vector.broadcast %cst_46 : f32 to vector<8x8xf32>
    %111 = arith.mulf %109, %110 : vector<8x8xf32>
    %cst_47 = arith.constant 0.000000e+00 : f32
    %112 = vector.broadcast %cst_47 : f32 to vector<1x8xf32>
    %113 = arith.cmpf oeq, %48, %112 : vector<1x8xf32>
    %cst_48 = arith.constant -1.000000e+09 : f32
    %114 = vector.shape_cast %113 : vector<1x8xi1> to vector<1x8xi1>
    %115 = vector.broadcast %114 : vector<1x8xi1> to vector<8x8xi1>
    %116 = vector.broadcast %cst_48 : f32 to vector<8x8xf32>
    %117 = arith.select %115, %116, %111 : vector<8x8xi1>, vector<8x8xf32>
    %cst_49 = arith.constant dense<0xFF800000> : vector<8xf32>
    %118 = vector.multi_reduction <maximumf>, %117, %cst_49 [1] : vector<8x8xf32> to vector<8xf32>
    %119 = vector.shape_cast %118 : vector<8xf32> to vector<8x1xf32>
    %120 = vector.broadcast %119 : vector<8x1xf32> to vector<8x8xf32>
    %121 = arith.subf %117, %120 : vector<8x8xf32>
    %122 = math.exp %121 : vector<8x8xf32>
    %cst_50 = arith.constant dense<0.000000e+00> : vector<8xf32>
    %123 = vector.multi_reduction <add>, %122, %cst_50 [1] : vector<8x8xf32> to vector<8xf32>
    %124 = vector.shape_cast %123 : vector<8xf32> to vector<8x1xf32>
    %125 = tpu.reciprocal %124 {approx = true} : vector<8x1xf32> -> vector<8x1xf32>
    %126 = vector.broadcast %125 : vector<8x1xf32> to vector<8x8xf32>
    %127 = arith.mulf %122, %126 : vector<8x8xf32>
    %128 = arith.truncf %127 : vector<8x8xf32> to vector<8x8xbf16>
    %cst_51 = arith.constant dense<0.000000e+00> : vector<8x32xf32>
    %129 = tpu.matmul %128, %108, %cst_51 {dimension_numbers = #tpu.dot_dimension_numbers<[1], [0], [0], [1], [0, 0, 1, 1], [], []>} : vector<8x8xbf16>, vector<8x32xbf16>, vector<8x32xf32> -> vector<8x32xf32>
    %130 = vector.extract_strided_slice %34 {offsets = [0, 96], sizes = [8, 32], strides = [1, 1]} : vector<8x128xf32> to vector<8x32xf32>
    %131 = arith.truncf %130 : vector<8x32xf32> to vector<8x32xbf16>
    %132 = vector.extract_strided_slice %40 {offsets = [0, 96], sizes = [8, 32], strides = [1, 1]} : vector<8x128xf32> to vector<8x32xf32>
    %133 = arith.truncf %132 : vector<8x32xf32> to vector<8x32xbf16>
    %134 = vector.extract_strided_slice %46 {offsets = [0, 96], sizes = [8, 32], strides = [1, 1]} : vector<8x128xf32> to vector<8x32xf32>
    %135 = arith.truncf %134 : vector<8x32xf32> to vector<8x32xbf16>
    %cst_52 = arith.constant dense<0.000000e+00> : vector<8x8xf32>
    %136 = tpu.matmul %131, %133, %cst_52 {dimension_numbers = #tpu.dot_dimension_numbers<[1], [1], [0], [0], [0, 0, 1, 0], [], []>} : vector<8x32xbf16>, vector<8x32xbf16>, vector<8x8xf32> -> vector<8x8xf32>
    %cst_53 = arith.constant 0.176776692 : f32
    %137 = vector.broadcast %cst_53 : f32 to vector<8x8xf32>
    %138 = arith.mulf %136, %137 : vector<8x8xf32>
    %cst_54 = arith.constant 0.000000e+00 : f32
    %139 = vector.broadcast %cst_54 : f32 to vector<1x8xf32>
    %140 = arith.cmpf oeq, %48, %139 : vector<1x8xf32>
    %cst_55 = arith.constant -1.000000e+09 : f32
    %141 = vector.shape_cast %140 : vector<1x8xi1> to vector<1x8xi1>
    %142 = vector.broadcast %141 : vector<1x8xi1> to vector<8x8xi1>
    %143 = vector.broadcast %cst_55 : f32 to vector<8x8xf32>
    %144 = arith.select %142, %143, %138 : vector<8x8xi1>, vector<8x8xf32>
    %cst_56 = arith.constant dense<0xFF800000> : vector<8xf32>
    %145 = vector.multi_reduction <maximumf>, %144, %cst_56 [1] : vector<8x8xf32> to vector<8xf32>
    %146 = vector.shape_cast %145 : vector<8xf32> to vector<8x1xf32>
    %147 = vector.broadcast %146 : vector<8x1xf32> to vector<8x8xf32>
    %148 = arith.subf %144, %147 : vector<8x8xf32>
    %149 = math.exp %148 : vector<8x8xf32>
    %cst_57 = arith.constant dense<0.000000e+00> : vector<8xf32>
    %150 = vector.multi_reduction <add>, %149, %cst_57 [1] : vector<8x8xf32> to vector<8xf32>
    %151 = vector.shape_cast %150 : vector<8xf32> to vector<8x1xf32>
    %152 = tpu.reciprocal %151 {approx = true} : vector<8x1xf32> -> vector<8x1xf32>
    %153 = vector.broadcast %152 : vector<8x1xf32> to vector<8x8xf32>
    %154 = arith.mulf %149, %153 : vector<8x8xf32>
    %155 = arith.truncf %154 : vector<8x8xf32> to vector<8x8xbf16>
    %cst_58 = arith.constant dense<0.000000e+00> : vector<8x32xf32>
    %156 = tpu.matmul %155, %135, %cst_58 {dimension_numbers = #tpu.dot_dimension_numbers<[1], [0], [0], [1], [0, 0, 1, 1], [], []>} : vector<8x8xbf16>, vector<8x32xbf16>, vector<8x32xf32> -> vector<8x32xf32>
    %157 = tpu.concatenate %75, %102, %129, %156 in 1 : vector<8x32xf32>, vector<8x32xf32>, vector<8x32xf32>, vector<8x32xf32> -> vector<8x128xf32>
    %c0_59 = arith.constant 0 : index
    %c0_60 = arith.constant 0 : index
    %158 = vector.load %arg12[%c0_59, %c0_60] : memref<128x128xbf16, #tpu.memory_space<vmem>>, vector<128x128xbf16>
    %159 = arith.truncf %157 : vector<8x128xf32> to vector<8x128xbf16>
    %cst_61 = arith.constant dense<0.000000e+00> : vector<8x128xf32>
    %160 = tpu.matmul %159, %158, %cst_61 {dimension_numbers = #tpu.dot_dimension_numbers<[1], [0], [0], [1], [0, 0, 1, 1], [], []>} : vector<8x128xbf16>, vector<128x128xbf16>, vector<8x128xf32> -> vector<8x128xf32>
    %161 = arith.addf %1, %160 : vector<8x128xf32>
    %c0_62 = arith.constant 0 : index
    %c0_63 = arith.constant 0 : index
    %162 = vector.load %arg13[%c0_62, %c0_63] : memref<1x128xf32, #tpu.memory_space<vmem>>, vector<1x128xf32>
    %163 = vector.broadcast %162 : vector<1x128xf32> to vector<8x128xf32>
    %164 = arith.addf %161, %163 : vector<8x128xf32>
    %c0_64 = arith.constant 0 : index
    %c0_65 = arith.constant 0 : index
    %c0_66 = arith.constant 0 : index
    %165 = vector.load %arg14[%c0_64, %c0_65, %c0_66] : memref<1x8x128xf32, #tpu.memory_space<vmem>>, vector<1x8x128xf32>
    %166 = vector.shape_cast %165 : vector<1x8x128xf32> to vector<8x128xf32>
    %167 = vector.shape_cast %164 : vector<8x128xf32> to vector<1x8x128xf32>
    tpu.vector_store %arg14[%c0_64, %c0_65, %c0_66], %167 {strides = array<i32>} : memref<1x8x128xf32, #tpu.memory_space<vmem>>, vector<1x8x128xf32>,
    return
  }
  func.func @transform_0(%arg0: i32) -> (i32, i32, i32) {
    %c0_i32 = arith.constant 0 : i32
    %c0_i32_0 = arith.constant 0 : i32
    %c0_i32_1 = arith.constant 0 : i32
    return %arg0, %c0_i32, %c0_i32_0 : i32, i32, i32
  }
  func.func @transform_1(%arg0: i32) -> (i32, i32, i32) {
    %c0_i32 = arith.constant 0 : i32
    %c0_i32_0 = arith.constant 0 : i32
    %c0_i32_1 = arith.constant 0 : i32
    return %arg0, %c0_i32, %c0_i32_0 : i32, i32, i32
  }
  func.func @transform_2(%arg0: i32) -> (i32, i32, i32) {
    %c0_i32 = arith.constant 0 : i32
    %c0_i32_0 = arith.constant 0 : i32
    %c0_i32_1 = arith.constant 0 : i32
    return %arg0, %c0_i32, %c0_i32_0 : i32, i32, i32
  }
  func.func @transform_3(%arg0: i32) -> (i32, i32) {
    %c0_i32 = arith.constant 0 : i32
    %c0_i32_0 = arith.constant 0 : i32
    %c0_i32_1 = arith.constant 0 : i32
    return %c0_i32, %c0_i32_0 : i32, i32
  }
  func.func @transform_4(%arg0: i32) -> (i32, i32) {
    %c0_i32 = arith.constant 0 : i32
    %c0_i32_0 = arith.constant 0 : i32
    %c0_i32_1 = arith.constant 0 : i32
    return %c0_i32, %c0_i32_0 : i32, i32
  }
  func.func @transform_5(%arg0: i32) -> (i32, i32) {
    %c0_i32 = arith.constant 0 : i32
    %c0_i32_0 = arith.constant 0 : i32
    %c0_i32_1 = arith.constant 0 : i32
    return %c0_i32, %c0_i32_0 : i32, i32
  }
  func.func @transform_6(%arg0: i32) -> (i32, i32) {
    %c0_i32 = arith.constant 0 : i32
    %c0_i32_0 = arith.constant 0 : i32
    %c0_i32_1 = arith.constant 0 : i32
    return %c0_i32, %c0_i32_0 : i32, i32
  }
  func.func @transform_7(%arg0: i32) -> (i32, i32) {
    %c0_i32 = arith.constant 0 : i32
    %c0_i32_0 = arith.constant 0 : i32
    %c0_i32_1 = arith.constant 0 : i32
    return %c0_i32, %c0_i32_0 : i32, i32
  }
  func.func @transform_8(%arg0: i32) -> (i32, i32) {
    %c0_i32 = arith.constant 0 : i32
    %c0_i32_0 = arith.constant 0 : i32
    %c0_i32_1 = arith.constant 0 : i32
    return %c0_i32, %c0_i32_0 : i32, i32
  }
  func.func @transform_9(%arg0: i32) -> (i32, i32) {
    %c0_i32 = arith.constant 0 : i32
    %c0_i32_0 = arith.constant 0 : i32
    %c0_i32_1 = arith.constant 0 : i32
    return %c0_i32, %c0_i32_0 : i32, i32
  }
  func.func @transform_10(%arg0: i32) -> (i32, i32) {
    %c0_i32 = arith.constant 0 : i32
    %c0_i32_0 = arith.constant 0 : i32
    %c0_i32_1 = arith.constant 0 : i32
    return %c0_i32, %c0_i32_0 : i32, i32
  }
  func.func @transform_11(%arg0: i32) -> (i32, i32) {
    %c0_i32 = arith.constant 0 : i32
    %c0_i32_0 = arith.constant 0 : i32
    %c0_i32_1 = arith.constant 0 : i32
    return %c0_i32, %c0_i32_0 : i32, i32
  }
  func.func @transform_12(%arg0: i32) -> (i32, i32) {
    %c0_i32 = arith.constant 0 : i32
    %c0_i32_0 = arith.constant 0 : i32
    %c0_i32_1 = arith.constant 0 : i32
    return %c0_i32, %c0_i32_0 : i32, i32
  }
  func.func @transform_13(%arg0: i32) -> (i32, i32, i32) {
    %c0_i32 = arith.constant 0 : i32
    %c0_i32_0 = arith.constant 0 : i32
    %c0_i32_1 = arith.constant 0 : i32
    return %arg0, %c0_i32, %c0_i32_0 : i32, i32, i32
  }
}

module attributes {stable_mosaic.version = 11 : i64} {
  func.func @_ffn_kernel(%arg0: i32, %arg1: memref<1x8x128xf32, #tpu.memory_space<vmem>>, %arg2: memref<1x128xf32, #tpu.memory_space<vmem>>, %arg3: memref<1x128xf32, #tpu.memory_space<vmem>>, %arg4: memref<128x512xbf16, #tpu.memory_space<vmem>>, %arg5: memref<1x512xf32, #tpu.memory_space<vmem>>, %arg6: memref<512x128xbf16, #tpu.memory_space<vmem>>, %arg7: memref<1x128xf32, #tpu.memory_space<vmem>>, %arg8: memref<1x8x128xf32, #tpu.memory_space<vmem>>) attributes {dimension_semantics = [#tpu.dimension_semantics<parallel>], iteration_bounds = array<i64: 2>, scalar_prefetch = 0 : i64, scratch_operands = 0 : i64, tpu.core_type = #tpu.core_type<tc>, window_params = [{transform_indices = @transform_0, window_bounds = array<i64: 1, 8, 128>}, {pipeline_mode = #tpu.pipeline_mode<synchronous>, transform_indices = @transform_1, window_bounds = array<i64: 1, 128>}, {pipeline_mode = #tpu.pipeline_mode<synchronous>, transform_indices = @transform_2, window_bounds = array<i64: 1, 128>}, {pipeline_mode = #tpu.pipeline_mode<synchronous>, transform_indices = @transform_3, window_bounds = array<i64: 128, 512>}, {pipeline_mode = #tpu.pipeline_mode<synchronous>, transform_indices = @transform_4, window_bounds = array<i64: 1, 512>}, {pipeline_mode = #tpu.pipeline_mode<synchronous>, transform_indices = @transform_5, window_bounds = array<i64: 512, 128>}, {pipeline_mode = #tpu.pipeline_mode<synchronous>, transform_indices = @transform_6, window_bounds = array<i64: 1, 128>}, {transform_indices = @transform_7, window_bounds = array<i64: 1, 8, 128>}]} {
    %c0 = arith.constant 0 : index
    %c0_0 = arith.constant 0 : index
    %c0_1 = arith.constant 0 : index
    %0 = vector.load %arg1[%c0, %c0_0, %c0_1] : memref<1x8x128xf32, #tpu.memory_space<vmem>>, vector<1x8x128xf32>
    %1 = vector.shape_cast %0 : vector<1x8x128xf32> to vector<8x128xf32>
    %c0_2 = arith.constant 0 : index
    %c0_3 = arith.constant 0 : index
    %2 = vector.load %arg2[%c0_2, %c0_3] : memref<1x128xf32, #tpu.memory_space<vmem>>, vector<1x128xf32>
    %c0_4 = arith.constant 0 : index
    %c0_5 = arith.constant 0 : index
    %3 = vector.load %arg3[%c0_4, %c0_5] : memref<1x128xf32, #tpu.memory_space<vmem>>, vector<1x128xf32>
    %cst = arith.constant dense<0.000000e+00> : vector<8xf32>
    %4 = vector.multi_reduction <add>, %1, %cst [1] : vector<8x128xf32> to vector<8xf32>
    %5 = vector.shape_cast %4 : vector<8xf32> to vector<8x1xf32>
    %cst_6 = arith.constant 1.280000e+02 : f32
    %6 = vector.broadcast %cst_6 : f32 to vector<8x1xf32>
    %7 = arith.divf %5, %6 : vector<8x1xf32>
    %8 = vector.broadcast %7 : vector<8x1xf32> to vector<8x128xf32>
    %9 = arith.subf %1, %8 : vector<8x128xf32>
    %10 = arith.mulf %9, %9 : vector<8x128xf32>
    %cst_7 = arith.constant dense<0.000000e+00> : vector<8xf32>
    %11 = vector.multi_reduction <add>, %10, %cst_7 [1] : vector<8x128xf32> to vector<8xf32>
    %12 = vector.shape_cast %11 : vector<8xf32> to vector<8x1xf32>
    %cst_8 = arith.constant 0.00787401571 : f32
    %13 = vector.broadcast %cst_8 : f32 to vector<8x1xf32>
    %14 = arith.mulf %12, %13 : vector<8x1xf32>
    %15 = math.sqrt %14 : vector<8x1xf32>
    %cst_9 = arith.constant 9.99999997E-7 : f32
    %16 = vector.broadcast %cst_9 : f32 to vector<8x1xf32>
    %17 = arith.addf %15, %16 : vector<8x1xf32>
    %18 = tpu.reciprocal %17 {approx = true} : vector<8x1xf32> -> vector<8x1xf32>
    %19 = vector.broadcast %7 : vector<8x1xf32> to vector<8x128xf32>
    %20 = arith.subf %1, %19 : vector<8x128xf32>
    %21 = vector.broadcast %2 : vector<1x128xf32> to vector<8x128xf32>
    %22 = arith.mulf %21, %20 : vector<8x128xf32>
    %23 = vector.broadcast %18 : vector<8x1xf32> to vector<8x128xf32>
    %24 = arith.mulf %22, %23 : vector<8x128xf32>
    %25 = vector.broadcast %3 : vector<1x128xf32> to vector<8x128xf32>
    %26 = arith.addf %24, %25 : vector<8x128xf32>
    %c0_10 = arith.constant 0 : index
    %c0_11 = arith.constant 0 : index
    %27 = vector.load %arg4[%c0_10, %c0_11] : memref<128x512xbf16, #tpu.memory_space<vmem>>, vector<128x512xbf16>
    %28 = arith.truncf %26 : vector<8x128xf32> to vector<8x128xbf16>
    %cst_12 = arith.constant dense<0.000000e+00> : vector<8x512xf32>
    %29 = tpu.matmul %28, %27, %cst_12 {dimension_numbers = #tpu.dot_dimension_numbers<[1], [0], [0], [1], [0, 0, 1, 1], [], []>} : vector<8x128xbf16>, vector<128x512xbf16>, vector<8x512xf32> -> vector<8x512xf32>
    %c0_13 = arith.constant 0 : index
    %c0_14 = arith.constant 0 : index
    %30 = vector.load %arg5[%c0_13, %c0_14] : memref<1x512xf32, #tpu.memory_space<vmem>>, vector<1x512xf32>
    %31 = vector.broadcast %30 : vector<1x512xf32> to vector<8x512xf32>
    %32 = arith.addf %29, %31 : vector<8x512xf32>
    %cst_15 = arith.constant 0.000000e+00 : f32
    %33 = vector.broadcast %cst_15 : f32 to vector<8x512xf32>
    %34 = arith.maximumf %32, %33 : vector<8x512xf32>
    %c0_16 = arith.constant 0 : index
    %c0_17 = arith.constant 0 : index
    %35 = vector.load %arg6[%c0_16, %c0_17] : memref<512x128xbf16, #tpu.memory_space<vmem>>, vector<512x128xbf16>
    %36 = arith.truncf %34 : vector<8x512xf32> to vector<8x512xbf16>
    %cst_18 = arith.constant dense<0.000000e+00> : vector<8x128xf32>
    %37 = tpu.matmul %36, %35, %cst_18 {dimension_numbers = #tpu.dot_dimension_numbers<[1], [0], [0], [1], [0, 0, 1, 1], [], []>} : vector<8x512xbf16>, vector<512x128xbf16>, vector<8x128xf32> -> vector<8x128xf32>
    %38 = arith.addf %1, %37 : vector<8x128xf32>
    %c0_19 = arith.constant 0 : index
    %c0_20 = arith.constant 0 : index
    %39 = vector.load %arg7[%c0_19, %c0_20] : memref<1x128xf32, #tpu.memory_space<vmem>>, vector<1x128xf32>
    %40 = vector.broadcast %39 : vector<1x128xf32> to vector<8x128xf32>
    %41 = arith.addf %38, %40 : vector<8x128xf32>
    %c0_21 = arith.constant 0 : index
    %c0_22 = arith.constant 0 : index
    %c0_23 = arith.constant 0 : index
    %42 = vector.load %arg8[%c0_21, %c0_22, %c0_23] : memref<1x8x128xf32, #tpu.memory_space<vmem>>, vector<1x8x128xf32>
    %43 = vector.shape_cast %42 : vector<1x8x128xf32> to vector<8x128xf32>
    %44 = vector.shape_cast %41 : vector<8x128xf32> to vector<1x8x128xf32>
    tpu.vector_store %arg8[%c0_21, %c0_22, %c0_23], %44 {strides = array<i32>} : memref<1x8x128xf32, #tpu.memory_space<vmem>>, vector<1x8x128xf32>,
    return
  }
  func.func @transform_0(%arg0: i32) -> (i32, i32, i32) {
    %c0_i32 = arith.constant 0 : i32
    %c0_i32_0 = arith.constant 0 : i32
    %c0_i32_1 = arith.constant 0 : i32
    return %arg0, %c0_i32, %c0_i32_0 : i32, i32, i32
  }
  func.func @transform_1(%arg0: i32) -> (i32, i32) {
    %c0_i32 = arith.constant 0 : i32
    %c0_i32_0 = arith.constant 0 : i32
    %c0_i32_1 = arith.constant 0 : i32
    return %c0_i32, %c0_i32_0 : i32, i32
  }
  func.func @transform_2(%arg0: i32) -> (i32, i32) {
    %c0_i32 = arith.constant 0 : i32
    %c0_i32_0 = arith.constant 0 : i32
    %c0_i32_1 = arith.constant 0 : i32
    return %c0_i32, %c0_i32_0 : i32, i32
  }
  func.func @transform_3(%arg0: i32) -> (i32, i32) {
    %c0_i32 = arith.constant 0 : i32
    %c0_i32_0 = arith.constant 0 : i32
    %c0_i32_1 = arith.constant 0 : i32
    return %c0_i32, %c0_i32_0 : i32, i32
  }
  func.func @transform_4(%arg0: i32) -> (i32, i32) {
    %c0_i32 = arith.constant 0 : i32
    %c0_i32_0 = arith.constant 0 : i32
    %c0_i32_1 = arith.constant 0 : i32
    return %c0_i32, %c0_i32_0 : i32, i32
  }
  func.func @transform_5(%arg0: i32) -> (i32, i32) {
    %c0_i32 = arith.constant 0 : i32
    %c0_i32_0 = arith.constant 0 : i32
    %c0_i32_1 = arith.constant 0 : i32
    return %c0_i32, %c0_i32_0 : i32, i32
  }
  func.func @transform_6(%arg0: i32) -> (i32, i32) {
    %c0_i32 = arith.constant 0 : i32
    %c0_i32_0 = arith.constant 0 : i32
    %c0_i32_1 = arith.constant 0 : i32
    return %c0_i32, %c0_i32_0 : i32, i32
  }
  func.func @transform_7(%arg0: i32) -> (i32, i32, i32) {
    %c0_i32 = arith.constant 0 : i32
    %c0_i32_0 = arith.constant 0 : i32
    %c0_i32_1 = arith.constant 0 : i32
    return %arg0, %c0_i32, %c0_i32_0 : i32, i32, i32
  }
}

module attributes {stable_mosaic.version = 11 : i64} {
  func.func @_ln_kernel(%arg0: i32, %arg1: memref<1x8x128xf32, #tpu.memory_space<vmem>>, %arg2: memref<1x128xf32, #tpu.memory_space<vmem>>, %arg3: memref<1x128xf32, #tpu.memory_space<vmem>>, %arg4: memref<1x8x128xf32, #tpu.memory_space<vmem>>) attributes {dimension_semantics = [#tpu.dimension_semantics<parallel>], iteration_bounds = array<i64: 2>, scalar_prefetch = 0 : i64, scratch_operands = 0 : i64, tpu.core_type = #tpu.core_type<tc>, window_params = [{transform_indices = @transform_0, window_bounds = array<i64: 1, 8, 128>}, {pipeline_mode = #tpu.pipeline_mode<synchronous>, transform_indices = @transform_1, window_bounds = array<i64: 1, 128>}, {pipeline_mode = #tpu.pipeline_mode<synchronous>, transform_indices = @transform_2, window_bounds = array<i64: 1, 128>}, {transform_indices = @transform_3, window_bounds = array<i64: 1, 8, 128>}]} {
    %c0 = arith.constant 0 : index
    %c0_0 = arith.constant 0 : index
    %c0_1 = arith.constant 0 : index
    %0 = vector.load %arg1[%c0, %c0_0, %c0_1] : memref<1x8x128xf32, #tpu.memory_space<vmem>>, vector<1x8x128xf32>
    %1 = vector.shape_cast %0 : vector<1x8x128xf32> to vector<8x128xf32>
    %c0_2 = arith.constant 0 : index
    %c0_3 = arith.constant 0 : index
    %2 = vector.load %arg2[%c0_2, %c0_3] : memref<1x128xf32, #tpu.memory_space<vmem>>, vector<1x128xf32>
    %c0_4 = arith.constant 0 : index
    %c0_5 = arith.constant 0 : index
    %3 = vector.load %arg3[%c0_4, %c0_5] : memref<1x128xf32, #tpu.memory_space<vmem>>, vector<1x128xf32>
    %cst = arith.constant dense<0.000000e+00> : vector<8xf32>
    %4 = vector.multi_reduction <add>, %1, %cst [1] : vector<8x128xf32> to vector<8xf32>
    %5 = vector.shape_cast %4 : vector<8xf32> to vector<8x1xf32>
    %cst_6 = arith.constant 1.280000e+02 : f32
    %6 = vector.broadcast %cst_6 : f32 to vector<8x1xf32>
    %7 = arith.divf %5, %6 : vector<8x1xf32>
    %8 = vector.broadcast %7 : vector<8x1xf32> to vector<8x128xf32>
    %9 = arith.subf %1, %8 : vector<8x128xf32>
    %10 = arith.mulf %9, %9 : vector<8x128xf32>
    %cst_7 = arith.constant dense<0.000000e+00> : vector<8xf32>
    %11 = vector.multi_reduction <add>, %10, %cst_7 [1] : vector<8x128xf32> to vector<8xf32>
    %12 = vector.shape_cast %11 : vector<8xf32> to vector<8x1xf32>
    %cst_8 = arith.constant 0.00787401571 : f32
    %13 = vector.broadcast %cst_8 : f32 to vector<8x1xf32>
    %14 = arith.mulf %12, %13 : vector<8x1xf32>
    %15 = math.sqrt %14 : vector<8x1xf32>
    %cst_9 = arith.constant 9.99999997E-7 : f32
    %16 = vector.broadcast %cst_9 : f32 to vector<8x1xf32>
    %17 = arith.addf %15, %16 : vector<8x1xf32>
    %18 = tpu.reciprocal %17 {approx = true} : vector<8x1xf32> -> vector<8x1xf32>
    %19 = vector.broadcast %7 : vector<8x1xf32> to vector<8x128xf32>
    %20 = arith.subf %1, %19 : vector<8x128xf32>
    %21 = vector.broadcast %2 : vector<1x128xf32> to vector<8x128xf32>
    %22 = arith.mulf %21, %20 : vector<8x128xf32>
    %23 = vector.broadcast %18 : vector<8x1xf32> to vector<8x128xf32>
    %24 = arith.mulf %22, %23 : vector<8x128xf32>
    %25 = vector.broadcast %3 : vector<1x128xf32> to vector<8x128xf32>
    %26 = arith.addf %24, %25 : vector<8x128xf32>
    %c0_10 = arith.constant 0 : index
    %c0_11 = arith.constant 0 : index
    %c0_12 = arith.constant 0 : index
    %27 = vector.load %arg4[%c0_10, %c0_11, %c0_12] : memref<1x8x128xf32, #tpu.memory_space<vmem>>, vector<1x8x128xf32>
    %28 = vector.shape_cast %27 : vector<1x8x128xf32> to vector<8x128xf32>
    %29 = vector.shape_cast %26 : vector<8x128xf32> to vector<1x8x128xf32>
    tpu.vector_store %arg4[%c0_10, %c0_11, %c0_12], %29 {strides = array<i32>} : memref<1x8x128xf32, #tpu.memory_space<vmem>>, vector<1x8x128xf32>,
    return
  }
  func.func @transform_0(%arg0: i32) -> (i32, i32, i32) {
    %c0_i32 = arith.constant 0 : i32
    %c0_i32_0 = arith.constant 0 : i32
    %c0_i32_1 = arith.constant 0 : i32
    return %arg0, %c0_i32, %c0_i32_0 : i32, i32, i32
  }
  func.func @transform_1(%arg0: i32) -> (i32, i32) {
    %c0_i32 = arith.constant 0 : i32
    %c0_i32_0 = arith.constant 0 : i32
    %c0_i32_1 = arith.constant 0 : i32
    return %c0_i32, %c0_i32_0 : i32, i32
  }
  func.func @transform_2(%arg0: i32) -> (i32, i32) {
    %c0_i32 = arith.constant 0 : i32
    %c0_i32_0 = arith.constant 0 : i32
    %c0_i32_1 = arith.constant 0 : i32
    return %c0_i32, %c0_i32_0 : i32, i32
  }
  func.func @transform_3(%arg0: i32) -> (i32, i32, i32) {
    %c0_i32 = arith.constant 0 : i32
    %c0_i32_0 = arith.constant 0 : i32
    %c0_i32_1 = arith.constant 0 : i32
    return %arg0, %c0_i32, %c0_i32_0 : i32, i32, i32
  }
}

</mosaic_0001>

<llo_original>
// kernel: atnet_forward.9
$region0: #{atnet_forward.9}
  #allocation0 [shape = 'u32[]', space=smem, size = 0x4, offset = 0x4, fixed_abs, tag = 'smem constant byte address 0x4 - core index']
  #allocation1 [shape = 'u32[144,128]{1,0:T(1,128)}', space=vmem, size = 0x12000, scoped, tag = 'internal scratch']
  %s0 = inlined_call_operand.vmem [shape: f32[2,8,128], index: 0, kind: input, shape index: {}]
  %s1 = inlined_call_operand.vmem [shape: f32[1,128], index: 1, kind: input, shape index: {}]
  %s2 = inlined_call_operand.vmem [shape: f32[1,128], index: 2, kind: input, shape index: {}]
  %s3 = inlined_call_operand.vmem [shape: f32[2,8,128], index: 3, kind: output, shape index: {}]
  %s4 = sld [smem:[#allocation0]]
  $region45: #{atnet_forward.9} parent=0
    _
  %s6 = ssub.s32 1, %s4
  %s7 = scalar_select 0, %s6, %s4
  loop: start=0, step=1, limit=4
  $region2: #{atnet_forward.9} parent=0 // loop_pre_header
    _
  $region3: #{atnet_forward.9} parent=0 // loop_header
    %s9 = sphi 0, %s13
    %p10 = scmp.ge.s32.totalorder %s9, 4
    %s19 = sphi 0, %s21
    %s22 = sphi 0, %s19
    %s23 = sphi 0, %s22
    %s39 = sphi 0, %s23
    %s43 = sphi 0, %s43
    %s45 = sphi 0, %s43
    %s46 = sphi 0, %s45
    %s60 = sphi 0, %s46
    %s64 = sphi 0, %s64
    %s66 = sphi 0, %s64
    %s67 = sphi 0, %s66
    %s81 = sphi 0, %s67
    %s87 = sphi 0, %s89
    %s90 = sphi 0, %s87
    %s91 = sphi 0, %s90
    %s107 = sphi 0, %s91
  $region4: #{atnet_forward.9} parent=0 // loop_header_branch
    %12 = sbr.rel (%p10) target = $region8
  $region5: #{atnet_forward.9} parent=0 // loop_body
    %s14 = ssub.s32 %s9, 1
    %s15 = ssub.s32 %s9, 2
    %s16 = sadd.s32 %s9, 1
    %s17 = ssub.s32 %s9, %s16
    %p18 = scmp.eq.s32.totalorder %s17, 0
    %s20 = sadd.s32 %s19, 1
    %s21 = scalar_select %p18, %s19, %s20
    %p24 = pneg %p18
    %p25 = scmp.eq.s32.totalorder %s9, 1
    %p26 = por %p24, %p25
    %p27 = scmp.ne.s32.totalorder %s19, %s22
    %p28 = scmp.eq.s32.totalorder %s9, 0
    %p29 = por %p27, %p28
    %p30 = scmp.ne.s32.totalorder %s19, %s22
    %p31 = scmp.eq.s32.totalorder %s14, 1
    %p32 = por %p30, %p31
    %p33 = scmp.ne.s32.totalorder %s22, %s23
    %p34 = scmp.eq.s32.totalorder %s14, 0
    %p35 = por %p33, %p34
    %p36 = scmp.ne.s32.totalorder %s22, %s23
    %p37 = scmp.eq.s32.totalorder %s15, 1
    %p38 = por %p36, %p37
    %p40 = scmp.ne.s32.totalorder %s23, %s39
    %p41 = scmp.eq.s32.totalorder %s15, 0
    %p42 = por %p40, %p41
    %s44 = sadd.s32 %s43, 1
    %p47 = scmp.eq.s32.totalorder %s9, 1
    %p48 = scmp.ne.s32.totalorder %s43, %s45
    %p49 = scmp.eq.s32.totalorder %s9, 0
    %p50 = por %p48, %p49
    %p51 = scmp.ne.s32.totalorder %s43, %s45
    %p52 = scmp.eq.s32.totalorder %s14, 1
    %p53 = por %p51, %p52
    %p54 = scmp.ne.s32.totalorder %s45, %s46
    %p55 = scmp.eq.s32.totalorder %s14, 0
    %p56 = por %p54, %p55
    %p57 = scmp.ne.s32.totalorder %s45, %s46
    %p58 = scmp.eq.s32.totalorder %s15, 1
    %p59 = por %p57, %p58
    %p61 = scmp.ne.s32.totalorder %s46, %s60
    %p62 = scmp.eq.s32.totalorder %s15, 0
    %p63 = por %p61, %p62
    %s65 = sadd.s32 %s64, 1
    %p68 = scmp.eq.s32.totalorder %s9, 1
    %p69 = scmp.ne.s32.totalorder %s64, %s66
    %p70 = scmp.eq.s32.totalorder %s9, 0
    %p71 = por %p69, %p70
    %p72 = scmp.ne.s32.totalorder %s64, %s66
    %p73 = scmp.eq.s32.totalorder %s14, 1
    %p74 = por %p72, %p73
    %p75 = scmp.ne.s32.totalorder %s66, %s67
    %p76 = scmp.eq.s32.totalorder %s14, 0
    %p77 = por %p75, %p76
    %p78 = scmp.ne.s32.totalorder %s66, %s67
    %p79 = scmp.eq.s32.totalorder %s15, 1
    %p80 = por %p78, %p79
    %p82 = scmp.ne.s32.totalorder %s67, %s81
    %p83 = scmp.eq.s32.totalorder %s15, 0
    %p84 = por %p82, %p83
    %s85 = ssub.s32 %s9, %s16
    %p86 = scmp.eq.s32.totalorder %s85, 0
    %s88 = sadd.s32 %s87, 1
    %s89 = scalar_select %p86, %s87, %s88
    %p92 = pneg %p86
    %p93 = scmp.eq.s32.totalorder %s9, 1
    %p94 = por %p92, %p93
    %p95 = scmp.ne.s32.totalorder %s87, %s90
    %p96 = scmp.eq.s32.totalorder %s9, 0
    %p97 = por %p95, %p96
    %p98 = scmp.ne.s32.totalorder %s87, %s90
    %p99 = scmp.eq.s32.totalorder %s14, 1
    %p100 = por %p98, %p99
    %p101 = scmp.ne.s32.totalorder %s90, %s91
    %p102 = scmp.eq.s32.totalorder %s14, 0
    %p103 = por %p101, %p102
    %p104 = scmp.ne.s32.totalorder %s90, %s91
    %p105 = scmp.eq.s32.totalorder %s15, 1
    %p106 = por %p104, %p105
    %p108 = scmp.ne.s32.totalorder %s91, %s107
    %p109 = scmp.eq.s32.totalorder %s15, 0
    %p110 = por %p108, %p109
    %p111 = scmp.le.s32.totalorder 1, %s9
    %p112 = scmp.lt.s32.totalorder %s9, 3
    %p113 = pnand %p111, %p112
    %p114 = pneg %p113
    // Predicated region
    $region9: #{atnet_forward.9} parent=5 // pred_check
      _
    $region10: #{atnet_forward.9} parent=5 // pred_check_branch
      %116 = sbr.rel (%p113) target = $region12
    $region11: #{atnet_forward.9} parent=5 // pred_region
      %s117 = ssub.s32 %s9, 1
      // Predicated region
      $region13: #{atnet_forward.9} parent=11 // pred_check
        %p118 = pneg %p56
      $region14: #{atnet_forward.9} parent=11 // pred_check_branch
        %120 = sbr.rel (%p118) target = $region16
      $region15: #{atnet_forward.9} parent=11 // pred_region
        _
      $region16: #{atnet_forward.9} parent=11 // pred_fallthru
        _
      // Predicated region
      $region17: #{atnet_forward.9} parent=11 // pred_check
        %p121 = pneg %p77
      $region18: #{atnet_forward.9} parent=11 // pred_check_branch
        %123 = sbr.rel (%p121) target = $region20
      $region19: #{atnet_forward.9} parent=11 // pred_region
        _
      $region20: #{atnet_forward.9} parent=11 // pred_fallthru
        _
    $region12: #{atnet_forward.9} parent=5 // pred_fallthru
      _
    %p124 = scmp.lt.s32.totalorder %s9, 2
    // Predicated region
    $region21: #{atnet_forward.9} parent=5 // pred_check
      %p125 = pneg %p124
    $region22: #{atnet_forward.9} parent=5 // pred_check_branch
      %127 = sbr.rel (%p125) target = $region24
    $region23: #{atnet_forward.9} parent=5 // pred_region
      // Predicated region
      $region25: #{atnet_forward.9} parent=23 // pred_check
        %p128 = pneg %p29
      $region26: #{atnet_forward.9} parent=23 // pred_check_branch
        %130 = sbr.rel (%p128) target = $region28
      $region27: #{atnet_forward.9} parent=23 // pred_region
        %p131 = scmp.lt.s32.totalorder %s9, 1
        %s132 = scalar_select %p131, %s9, 1
        %s133 = smul.addr %s132, 8
        %s134 = scalar_lea.vmem %s0, %s133
      $region28: #{atnet_forward.9} parent=23 // pred_fallthru
        _
    $region24: #{atnet_forward.9} parent=5 // pred_fallthru
      _
    %p135 = scmp.le.s32.totalorder 1, %s9
    %p136 = scmp.lt.s32.totalorder %s9, 3
    %p137 = pnand %p135, %p136
    %p138 = pneg %p137
    // Predicated region
    $region29: #{atnet_forward.9} parent=5 // pred_check
      _
    $region30: #{atnet_forward.9} parent=5 // pred_check_branch
      %140 = sbr.rel (%p137) target = $region32
    $region31: #{atnet_forward.9} parent=5 // pred_region
      %s141 = ssub.s32 %s9, 1
      %p142 = scmp.lt.s32.totalorder %s14, 1
      %s143 = scalar_select %p142, %s14, 1
      %s144 = smul.addr %s143, 8
      %s145 = scalar_lea.vmem %s0, %s144
      %p146 = pneg %p35
      %p147 = pneg %p32
      %p148 = pneg %p56
      %p149 = pneg %p53
      %p150 = pneg %p77
      %p151 = pneg %p74
      %p152 = pneg %p103
      %p153 = pneg %p100
      %p154 = scmp.lt.s32.totalorder %s14, 1
      %s155 = scalar_select %p154, %s14, 1
      %s156 = smul.addr %s155, 8
      %s157 = scalar_lea.vmem %s3, %s156
      %p158 = scmp.lt.s32.totalorder %s14, 1
      %s159 = scalar_select %p158, %s14, 1
      %s160 = smul.addr %s159, 8
      %s161 = scalar_lea.vmem %s0, %s160
      %p162 = scmp.lt.s32.totalorder %s14, 1
      %s163 = scalar_select %p162, %s14, 1
      %s164 = smul.addr %s163, 8
      %s165 = scalar_lea.vmem %s3, %s164
      %v166 = vld [vmem:[%s161] sm:$0xff]
      %v167 = vld [vmem:[%s1] sm:$0x1]
      %v168 = vld [vmem:[%s2] sm:$0x1]
      %169 = vadd.xlane.f32.xlu0 %v166
      %v170 = vpop.xlane.xlu0 %169
      %v171 = vrcp.pop 128.0
      %v172 = vmul.f32 %v170, %v171
      %v173 = vsub.f32 %v166, %v172
      %v174 = vmul.f32 %v173, %v173
      %175 = vadd.xlane.f32.xlu0 %v174
      %v176 = vpop.xlane.xlu0 %175
      %v177 = vmul.f32 %v176, 0.007874016
      %v178 = vrsqrt.pop %v177
      %v179 = vmul.f32 %v177, %v178
      %vm180 = vcmp.eq.f32.partialorder %v177, inf
      %v181 = vsel %vm180, %v177, %v179
      %vm182 = vcmp.eq.f32.partialorder %v177, 0.0
      %v183 = vand.u32 %v177, 2147483648
      %v184 = vsel %vm182, %v183, %v181
      %v185 = vadd.f32 %v184, 1e-06
      %v186 = vrcp.pop %v185
      %v188 = vlaneseq
      %v189 = vshrl.u32 %v188, 7
      %v190 = vsub.s32 0, %v189
      %v191 = vrot.slane %v167, %v190
      %v193 = vmul.f32 %v191, %v173
      %v194 = vmul.f32 %v193, %v186
      %v196 = vlaneseq
      %v197 = vshrl.u32 %v196, 7
      %v198 = vsub.s32 0, %v197
      %v199 = vrot.slane %v168, %v198
      %v201 = vadd.f32 %v194, %v199
      %202 = vst [vmem:[%s165] sm:$0xff] %v201
      %p203 = scmp.lt.s32.totalorder %s14, 1
      %s204 = scalar_select %p203, %s14, 1
      %s205 = smul.addr %s204, 8
      %s206 = scalar_lea.vmem %s3, %s205
      // Predicated region
      $region33: #{atnet_forward.9} parent=31 // pred_check
        %p207 = pneg %p100
      $region34: #{atnet_forward.9} parent=31 // pred_check_branch
        %209 = sbr.rel (%p207) target = $region36
      $region35: #{atnet_forward.9} parent=31 // pred_region
        _
      $region36: #{atnet_forward.9} parent=31 // pred_fallthru
        _
    $region32: #{atnet_forward.9} parent=5 // pred_fallthru
      _
    %p210 = scmp.le.s32.totalorder 2, %s9
    // Predicated region
    $region37: #{atnet_forward.9} parent=5 // pred_check
      %p211 = pneg %p210
    $region38: #{atnet_forward.9} parent=5 // pred_check_branch
      %213 = sbr.rel (%p211) target = $region40
    $region39: #{atnet_forward.9} parent=5 // pred_region
      %s214 = ssub.s32 %s9, 2
      // Predicated region
      $region41: #{atnet_forward.9} parent=39 // pred_check
        %p215 = pneg %p106
      $region42: #{atnet_forward.9} parent=39 // pred_check_branch
        %217 = sbr.rel (%p215) target = $region44
      $region43: #{atnet_forward.9} parent=39 // pred_region
        %p218 = scmp.lt.s32.totalorder %s15, 1
        %s219 = scalar_select %p218, %s15, 1
        %s220 = smul.addr %s219, 8
        %s221 = scalar_lea.vmem %s3, %s220
      $region44: #{atnet_forward.9} parent=39 // pred_fallthru
        _
    $region40: #{atnet_forward.9} parent=5 // pred_fallthru
      _
  $region6: #{atnet_forward.9} parent=0 // loop_footer
    %s13 = sadd.s32 1, %s9
  $region7: #{atnet_forward.9} parent=0 // loop_footer_branch
    %8 = sbr.rel target = $region3
  $region8: #{atnet_forward.9} parent=0 // loop_exit
    _

// kernel: atnet_forward.8
$region0: #{atnet_forward.8}
  #allocation0 [shape = 'u32[]', space=smem, size = 0x4, offset = 0x4, fixed_abs, tag = 'smem constant byte address 0x4 - core index']
  #allocation1 [shape = 'u32[144,128]{1,0:T(1,128)}', space=vmem, size = 0x12000, scoped, tag = 'internal scratch']
  %s0 = inlined_call_operand.vmem [shape: f32[2,8,128], index: 0, kind: input, shape index: {}]
  %s1 = inlined_call_operand.vmem [shape: f32[1,128], index: 1, kind: input, shape index: {}]
  %s2 = inlined_call_operand.vmem [shape: f32[1,128], index: 2, kind: input, shape index: {}]
  %s3 = inlined_call_operand.vmem [shape: bf16[128,512], index: 3, kind: input, shape index: {}]
  %s4 = inlined_call_operand.vmem [shape: f32[1,512], index: 4, kind: input, shape index: {}]
  %s5 = inlined_call_operand.vmem [shape: bf16[512,128], index: 5, kind: input, shape index: {}]
  %s6 = inlined_call_operand.vmem [shape: f32[1,128], index: 6, kind: input, shape index: {}]
  %s7 = inlined_call_operand.vmem [shape: f32[2,8,128], index: 7, kind: output, shape index: {}]
  %s8 = sld [smem:[#allocation0]]
  $region61: #{atnet_forward.8} parent=0
    _
  %s10 = ssub.s32 1, %s8
  %s11 = scalar_select 0, %s10, %s8
  loop: start=0, step=1, limit=4
  $region2: #{atnet_forward.8} parent=0 // loop_pre_header
    _
  $region3: #{atnet_forward.8} parent=0 // loop_header
    %s13 = sphi 0, %s17
    %p14 = scmp.ge.s32.totalorder %s13, 4
    %s23 = sphi 0, %s25
    %s26 = sphi 0, %s23
    %s27 = sphi 0, %s26
    %s43 = sphi 0, %s27
    %s47 = sphi 0, %s47
    %s49 = sphi 0, %s47
    %s50 = sphi 0, %s49
    %s64 = sphi 0, %s50
    %s68 = sphi 0, %s68
    %s70 = sphi 0, %s68
    %s71 = sphi 0, %s70
    %s85 = sphi 0, %s71
    %s89 = sphi 0, %s89
    %s91 = sphi 0, %s89
    %s92 = sphi 0, %s91
    %s106 = sphi 0, %s92
    %s110 = sphi 0, %s110
    %s112 = sphi 0, %s110
    %s113 = sphi 0, %s112
    %s127 = sphi 0, %s113
    %s131 = sphi 0, %s131
    %s133 = sphi 0, %s131
    %s134 = sphi 0, %s133
    %s148 = sphi 0, %s134
    %s152 = sphi 0, %s152
    %s154 = sphi 0, %s152
    %s155 = sphi 0, %s154
    %s169 = sphi 0, %s155
    %s175 = sphi 0, %s177
    %s178 = sphi 0, %s175
    %s179 = sphi 0, %s178
    %s195 = sphi 0, %s179
  $region4: #{atnet_forward.8} parent=0 // loop_header_branch
    %16 = sbr.rel (%p14) target = $region8
  $region5: #{atnet_forward.8} parent=0 // loop_body
    %s18 = ssub.s32 %s13, 1
    %s19 = ssub.s32 %s13, 2
    %s20 = sadd.s32 %s13, 1
    %s21 = ssub.s32 %s13, %s20
    %p22 = scmp.eq.s32.totalorder %s21, 0
    %s24 = sadd.s32 %s23, 1
    %s25 = scalar_select %p22, %s23, %s24
    %p28 = pneg %p22
    %p29 = scmp.eq.s32.totalorder %s13, 1
    %p30 = por %p28, %p29
    %p31 = scmp.ne.s32.totalorder %s23, %s26
    %p32 = scmp.eq.s32.totalorder %s13, 0
    %p33 = por %p31, %p32
    %p34 = scmp.ne.s32.totalorder %s23, %s26
    %p35 = scmp.eq.s32.totalorder %s18, 1
    %p36 = por %p34, %p35
    %p37 = scmp.ne.s32.totalorder %s26, %s27
    %p38 = scmp.eq.s32.totalorder %s18, 0
    %p39 = por %p37, %p38
    %p40 = scmp.ne.s32.totalorder %s26, %s27
    %p41 = scmp.eq.s32.totalorder %s19, 1
    %p42 = por %p40, %p41
    %p44 = scmp.ne.s32.totalorder %s27, %s43
    %p45 = scmp.eq.s32.totalorder %s19, 0
    %p46 = por %p44, %p45
    %s48 = sadd.s32 %s47, 1
    %p51 = scmp.eq.s32.totalorder %s13, 1
    %p52 = scmp.ne.s32.totalorder %s47, %s49
    %p53 = scmp.eq.s32.totalorder %s13, 0
    %p54 = por %p52, %p53
    %p55 = scmp.ne.s32.totalorder %s47, %s49
    %p56 = scmp.eq.s32.totalorder %s18, 1
    %p57 = por %p55, %p56
    %p58 = scmp.ne.s32.totalorder %s49, %s50
    %p59 = scmp.eq.s32.totalorder %s18, 0
    %p60 = por %p58, %p59
    %p61 = scmp.ne.s32.totalorder %s49, %s50
    %p62 = scmp.eq.s32.totalorder %s19, 1
    %p63 = por %p61, %p62
    %p65 = scmp.ne.s32.totalorder %s50, %s64
    %p66 = scmp.eq.s32.totalorder %s19, 0
    %p67 = por %p65, %p66
    %s69 = sadd.s32 %s68, 1
    %p72 = scmp.eq.s32.totalorder %s13, 1
    %p73 = scmp.ne.s32.totalorder %s68, %s70
    %p74 = scmp.eq.s32.totalorder %s13, 0
    %p75 = por %p73, %p74
    %p76 = scmp.ne.s32.totalorder %s68, %s70
    %p77 = scmp.eq.s32.totalorder %s18, 1
    %p78 = por %p76, %p77
    %p79 = scmp.ne.s32.totalorder %s70, %s71
    %p80 = scmp.eq.s32.totalorder %s18, 0
    %p81 = por %p79, %p80
    %p82 = scmp.ne.s32.totalorder %s70, %s71
    %p83 = scmp.eq.s32.totalorder %s19, 1
    %p84 = por %p82, %p83
    %p86 = scmp.ne.s32.totalorder %s71, %s85
    %p87 = scmp.eq.s32.totalorder %s19, 0
    %p88 = por %p86, %p87
    %s90 = sadd.s32 %s89, 1
    %p93 = scmp.eq.s32.totalorder %s13, 1
    %p94 = scmp.ne.s32.totalorder %s89, %s91
    %p95 = scmp.eq.s32.totalorder %s13, 0
    %p96 = por %p94, %p95
    %p97 = scmp.ne.s32.totalorder %s89, %s91
    %p98 = scmp.eq.s32.totalorder %s18, 1
    %p99 = por %p97, %p98
    %p100 = scmp.ne.s32.totalorder %s91, %s92
    %p101 = scmp.eq.s32.totalorder %s18, 0
    %p102 = por %p100, %p101
    %p103 = scmp.ne.s32.totalorder %s91, %s92
    %p104 = scmp.eq.s32.totalorder %s19, 1
    %p105 = por %p103, %p104
    %p107 = scmp.ne.s32.totalorder %s92, %s106
    %p108 = scmp.eq.s32.totalorder %s19, 0
    %p109 = por %p107, %p108
    %s111 = sadd.s32 %s110, 1
    %p114 = scmp.eq.s32.totalorder %s13, 1
    %p115 = scmp.ne.s32.totalorder %s110, %s112
    %p116 = scmp.eq.s32.totalorder %s13, 0
    %p117 = por %p115, %p116
    %p118 = scmp.ne.s32.totalorder %s110, %s112
    %p119 = scmp.eq.s32.totalorder %s18, 1
    %p120 = por %p118, %p119
    %p121 = scmp.ne.s32.totalorder %s112, %s113
    %p122 = scmp.eq.s32.totalorder %s18, 0
    %p123 = por %p121, %p122
    %p124 = scmp.ne.s32.totalorder %s112, %s113
    %p125 = scmp.eq.s32.totalorder %s19, 1
    %p126 = por %p124, %p125
    %p128 = scmp.ne.s32.totalorder %s113, %s127
    %p129 = scmp.eq.s32.totalorder %s19, 0
    %p130 = por %p128, %p129
    %s132 = sadd.s32 %s131, 1
    %p135 = scmp.eq.s32.totalorder %s13, 1
    %p136 = scmp.ne.s32.totalorder %s131, %s133
    %p137 = scmp.eq.s32.totalorder %s13, 0
    %p138 = por %p136, %p137
    %p139 = scmp.ne.s32.totalorder %s131, %s133
    %p140 = scmp.eq.s32.totalorder %s18, 1
    %p141 = por %p139, %p140
    %p142 = scmp.ne.s32.totalorder %s133, %s134
    %p143 = scmp.eq.s32.totalorder %s18, 0
    %p144 = por %p142, %p143
    %p145 = scmp.ne.s32.totalorder %s133, %s134
    %p146 = scmp.eq.s32.totalorder %s19, 1
    %p147 = por %p145, %p146
    %p149 = scmp.ne.s32.totalorder %s134, %s148
    %p150 = scmp.eq.s32.totalorder %s19, 0
    %p151 = por %p149, %p150
    %s153 = sadd.s32 %s152, 1
    %p156 = scmp.eq.s32.totalorder %s13, 1
    %p157 = scmp.ne.s32.totalorder %s152, %s154
    %p158 = scmp.eq.s32.totalorder %s13, 0
    %p159 = por %p157, %p158
    %p160 = scmp.ne.s32.totalorder %s152, %s154
    %p161 = scmp.eq.s32.totalorder %s18, 1
    %p162 = por %p160, %p161
    %p163 = scmp.ne.s32.totalorder %s154, %s155
    %p164 = scmp.eq.s32.totalorder %s18, 0
    %p165 = por %p163, %p164
    %p166 = scmp.ne.s32.totalorder %s154, %s155
    %p167 = scmp.eq.s32.totalorder %s19, 1
    %p168 = por %p166, %p167
    %p170 = scmp.ne.s32.totalorder %s155, %s169
    %p171 = scmp.eq.s32.totalorder %s19, 0
    %p172 = por %p170, %p171
    %s173 = ssub.s32 %s13, %s20
    %p174 = scmp.eq.s32.totalorder %s173, 0
    %s176 = sadd.s32 %s175, 1
    %s177 = scalar_select %p174, %s175, %s176
    %p180 = pneg %p174
    %p181 = scmp.eq.s32.totalorder %s13, 1
    %p182 = por %p180, %p181
    %p183 = scmp.ne.s32.totalorder %s175, %s178
    %p184 = scmp.eq.s32.totalorder %s13, 0
    %p185 = por %p183, %p184
    %p186 = scmp.ne.s32.totalorder %s175, %s178
    %p187 = scmp.eq.s32.totalorder %s18, 1
    %p188 = por %p186, %p187
    %p189 = scmp.ne.s32.totalorder %s178, %s179
    %p190 = scmp.eq.s32.totalorder %s18, 0
    %p191 = por %p189, %p190
    %p192 = scmp.ne.s32.totalorder %s178, %s179
    %p193 = scmp.eq.s32.totalorder %s19, 1
    %p194 = por %p192, %p193
    %p196 = scmp.ne.s32.totalorder %s179, %s195
    %p197 = scmp.eq.s32.totalorder %s19, 0
    %p198 = por %p196, %p197
    %p199 = scmp.le.s32.totalorder 1, %s13
    %p200 = scmp.lt.s32.totalorder %s13, 3
    %p201 = pnand %p199, %p200
    %p202 = pneg %p201
    // Predicated region
    $region9: #{atnet_forward.8} parent=5 // pred_check
      _
    $region10: #{atnet_forward.8} parent=5 // pred_check_branch
      %204 = sbr.rel (%p201) target = $region12
    $region11: #{atnet_forward.8} parent=5 // pred_region
      %s205 = ssub.s32 %s13, 1
      // Predicated region
      $region13: #{atnet_forward.8} parent=11 // pred_check
        %p206 = pneg %p60
      $region14: #{atnet_forward.8} parent=11 // pred_check_branch
        %208 = sbr.rel (%p206) target = $region16
      $region15: #{atnet_forward.8} parent=11 // pred_region
        _
      $region16: #{atnet_forward.8} parent=11 // pred_fallthru
        _
      // Predicated region
      $region17: #{atnet_forward.8} parent=11 // pred_check
        %p209 = pneg %p81
      $region18: #{atnet_forward.8} parent=11 // pred_check_branch
        %211 = sbr.rel (%p209) target = $region20
      $region19: #{atnet_forward.8} parent=11 // pred_region
        _
      $region20: #{atnet_forward.8} parent=11 // pred_fallthru
        _
      // Predicated region
      $region21: #{atnet_forward.8} parent=11 // pred_check
        %p212 = pneg %p102
      $region22: #{atnet_forward.8} parent=11 // pred_check_branch
        %214 = sbr.rel (%p212) target = $region24
      $region23: #{atnet_forward.8} parent=11 // pred_region
        _
      $region24: #{atnet_forward.8} parent=11 // pred_fallthru
        _
      // Predicated region
      $region25: #{atnet_forward.8} parent=11 // pred_check
        %p215 = pneg %p123
      $region26: #{atnet_forward.8} parent=11 // pred_check_branch
        %217 = sbr.rel (%p215) target = $region28
      $region27: #{atnet_forward.8} parent=11 // pred_region
        _
      $region28: #{atnet_forward.8} parent=11 // pred_fallthru
        _
      // Predicated region
      $region29: #{atnet_forward.8} parent=11 // pred_check
        %p218 = pneg %p144
      $region30: #{atnet_forward.8} parent=11 // pred_check_branch
        %220 = sbr.rel (%p218) target = $region32
      $region31: #{atnet_forward.8} parent=11 // pred_region
        _
      $region32: #{atnet_forward.8} parent=11 // pred_fallthru
        _
      // Predicated region
      $region33: #{atnet_forward.8} parent=11 // pred_check
        %p221 = pneg %p165
      $region34: #{atnet_forward.8} parent=11 // pred_check_branch
        %223 = sbr.rel (%p221) target = $region36
      $region35: #{atnet_forward.8} parent=11 // pred_region
        _
      $region36: #{atnet_forward.8} parent=11 // pred_fallthru
        _
    $region12: #{atnet_forward.8} parent=5 // pred_fallthru
      _
    %p224 = scmp.lt.s32.totalorder %s13, 2
    // Predicated region
    $region37: #{atnet_forward.8} parent=5 // pred_check
      %p225 = pneg %p224
    $region38: #{atnet_forward.8} parent=5 // pred_check_branch
      %227 = sbr.rel (%p225) target = $region40
    $region39: #{atnet_forward.8} parent=5 // pred_region
      // Predicated region
      $region41: #{atnet_forward.8} parent=39 // pred_check
        %p228 = pneg %p33
      $region42: #{atnet_forward.8} parent=39 // pred_check_branch
        %230 = sbr.rel (%p228) target = $region44
      $region43: #{atnet_forward.8} parent=39 // pred_region
        %p231 = scmp.lt.s32.totalorder %s13, 1
        %s232 = scalar_select %p231, %s13, 1
        %s233 = smul.addr %s232, 8
        %s234 = scalar_lea.vmem %s0, %s233
      $region44: #{atnet_forward.8} parent=39 // pred_fallthru
        _
    $region40: #{atnet_forward.8} parent=5 // pred_fallthru
      _
    %p235 = scmp.le.s32.totalorder 1, %s13
    %p236 = scmp.lt.s32.totalorder %s13, 3
    %p237 = pnand %p235, %p236
    %p238 = pneg %p237
    // Predicated region
    $region45: #{atnet_forward.8} parent=5 // pred_check
      _
    $region46: #{atnet_forward.8} parent=5 // pred_check_branch
      %240 = sbr.rel (%p237) target = $region48
    $region47: #{atnet_forward.8} parent=5 // pred_region
      %s241 = ssub.s32 %s13, 1
      %p242 = scmp.lt.s32.totalorder %s18, 1
      %s243 = scalar_select %p242, %s18, 1
      %s244 = smul.addr %s243, 8
      %s245 = scalar_lea.vmem %s0, %s244
      %p246 = pneg %p39
      %p247 = pneg %p36
      %p248 = pneg %p60
      %p249 = pneg %p57
      %p250 = pneg %p81
      %p251 = pneg %p78
      %p252 = pneg %p102
      %p253 = pneg %p99
      %p254 = pneg %p123
      %p255 = pneg %p120
      %p256 = pneg %p144
      %p257 = pneg %p141
      %p258 = pneg %p165
      %p259 = pneg %p162
      %p260 = pneg %p191
      %p261 = pneg %p188
      %p262 = scmp.lt.s32.totalorder %s18, 1
      %s263 = scalar_select %p262, %s18, 1
      %s264 = smul.addr %s263, 8
      %s265 = scalar_lea.vmem %s7, %s264
      %p266 = scmp.lt.s32.totalorder %s18, 1
      %s267 = scalar_select %p266, %s18, 1
      %s268 = smul.addr %s267, 8
      %s269 = scalar_lea.vmem %s0, %s268
      %p270 = scmp.lt.s32.totalorder %s18, 1
      %s271 = scalar_select %p270, %s18, 1
      %s272 = smul.addr %s271, 8
      %s273 = scalar_lea.vmem %s7, %s272
      %v275 = vld [vmem:[%s269] sm:$0xff]
      %v276 = vld [vmem:[%s1] sm:$0x1]
      %v277 = vld [vmem:[%s2] sm:$0x1]
      %278 = vadd.xlane.f32.xlu0 %v275
      %v279 = vpop.xlane.xlu0 %278
      %v280 = vrcp.pop 128.0
      %v281 = vmul.f32 %v279, %v280
      %v282 = vsub.f32 %v275, %v281
      %v283 = vmul.f32 %v282, %v282
      %284 = vadd.xlane.f32.xlu0 %v283
      %v285 = vpop.xlane.xlu0 %284
      %v286 = vmul.f32 %v285, 0.007874016
      %v287 = vrsqrt.pop %v286
      %v288 = vmul.f32 %v286, %v287
      %vm289 = vcmp.eq.f32.partialorder %v286, inf
      %v290 = vsel %vm289, %v286, %v288
      %vm291 = vcmp.eq.f32.partialorder %v286, 0.0
      %v292 = vand.u32 %v286, 2147483648
      %v293 = vsel %vm291, %v292, %v290
      %v294 = vadd.f32 %v293, 1e-06
      %v295 = vrcp.pop %v294
      %v297 = vlaneseq
      %v298 = vshrl.u32 %v297, 7
      %v299 = vsub.s32 0, %v298
      %v300 = vrot.slane %v276, %v299
      %v302 = vmul.f32 %v300, %v282
      %v303 = vmul.f32 %v302, %v295
      %v305 = vlaneseq
      %v306 = vshrl.u32 %v305, 7
      %v307 = vsub.s32 0, %v306
      %v308 = vrot.slane %v277, %v307
      %v310 = vadd.f32 %v303, %v308
      %v311 = vld [vmem:[%s3] sm:$0xff]
      %v312 = vld [vmem:[%s3 + $0x8] sm:$0xff]
      %v313 = vld [vmem:[%s3 + $0x10] sm:$0xff]
      %v314 = vld [vmem:[%s3 + $0x18] sm:$0xff]
      %v315 = vld [vmem:[%s3 + $0x20] sm:$0xff]
      %v316 = vld [vmem:[%s3 + $0x28] sm:$0xff]
      %v317 = vld [vmem:[%s3 + $0x30] sm:$0xff]
      %v318 = vld [vmem:[%s3 + $0x38] sm:$0xff]
      %v319 = vld [vmem:[%s3 + $0x40] sm:$0xff]
      %v320 = vld [vmem:[%s3 + $0x48] sm:$0xff]
      %v321 = vld [vmem:[%s3 + $0x50] sm:$0xff]
      %v322 = vld [vmem:[%s3 + $0x58] sm:$0xff]
      %v323 = vld [vmem:[%s3 + $0x60] sm:$0xff]
      %v324 = vld [vmem:[%s3 + $0x68] sm:$0xff]
      %v325 = vld [vmem:[%s3 + $0x70] sm:$0xff]
      %v326 = vld [vmem:[%s3 + $0x78] sm:$0xff]
      %v327 = vld [vmem:[%s3 + $0x80] sm:$0xff]
      %v328 = vld [vmem:[%s3 + $0x88] sm:$0xff]
      %v329 = vld [vmem:[%s3 + $0x90] sm:$0xff]
      %v330 = vld [vmem:[%s3 + $0x98] sm:$0xff]
      %v331 = vld [vmem:[%s3 + $0xa0] sm:$0xff]
      %v332 = vld [vmem:[%s3 + $0xa8] sm:$0xff]
      %v333 = vld [vmem:[%s3 + $0xb0] sm:$0xff]
      %v334 = vld [vmem:[%s3 + $0xb8] sm:$0xff]
      %v335 = vld [vmem:[%s3 + $0xc0] sm:$0xff]
      %v336 = vld [vmem:[%s3 + $0xc8] sm:$0xff]
      %v337 = vld [vmem:[%s3 + $0xd0] sm:$0xff]
      %v338 = vld [vmem:[%s3 + $0xd8] sm:$0xff]
      %v339 = vld [vmem:[%s3 + $0xe0] sm:$0xff]
      %v340 = vld [vmem:[%s3 + $0xe8] sm:$0xff]
      %v341 = vld [vmem:[%s3 + $0xf0] sm:$0xff]
      %v342 = vld [vmem:[%s3 + $0xf8] sm:$0xff]
      %v343 = vpack.c.bf16 %v310, %v310
      %v344 = vld [vmem:[%s4] sm:$0xf]
      %v346 = vlaneseq
      %v347 = vshrl.u32 %v346, 7
      %v348 = vsub.s32 0, %v347
      %v349 = vrot.slane %v344, %v348
      %v350 = vlaneseq
      %v351 = vshrl.u32 %v350, 7
      %v352 = vsub.s32 1, %v351
      %v353 = vrot.slane %v344, %v352
      %v354 = vlaneseq
      %v355 = vshrl.u32 %v354, 7
      %v356 = vsub.s32 2, %v355
      %v357 = vrot.slane %v344, %v356
      %v358 = vlaneseq
      %v359 = vshrl.u32 %v358, 7
      %v360 = vsub.s32 3, %v359
      %v361 = vrot.slane %v344, %v360
      %v398 = vunpack.c.l.b16 %v311
      %v399 = vunpack.c.h.b16 %v311
      %v400 = vunpack.c.l.b16 %v312
      %v401 = vunpack.c.h.b16 %v312
      %v402 = vunpack.c.l.b16 %v313
      %v403 = vunpack.c.h.b16 %v313
      %v404 = vunpack.c.l.b16 %v314
      %v405 = vunpack.c.h.b16 %v314
      %v406 = vunpack.c.l.b16 %v315
      %v407 = vunpack.c.h.b16 %v315
      %v408 = vunpack.c.l.b16 %v316
      %v409 = vunpack.c.h.b16 %v316
      %v410 = vunpack.c.l.b16 %v317
      %v411 = vunpack.c.h.b16 %v317
      %v412 = vunpack.c.l.b16 %v318
      %v413 = vunpack.c.h.b16 %v318
      %v414 = vunpack.c.l.b16 %v319
      %v415 = vunpack.c.h.b16 %v319
      %v416 = vunpack.c.l.b16 %v320
      %v417 = vunpack.c.h.b16 %v320
      %v418 = vunpack.c.l.b16 %v321
      %v419 = vunpack.c.h.b16 %v321
      %v420 = vunpack.c.l.b16 %v322
      %v421 = vunpack.c.h.b16 %v322
      %v422 = vunpack.c.l.b16 %v323
      %v423 = vunpack.c.h.b16 %v323
      %v424 = vunpack.c.l.b16 %v324
      %v425 = vunpack.c.h.b16 %v324
      %v426 = vunpack.c.l.b16 %v325
      %v427 = vunpack.c.h.b16 %v325
      %v428 = vunpack.c.l.b16 %v326
      %v429 = vunpack.c.h.b16 %v326
      %v430 = vunpack.c.l.b16 %v327
      %v431 = vunpack.c.h.b16 %v327
      %v432 = vunpack.c.l.b16 %v328
      %v433 = vunpack.c.h.b16 %v328
      %v434 = vunpack.c.l.b16 %v329
      %v435 = vunpack.c.h.b16 %v329
      %v436 = vunpack.c.l.b16 %v330
      %v437 = vunpack.c.h.b16 %v330
      %v438 = vunpack.c.l.b16 %v331
      %v439 = vunpack.c.h.b16 %v331
      %v440 = vunpack.c.l.b16 %v332
      %v441 = vunpack.c.h.b16 %v332
      %v442 = vunpack.c.l.b16 %v333
      %v443 = vunpack.c.h.b16 %v333
      %v444 = vunpack.c.l.b16 %v334
      %v445 = vunpack.c.h.b16 %v334
      %v446 = vunpack.c.l.b16 %v335
      %v447 = vunpack.c.h.b16 %v335
      %v448 = vunpack.c.l.b16 %v336
      %v449 = vunpack.c.h.b16 %v336
      %v450 = vunpack.c.l.b16 %v337
      %v451 = vunpack.c.h.b16 %v337
      %v452 = vunpack.c.l.b16 %v338
      %v453 = vunpack.c.h.b16 %v338
      %v454 = vunpack.c.l.b16 %v339
      %v455 = vunpack.c.h.b16 %v339
      %v456 = vunpack.c.l.b16 %v340
      %v457 = vunpack.c.h.b16 %v340
      %v458 = vunpack.c.l.b16 %v341
      %v459 = vunpack.c.h.b16 %v341
      %v460 = vunpack.c.l.b16 %v342
      %v461 = vunpack.c.h.b16 %v342
      %v462 = vpack.c.b16 %v402, %v398
      %v463 = vpack.c.b16 %v403, %v399
      %v464 = vpack.c.b16 %v404, %v400
      %v465 = vpack.c.b16 %v405, %v401
      %v466 = vpack.c.b16 %v410, %v406
      %v467 = vpack.c.b16 %v411, %v407
      %v468 = vpack.c.b16 %v412, %v408
      %v469 = vpack.c.b16 %v413, %v409
      %v470 = vpack.c.b16 %v418, %v414
      %v471 = vpack.c.b16 %v419, %v415
      %v472 = vpack.c.b16 %v420, %v416
      %v473 = vpack.c.b16 %v421, %v417
      %v474 = vpack.c.b16 %v426, %v422
      %v475 = vpack.c.b16 %v427, %v423
      %v476 = vpack.c.b16 %v428, %v424
      %v477 = vpack.c.b16 %v429, %v425
      %v478 = vpack.c.b16 %v434, %v430
      %v479 = vpack.c.b16 %v435, %v431
      %v480 = vpack.c.b16 %v436, %v432
      %v481 = vpack.c.b16 %v437, %v433
      %v482 = vpack.c.b16 %v442, %v438
      %v483 = vpack.c.b16 %v443, %v439
      %v484 = vpack.c.b16 %v444, %v440
      %v485 = vpack.c.b16 %v445, %v441
      %v486 = vpack.c.b16 %v450, %v446
      %v487 = vpack.c.b16 %v451, %v447
      %v488 = vpack.c.b16 %v452, %v448
      %v489 = vpack.c.b16 %v453, %v449
      %v490 = vpack.c.b16 %v458, %v454
      %v491 = vpack.c.b16 %v459, %v455
      %v492 = vpack.c.b16 %v460, %v456
      %v493 = vpack.c.b16 %v461, %v457
      %526 = vmatprep.subr.bf16.mxu0 %v463
      %527 = vmatpush1.bf16.msra.mxu0 %v462
      %528 = vmatprep.subr.bf16.mxu0 %v467
      %529 = vmatpush1.bf16.msra.mxu0 %v466
      %530 = vmatprep.subr.bf16.mxu0 %v471
      %531 = vmatpush1.bf16.msra.mxu0 %v470
      %532 = vmatprep.subr.bf16.mxu0 %v475
      %533 = vmatpush1.bf16.msra.mxu0 %v474
      %534 = vmatprep.subr.bf16.mxu0 %v479
      %535 = vmatpush1.bf16.msra.mxu0 %v478
      %536 = vmatprep.subr.bf16.mxu0 %v483
      %537 = vmatpush1.bf16.msra.mxu0 %v482
      %538 = vmatprep.subr.bf16.mxu0 %v487
      %539 = vmatpush1.bf16.msra.mxu0 %v486
      %540 = vmatprep.subr.bf16.mxu0 %v491
      %541 = vmatpush1.bf16.msra.mxu0 %v490
      %542 = vmatprep.subr.bf16.mxu0 0
      %543 = vmatpush1.bf16.msra.mxu0 0
      %544 = vmatprep.subr.bf16.mxu0 0
      %545 = vmatpush1.bf16.msra.mxu0 0
      %546 = vmatprep.subr.bf16.mxu0 0
      %547 = vmatpush1.bf16.msra.mxu0 0
      %548 = vmatprep.subr.bf16.mxu0 0
      %549 = vmatpush1.bf16.msra.mxu0 0
      %550 = vmatprep.subr.bf16.mxu0 0
      %551 = vmatpush1.bf16.msra.mxu0 0
      %552 = vmatprep.subr.bf16.mxu0 0
      %553 = vmatpush1.bf16.msra.mxu0 0
      %554 = vmatprep.subr.bf16.mxu0 0
      %555 = vmatpush1.bf16.msra.mxu0 0
      %556 = vmatprep.subr.bf16.mxu0 0
      %557 = vmatpush1.bf16.msra.mxu0 0
      %558 = vmatprep.mubr.bf16.mxu0 0
      %559 = vmatmul.mubr.bf16.gmra.mrb[0].mxu0 %v343
      %v560 = vpop.f32.mrb[0].mxu0
      %v561 = vadd.f32 %v349, %v560
      %v562 = vpop.f32.mrb[0].mxu0
      %v563 = vadd.f32 %v353, %v562
      %v564 = vpop.f32.mrb[0].mxu0
      %v565 = vpop.f32.mrb[0].mxu0
      %566 = vdwg.mxu0
      %567 = vmatprep.subr.bf16.mxu0 %v465
      %568 = vmatpush1.bf16.msra.mxu0 %v464
      %569 = vmatprep.subr.bf16.mxu0 %v469
      %570 = vmatpush1.bf16.msra.mxu0 %v468
      %571 = vmatprep.subr.bf16.mxu0 %v473
      %572 = vmatpush1.bf16.msra.mxu0 %v472
      %573 = vmatprep.subr.bf16.mxu0 %v477
      %574 = vmatpush1.bf16.msra.mxu0 %v476
      %575 = vmatprep.subr.bf16.mxu0 %v481
      %576 = vmatpush1.bf16.msra.mxu0 %v480
      %577 = vmatprep.subr.bf16.mxu0 %v485
      %578 = vmatpush1.bf16.msra.mxu0 %v484
      %579 = vmatprep.subr.bf16.mxu0 %v489
      %580 = vmatpush1.bf16.msra.mxu0 %v488
      %581 = vmatprep.subr.bf16.mxu0 %v493
      %582 = vmatpush1.bf16.msra.mxu0 %v492
      %583 = vmatprep.subr.bf16.mxu0 0
      %584 = vmatpush1.bf16.msra.mxu0 0
      %585 = vmatprep.subr.bf16.mxu0 0
      %586 = vmatpush1.bf16.msra.mxu0 0
      %587 = vmatprep.subr.bf16.mxu0 0
      %588 = vmatpush1.bf16.msra.mxu0 0
      %589 = vmatprep.subr.bf16.mxu0 0
      %590 = vmatpush1.bf16.msra.mxu0 0
      %591 = vmatprep.subr.bf16.mxu0 0
      %592 = vmatpush1.bf16.msra.mxu0 0
      %593 = vmatprep.subr.bf16.mxu0 0
      %594 = vmatpush1.bf16.msra.mxu0 0
      %595 = vmatprep.subr.bf16.mxu0 0
      %596 = vmatpush1.bf16.msra.mxu0 0
      %597 = vmatprep.subr.bf16.mxu0 0
      %598 = vmatpush1.bf16.msra.mxu0 0
      %599 = vmatprep.mubr.bf16.mxu0 0
      %600 = vmatmul.mubr.bf16.gmra.mrb[0].mxu0 %v343
      %v601 = vpop.f32.mrb[0].mxu0
      %v602 = vadd.f32 %v357, %v601
      %v603 = vpop.f32.mrb[0].mxu0
      %v604 = vadd.f32 %v361, %v603
      %v605 = vpop.f32.mrb[0].mxu0
      %v606 = vpop.f32.mrb[0].mxu0
      %607 = vdwg.mxu0
      %v608 = vmax.f32 %v561, 0.0
      %v609 = vmax.f32 %v563, 0.0
      %v610 = vmax.f32 %v602, 0.0
      %v611 = vmax.f32 %v604, 0.0
      %v612 = vld [vmem:[%s5] sm:$0xf]
      %v613 = vld [vmem:[%s5 + $0x4] sm:$0xf]
      %v614 = vld [vmem:[%s5 + $0x8] sm:$0xf]
      %v615 = vld [vmem:[%s5 + $0xc] sm:$0xf]
      %v616 = vld [vmem:[%s5 + $0x10] sm:$0xf]
      %v617 = vld [vmem:[%s5 + $0x14] sm:$0xf]
      %v618 = vld [vmem:[%s5 + $0x18] sm:$0xf]
      %v619 = vld [vmem:[%s5 + $0x1c] sm:$0xf]
      %v620 = vld [vmem:[%s5 + $0x20] sm:$0xf]
      %v621 = vld [vmem:[%s5 + $0x24] sm:$0xf]
      %v622 = vld [vmem:[%s5 + $0x28] sm:$0xf]
      %v623 = vld [vmem:[%s5 + $0x2c] sm:$0xf]
      %v624 = vld [vmem:[%s5 + $0x30] sm:$0xf]
      %v625 = vld [vmem:[%s5 + $0x34] sm:$0xf]
      %v626 = vld [vmem:[%s5 + $0x38] sm:$0xf]
      %v627 = vld [vmem:[%s5 + $0x3c] sm:$0xf]
      %v628 = vld [vmem:[%s5 + $0x40] sm:$0xf]
      %v629 = vld [vmem:[%s5 + $0x44] sm:$0xf]
      %v630 = vld [vmem:[%s5 + $0x48] sm:$0xf]
      %v631 = vld [vmem:[%s5 + $0x4c] sm:$0xf]
      %v632 = vld [vmem:[%s5 + $0x50] sm:$0xf]
      %v633 = vld [vmem:[%s5 + $0x54] sm:$0xf]
      %v634 = vld [vmem:[%s5 + $0x58] sm:$0xf]
      %v635 = vld [vmem:[%s5 + $0x5c] sm:$0xf]
      %v636 = vld [vmem:[%s5 + $0x60] sm:$0xf]
      %v637 = vld [vmem:[%s5 + $0x64] sm:$0xf]
      %v638 = vld [vmem:[%s5 + $0x68] sm:$0xf]
      %v639 = vld [vmem:[%s5 + $0x6c] sm:$0xf]
      %v640 = vld [vmem:[%s5 + $0x70] sm:$0xf]
      %v641 = vld [vmem:[%s5 + $0x74] sm:$0xf]
      %v642 = vld [vmem:[%s5 + $0x78] sm:$0xf]
      %v643 = vld [vmem:[%s5 + $0x7c] sm:$0xf]
      %v644 = vld [vmem:[%s5 + $0x80] sm:$0xf]
      %v645 = vld [vmem:[%s5 + $0x84] sm:$0xf]
      %v646 = vld [vmem:[%s5 + $0x88] sm:$0xf]
      %v647 = vld [vmem:[%s5 + $0x8c] sm:$0xf]
      %v648 = vld [vmem:[%s5 + $0x90] sm:$0xf]
      %v649 = vld [vmem:[%s5 + $0x94] sm:$0xf]
      %v650 = vld [vmem:[%s5 + $0x98] sm:$0xf]
      %v651 = vld [vmem:[%s5 + $0x9c] sm:$0xf]
      %v652 = vld [vmem:[%s5 + $0xa0] sm:$0xf]
      %v653 = vld [vmem:[%s5 + $0xa4] sm:$0xf]
      %v654 = vld [vmem:[%s5 + $0xa8] sm:$0xf]
      %v655 = vld [vmem:[%s5 + $0xac] sm:$0xf]
      %v656 = vld [vmem:[%s5 + $0xb0] sm:$0xf]
      %v657 = vld [vmem:[%s5 + $0xb4] sm:$0xf]
      %v658 = vld [vmem:[%s5 + $0xb8] sm:$0xf]
      %v659 = vld [vmem:[%s5 + $0xbc] sm:$0xf]
      %v660 = vld [vmem:[%s5 + $0xc0] sm:$0xf]
      %v661 = vld [vmem:[%s5 + $0xc4] sm:$0xf]
      %v662 = vld [vmem:[%s5 + $0xc8] sm:$0xf]
      %v663 = vld [vmem:[%s5 + $0xcc] sm:$0xf]
      %v664 = vld [vmem:[%s5 + $0xd0] sm:$0xf]
      %v665 = vld [vmem:[%s5 + $0xd4] sm:$0xf]
      %v666 = vld [vmem:[%s5 + $0xd8] sm:$0xf]
      %v667 = vld [vmem:[%s5 + $0xdc] sm:$0xf]
      %v668 = vld [vmem:[%s5 + $0xe0] sm:$0xf]
      %v669 = vld [vmem:[%s5 + $0xe4] sm:$0xf]
      %v670 = vld [vmem:[%s5 + $0xe8] sm:$0xf]
      %v671 = vld [vmem:[%s5 + $0xec] sm:$0xf]
      %v672 = vld [vmem:[%s5 + $0xf0] sm:$0xf]
      %v673 = vld [vmem:[%s5 + $0xf4] sm:$0xf]
      %v674 = vld [vmem:[%s5 + $0xf8] sm:$0xf]
      %v675 = vld [vmem:[%s5 + $0xfc] sm:$0xf]
      %v676 = vpack.c.bf16 %v608, %v608
      %v677 = vpack.c.bf16 %v609, %v609
      %v678 = vpack.c.bf16 %v610, %v610
      %v679 = vpack.c.bf16 %v611, %v611
      %v744 = vunpack.c.l.b16 %v612
      %v745 = vunpack.c.l.b16 %v613
      %v746 = vunpack.c.l.b16 %v614
      %v747 = vunpack.c.l.b16 %v615
      %v748 = vunpack.c.l.b16 %v616
      %v749 = vunpack.c.l.b16 %v617
      %v750 = vunpack.c.l.b16 %v618
      %v751 = vunpack.c.l.b16 %v619
      %v752 = vunpack.c.l.b16 %v620
      %v753 = vunpack.c.l.b16 %v621
      %v754 = vunpack.c.l.b16 %v622
      %v755 = vunpack.c.l.b16 %v623
      %v756 = vunpack.c.l.b16 %v624
      %v757 = vunpack.c.l.b16 %v625
      %v758 = vunpack.c.l.b16 %v626
      %v759 = vunpack.c.l.b16 %v627
      %v760 = vunpack.c.l.b16 %v628
      %v761 = vunpack.c.l.b16 %v629
      %v762 = vunpack.c.l.b16 %v630
      %v763 = vunpack.c.l.b16 %v631
      %v764 = vunpack.c.l.b16 %v632
      %v765 = vunpack.c.l.b16 %v633
      %v766 = vunpack.c.l.b16 %v634
      %v767 = vunpack.c.l.b16 %v635
      %v768 = vunpack.c.l.b16 %v636
      %v769 = vunpack.c.l.b16 %v637
      %v770 = vunpack.c.l.b16 %v638
      %v771 = vunpack.c.l.b16 %v639
      %v772 = vunpack.c.l.b16 %v640
      %v773 = vunpack.c.l.b16 %v641
      %v774 = vunpack.c.l.b16 %v642
      %v775 = vunpack.c.l.b16 %v643
      %v776 = vunpack.c.l.b16 %v644
      %v777 = vunpack.c.l.b16 %v645
      %v778 = vunpack.c.l.b16 %v646
      %v779 = vunpack.c.l.b16 %v647
      %v780 = vunpack.c.l.b16 %v648
      %v781 = vunpack.c.l.b16 %v649
      %v782 = vunpack.c.l.b16 %v650
      %v783 = vunpack.c.l.b16 %v651
      %v784 = vunpack.c.l.b16 %v652
      %v785 = vunpack.c.l.b16 %v653
      %v786 = vunpack.c.l.b16 %v654
      %v787 = vunpack.c.l.b16 %v655
      %v788 = vunpack.c.l.b16 %v656
      %v789 = vunpack.c.l.b16 %v657
      %v790 = vunpack.c.l.b16 %v658
      %v791 = vunpack.c.l.b16 %v659
      %v792 = vunpack.c.l.b16 %v660
      %v793 = vunpack.c.l.b16 %v661
      %v794 = vunpack.c.l.b16 %v662
      %v795 = vunpack.c.l.b16 %v663
      %v796 = vunpack.c.l.b16 %v664
      %v797 = vunpack.c.l.b16 %v665
      %v798 = vunpack.c.l.b16 %v666
      %v799 = vunpack.c.l.b16 %v667
      %v800 = vunpack.c.l.b16 %v668
      %v801 = vunpack.c.l.b16 %v669
      %v802 = vunpack.c.l.b16 %v670
      %v803 = vunpack.c.l.b16 %v671
      %v804 = vunpack.c.l.b16 %v672
      %v805 = vunpack.c.l.b16 %v673
      %v806 = vunpack.c.l.b16 %v674
      %v807 = vunpack.c.l.b16 %v675
      %v808 = vpack.c.b16 %v745, %v744
      %v809 = vpack.c.b16 %v747, %v746
      %v810 = vpack.c.b16 %v749, %v748
      %v811 = vpack.c.b16 %v751, %v750
      %v812 = vpack.c.b16 %v753, %v752
      %v813 = vpack.c.b16 %v755, %v754
      %v814 = vpack.c.b16 %v757, %v756
      %v815 = vpack.c.b16 %v759, %v758
      %v816 = vpack.c.b16 %v761, %v760
      %v817 = vpack.c.b16 %v763, %v762
      %v818 = vpack.c.b16 %v765, %v764
      %v819 = vpack.c.b16 %v767, %v766
      %v820 = vpack.c.b16 %v769, %v768
      %v821 = vpack.c.b16 %v771, %v770
      %v822 = vpack.c.b16 %v773, %v772
      %v823 = vpack.c.b16 %v775, %v774
      %v824 = vpack.c.b16 %v777, %v776
      %v825 = vpack.c.b16 %v779, %v778
      %v826 = vpack.c.b16 %v781, %v780
      %v827 = vpack.c.b16 %v783, %v782
      %v828 = vpack.c.b16 %v785, %v784
      %v829 = vpack.c.b16 %v787, %v786
      %v830 = vpack.c.b16 %v789, %v788
      %v831 = vpack.c.b16 %v791, %v790
      %v832 = vpack.c.b16 %v793, %v792
      %v833 = vpack.c.b16 %v795, %v794
      %v834 = vpack.c.b16 %v797, %v796
      %v835 = vpack.c.b16 %v799, %v798
      %v836 = vpack.c.b16 %v801, %v800
      %v837 = vpack.c.b16 %v803, %v802
      %v838 = vpack.c.b16 %v805, %v804
      %v839 = vpack.c.b16 %v807, %v806
      %872 = vmatprep.subr.bf16.mxu0 0
      %873 = vmatpush1.bf16.msra.mxu0 %v808
      %874 = vmatprep.subr.bf16.mxu0 0
      %875 = vmatpush1.bf16.msra.mxu0 %v809
      %876 = vmatprep.subr.bf16.mxu0 0
      %877 = vmatpush1.bf16.msra.mxu0 %v810
      %878 = vmatprep.subr.bf16.mxu0 0
      %879 = vmatpush1.bf16.msra.mxu0 %v811
      %880 = vmatprep.subr.bf16.mxu0 0
      %881 = vmatpush1.bf16.msra.mxu0 %v812
      %882 = vmatprep.subr.bf16.mxu0 0
      %883 = vmatpush1.bf16.msra.mxu0 %v813
      %884 = vmatprep.subr.bf16.mxu0 0
      %885 = vmatpush1.bf16.msra.mxu0 %v814
      %886 = vmatprep.subr.bf16.mxu0 0
      %887 = vmatpush1.bf16.msra.mxu0 %v815
      %888 = vmatprep.subr.bf16.mxu0 0
      %889 = vmatpush1.bf16.msra.mxu0 %v816
      %890 = vmatprep.subr.bf16.mxu0 0
      %891 = vmatpush1.bf16.msra.mxu0 %v817
      %892 = vmatprep.subr.bf16.mxu0 0
      %893 = vmatpush1.bf16.msra.mxu0 %v818
      %894 = vmatprep.subr.bf16.mxu0 0
      %895 = vmatpush1.bf16.msra.mxu0 %v819
      %896 = vmatprep.subr.bf16.mxu0 0
      %897 = vmatpush1.bf16.msra.mxu0 %v820
      %898 = vmatprep.subr.bf16.mxu0 0
      %899 = vmatpush1.bf16.msra.mxu0 %v821
      %900 = vmatprep.subr.bf16.mxu0 0
      %901 = vmatpush1.bf16.msra.mxu0 %v822
      %902 = vmatprep.subr.bf16.mxu0 0
      %903 = vmatpush1.bf16.msra.mxu0 %v823
      %904 = vmatprep.mubr.bf16.mxu0 %v677
      %905 = vmatmul.mubr.bf16.gmra.mrb[0].mxu0 %v676
      %v906 = vpop.f32.mrb[0].mxu0
      %v907 = vadd.f32 0.0, %v906
      %v908 = vpop.f32.mrb[0].mxu0
      %v909 = vpop.f32.mrb[0].mxu0
      %v910 = vpop.f32.mrb[0].mxu0
      %911 = vdwg.mxu0
      %912 = vmatprep.subr.bf16.mxu0 0
      %913 = vmatpush1.bf16.msra.mxu0 %v824
      %914 = vmatprep.subr.bf16.mxu0 0
      %915 = vmatpush1.bf16.msra.mxu0 %v825
      %916 = vmatprep.subr.bf16.mxu0 0
      %917 = vmatpush1.bf16.msra.mxu0 %v826
      %918 = vmatprep.subr.bf16.mxu0 0
      %919 = vmatpush1.bf16.msra.mxu0 %v827
      %920 = vmatprep.subr.bf16.mxu0 0
      %921 = vmatpush1.bf16.msra.mxu0 %v828
      %922 = vmatprep.subr.bf16.mxu0 0
      %923 = vmatpush1.bf16.msra.mxu0 %v829
      %924 = vmatprep.subr.bf16.mxu0 0
      %925 = vmatpush1.bf16.msra.mxu0 %v830
      %926 = vmatprep.subr.bf16.mxu0 0
      %927 = vmatpush1.bf16.msra.mxu0 %v831
      %928 = vmatprep.subr.bf16.mxu0 0
      %929 = vmatpush1.bf16.msra.mxu0 %v832
      %930 = vmatprep.subr.bf16.mxu0 0
      %931 = vmatpush1.bf16.msra.mxu0 %v833
      %932 = vmatprep.subr.bf16.mxu0 0
      %933 = vmatpush1.bf16.msra.mxu0 %v834
      %934 = vmatprep.subr.bf16.mxu0 0
      %935 = vmatpush1.bf16.msra.mxu0 %v835
      %936 = vmatprep.subr.bf16.mxu0 0
      %937 = vmatpush1.bf16.msra.mxu0 %v836
      %938 = vmatprep.subr.bf16.mxu0 0
      %939 = vmatpush1.bf16.msra.mxu0 %v837
      %940 = vmatprep.subr.bf16.mxu0 0
      %941 = vmatpush1.bf16.msra.mxu0 %v838
      %942 = vmatprep.subr.bf16.mxu0 0
      %943 = vmatpush1.bf16.msra.mxu0 %v839
      %944 = vmatprep.mubr.bf16.mxu0 %v679
      %945 = vmatmul.mubr.bf16.gmra.mrb[0].mxu0 %v678
      %v946 = vpop.f32.mrb[0].mxu0
      %v947 = vadd.f32 %v907, %v946
      %v948 = vpop.f32.mrb[0].mxu0
      %v949 = vpop.f32.mrb[0].mxu0
      %v950 = vpop.f32.mrb[0].mxu0
      %951 = vdwg.mxu0
      %v952 = vadd.f32 %v275, %v947
      %v953 = vld [vmem:[%s6] sm:$0x1]
      %v955 = vlaneseq
      %v956 = vshrl.u32 %v955, 7
      %v957 = vsub.s32 0, %v956
      %v958 = vrot.slane %v953, %v957
      %v960 = vadd.f32 %v952, %v958
      %961 = vst [vmem:[%s273] sm:$0xff] %v960
      %p962 = scmp.lt.s32.totalorder %s18, 1
      %s963 = scalar_select %p962, %s18, 1
      %s964 = smul.addr %s963, 8
      %s965 = scalar_lea.vmem %s7, %s964
      // Predicated region
      $region49: #{atnet_forward.8} parent=47 // pred_check
        %p966 = pneg %p188
      $region50: #{atnet_forward.8} parent=47 // pred_check_branch
        %968 = sbr.rel (%p966) target = $region52
      $region51: #{atnet_forward.8} parent=47 // pred_region
        _
      $region52: #{atnet_forward.8} parent=47 // pred_fallthru
        _
    $region48: #{atnet_forward.8} parent=5 // pred_fallthru
      _
    %p969 = scmp.le.s32.totalorder 2, %s13
    // Predicated region
    $region53: #{atnet_forward.8} parent=5 // pred_check
      %p970 = pneg %p969
    $region54: #{atnet_forward.8} parent=5 // pred_check_branch
      %972 = sbr.rel (%p970) target = $region56
    $region55: #{atnet_forward.8} parent=5 // pred_region
      %s973 = ssub.s32 %s13, 2
      // Predicated region
      $region57: #{atnet_forward.8} parent=55 // pred_check
        %p974 = pneg %p194
      $region58: #{atnet_forward.8} parent=55 // pred_check_branch
        %976 = sbr.rel (%p974) target = $region60
      $region59: #{atnet_forward.8} parent=55 // pred_region
        %p977 = scmp.lt.s32.totalorder %s19, 1
        %s978 = scalar_select %p977, %s19, 1
        %s979 = smul.addr %s978, 8
        %s980 = scalar_lea.vmem %s7, %s979
      $region60: #{atnet_forward.8} parent=55 // pred_fallthru
        _
    $region56: #{atnet_forward.8} parent=5 // pred_fallthru
      _
  $region6: #{atnet_forward.8} parent=0 // loop_footer
    %s17 = sadd.s32 1, %s13
  $region7: #{atnet_forward.8} parent=0 // loop_footer_branch
    %12 = sbr.rel target = $region3
  $region8: #{atnet_forward.8} parent=0 // loop_exit
    _

// kernel: atnet_forward.10
$region0: #{atnet_forward.10}
  #allocation0 [shape = 'u32[]', space=smem, size = 0x4, offset = 0x4, fixed_abs, tag = 'smem constant byte address 0x4 - core index']
  #allocation1 [shape = 'u32[144,128]{1,0:T(1,128)}', space=vmem, size = 0x12000, scoped, tag = 'internal scratch']
  %s0 = inlined_call_operand.vmem [shape: f32[2,8,128], index: 0, kind: input, shape index: {}, may-alias: {0,1}]
  %s1 = inlined_call_operand.vmem [shape: f32[2,8,128], index: 1, kind: input, shape index: {}, may-alias: {0,1}]
  %s2 = inlined_call_operand.vmem [shape: f32[2,8,8], index: 2, kind: input, shape index: {}]
  %s3 = inlined_call_operand.vmem [shape: f32[1,128], index: 3, kind: input, shape index: {}]
  %s4 = inlined_call_operand.vmem [shape: f32[1,128], index: 4, kind: input, shape index: {}]
  %s5 = inlined_call_operand.vmem [shape: bf16[128,128], index: 5, kind: input, shape index: {}]
  %s6 = inlined_call_operand.vmem [shape: f32[1,128], index: 6, kind: input, shape index: {}]
  %s7 = inlined_call_operand.vmem [shape: bf16[128,128], index: 7, kind: input, shape index: {}]
  %s8 = inlined_call_operand.vmem [shape: f32[1,128], index: 8, kind: input, shape index: {}]
  %s9 = inlined_call_operand.vmem [shape: bf16[128,128], index: 9, kind: input, shape index: {}]
  %s10 = inlined_call_operand.vmem [shape: f32[1,128], index: 10, kind: input, shape index: {}]
  %s11 = inlined_call_operand.vmem [shape: bf16[128,128], index: 11, kind: input, shape index: {}]
  %s12 = inlined_call_operand.vmem [shape: f32[1,128], index: 12, kind: input, shape index: {}]
  %s13 = inlined_call_operand.vmem [shape: f32[2,8,128], index: 13, kind: output, shape index: {}]
  %s14 = sld [smem:[#allocation0]]
  $region85: #{atnet_forward.10} parent=0
    _
  %s16 = ssub.s32 1, %s14
  %s17 = scalar_select 0, %s16, %s14
  loop: start=0, step=1, limit=4
  $region2: #{atnet_forward.10} parent=0 // loop_pre_header
    _
  $region3: #{atnet_forward.10} parent=0 // loop_header
    %s19 = sphi 0, %s23
    %p20 = scmp.ge.s32.totalorder %s19, 4
    %s29 = sphi 0, %s31
    %s32 = sphi 0, %s29
    %s33 = sphi 0, %s32
    %s49 = sphi 0, %s33
    %s55 = sphi 0, %s57
    %s58 = sphi 0, %s55
    %s59 = sphi 0, %s58
    %s75 = sphi 0, %s59
    %s81 = sphi 0, %s83
    %s84 = sphi 0, %s81
    %s85 = sphi 0, %s84
    %s101 = sphi 0, %s85
    %s105 = sphi 0, %s105
    %s107 = sphi 0, %s105
    %s108 = sphi 0, %s107
    %s122 = sphi 0, %s108
    %s126 = sphi 0, %s126
    %s128 = sphi 0, %s126
    %s129 = sphi 0, %s128
    %s143 = sphi 0, %s129
    %s147 = sphi 0, %s147
    %s149 = sphi 0, %s147
    %s150 = sphi 0, %s149
    %s164 = sphi 0, %s150
    %s168 = sphi 0, %s168
    %s170 = sphi 0, %s168
    %s171 = sphi 0, %s170
    %s185 = sphi 0, %s171
    %s189 = sphi 0, %s189
    %s191 = sphi 0, %s189
    %s192 = sphi 0, %s191
    %s206 = sphi 0, %s192
    %s210 = sphi 0, %s210
    %s212 = sphi 0, %s210
    %s213 = sphi 0, %s212
    %s227 = sphi 0, %s213
    %s231 = sphi 0, %s231
    %s233 = sphi 0, %s231
    %s234 = sphi 0, %s233
    %s248 = sphi 0, %s234
    %s252 = sphi 0, %s252
    %s254 = sphi 0, %s252
    %s255 = sphi 0, %s254
    %s269 = sphi 0, %s255
    %s273 = sphi 0, %s273
    %s275 = sphi 0, %s273
    %s276 = sphi 0, %s275
    %s290 = sphi 0, %s276
    %s294 = sphi 0, %s294
    %s296 = sphi 0, %s294
    %s297 = sphi 0, %s296
    %s311 = sphi 0, %s297
    %s317 = sphi 0, %s319
    %s320 = sphi 0, %s317
    %s321 = sphi 0, %s320
    %s337 = sphi 0, %s321
  $region4: #{atnet_forward.10} parent=0 // loop_header_branch
    %22 = sbr.rel (%p20) target = $region8
  $region5: #{atnet_forward.10} parent=0 // loop_body
    %s24 = ssub.s32 %s19, 1
    %s25 = ssub.s32 %s19, 2
    %s26 = sadd.s32 %s19, 1
    %s27 = ssub.s32 %s19, %s26
    %p28 = scmp.eq.s32.totalorder %s27, 0
    %s30 = sadd.s32 %s29, 1
    %s31 = scalar_select %p28, %s29, %s30
    %p34 = pneg %p28
    %p35 = scmp.eq.s32.totalorder %s19, 1
    %p36 = por %p34, %p35
    %p37 = scmp.ne.s32.totalorder %s29, %s32
    %p38 = scmp.eq.s32.totalorder %s19, 0
    %p39 = por %p37, %p38
    %p40 = scmp.ne.s32.totalorder %s29, %s32
    %p41 = scmp.eq.s32.totalorder %s24, 1
    %p42 = por %p40, %p41
    %p43 = scmp.ne.s32.totalorder %s32, %s33
    %p44 = scmp.eq.s32.totalorder %s24, 0
    %p45 = por %p43, %p44
    %p46 = scmp.ne.s32.totalorder %s32, %s33
    %p47 = scmp.eq.s32.totalorder %s25, 1
    %p48 = por %p46, %p47
    %p50 = scmp.ne.s32.totalorder %s33, %s49
    %p51 = scmp.eq.s32.totalorder %s25, 0
    %p52 = por %p50, %p51
    %s53 = ssub.s32 %s19, %s26
    %p54 = scmp.eq.s32.totalorder %s53, 0
    %s56 = sadd.s32 %s55, 1
    %s57 = scalar_select %p54, %s55, %s56
    %p60 = pneg %p54
    %p61 = scmp.eq.s32.totalorder %s19, 1
    %p62 = por %p60, %p61
    %p63 = scmp.ne.s32.totalorder %s55, %s58
    %p64 = scmp.eq.s32.totalorder %s19, 0
    %p65 = por %p63, %p64
    %p66 = scmp.ne.s32.totalorder %s55, %s58
    %p67 = scmp.eq.s32.totalorder %s24, 1
    %p68 = por %p66, %p67
    %p69 = scmp.ne.s32.totalorder %s58, %s59
    %p70 = scmp.eq.s32.totalorder %s24, 0
    %p71 = por %p69, %p70
    %p72 = scmp.ne.s32.totalorder %s58, %s59
    %p73 = scmp.eq.s32.totalorder %s25, 1
    %p74 = por %p72, %p73
    %p76 = scmp.ne.s32.totalorder %s59, %s75
    %p77 = scmp.eq.s32.totalorder %s25, 0
    %p78 = por %p76, %p77
    %s79 = ssub.s32 %s19, %s26
    %p80 = scmp.eq.s32.totalorder %s79, 0
    %s82 = sadd.s32 %s81, 1
    %s83 = scalar_select %p80, %s81, %s82
    %p86 = pneg %p80
    %p87 = scmp.eq.s32.totalorder %s19, 1
    %p88 = por %p86, %p87
    %p89 = scmp.ne.s32.totalorder %s81, %s84
    %p90 = scmp.eq.s32.totalorder %s19, 0
    %p91 = por %p89, %p90
    %p92 = scmp.ne.s32.totalorder %s81, %s84
    %p93 = scmp.eq.s32.totalorder %s24, 1
    %p94 = por %p92, %p93
    %p95 = scmp.ne.s32.totalorder %s84, %s85
    %p96 = scmp.eq.s32.totalorder %s24, 0
    %p97 = por %p95, %p96
    %p98 = scmp.ne.s32.totalorder %s84, %s85
    %p99 = scmp.eq.s32.totalorder %s25, 1
    %p100 = por %p98, %p99
    %p102 = scmp.ne.s32.totalorder %s85, %s101
    %p103 = scmp.eq.s32.totalorder %s25, 0
    %p104 = por %p102, %p103
    %s106 = sadd.s32 %s105, 1
    %p109 = scmp.eq.s32.totalorder %s19, 1
    %p110 = scmp.ne.s32.totalorder %s105, %s107
    %p111 = scmp.eq.s32.totalorder %s19, 0
    %p112 = por %p110, %p111
    %p113 = scmp.ne.s32.totalorder %s105, %s107
    %p114 = scmp.eq.s32.totalorder %s24, 1
    %p115 = por %p113, %p114
    %p116 = scmp.ne.s32.totalorder %s107, %s108
    %p117 = scmp.eq.s32.totalorder %s24, 0
    %p118 = por %p116, %p117
    %p119 = scmp.ne.s32.totalorder %s107, %s108
    %p120 = scmp.eq.s32.totalorder %s25, 1
    %p121 = por %p119, %p120
    %p123 = scmp.ne.s32.totalorder %s108, %s122
    %p124 = scmp.eq.s32.totalorder %s25, 0
    %p125 = por %p123, %p124
    %s127 = sadd.s32 %s126, 1
    %p130 = scmp.eq.s32.totalorder %s19, 1
    %p131 = scmp.ne.s32.totalorder %s126, %s128
    %p132 = scmp.eq.s32.totalorder %s19, 0
    %p133 = por %p131, %p132
    %p134 = scmp.ne.s32.totalorder %s126, %s128
    %p135 = scmp.eq.s32.totalorder %s24, 1
    %p136 = por %p134, %p135
    %p137 = scmp.ne.s32.totalorder %s128, %s129
    %p138 = scmp.eq.s32.totalorder %s24, 0
    %p139 = por %p137, %p138
    %p140 = scmp.ne.s32.totalorder %s128, %s129
    %p141 = scmp.eq.s32.totalorder %s25, 1
    %p142 = por %p140, %p141
    %p144 = scmp.ne.s32.totalorder %s129, %s143
    %p145 = scmp.eq.s32.totalorder %s25, 0
    %p146 = por %p144, %p145
    %s148 = sadd.s32 %s147, 1
    %p151 = scmp.eq.s32.totalorder %s19, 1
    %p152 = scmp.ne.s32.totalorder %s147, %s149
    %p153 = scmp.eq.s32.totalorder %s19, 0
    %p154 = por %p152, %p153
    %p155 = scmp.ne.s32.totalorder %s147, %s149
    %p156 = scmp.eq.s32.totalorder %s24, 1
    %p157 = por %p155, %p156
    %p158 = scmp.ne.s32.totalorder %s149, %s150
    %p159 = scmp.eq.s32.totalorder %s24, 0
    %p160 = por %p158, %p159
    %p161 = scmp.ne.s32.totalorder %s149, %s150
    %p162 = scmp.eq.s32.totalorder %s25, 1
    %p163 = por %p161, %p162
    %p165 = scmp.ne.s32.totalorder %s150, %s164
    %p166 = scmp.eq.s32.totalorder %s25, 0
    %p167 = por %p165, %p166
    %s169 = sadd.s32 %s168, 1
    %p172 = scmp.eq.s32.totalorder %s19, 1
    %p173 = scmp.ne.s32.totalorder %s168, %s170
    %p174 = scmp.eq.s32.totalorder %s19, 0
    %p175 = por %p173, %p174
    %p176 = scmp.ne.s32.totalorder %s168, %s170
    %p177 = scmp.eq.s32.totalorder %s24, 1
    %p178 = por %p176, %p177
    %p179 = scmp.ne.s32.totalorder %s170, %s171
    %p180 = scmp.eq.s32.totalorder %s24, 0
    %p181 = por %p179, %p180
    %p182 = scmp.ne.s32.totalorder %s170, %s171
    %p183 = scmp.eq.s32.totalorder %s25, 1
    %p184 = por %p182, %p183
    %p186 = scmp.ne.s32.totalorder %s171, %s185
    %p187 = scmp.eq.s32.totalorder %s25, 0
    %p188 = por %p186, %p187
    %s190 = sadd.s32 %s189, 1
    %p193 = scmp.eq.s32.totalorder %s19, 1
    %p194 = scmp.ne.s32.totalorder %s189, %s191
    %p195 = scmp.eq.s32.totalorder %s19, 0
    %p196 = por %p194, %p195
    %p197 = scmp.ne.s32.totalorder %s189, %s191
    %p198 = scmp.eq.s32.totalorder %s24, 1
    %p199 = por %p197, %p198
    %p200 = scmp.ne.s32.totalorder %s191, %s192
    %p201 = scmp.eq.s32.totalorder %s24, 0
    %p202 = por %p200, %p201
    %p203 = scmp.ne.s32.totalorder %s191, %s192
    %p204 = scmp.eq.s32.totalorder %s25, 1
    %p205 = por %p203, %p204
    %p207 = scmp.ne.s32.totalorder %s192, %s206
    %p208 = scmp.eq.s32.totalorder %s25, 0
    %p209 = por %p207, %p208
    %s211 = sadd.s32 %s210, 1
    %p214 = scmp.eq.s32.totalorder %s19, 1
    %p215 = scmp.ne.s32.totalorder %s210, %s212
    %p216 = scmp.eq.s32.totalorder %s19, 0
    %p217 = por %p215, %p216
    %p218 = scmp.ne.s32.totalorder %s210, %s212
    %p219 = scmp.eq.s32.totalorder %s24, 1
    %p220 = por %p218, %p219
    %p221 = scmp.ne.s32.totalorder %s212, %s213
    %p222 = scmp.eq.s32.totalorder %s24, 0
    %p223 = por %p221, %p222
    %p224 = scmp.ne.s32.totalorder %s212, %s213
    %p225 = scmp.eq.s32.totalorder %s25, 1
    %p226 = por %p224, %p225
    %p228 = scmp.ne.s32.totalorder %s213, %s227
    %p229 = scmp.eq.s32.totalorder %s25, 0
    %p230 = por %p228, %p229
    %s232 = sadd.s32 %s231, 1
    %p235 = scmp.eq.s32.totalorder %s19, 1
    %p236 = scmp.ne.s32.totalorder %s231, %s233
    %p237 = scmp.eq.s32.totalorder %s19, 0
    %p238 = por %p236, %p237
    %p239 = scmp.ne.s32.totalorder %s231, %s233
    %p240 = scmp.eq.s32.totalorder %s24, 1
    %p241 = por %p239, %p240
    %p242 = scmp.ne.s32.totalorder %s233, %s234
    %p243 = scmp.eq.s32.totalorder %s24, 0
    %p244 = por %p242, %p243
    %p245 = scmp.ne.s32.totalorder %s233, %s234
    %p246 = scmp.eq.s32.totalorder %s25, 1
    %p247 = por %p245, %p246
    %p249 = scmp.ne.s32.totalorder %s234, %s248
    %p250 = scmp.eq.s32.totalorder %s25, 0
    %p251 = por %p249, %p250
    %s253 = sadd.s32 %s252, 1
    %p256 = scmp.eq.s32.totalorder %s19, 1
    %p257 = scmp.ne.s32.totalorder %s252, %s254
    %p258 = scmp.eq.s32.totalorder %s19, 0
    %p259 = por %p257, %p258
    %p260 = scmp.ne.s32.totalorder %s252, %s254
    %p261 = scmp.eq.s32.totalorder %s24, 1
    %p262 = por %p260, %p261
    %p263 = scmp.ne.s32.totalorder %s254, %s255
    %p264 = scmp.eq.s32.totalorder %s24, 0
    %p265 = por %p263, %p264
    %p266 = scmp.ne.s32.totalorder %s254, %s255
    %p267 = scmp.eq.s32.totalorder %s25, 1
    %p268 = por %p266, %p267
    %p270 = scmp.ne.s32.totalorder %s255, %s269
    %p271 = scmp.eq.s32.totalorder %s25, 0
    %p272 = por %p270, %p271
    %s274 = sadd.s32 %s273, 1
    %p277 = scmp.eq.s32.totalorder %s19, 1
    %p278 = scmp.ne.s32.totalorder %s273, %s275
    %p279 = scmp.eq.s32.totalorder %s19, 0
    %p280 = por %p278, %p279
    %p281 = scmp.ne.s32.totalorder %s273, %s275
    %p282 = scmp.eq.s32.totalorder %s24, 1
    %p283 = por %p281, %p282
    %p284 = scmp.ne.s32.totalorder %s275, %s276
    %p285 = scmp.eq.s32.totalorder %s24, 0
    %p286 = por %p284, %p285
    %p287 = scmp.ne.s32.totalorder %s275, %s276
    %p288 = scmp.eq.s32.totalorder %s25, 1
    %p289 = por %p287, %p288
    %p291 = scmp.ne.s32.totalorder %s276, %s290
    %p292 = scmp.eq.s32.totalorder %s25, 0
    %p293 = por %p291, %p292
    %s295 = sadd.s32 %s294, 1
    %p298 = scmp.eq.s32.totalorder %s19, 1
    %p299 = scmp.ne.s32.totalorder %s294, %s296
    %p300 = scmp.eq.s32.totalorder %s19, 0
    %p301 = por %p299, %p300
    %p302 = scmp.ne.s32.totalorder %s294, %s296
    %p303 = scmp.eq.s32.totalorder %s24, 1
    %p304 = por %p302, %p303
    %p305 = scmp.ne.s32.totalorder %s296, %s297
    %p306 = scmp.eq.s32.totalorder %s24, 0
    %p307 = por %p305, %p306
    %p308 = scmp.ne.s32.totalorder %s296, %s297
    %p309 = scmp.eq.s32.totalorder %s25, 1
    %p310 = por %p308, %p309
    %p312 = scmp.ne.s32.totalorder %s297, %s311
    %p313 = scmp.eq.s32.totalorder %s25, 0
    %p314 = por %p312, %p313
    %s315 = ssub.s32 %s19, %s26
    %p316 = scmp.eq.s32.totalorder %s315, 0
    %s318 = sadd.s32 %s317, 1
    %s319 = scalar_select %p316, %s317, %s318
    %p322 = pneg %p316
    %p323 = scmp.eq.s32.totalorder %s19, 1
    %p324 = por %p322, %p323
    %p325 = scmp.ne.s32.totalorder %s317, %s320
    %p326 = scmp.eq.s32.totalorder %s19, 0
    %p327 = por %p325, %p326
    %p328 = scmp.ne.s32.totalorder %s317, %s320
    %p329 = scmp.eq.s32.totalorder %s24, 1
    %p330 = por %p328, %p329
    %p331 = scmp.ne.s32.totalorder %s320, %s321
    %p332 = scmp.eq.s32.totalorder %s24, 0
    %p333 = por %p331, %p332
    %p334 = scmp.ne.s32.totalorder %s320, %s321
    %p335 = scmp.eq.s32.totalorder %s25, 1
    %p336 = por %p334, %p335
    %p338 = scmp.ne.s32.totalorder %s321, %s337
    %p339 = scmp.eq.s32.totalorder %s25, 0
    %p340 = por %p338, %p339
    %p341 = scmp.le.s32.totalorder 1, %s19
    %p342 = scmp.lt.s32.totalorder %s19, 3
    %p343 = pnand %p341, %p342
    %p344 = pneg %p343
    // Predicated region
    $region9: #{atnet_forward.10} parent=5 // pred_check
      _
    $region10: #{atnet_forward.10} parent=5 // pred_check_branch
      %346 = sbr.rel (%p343) target = $region12
    $region11: #{atnet_forward.10} parent=5 // pred_region
      %s347 = ssub.s32 %s19, 1
      // Predicated region
      $region13: #{atnet_forward.10} parent=11 // pred_check
        %p348 = pneg %p118
      $region14: #{atnet_forward.10} parent=11 // pred_check_branch
        %350 = sbr.rel (%p348) target = $region16
      $region15: #{atnet_forward.10} parent=11 // pred_region
        _
      $region16: #{atnet_forward.10} parent=11 // pred_fallthru
        _
      // Predicated region
      $region17: #{atnet_forward.10} parent=11 // pred_check
        %p351 = pneg %p139
      $region18: #{atnet_forward.10} parent=11 // pred_check_branch
        %353 = sbr.rel (%p351) target = $region20
      $region19: #{atnet_forward.10} parent=11 // pred_region
        _
      $region20: #{atnet_forward.10} parent=11 // pred_fallthru
        _
      // Predicated region
      $region21: #{atnet_forward.10} parent=11 // pred_check
        %p354 = pneg %p160
      $region22: #{atnet_forward.10} parent=11 // pred_check_branch
        %356 = sbr.rel (%p354) target = $region24
      $region23: #{atnet_forward.10} parent=11 // pred_region
        _
      $region24: #{atnet_forward.10} parent=11 // pred_fallthru
        _
      // Predicated region
      $region25: #{atnet_forward.10} parent=11 // pred_check
        %p357 = pneg %p181
      $region26: #{atnet_forward.10} parent=11 // pred_check_branch
        %359 = sbr.rel (%p357) target = $region28
      $region27: #{atnet_forward.10} parent=11 // pred_region
        _
      $region28: #{atnet_forward.10} parent=11 // pred_fallthru
        _
      // Predicated region
      $region29: #{atnet_forward.10} parent=11 // pred_check
        %p360 = pneg %p202
      $region30: #{atnet_forward.10} parent=11 // pred_check_branch
        %362 = sbr.rel (%p360) target = $region32
      $region31: #{atnet_forward.10} parent=11 // pred_region
        _
      $region32: #{atnet_forward.10} parent=11 // pred_fallthru
        _
      // Predicated region
      $region33: #{atnet_forward.10} parent=11 // pred_check
        %p363 = pneg %p223
      $region34: #{atnet_forward.10} parent=11 // pred_check_branch
        %365 = sbr.rel (%p363) target = $region36
      $region35: #{atnet_forward.10} parent=11 // pred_region
        _
      $region36: #{atnet_forward.10} parent=11 // pred_fallthru
        _
      // Predicated region
      $region37: #{atnet_forward.10} parent=11 // pred_check
        %p366 = pneg %p244
      $region38: #{atnet_forward.10} parent=11 // pred_check_branch
        %368 = sbr.rel (%p366) target = $region40
      $region39: #{atnet_forward.10} parent=11 // pred_region
        _
      $region40: #{atnet_forward.10} parent=11 // pred_fallthru
        _
      // Predicated region
      $region41: #{atnet_forward.10} parent=11 // pred_check
        %p369 = pneg %p265
      $region42: #{atnet_forward.10} parent=11 // pred_check_branch
        %371 = sbr.rel (%p369) target = $region44
      $region43: #{atnet_forward.10} parent=11 // pred_region
        _
      $region44: #{atnet_forward.10} parent=11 // pred_fallthru
        _
      // Predicated region
      $region45: #{atnet_forward.10} parent=11 // pred_check
        %p372 = pneg %p286
      $region46: #{atnet_forward.10} parent=11 // pred_check_branch
        %374 = sbr.rel (%p372) target = $region48
      $region47: #{atnet_forward.10} parent=11 // pred_region
        _
      $region48: #{atnet_forward.10} parent=11 // pred_fallthru
        _
      // Predicated region
      $region49: #{atnet_forward.10} parent=11 // pred_check
        %p375 = pneg %p307
      $region50: #{atnet_forward.10} parent=11 // pred_check_branch
        %377 = sbr.rel (%p375) target = $region52
      $region51: #{atnet_forward.10} parent=11 // pred_region
        _
      $region52: #{atnet_forward.10} parent=11 // pred_fallthru
        _
    $region12: #{atnet_forward.10} parent=5 // pred_fallthru
      _
    %p378 = scmp.lt.s32.totalorder %s19, 2
    // Predicated region
    $region53: #{atnet_forward.10} parent=5 // pred_check
      %p379 = pneg %p378
    $region54: #{atnet_forward.10} parent=5 // pred_check_branch
      %381 = sbr.rel (%p379) target = $region56
    $region55: #{atnet_forward.10} parent=5 // pred_region
      // Predicated region
      $region57: #{atnet_forward.10} parent=55 // pred_check
        %p382 = pneg %p39
      $region58: #{atnet_forward.10} parent=55 // pred_check_branch
        %384 = sbr.rel (%p382) target = $region60
      $region59: #{atnet_forward.10} parent=55 // pred_region
        %p385 = scmp.lt.s32.totalorder %s19, 1
        %s386 = scalar_select %p385, %s19, 1
        %s387 = smul.addr %s386, 8
        %s388 = scalar_lea.vmem %s0, %s387
      $region60: #{atnet_forward.10} parent=55 // pred_fallthru
        _
      // Predicated region
      $region61: #{atnet_forward.10} parent=55 // pred_check
        %p389 = pneg %p65
      $region62: #{atnet_forward.10} parent=55 // pred_check_branch
        %391 = sbr.rel (%p389) target = $region64
      $region63: #{atnet_forward.10} parent=55 // pred_region
        %p392 = scmp.lt.s32.totalorder %s19, 1
        %s393 = scalar_select %p392, %s19, 1
        %s394 = smul.addr %s393, 8
        %s395 = scalar_lea.vmem %s1, %s394
      $region64: #{atnet_forward.10} parent=55 // pred_fallthru
        _
      // Predicated region
      $region65: #{atnet_forward.10} parent=55 // pred_check
        %p396 = pneg %p91
      $region66: #{atnet_forward.10} parent=55 // pred_check_branch
        %398 = sbr.rel (%p396) target = $region68
      $region67: #{atnet_forward.10} parent=55 // pred_region
        %p399 = scmp.lt.s32.totalorder %s19, 1
        %s400 = scalar_select %p399, %s19, 1
        %s401 = smul.addr %s400, 8
        %s402 = scalar_lea.vmem %s2, %s401
      $region68: #{atnet_forward.10} parent=55 // pred_fallthru
        _
    $region56: #{atnet_forward.10} parent=5 // pred_fallthru
      _
    %p403 = scmp.le.s32.totalorder 1, %s19
    %p404 = scmp.lt.s32.totalorder %s19, 3
    %p405 = pnand %p403, %p404
    %p406 = pneg %p405
    // Predicated region
    $region69: #{atnet_forward.10} parent=5 // pred_check
      _
    $region70: #{atnet_forward.10} parent=5 // pred_check_branch
      %408 = sbr.rel (%p405) target = $region72
    $region71: #{atnet_forward.10} parent=5 // pred_region
      %s409 = ssub.s32 %s19, 1
      %p410 = scmp.lt.s32.totalorder %s24, 1
      %s411 = scalar_select %p410, %s24, 1
      %s412 = smul.addr %s411, 8
      %s413 = scalar_lea.vmem %s0, %s412
      %p414 = pneg %p45
      %p415 = pneg %p42
      %p416 = scmp.lt.s32.totalorder %s24, 1
      %s417 = scalar_select %p416, %s24, 1
      %s418 = smul.addr %s417, 8
      %s419 = scalar_lea.vmem %s1, %s418
      %p420 = pneg %p71
      %p421 = pneg %p68
      %p422 = scmp.lt.s32.totalorder %s24, 1
      %s423 = scalar_select %p422, %s24, 1
      %s424 = smul.addr %s423, 8
      %s425 = scalar_lea.vmem %s2, %s424
      %p426 = pneg %p97
      %p427 = pneg %p94
      %p428 = pneg %p118
      %p429 = pneg %p115
      %p430 = pneg %p139
      %p431 = pneg %p136
      %p432 = pneg %p160
      %p433 = pneg %p157
      %p434 = pneg %p181
      %p435 = pneg %p178
      %p436 = pneg %p202
      %p437 = pneg %p199
      %p438 = pneg %p223
      %p439 = pneg %p220
      %p440 = pneg %p244
      %p441 = pneg %p241
      %p442 = pneg %p265
      %p443 = pneg %p262
      %p444 = pneg %p286
      %p445 = pneg %p283
      %p446 = pneg %p307
      %p447 = pneg %p304
      %p448 = pneg %p333
      %p449 = pneg %p330
      %p450 = scmp.lt.s32.totalorder %s24, 1
      %s451 = scalar_select %p450, %s24, 1
      %s452 = smul.addr %s451, 8
      %s453 = scalar_lea.vmem %s13, %s452
      %p454 = scmp.lt.s32.totalorder %s24, 1
      %s455 = scalar_select %p454, %s24, 1
      %s456 = smul.addr %s455, 8
      %s457 = scalar_lea.vmem %s0, %s456
      %p458 = scmp.lt.s32.totalorder %s24, 1
      %s459 = scalar_select %p458, %s24, 1
      %s460 = smul.addr %s459, 8
      %s461 = scalar_lea.vmem %s1, %s460
      %p462 = scmp.lt.s32.totalorder %s24, 1
      %s463 = scalar_select %p462, %s24, 1
      %s464 = smul.addr %s463, 8
      %s465 = scalar_lea.vmem %s2, %s464
      %p466 = scmp.lt.s32.totalorder %s24, 1
      %s467 = scalar_select %p466, %s24, 1
      %s468 = smul.addr %s467, 8
      %s469 = scalar_lea.vmem %s13, %s468
      %v471 = vld [vmem:[%s457] sm:$0xff]
      %v472 = vld [vmem:[%s3] sm:$0x1]
      %v473 = vld [vmem:[%s4] sm:$0x1]
      %474 = vadd.xlane.f32.xlu0 %v471
      %v475 = vpop.xlane.xlu0 %474
      %v476 = vrcp.pop 128.0
      %v477 = vmul.f32 %v475, %v476
      %v478 = vsub.f32 %v471, %v477
      %v479 = vmul.f32 %v478, %v478
      %480 = vadd.xlane.f32.xlu0 %v479
      %v481 = vpop.xlane.xlu0 %480
      %v482 = vmul.f32 %v481, 0.007874016
      %v483 = vrsqrt.pop %v482
      %v484 = vmul.f32 %v482, %v483
      %vm485 = vcmp.eq.f32.partialorder %v482, inf
      %v486 = vsel %vm485, %v482, %v484
      %vm487 = vcmp.eq.f32.partialorder %v482, 0.0
      %v488 = vand.u32 %v482, 2147483648
      %v489 = vsel %vm487, %v488, %v486
      %v490 = vadd.f32 %v489, 1e-06
      %v491 = vrcp.pop %v490
      %v493 = vlaneseq
      %v494 = vshrl.u32 %v493, 7
      %v495 = vsub.s32 0, %v494
      %v496 = vrot.slane %v472, %v495
      %v498 = vmul.f32 %v496, %v478
      %v499 = vmul.f32 %v498, %v491
      %v501 = vlaneseq
      %v502 = vshrl.u32 %v501, 7
      %v503 = vsub.s32 0, %v502
      %v504 = vrot.slane %v473, %v503
      %v506 = vadd.f32 %v499, %v504
      %v507 = vld [vmem:[%s5] sm:$0xf]
      %v508 = vld [vmem:[%s5 + $0x4] sm:$0xf]
      %v509 = vld [vmem:[%s5 + $0x8] sm:$0xf]
      %v510 = vld [vmem:[%s5 + $0xc] sm:$0xf]
      %v511 = vld [vmem:[%s5 + $0x10] sm:$0xf]
      %v512 = vld [vmem:[%s5 + $0x14] sm:$0xf]
      %v513 = vld [vmem:[%s5 + $0x18] sm:$0xf]
      %v514 = vld [vmem:[%s5 + $0x1c] sm:$0xf]
      %v515 = vld [vmem:[%s5 + $0x20] sm:$0xf]
      %v516 = vld [vmem:[%s5 + $0x24] sm:$0xf]
      %v517 = vld [vmem:[%s5 + $0x28] sm:$0xf]
      %v518 = vld [vmem:[%s5 + $0x2c] sm:$0xf]
      %v519 = vld [vmem:[%s5 + $0x30] sm:$0xf]
      %v520 = vld [vmem:[%s5 + $0x34] sm:$0xf]
      %v521 = vld [vmem:[%s5 + $0x38] sm:$0xf]
      %v522 = vld [vmem:[%s5 + $0x3c] sm:$0xf]
      %v523 = vpack.c.bf16 %v506, %v506
      %v524 = vld [vmem:[%s6] sm:$0x1]
      %v526 = vlaneseq
      %v527 = vshrl.u32 %v526, 7
      %v528 = vsub.s32 0, %v527
      %v529 = vrot.slane %v524, %v528
      %v547 = vunpack.c.l.b16 %v507
      %v548 = vunpack.c.l.b16 %v508
      %v549 = vunpack.c.l.b16 %v509
      %v550 = vunpack.c.l.b16 %v510
      %v551 = vunpack.c.l.b16 %v511
      %v552 = vunpack.c.l.b16 %v512
      %v553 = vunpack.c.l.b16 %v513
      %v554 = vunpack.c.l.b16 %v514
      %v555 = vunpack.c.l.b16 %v515
      %v556 = vunpack.c.l.b16 %v516
      %v557 = vunpack.c.l.b16 %v517
      %v558 = vunpack.c.l.b16 %v518
      %v559 = vunpack.c.l.b16 %v519
      %v560 = vunpack.c.l.b16 %v520
      %v561 = vunpack.c.l.b16 %v521
      %v562 = vunpack.c.l.b16 %v522
      %v563 = vpack.c.b16 %v548, %v547
      %v564 = vpack.c.b16 %v550, %v549
      %v565 = vpack.c.b16 %v552, %v551
      %v566 = vpack.c.b16 %v554, %v553
      %v567 = vpack.c.b16 %v556, %v555
      %v568 = vpack.c.b16 %v558, %v557
      %v569 = vpack.c.b16 %v560, %v559
      %v570 = vpack.c.b16 %v562, %v561
      %579 = vmatprep.subr.bf16.mxu0 0
      %580 = vmatpush1.bf16.msra.mxu0 %v563
      %581 = vmatprep.subr.bf16.mxu0 0
      %582 = vmatpush1.bf16.msra.mxu0 %v564
      %583 = vmatprep.subr.bf16.mxu0 0
      %584 = vmatpush1.bf16.msra.mxu0 %v565
      %585 = vmatprep.subr.bf16.mxu0 0
      %586 = vmatpush1.bf16.msra.mxu0 %v566
      %587 = vmatprep.subr.bf16.mxu0 0
      %588 = vmatpush1.bf16.msra.mxu0 %v567
      %589 = vmatprep.subr.bf16.mxu0 0
      %590 = vmatpush1.bf16.msra.mxu0 %v568
      %591 = vmatprep.subr.bf16.mxu0 0
      %592 = vmatpush1.bf16.msra.mxu0 %v569
      %593 = vmatprep.subr.bf16.mxu0 0
      %594 = vmatpush1.bf16.msra.mxu0 %v570
      %595 = vmatprep.subr.bf16.mxu0 0
      %596 = vmatpush1.bf16.msra.mxu0 0
      %597 = vmatprep.subr.bf16.mxu0 0
      %598 = vmatpush1.bf16.msra.mxu0 0
      %599 = vmatprep.subr.bf16.mxu0 0
      %600 = vmatpush1.bf16.msra.mxu0 0
      %601 = vmatprep.subr.bf16.mxu0 0
      %602 = vmatpush1.bf16.msra.mxu0 0
      %603 = vmatprep.subr.bf16.mxu0 0
      %604 = vmatpush1.bf16.msra.mxu0 0
      %605 = vmatprep.subr.bf16.mxu0 0
      %606 = vmatpush1.bf16.msra.mxu0 0
      %607 = vmatprep.subr.bf16.mxu0 0
      %608 = vmatpush1.bf16.msra.mxu0 0
      %609 = vmatprep.subr.bf16.mxu0 0
      %610 = vmatpush1.bf16.msra.mxu0 0
      %611 = vmatprep.mubr.bf16.mxu0 0
      %612 = vmatmul.mubr.bf16.gmra.mrb[0].mxu0 %v523
      %v613 = vpop.f32.mrb[0].mxu0
      %v614 = vadd.f32 %v529, %v613
      %v615 = vpop.f32.mrb[0].mxu0
      %v616 = vpop.f32.mrb[0].mxu0
      %v617 = vpop.f32.mrb[0].mxu0
      %618 = vdwg.mxu0
      %v619 = vld [vmem:[%s7] sm:$0xf]
      %v620 = vld [vmem:[%s7 + $0x4] sm:$0xf]
      %v621 = vld [vmem:[%s7 + $0x8] sm:$0xf]
      %v622 = vld [vmem:[%s7 + $0xc] sm:$0xf]
      %v623 = vld [vmem:[%s7 + $0x10] sm:$0xf]
      %v624 = vld [vmem:[%s7 + $0x14] sm:$0xf]
      %v625 = vld [vmem:[%s7 + $0x18] sm:$0xf]
      %v626 = vld [vmem:[%s7 + $0x1c] sm:$0xf]
      %v627 = vld [vmem:[%s7 + $0x20] sm:$0xf]
      %v628 = vld [vmem:[%s7 + $0x24] sm:$0xf]
      %v629 = vld [vmem:[%s7 + $0x28] sm:$0xf]
      %v630 = vld [vmem:[%s7 + $0x2c] sm:$0xf]
      %v631 = vld [vmem:[%s7 + $0x30] sm:$0xf]
      %v632 = vld [vmem:[%s7 + $0x34] sm:$0xf]
      %v633 = vld [vmem:[%s7 + $0x38] sm:$0xf]
      %v634 = vld [vmem:[%s7 + $0x3c] sm:$0xf]
      %v635 = vld [vmem:[%s8] sm:$0x1]
      %v637 = vlaneseq
      %v638 = vshrl.u32 %v637, 7
      %v639 = vsub.s32 0, %v638
      %v640 = vrot.slane %v635, %v639
      %v658 = vunpack.c.l.b16 %v619
      %v659 = vunpack.c.l.b16 %v620
      %v660 = vunpack.c.l.b16 %v621
      %v661 = vunpack.c.l.b16 %v622
      %v662 = vunpack.c.l.b16 %v623
      %v663 = vunpack.c.l.b16 %v624
      %v664 = vunpack.c.l.b16 %v625
      %v665 = vunpack.c.l.b16 %v626
      %v666 = vunpack.c.l.b16 %v627
      %v667 = vunpack.c.l.b16 %v628
      %v668 = vunpack.c.l.b16 %v629
      %v669 = vunpack.c.l.b16 %v630
      %v670 = vunpack.c.l.b16 %v631
      %v671 = vunpack.c.l.b16 %v632
      %v672 = vunpack.c.l.b16 %v633
      %v673 = vunpack.c.l.b16 %v634
      %v674 = vpack.c.b16 %v659, %v658
      %v675 = vpack.c.b16 %v661, %v660
      %v676 = vpack.c.b16 %v663, %v662
      %v677 = vpack.c.b16 %v665, %v664
      %v678 = vpack.c.b16 %v667, %v666
      %v679 = vpack.c.b16 %v669, %v668
      %v680 = vpack.c.b16 %v671, %v670
      %v681 = vpack.c.b16 %v673, %v672
      %690 = vmatprep.subr.bf16.mxu0 0
      %691 = vmatpush1.bf16.msra.mxu0 %v674
      %692 = vmatprep.subr.bf16.mxu0 0
      %693 = vmatpush1.bf16.msra.mxu0 %v675
      %694 = vmatprep.subr.bf16.mxu0 0
      %695 = vmatpush1.bf16.msra.mxu0 %v676
      %696 = vmatprep.subr.bf16.mxu0 0
      %697 = vmatpush1.bf16.msra.mxu0 %v677
      %698 = vmatprep.subr.bf16.mxu0 0
      %699 = vmatpush1.bf16.msra.mxu0 %v678
      %700 = vmatprep.subr.bf16.mxu0 0
      %701 = vmatpush1.bf16.msra.mxu0 %v679
      %702 = vmatprep.subr.bf16.mxu0 0
      %703 = vmatpush1.bf16.msra.mxu0 %v680
      %704 = vmatprep.subr.bf16.mxu0 0
      %705 = vmatpush1.bf16.msra.mxu0 %v681
      %706 = vmatprep.subr.bf16.mxu0 0
      %707 = vmatpush1.bf16.msra.mxu0 0
      %708 = vmatprep.subr.bf16.mxu0 0
      %709 = vmatpush1.bf16.msra.mxu0 0
      %710 = vmatprep.subr.bf16.mxu0 0
      %711 = vmatpush1.bf16.msra.mxu0 0
      %712 = vmatprep.subr.bf16.mxu0 0
      %713 = vmatpush1.bf16.msra.mxu0 0
      %714 = vmatprep.subr.bf16.mxu0 0
      %715 = vmatpush1.bf16.msra.mxu0 0
      %716 = vmatprep.subr.bf16.mxu0 0
      %717 = vmatpush1.bf16.msra.mxu0 0
      %718 = vmatprep.subr.bf16.mxu0 0
      %719 = vmatpush1.bf16.msra.mxu0 0
      %720 = vmatprep.subr.bf16.mxu0 0
      %721 = vmatpush1.bf16.msra.mxu0 0
      %722 = vmatprep.mubr.bf16.mxu0 0
      %723 = vmatmul.mubr.bf16.gmra.mrb[0].mxu0 %v523
      %v724 = vpop.f32.mrb[0].mxu0
      %v725 = vadd.f32 %v640, %v724
      %v726 = vpop.f32.mrb[0].mxu0
      %v727 = vpop.f32.mrb[0].mxu0
      %v728 = vpop.f32.mrb[0].mxu0
      %729 = vdwg.mxu0
      %v730 = vld [vmem:[%s9] sm:$0xf]
      %v731 = vld [vmem:[%s9 + $0x4] sm:$0xf]
      %v732 = vld [vmem:[%s9 + $0x8] sm:$0xf]
      %v733 = vld [vmem:[%s9 + $0xc] sm:$0xf]
      %v734 = vld [vmem:[%s9 + $0x10] sm:$0xf]
      %v735 = vld [vmem:[%s9 + $0x14] sm:$0xf]
      %v736 = vld [vmem:[%s9 + $0x18] sm:$0xf]
      %v737 = vld [vmem:[%s9 + $0x1c] sm:$0xf]
      %v738 = vld [vmem:[%s9 + $0x20] sm:$0xf]
      %v739 = vld [vmem:[%s9 + $0x24] sm:$0xf]
      %v740 = vld [vmem:[%s9 + $0x28] sm:$0xf]
      %v741 = vld [vmem:[%s9 + $0x2c] sm:$0xf]
      %v742 = vld [vmem:[%s9 + $0x30] sm:$0xf]
      %v743 = vld [vmem:[%s9 + $0x34] sm:$0xf]
      %v744 = vld [vmem:[%s9 + $0x38] sm:$0xf]
      %v745 = vld [vmem:[%s9 + $0x3c] sm:$0xf]
      %v746 = vld [vmem:[%s10] sm:$0x1]
      %v748 = vlaneseq
      %v749 = vshrl.u32 %v748, 7
      %v750 = vsub.s32 0, %v749
      %v751 = vrot.slane %v746, %v750
      %v769 = vunpack.c.l.b16 %v730
      %v770 = vunpack.c.l.b16 %v731
      %v771 = vunpack.c.l.b16 %v732
      %v772 = vunpack.c.l.b16 %v733
      %v773 = vunpack.c.l.b16 %v734
      %v774 = vunpack.c.l.b16 %v735
      %v775 = vunpack.c.l.b16 %v736
      %v776 = vunpack.c.l.b16 %v737
      %v777 = vunpack.c.l.b16 %v738
      %v778 = vunpack.c.l.b16 %v739
      %v779 = vunpack.c.l.b16 %v740
      %v780 = vunpack.c.l.b16 %v741
      %v781 = vunpack.c.l.b16 %v742
      %v782 = vunpack.c.l.b16 %v743
      %v783 = vunpack.c.l.b16 %v744
      %v784 = vunpack.c.l.b16 %v745
      %v785 = vpack.c.b16 %v770, %v769
      %v786 = vpack.c.b16 %v772, %v771
      %v787 = vpack.c.b16 %v774, %v773
      %v788 = vpack.c.b16 %v776, %v775
      %v789 = vpack.c.b16 %v778, %v777
      %v790 = vpack.c.b16 %v780, %v779
      %v791 = vpack.c.b16 %v782, %v781
      %v792 = vpack.c.b16 %v784, %v783
      %801 = vmatprep.subr.bf16.mxu0 0
      %802 = vmatpush1.bf16.msra.mxu0 %v785
      %803 = vmatprep.subr.bf16.mxu0 0
      %804 = vmatpush1.bf16.msra.mxu0 %v786
      %805 = vmatprep.subr.bf16.mxu0 0
      %806 = vmatpush1.bf16.msra.mxu0 %v787
      %807 = vmatprep.subr.bf16.mxu0 0
      %808 = vmatpush1.bf16.msra.mxu0 %v788
      %809 = vmatprep.subr.bf16.mxu0 0
      %810 = vmatpush1.bf16.msra.mxu0 %v789
      %811 = vmatprep.subr.bf16.mxu0 0
      %812 = vmatpush1.bf16.msra.mxu0 %v790
      %813 = vmatprep.subr.bf16.mxu0 0
      %814 = vmatpush1.bf16.msra.mxu0 %v791
      %815 = vmatprep.subr.bf16.mxu0 0
      %816 = vmatpush1.bf16.msra.mxu0 %v792
      %817 = vmatprep.subr.bf16.mxu0 0
      %818 = vmatpush1.bf16.msra.mxu0 0
      %819 = vmatprep.subr.bf16.mxu0 0
      %820 = vmatpush1.bf16.msra.mxu0 0
      %821 = vmatprep.subr.bf16.mxu0 0
      %822 = vmatpush1.bf16.msra.mxu0 0
      %823 = vmatprep.subr.bf16.mxu0 0
      %824 = vmatpush1.bf16.msra.mxu0 0
      %825 = vmatprep.subr.bf16.mxu0 0
      %826 = vmatpush1.bf16.msra.mxu0 0
      %827 = vmatprep.subr.bf16.mxu0 0
      %828 = vmatpush1.bf16.msra.mxu0 0
      %829 = vmatprep.subr.bf16.mxu0 0
      %830 = vmatpush1.bf16.msra.mxu0 0
      %831 = vmatprep.subr.bf16.mxu0 0
      %832 = vmatpush1.bf16.msra.mxu0 0
      %833 = vmatprep.mubr.bf16.mxu0 0
      %834 = vmatmul.mubr.bf16.gmra.mrb[0].mxu0 %v523
      %v835 = vpop.f32.mrb[0].mxu0
      %v836 = vadd.f32 %v751, %v835
      %v837 = vpop.f32.mrb[0].mxu0
      %v838 = vpop.f32.mrb[0].mxu0
      %v839 = vpop.f32.mrb[0].mxu0
      %840 = vdwg.mxu0
      %v841 = vld [vmem:[%s465] sm:$0xff]
      %v842 = vpack.c.bf16 %v614, %v614
      %v843 = vpack.c.bf16 %v725, %v725
      %v844 = vpack.c.bf16 %v836, %v836
      %vm845 = vcmask 261120
      %v847 = vsel %vm845, %v842, 0
      %v850 = vsel %vm845, %v843, 0
      %852 = vmatprep.subr.bf16.mxu0 0
      %853 = vmatpush1.bf16.xpose.msra.mxu0 %v850
      %854 = vmatprep.subr.bf16.mxu0 0
      %855 = vmatpush1.bf16.xpose.msra.mxu0 0
      %856 = vmatprep.subr.bf16.mxu0 0
      %857 = vmatpush1.bf16.xpose.msra.mxu0 0
      %858 = vmatprep.subr.bf16.mxu0 0
      %859 = vmatpush1.bf16.xpose.msra.mxu0 0
      %860 = vmatprep.subr.bf16.mxu0 0
      %861 = vmatpush1.bf16.xpose.msra.mxu0 0
      %862 = vmatprep.subr.bf16.mxu0 0
      %863 = vmatpush1.bf16.xpose.msra.mxu0 0
      %864 = vmatprep.subr.bf16.mxu0 0
      %865 = vmatpush1.bf16.xpose.msra.mxu0 0
      %866 = vmatprep.subr.bf16.mxu0 0
      %867 = vmatpush1.bf16.xpose.msra.mxu0 0
      %868 = vmatprep.subr.bf16.mxu0 0
      %869 = vmatpush1.bf16.xpose.msra.mxu0 0
      %870 = vmatprep.subr.bf16.mxu0 0
      %871 = vmatpush1.bf16.xpose.msra.mxu0 0
      %872 = vmatprep.subr.bf16.mxu0 0
      %873 = vmatpush1.bf16.xpose.msra.mxu0 0
      %874 = vmatprep.subr.bf16.mxu0 0
      %875 = vmatpush1.bf16.xpose.msra.mxu0 0
      %876 = vmatprep.subr.bf16.mxu0 0
      %877 = vmatpush1.bf16.xpose.msra.mxu0 0
      %878 = vmatprep.subr.bf16.mxu0 0
      %879 = vmatpush1.bf16.xpose.msra.mxu0 0
      %880 = vmatprep.subr.bf16.mxu0 0
      %881 = vmatpush1.bf16.xpose.msra.mxu0 0
      %882 = vmatprep.subr.bf16.mxu0 0
      %883 = vmatpush1.bf16.xpose.msra.mxu0 0
      %884 = vmatprep.mubr.bf16.mxu0 0
      %885 = vmatmul.mubr.bf16.gmra.mrb[0].mxu0 %v847
      %v886 = vpop.f32.mrb[0].mxu0
      %v887 = vadd.f32 0.0, %v886
      %v888 = vpop.f32.mrb[0].mxu0
      %v889 = vpop.f32.mrb[0].mxu0
      %v890 = vpop.f32.mrb[0].mxu0
      %891 = vdwg.mxu0
      %v892 = vmul.f32 %v887, 0.17677669
      %vm893 = vcmp.eq.f32.partialorder %v841, 0.0
      %v894 = vsel %vm893, -1e+09, %v892
      %vm895 = vcmask 64512
      %v896 = vsel %vm895, %v894, -inf
      %897 = vmax.xlane.f32.xlu0 %v896
      %v898 = vpop.xlane.xlu0 %897
      %v899 = vsub.f32 %v894, %v898
      %v900 = vmul.f32 %v899, 1.442695
      %v901 = vpow.pop %v900
      %v902 = vsel %vm895, %v901, 0.0
      %903 = vadd.xlane.f32.xlu0 %v902
      %v904 = vpop.xlane.xlu0 %903
      %v905 = vrcp.pop %v904
      %v906 = vmul.f32 %v901, %v905
      %v907 = vpack.c.bf16 %v906, %v906
      %v909 = vsel %vm895, %v907, 0
      %vm911 = vcmask 1043456
      %v913 = vsel %vm911, %v844, 0
      %915 = vmatprep.subr.bf16.mxu0 0
      %916 = vmatpush1.bf16.msra.mxu0 %v913
      %917 = vmatprep.subr.bf16.mxu0 0
      %918 = vmatpush1.bf16.msra.mxu0 0
      %919 = vmatprep.subr.bf16.mxu0 0
      %920 = vmatpush1.bf16.msra.mxu0 0
      %921 = vmatprep.subr.bf16.mxu0 0
      %922 = vmatpush1.bf16.msra.mxu0 0
      %923 = vmatprep.subr.bf16.mxu0 0
      %924 = vmatpush1.bf16.msra.mxu0 0
      %925 = vmatprep.subr.bf16.mxu0 0
      %926 = vmatpush1.bf16.msra.mxu0 0
      %927 = vmatprep.subr.bf16.mxu0 0
      %928 = vmatpush1.bf16.msra.mxu0 0
      %929 = vmatprep.subr.bf16.mxu0 0
      %930 = vmatpush1.bf16.msra.mxu0 0
      %931 = vmatprep.subr.bf16.mxu0 0
      %932 = vmatpush1.bf16.msra.mxu0 0
      %933 = vmatprep.subr.bf16.mxu0 0
      %934 = vmatpush1.bf16.msra.mxu0 0
      %935 = vmatprep.subr.bf16.mxu0 0
      %936 = vmatpush1.bf16.msra.mxu0 0
      %937 = vmatprep.subr.bf16.mxu0 0
      %938 = vmatpush1.bf16.msra.mxu0 0
      %939 = vmatprep.subr.bf16.mxu0 0
      %940 = vmatpush1.bf16.msra.mxu0 0
      %941 = vmatprep.subr.bf16.mxu0 0
      %942 = vmatpush1.bf16.msra.mxu0 0
      %943 = vmatprep.subr.bf16.mxu0 0
      %944 = vmatpush1.bf16.msra.mxu0 0
      %945 = vmatprep.subr.bf16.mxu0 0
      %946 = vmatpush1.bf16.msra.mxu0 0
      %947 = vmatprep.mubr.bf16.mxu0 0
      %948 = vmatmul.mubr.bf16.gmra.mrb[0].mxu0 %v909
      %v949 = vpop.f32.mrb[0].mxu0
      %v950 = vadd.f32 0.0, %v949
      %v951 = vpop.f32.mrb[0].mxu0
      %v952 = vpop.f32.mrb[0].mxu0
      %v953 = vpop.f32.mrb[0].mxu0
      %954 = vdwg.mxu0
      %956 = vrot.lane.b32.xlu0 %v842, 96
      %v957 = vpop.permute.xlu0 %956
      %959 = vrot.lane.b32.xlu0 %v843, 96
      %v960 = vpop.permute.xlu0 %959
      %v962 = vsel %vm845, %v957, 0
      %v965 = vsel %vm845, %v960, 0
      %967 = vmatprep.subr.bf16.mxu0 0
      %968 = vmatpush1.bf16.xpose.msra.mxu0 %v965
      %969 = vmatprep.subr.bf16.mxu0 0
      %970 = vmatpush1.bf16.xpose.msra.mxu0 0
      %971 = vmatprep.subr.bf16.mxu0 0
      %972 = vmatpush1.bf16.xpose.msra.mxu0 0
      %973 = vmatprep.subr.bf16.mxu0 0
      %974 = vmatpush1.bf16.xpose.msra.mxu0 0
      %975 = vmatprep.subr.bf16.mxu0 0
      %976 = vmatpush1.bf16.xpose.msra.mxu0 0
      %977 = vmatprep.subr.bf16.mxu0 0
      %978 = vmatpush1.bf16.xpose.msra.mxu0 0
      %979 = vmatprep.subr.bf16.mxu0 0
      %980 = vmatpush1.bf16.xpose.msra.mxu0 0
      %981 = vmatprep.subr.bf16.mxu0 0
      %982 = vmatpush1.bf16.xpose.msra.mxu0 0
      %983 = vmatprep.subr.bf16.mxu0 0
      %984 = vmatpush1.bf16.xpose.msra.mxu0 0
      %985 = vmatprep.subr.bf16.mxu0 0
      %986 = vmatpush1.bf16.xpose.msra.mxu0 0
      %987 = vmatprep.subr.bf16.mxu0 0
      %988 = vmatpush1.bf16.xpose.msra.mxu0 0
      %989 = vmatprep.subr.bf16.mxu0 0
      %990 = vmatpush1.bf16.xpose.msra.mxu0 0
      %991 = vmatprep.subr.bf16.mxu0 0
      %992 = vmatpush1.bf16.xpose.msra.mxu0 0
      %993 = vmatprep.subr.bf16.mxu0 0
      %994 = vmatpush1.bf16.xpose.msra.mxu0 0
      %995 = vmatprep.subr.bf16.mxu0 0
      %996 = vmatpush1.bf16.xpose.msra.mxu0 0
      %997 = vmatprep.subr.bf16.mxu0 0
      %998 = vmatpush1.bf16.xpose.msra.mxu0 0
      %999 = vmatprep.mubr.bf16.mxu0 0
      %1000 = vmatmul.mubr.bf16.gmra.mrb[0].mxu0 %v962
      %v1001 = vpop.f32.mrb[0].mxu0
      %v1002 = vadd.f32 0.0, %v1001
      %v1003 = vpop.f32.mrb[0].mxu0
      %v1004 = vpop.f32.mrb[0].mxu0
      %v1005 = vpop.f32.mrb[0].mxu0
      %1006 = vdwg.mxu0
      %v1007 = vmul.f32 %v1002, 0.17677669
      %v1008 = vsel %vm893, -1e+09, %v1007
      %v1009 = vsel %vm895, %v1008, -inf
      %1010 = vmax.xlane.f32.xlu0 %v1009
      %v1011 = vpop.xlane.xlu0 %1010
      %v1012 = vsub.f32 %v1008, %v1011
      %v1013 = vmul.f32 %v1012, 1.442695
      %v1014 = vpow.pop %v1013
      %v1015 = vsel %vm895, %v1014, 0.0
      %1016 = vadd.xlane.f32.xlu0 %v1015
      %v1017 = vpop.xlane.xlu0 %1016
      %v1018 = vrcp.pop %v1017
      %v1019 = vmul.f32 %v1014, %v1018
      %v1020 = vpack.c.bf16 %v1019, %v1019
      %1022 = vrot.lane.b32.xlu0 %v844, 96
      %v1023 = vpop.permute.xlu0 %1022
      %v1025 = vsel %vm895, %v1020, 0
      %v1028 = vsel %vm911, %v1023, 0
      %1030 = vmatprep.subr.bf16.mxu0 0
      %1031 = vmatpush1.bf16.msra.mxu0 %v1028
      %1032 = vmatprep.subr.bf16.mxu0 0
      %1033 = vmatpush1.bf16.msra.mxu0 0
      %1034 = vmatprep.subr.bf16.mxu0 0
      %1035 = vmatpush1.bf16.msra.mxu0 0
      %1036 = vmatprep.subr.bf16.mxu0 0
      %1037 = vmatpush1.bf16.msra.mxu0 0
      %1038 = vmatprep.subr.bf16.mxu0 0
      %1039 = vmatpush1.bf16.msra.mxu0 0
      %1040 = vmatprep.subr.bf16.mxu0 0
      %1041 = vmatpush1.bf16.msra.mxu0 0
      %1042 = vmatprep.subr.bf16.mxu0 0
      %1043 = vmatpush1.bf16.msra.mxu0 0
      %1044 = vmatprep.subr.bf16.mxu0 0
      %1045 = vmatpush1.bf16.msra.mxu0 0
      %1046 = vmatprep.subr.bf16.mxu0 0
      %1047 = vmatpush1.bf16.msra.mxu0 0
      %1048 = vmatprep.subr.bf16.mxu0 0
      %1049 = vmatpush1.bf16.msra.mxu0 0
      %1050 = vmatprep.subr.bf16.mxu0 0
      %1051 = vmatpush1.bf16.msra.mxu0 0
      %1052 = vmatprep.subr.bf16.mxu0 0
      %1053 = vmatpush1.bf16.msra.mxu0 0
      %1054 = vmatprep.subr.bf16.mxu0 0
      %1055 = vmatpush1.bf16.msra.mxu0 0
      %1056 = vmatprep.subr.bf16.mxu0 0
      %1057 = vmatpush1.bf16.msra.mxu0 0
      %1058 = vmatprep.subr.bf16.mxu0 0
      %1059 = vmatpush1.bf16.msra.mxu0 0
      %1060 = vmatprep.subr.bf16.mxu0 0
      %1061 = vmatpush1.bf16.msra.mxu0 0
      %1062 = vmatprep.mubr.bf16.mxu0 0
      %1063 = vmatmul.mubr.bf16.gmra.mrb[0].mxu0 %v1025
      %v1064 = vpop.f32.mrb[0].mxu0
      %v1065 = vadd.f32 0.0, %v1064
      %v1066 = vpop.f32.mrb[0].mxu0
      %v1067 = vpop.f32.mrb[0].mxu0
      %v1068 = vpop.f32.mrb[0].mxu0
      %1069 = vdwg.mxu0
      %1070 = vrot.lane.b32.xlu0 %v842, 64
      %v1071 = vpop.permute.xlu0 %1070
      %1072 = vrot.lane.b32.xlu0 %v843, 64
      %v1073 = vpop.permute.xlu0 %1072
      %v1075 = vsel %vm845, %v1071, 0
      %v1078 = vsel %vm845, %v1073, 0
      %1080 = vmatprep.subr.bf16.mxu0 0
      %1081 = vmatpush1.bf16.xpose.msra.mxu0 %v1078
      %1082 = vmatprep.subr.bf16.mxu0 0
      %1083 = vmatpush1.bf16.xpose.msra.mxu0 0
      %1084 = vmatprep.subr.bf16.mxu0 0
      %1085 = vmatpush1.bf16.xpose.msra.mxu0 0
      %1086 = vmatprep.subr.bf16.mxu0 0
      %1087 = vmatpush1.bf16.xpose.msra.mxu0 0
      %1088 = vmatprep.subr.bf16.mxu0 0
      %1089 = vmatpush1.bf16.xpose.msra.mxu0 0
      %1090 = vmatprep.subr.bf16.mxu0 0
      %1091 = vmatpush1.bf16.xpose.msra.mxu0 0
      %1092 = vmatprep.subr.bf16.mxu0 0
      %1093 = vmatpush1.bf16.xpose.msra.mxu0 0
      %1094 = vmatprep.subr.bf16.mxu0 0
      %1095 = vmatpush1.bf16.xpose.msra.mxu0 0
      %1096 = vmatprep.subr.bf16.mxu0 0
      %1097 = vmatpush1.bf16.xpose.msra.mxu0 0
      %1098 = vmatprep.subr.bf16.mxu0 0
      %1099 = vmatpush1.bf16.xpose.msra.mxu0 0
      %1100 = vmatprep.subr.bf16.mxu0 0
      %1101 = vmatpush1.bf16.xpose.msra.mxu0 0
      %1102 = vmatprep.subr.bf16.mxu0 0
      %1103 = vmatpush1.bf16.xpose.msra.mxu0 0
      %1104 = vmatprep.subr.bf16.mxu0 0
      %1105 = vmatpush1.bf16.xpose.msra.mxu0 0
      %1106 = vmatprep.subr.bf16.mxu0 0
      %1107 = vmatpush1.bf16.xpose.msra.mxu0 0
      %1108 = vmatprep.subr.bf16.mxu0 0
      %1109 = vmatpush1.bf16.xpose.msra.mxu0 0
      %1110 = vmatprep.subr.bf16.mxu0 0
      %1111 = vmatpush1.bf16.xpose.msra.mxu0 0
      %1112 = vmatprep.mubr.bf16.mxu0 0
      %1113 = vmatmul.mubr.bf16.gmra.mrb[0].mxu0 %v1075
      %v1114 = vpop.f32.mrb[0].mxu0
      %v1115 = vadd.f32 0.0, %v1114
      %v1116 = vpop.f32.mrb[0].mxu0
      %v1117 = vpop.f32.mrb[0].mxu0
      %v1118 = vpop.f32.mrb[0].mxu0
      %1119 = vdwg.mxu0
      %v1120 = vmul.f32 %v1115, 0.17677669
      %v1121 = vsel %vm893, -1e+09, %v1120
      %v1122 = vsel %vm895, %v1121, -inf
      %1123 = vmax.xlane.f32.xlu0 %v1122
      %v1124 = vpop.xlane.xlu0 %1123
      %v1125 = vsub.f32 %v1121, %v1124
      %v1126 = vmul.f32 %v1125, 1.442695
      %v1127 = vpow.pop %v1126
      %v1128 = vsel %vm895, %v1127, 0.0
      %1129 = vadd.xlane.f32.xlu0 %v1128
      %v1130 = vpop.xlane.xlu0 %1129
      %v1131 = vrcp.pop %v1130
      %v1132 = vmul.f32 %v1127, %v1131
      %v1133 = vpack.c.bf16 %v1132, %v1132
      %1134 = vrot.lane.b32.xlu0 %v844, 64
      %v1135 = vpop.permute.xlu0 %1134
      %v1137 = vsel %vm895, %v1133, 0
      %v1140 = vsel %vm911, %v1135, 0
      %1142 = vmatprep.subr.bf16.mxu0 0
      %1143 = vmatpush1.bf16.msra.mxu0 %v1140
      %1144 = vmatprep.subr.bf16.mxu0 0
      %1145 = vmatpush1.bf16.msra.mxu0 0
      %1146 = vmatprep.subr.bf16.mxu0 0
      %1147 = vmatpush1.bf16.msra.mxu0 0
      %1148 = vmatprep.subr.bf16.mxu0 0
      %1149 = vmatpush1.bf16.msra.mxu0 0
      %1150 = vmatprep.subr.bf16.mxu0 0
      %1151 = vmatpush1.bf16.msra.mxu0 0
      %1152 = vmatprep.subr.bf16.mxu0 0
      %1153 = vmatpush1.bf16.msra.mxu0 0
      %1154 = vmatprep.subr.bf16.mxu0 0
      %1155 = vmatpush1.bf16.msra.mxu0 0
      %1156 = vmatprep.subr.bf16.mxu0 0
      %1157 = vmatpush1.bf16.msra.mxu0 0
      %1158 = vmatprep.subr.bf16.mxu0 0
      %1159 = vmatpush1.bf16.msra.mxu0 0
      %1160 = vmatprep.subr.bf16.mxu0 0
      %1161 = vmatpush1.bf16.msra.mxu0 0
      %1162 = vmatprep.subr.bf16.mxu0 0
      %1163 = vmatpush1.bf16.msra.mxu0 0
      %1164 = vmatprep.subr.bf16.mxu0 0
      %1165 = vmatpush1.bf16.msra.mxu0 0
      %1166 = vmatprep.subr.bf16.mxu0 0
      %1167 = vmatpush1.bf16.msra.mxu0 0
      %1168 = vmatprep.subr.bf16.mxu0 0
      %1169 = vmatpush1.bf16.msra.mxu0 0
      %1170 = vmatprep.subr.bf16.mxu0 0
      %1171 = vmatpush1.bf16.msra.mxu0 0
      %1172 = vmatprep.subr.bf16.mxu0 0
      %1173 = vmatpush1.bf16.msra.mxu0 0
      %1174 = vmatprep.mubr.bf16.mxu0 0
      %1175 = vmatmul.mubr.bf16.gmra.mrb[0].mxu0 %v1137
      %v1176 = vpop.f32.mrb[0].mxu0
      %v1177 = vadd.f32 0.0, %v1176
      %v1178 = vpop.f32.mrb[0].mxu0
      %v1179 = vpop.f32.mrb[0].mxu0
      %v1180 = vpop.f32.mrb[0].mxu0
      %1181 = vdwg.mxu0
      %1182 = vrot.lane.b32.xlu0 %v842, 32
      %v1183 = vpop.permute.xlu0 %1182
      %1184 = vrot.lane.b32.xlu0 %v843, 32
      %v1185 = vpop.permute.xlu0 %1184
      %v1187 = vsel %vm845, %v1183, 0
      %v1190 = vsel %vm845, %v1185, 0
      %1192 = vmatprep.subr.bf16.mxu0 0
      %1193 = vmatpush1.bf16.xpose.msra.mxu0 %v1190
      %1194 = vmatprep.subr.bf16.mxu0 0
      %1195 = vmatpush1.bf16.xpose.msra.mxu0 0
      %1196 = vmatprep.subr.bf16.mxu0 0
      %1197 = vmatpush1.bf16.xpose.msra.mxu0 0
      %1198 = vmatprep.subr.bf16.mxu0 0
      %1199 = vmatpush1.bf16.xpose.msra.mxu0 0
      %1200 = vmatprep.subr.bf16.mxu0 0
      %1201 = vmatpush1.bf16.xpose.msra.mxu0 0
      %1202 = vmatprep.subr.bf16.mxu0 0
      %1203 = vmatpush1.bf16.xpose.msra.mxu0 0
      %1204 = vmatprep.subr.bf16.mxu0 0
      %1205 = vmatpush1.bf16.xpose.msra.mxu0 0
      %1206 = vmatprep.subr.bf16.mxu0 0
      %1207 = vmatpush1.bf16.xpose.msra.mxu0 0
      %1208 = vmatprep.subr.bf16.mxu0 0
      %1209 = vmatpush1.bf16.xpose.msra.mxu0 0
      %1210 = vmatprep.subr.bf16.mxu0 0
      %1211 = vmatpush1.bf16.xpose.msra.mxu0 0
      %1212 = vmatprep.subr.bf16.mxu0 0
      %1213 = vmatpush1.bf16.xpose.msra.mxu0 0
      %1214 = vmatprep.subr.bf16.mxu0 0
      %1215 = vmatpush1.bf16.xpose.msra.mxu0 0
      %1216 = vmatprep.subr.bf16.mxu0 0
      %1217 = vmatpush1.bf16.xpose.msra.mxu0 0
      %1218 = vmatprep.subr.bf16.mxu0 0
      %1219 = vmatpush1.bf16.xpose.msra.mxu0 0
      %1220 = vmatprep.subr.bf16.mxu0 0
      %1221 = vmatpush1.bf16.xpose.msra.mxu0 0
      %1222 = vmatprep.subr.bf16.mxu0 0
      %1223 = vmatpush1.bf16.xpose.msra.mxu0 0
      %1224 = vmatprep.mubr.bf16.mxu0 0
      %1225 = vmatmul.mubr.bf16.gmra.mrb[0].mxu0 %v1187
      %v1226 = vpop.f32.mrb[0].mxu0
      %v1227 = vadd.f32 0.0, %v1226
      %v1228 = vpop.f32.mrb[0].mxu0
      %v1229 = vpop.f32.mrb[0].mxu0
      %v1230 = vpop.f32.mrb[0].mxu0
      %1231 = vdwg.mxu0
      %v1232 = vmul.f32 %v1227, 0.17677669
      %v1233 = vsel %vm893, -1e+09, %v1232
      %v1234 = vsel %vm895, %v1233, -inf
      %1235 = vmax.xlane.f32.xlu0 %v1234
      %v1236 = vpop.xlane.xlu0 %1235
      %v1237 = vsub.f32 %v1233, %v1236
      %v1238 = vmul.f32 %v1237, 1.442695
      %v1239 = vpow.pop %v1238
      %v1240 = vsel %vm895, %v1239, 0.0
      %1241 = vadd.xlane.f32.xlu0 %v1240
      %v1242 = vpop.xlane.xlu0 %1241
      %v1243 = vrcp.pop %v1242
      %v1244 = vmul.f32 %v1239, %v1243
      %v1245 = vpack.c.bf16 %v1244, %v1244
      %1246 = vrot.lane.b32.xlu0 %v844, 32
      %v1247 = vpop.permute.xlu0 %1246
      %v1249 = vsel %vm895, %v1245, 0
      %v1252 = vsel %vm911, %v1247, 0
      %1254 = vmatprep.subr.bf16.mxu0 0
      %1255 = vmatpush1.bf16.msra.mxu0 %v1252
      %1256 = vmatprep.subr.bf16.mxu0 0
      %1257 = vmatpush1.bf16.msra.mxu0 0
      %1258 = vmatprep.subr.bf16.mxu0 0
      %1259 = vmatpush1.bf16.msra.mxu0 0
      %1260 = vmatprep.subr.bf16.mxu0 0
      %1261 = vmatpush1.bf16.msra.mxu0 0
      %1262 = vmatprep.subr.bf16.mxu0 0
      %1263 = vmatpush1.bf16.msra.mxu0 0
      %1264 = vmatprep.subr.bf16.mxu0 0
      %1265 = vmatpush1.bf16.msra.mxu0 0
      %1266 = vmatprep.subr.bf16.mxu0 0
      %1267 = vmatpush1.bf16.msra.mxu0 0
      %1268 = vmatprep.subr.bf16.mxu0 0
      %1269 = vmatpush1.bf16.msra.mxu0 0
      %1270 = vmatprep.subr.bf16.mxu0 0
      %1271 = vmatpush1.bf16.msra.mxu0 0
      %1272 = vmatprep.subr.bf16.mxu0 0
      %1273 = vmatpush1.bf16.msra.mxu0 0
      %1274 = vmatprep.subr.bf16.mxu0 0
      %1275 = vmatpush1.bf16.msra.mxu0 0
      %1276 = vmatprep.subr.bf16.mxu0 0
      %1277 = vmatpush1.bf16.msra.mxu0 0
      %1278 = vmatprep.subr.bf16.mxu0 0
      %1279 = vmatpush1.bf16.msra.mxu0 0
      %1280 = vmatprep.subr.bf16.mxu0 0
      %1281 = vmatpush1.bf16.msra.mxu0 0
      %1282 = vmatprep.subr.bf16.mxu0 0
      %1283 = vmatpush1.bf16.msra.mxu0 0
      %1284 = vmatprep.subr.bf16.mxu0 0
      %1285 = vmatpush1.bf16.msra.mxu0 0
      %1286 = vmatprep.mubr.bf16.mxu0 0
      %1287 = vmatmul.mubr.bf16.gmra.mrb[0].mxu0 %v1249
      %v1288 = vpop.f32.mrb[0].mxu0
      %v1289 = vadd.f32 0.0, %v1288
      %v1290 = vpop.f32.mrb[0].mxu0
      %v1291 = vpop.f32.mrb[0].mxu0
      %v1292 = vpop.f32.mrb[0].mxu0
      %1293 = vdwg.mxu0
      %1295 = vrot.lane.b32.xlu0 %v1065, 32
      %v1296 = vpop.permute.xlu0 %1295
      %1299 = vrot.lane.b32.xlu0 %v1177, 64
      %v1300 = vpop.permute.xlu0 %1299
      %1303 = vrot.lane.b32.xlu0 %v1289, 96
      %v1304 = vpop.permute.xlu0 %1303
      %v1306 = vsel %vm845, %v950, %v1296
      %vm1307 = vcmask 523264
      %v1308 = vsel %vm1307, %v1306, %v1300
      %vm1309 = vcmask 785408
      %v1310 = vsel %vm1309, %v1308, %v1304
      %v1311 = vld [vmem:[%s11] sm:$0xf]
      %v1312 = vld [vmem:[%s11 + $0x4] sm:$0xf]
      %v1313 = vld [vmem:[%s11 + $0x8] sm:$0xf]
      %v1314 = vld [vmem:[%s11 + $0xc] sm:$0xf]
      %v1315 = vld [vmem:[%s11 + $0x10] sm:$0xf]
      %v1316 = vld [vmem:[%s11 + $0x14] sm:$0xf]
      %v1317 = vld [vmem:[%s11 + $0x18] sm:$0xf]
      %v1318 = vld [vmem:[%s11 + $0x1c] sm:$0xf]
      %v1319 = vld [vmem:[%s11 + $0x20] sm:$0xf]
      %v1320 = vld [vmem:[%s11 + $0x24] sm:$0xf]
      %v1321 = vld [vmem:[%s11 + $0x28] sm:$0xf]
      %v1322 = vld [vmem:[%s11 + $0x2c] sm:$0xf]
      %v1323 = vld [vmem:[%s11 + $0x30] sm:$0xf]
      %v1324 = vld [vmem:[%s11 + $0x34] sm:$0xf]
      %v1325 = vld [vmem:[%s11 + $0x38] sm:$0xf]
      %v1326 = vld [vmem:[%s11 + $0x3c] sm:$0xf]
      %v1327 = vpack.c.bf16 %v1310, %v1310
      %v1344 = vunpack.c.l.b16 %v1311
      %v1345 = vunpack.c.l.b16 %v1312
      %v1346 = vunpack.c.l.b16 %v1313
      %v1347 = vunpack.c.l.b16 %v1314
      %v1348 = vunpack.c.l.b16 %v1315
      %v1349 = vunpack.c.l.b16 %v1316
      %v1350 = vunpack.c.l.b16 %v1317
      %v1351 = vunpack.c.l.b16 %v1318
      %v1352 = vunpack.c.l.b16 %v1319
      %v1353 = vunpack.c.l.b16 %v1320
      %v1354 = vunpack.c.l.b16 %v1321
      %v1355 = vunpack.c.l.b16 %v1322
      %v1356 = vunpack.c.l.b16 %v1323
      %v1357 = vunpack.c.l.b16 %v1324
      %v1358 = vunpack.c.l.b16 %v1325
      %v1359 = vunpack.c.l.b16 %v1326
      %v1360 = vpack.c.b16 %v1345, %v1344
      %v1361 = vpack.c.b16 %v1347, %v1346
      %v1362 = vpack.c.b16 %v1349, %v1348
      %v1363 = vpack.c.b16 %v1351, %v1350
      %v1364 = vpack.c.b16 %v1353, %v1352
      %v1365 = vpack.c.b16 %v1355, %v1354
      %v1366 = vpack.c.b16 %v1357, %v1356
      %v1367 = vpack.c.b16 %v1359, %v1358
      %1376 = vmatprep.subr.bf16.mxu0 0
      %1377 = vmatpush1.bf16.msra.mxu0 %v1360
      %1378 = vmatprep.subr.bf16.mxu0 0
      %1379 = vmatpush1.bf16.msra.mxu0 %v1361
      %1380 = vmatprep.subr.bf16.mxu0 0
      %1381 = vmatpush1.bf16.msra.mxu0 %v1362
      %1382 = vmatprep.subr.bf16.mxu0 0
      %1383 = vmatpush1.bf16.msra.mxu0 %v1363
      %1384 = vmatprep.subr.bf16.mxu0 0
      %1385 = vmatpush1.bf16.msra.mxu0 %v1364
      %1386 = vmatprep.subr.bf16.mxu0 0
      %1387 = vmatpush1.bf16.msra.mxu0 %v1365
      %1388 = vmatprep.subr.bf16.mxu0 0
      %1389 = vmatpush1.bf16.msra.mxu0 %v1366
      %1390 = vmatprep.subr.bf16.mxu0 0
      %1391 = vmatpush1.bf16.msra.mxu0 %v1367
      %1392 = vmatprep.subr.bf16.mxu0 0
      %1393 = vmatpush1.bf16.msra.mxu0 0
      %1394 = vmatprep.subr.bf16.mxu0 0
      %1395 = vmatpush1.bf16.msra.mxu0 0
      %1396 = vmatprep.subr.bf16.mxu0 0
      %1397 = vmatpush1.bf16.msra.mxu0 0
      %1398 = vmatprep.subr.bf16.mxu0 0
      %1399 = vmatpush1.bf16.msra.mxu0 0
      %1400 = vmatprep.subr.bf16.mxu0 0
      %1401 = vmatpush1.bf16.msra.mxu0 0
      %1402 = vmatprep.subr.bf16.mxu0 0
      %1403 = vmatpush1.bf16.msra.mxu0 0
      %1404 = vmatprep.subr.bf16.mxu0 0
      %1405 = vmatpush1.bf16.msra.mxu0 0
      %1406 = vmatprep.subr.bf16.mxu0 0
      %1407 = vmatpush1.bf16.msra.mxu0 0
      %1408 = vmatprep.mubr.bf16.mxu0 0
      %1409 = vmatmul.mubr.bf16.gmra.mrb[0].mxu0 %v1327
      %v1410 = vpop.f32.mrb[0].mxu0
      %v1411 = vadd.f32 0.0, %v1410
      %v1412 = vpop.f32.mrb[0].mxu0
      %v1413 = vpop.f32.mrb[0].mxu0
      %v1414 = vpop.f32.mrb[0].mxu0
      %1415 = vdwg.mxu0
      %v1416 = vadd.f32 %v471, %v1411
      %v1417 = vld [vmem:[%s12] sm:$0x1]
      %v1419 = vlaneseq
      %v1420 = vshrl.u32 %v1419, 7
      %v1421 = vsub.s32 0, %v1420
      %v1422 = vrot.slane %v1417, %v1421
      %v1424 = vadd.f32 %v1416, %v1422
      %1425 = vst [vmem:[%s469] sm:$0xff] %v1424
      %p1426 = scmp.lt.s32.totalorder %s24, 1
      %s1427 = scalar_select %p1426, %s24, 1
      %s1428 = smul.addr %s1427, 8
      %s1429 = scalar_lea.vmem %s13, %s1428
      // Predicated region
      $region73: #{atnet_forward.10} parent=71 // pred_check
        %p1430 = pneg %p330
      $region74: #{atnet_forward.10} parent=71 // pred_check_branch
        %1432 = sbr.rel (%p1430) target = $region76
      $region75: #{atnet_forward.10} parent=71 // pred_region
        _
      $region76: #{atnet_forward.10} parent=71 // pred_fallthru
        _
    $region72: #{atnet_forward.10} parent=5 // pred_fallthru
      _
    %p1433 = scmp.le.s32.totalorder 2, %s19
    // Predicated region
    $region77: #{atnet_forward.10} parent=5 // pred_check
      %p1434 = pneg %p1433
    $region78: #{atnet_forward.10} parent=5 // pred_check_branch
      %1436 = sbr.rel (%p1434) target = $region80
    $region79: #{atnet_forward.10} parent=5 // pred_region
      %s1437 = ssub.s32 %s19, 2
      // Predicated region
      $region81: #{atnet_forward.10} parent=79 // pred_check
        %p1438 = pneg %p336
      $region82: #{atnet_forward.10} parent=79 // pred_check_branch
        %1440 = sbr.rel (%p1438) target = $region84
      $region83: #{atnet_forward.10} parent=79 // pred_region
        %p1441 = scmp.lt.s32.totalorder %s25, 1
        %s1442 = scalar_select %p1441, %s25, 1
        %s1443 = smul.addr %s1442, 8
        %s1444 = scalar_lea.vmem %s13, %s1443
      $region84: #{atnet_forward.10} parent=79 // pred_fallthru
        _
    $region80: #{atnet_forward.10} parent=5 // pred_fallthru
      _
  $region6: #{atnet_forward.10} parent=0 // loop_footer
    %s23 = sadd.s32 1, %s19
  $region7: #{atnet_forward.10} parent=0 // loop_footer_branch
    %18 = sbr.rel target = $region3
  $region8: #{atnet_forward.10} parent=0 // loop_exit
    _

// kernel: atnet_forward.7
$region0: #{atnet_forward.7}
  #allocation0 [shape = 'u32[]', space=smem, size = 0x4, offset = 0x4, fixed_abs, tag = 'smem constant byte address 0x4 - core index']
  #allocation1 [shape = 'u32[144,128]{1,0:T(1,128)}', space=vmem, size = 0x12000, scoped, tag = 'internal scratch']
  %s0 = inlined_call_operand.vmem [shape: f32[2,8,128], index: 0, kind: input, shape index: {}, may-alias: {0,1}]
  %s1 = inlined_call_operand.vmem [shape: f32[2,8,128], index: 1, kind: input, shape index: {}, may-alias: {0,1}]
  %s2 = inlined_call_operand.vmem [shape: f32[2,1,8], index: 2, kind: input, shape index: {}]
  %s3 = inlined_call_operand.vmem [shape: f32[1,128], index: 3, kind: input, shape index: {}]
  %s4 = inlined_call_operand.vmem [shape: f32[1,128], index: 4, kind: input, shape index: {}]
  %s5 = inlined_call_operand.vmem [shape: bf16[128,128], index: 5, kind: input, shape index: {}]
  %s6 = inlined_call_operand.vmem [shape: f32[1,128], index: 6, kind: input, shape index: {}]
  %s7 = inlined_call_operand.vmem [shape: bf16[128,128], index: 7, kind: input, shape index: {}]
  %s8 = inlined_call_operand.vmem [shape: f32[1,128], index: 8, kind: input, shape index: {}]
  %s9 = inlined_call_operand.vmem [shape: bf16[128,128], index: 9, kind: input, shape index: {}]
  %s10 = inlined_call_operand.vmem [shape: f32[1,128], index: 10, kind: input, shape index: {}]
  %s11 = inlined_call_operand.vmem [shape: bf16[128,128], index: 11, kind: input, shape index: {}]
  %s12 = inlined_call_operand.vmem [shape: f32[1,128], index: 12, kind: input, shape index: {}]
  %s13 = inlined_call_operand.vmem [shape: f32[2,8,128], index: 13, kind: output, shape index: {}]
  %s14 = sld [smem:[#allocation0]]
  $region85: #{atnet_forward.7} parent=0
    _
  %s16 = ssub.s32 1, %s14
  %s17 = scalar_select 0, %s16, %s14
  loop: start=0, step=1, limit=4
  $region2: #{atnet_forward.7} parent=0 // loop_pre_header
    _
  $region3: #{atnet_forward.7} parent=0 // loop_header
    %s19 = sphi 0, %s23
    %p20 = scmp.ge.s32.totalorder %s19, 4
    %s29 = sphi 0, %s31
    %s32 = sphi 0, %s29
    %s33 = sphi 0, %s32
    %s49 = sphi 0, %s33
    %s55 = sphi 0, %s57
    %s58 = sphi 0, %s55
    %s59 = sphi 0, %s58
    %s75 = sphi 0, %s59
    %s81 = sphi 0, %s83
    %s84 = sphi 0, %s81
    %s85 = sphi 0, %s84
    %s101 = sphi 0, %s85
    %s105 = sphi 0, %s105
    %s107 = sphi 0, %s105
    %s108 = sphi 0, %s107
    %s122 = sphi 0, %s108
    %s126 = sphi 0, %s126
    %s128 = sphi 0, %s126
    %s129 = sphi 0, %s128
    %s143 = sphi 0, %s129
    %s147 = sphi 0, %s147
    %s149 = sphi 0, %s147
    %s150 = sphi 0, %s149
    %s164 = sphi 0, %s150
    %s168 = sphi 0, %s168
    %s170 = sphi 0, %s168
    %s171 = sphi 0, %s170
    %s185 = sphi 0, %s171
    %s189 = sphi 0, %s189
    %s191 = sphi 0, %s189
    %s192 = sphi 0, %s191
    %s206 = sphi 0, %s192
    %s210 = sphi 0, %s210
    %s212 = sphi 0, %s210
    %s213 = sphi 0, %s212
    %s227 = sphi 0, %s213
    %s231 = sphi 0, %s231
    %s233 = sphi 0, %s231
    %s234 = sphi 0, %s233
    %s248 = sphi 0, %s234
    %s252 = sphi 0, %s252
    %s254 = sphi 0, %s252
    %s255 = sphi 0, %s254
    %s269 = sphi 0, %s255
    %s273 = sphi 0, %s273
    %s275 = sphi 0, %s273
    %s276 = sphi 0, %s275
    %s290 = sphi 0, %s276
    %s294 = sphi 0, %s294
    %s296 = sphi 0, %s294
    %s297 = sphi 0, %s296
    %s311 = sphi 0, %s297
    %s317 = sphi 0, %s319
    %s320 = sphi 0, %s317
    %s321 = sphi 0, %s320
    %s337 = sphi 0, %s321
  $region4: #{atnet_forward.7} parent=0 // loop_header_branch
    %22 = sbr.rel (%p20) target = $region8
  $region5: #{atnet_forward.7} parent=0 // loop_body
    %s24 = ssub.s32 %s19, 1
    %s25 = ssub.s32 %s19, 2
    %s26 = sadd.s32 %s19, 1
    %s27 = ssub.s32 %s19, %s26
    %p28 = scmp.eq.s32.totalorder %s27, 0
    %s30 = sadd.s32 %s29, 1
    %s31 = scalar_select %p28, %s29, %s30
    %p34 = pneg %p28
    %p35 = scmp.eq.s32.totalorder %s19, 1
    %p36 = por %p34, %p35
    %p37 = scmp.ne.s32.totalorder %s29, %s32
    %p38 = scmp.eq.s32.totalorder %s19, 0
    %p39 = por %p37, %p38
    %p40 = scmp.ne.s32.totalorder %s29, %s32
    %p41 = scmp.eq.s32.totalorder %s24, 1
    %p42 = por %p40, %p41
    %p43 = scmp.ne.s32.totalorder %s32, %s33
    %p44 = scmp.eq.s32.totalorder %s24, 0
    %p45 = por %p43, %p44
    %p46 = scmp.ne.s32.totalorder %s32, %s33
    %p47 = scmp.eq.s32.totalorder %s25, 1
    %p48 = por %p46, %p47
    %p50 = scmp.ne.s32.totalorder %s33, %s49
    %p51 = scmp.eq.s32.totalorder %s25, 0
    %p52 = por %p50, %p51
    %s53 = ssub.s32 %s19, %s26
    %p54 = scmp.eq.s32.totalorder %s53, 0
    %s56 = sadd.s32 %s55, 1
    %s57 = scalar_select %p54, %s55, %s56
    %p60 = pneg %p54
    %p61 = scmp.eq.s32.totalorder %s19, 1
    %p62 = por %p60, %p61
    %p63 = scmp.ne.s32.totalorder %s55, %s58
    %p64 = scmp.eq.s32.totalorder %s19, 0
    %p65 = por %p63, %p64
    %p66 = scmp.ne.s32.totalorder %s55, %s58
    %p67 = scmp.eq.s32.totalorder %s24, 1
    %p68 = por %p66, %p67
    %p69 = scmp.ne.s32.totalorder %s58, %s59
    %p70 = scmp.eq.s32.totalorder %s24, 0
    %p71 = por %p69, %p70
    %p72 = scmp.ne.s32.totalorder %s58, %s59
    %p73 = scmp.eq.s32.totalorder %s25, 1
    %p74 = por %p72, %p73
    %p76 = scmp.ne.s32.totalorder %s59, %s75
    %p77 = scmp.eq.s32.totalorder %s25, 0
    %p78 = por %p76, %p77
    %s79 = ssub.s32 %s19, %s26
    %p80 = scmp.eq.s32.totalorder %s79, 0
    %s82 = sadd.s32 %s81, 1
    %s83 = scalar_select %p80, %s81, %s82
    %p86 = pneg %p80
    %p87 = scmp.eq.s32.totalorder %s19, 1
    %p88 = por %p86, %p87
    %p89 = scmp.ne.s32.totalorder %s81, %s84
    %p90 = scmp.eq.s32.totalorder %s19, 0
    %p91 = por %p89, %p90
    %p92 = scmp.ne.s32.totalorder %s81, %s84
    %p93 = scmp.eq.s32.totalorder %s24, 1
    %p94 = por %p92, %p93
    %p95 = scmp.ne.s32.totalorder %s84, %s85
    %p96 = scmp.eq.s32.totalorder %s24, 0
    %p97 = por %p95, %p96
    %p98 = scmp.ne.s32.totalorder %s84, %s85
    %p99 = scmp.eq.s32.totalorder %s25, 1
    %p100 = por %p98, %p99
    %p102 = scmp.ne.s32.totalorder %s85, %s101
    %p103 = scmp.eq.s32.totalorder %s25, 0
    %p104 = por %p102, %p103
    %s106 = sadd.s32 %s105, 1
    %p109 = scmp.eq.s32.totalorder %s19, 1
    %p110 = scmp.ne.s32.totalorder %s105, %s107
    %p111 = scmp.eq.s32.totalorder %s19, 0
    %p112 = por %p110, %p111
    %p113 = scmp.ne.s32.totalorder %s105, %s107
    %p114 = scmp.eq.s32.totalorder %s24, 1
    %p115 = por %p113, %p114
    %p116 = scmp.ne.s32.totalorder %s107, %s108
    %p117 = scmp.eq.s32.totalorder %s24, 0
    %p118 = por %p116, %p117
    %p119 = scmp.ne.s32.totalorder %s107, %s108
    %p120 = scmp.eq.s32.totalorder %s25, 1
    %p121 = por %p119, %p120
    %p123 = scmp.ne.s32.totalorder %s108, %s122
    %p124 = scmp.eq.s32.totalorder %s25, 0
    %p125 = por %p123, %p124
    %s127 = sadd.s32 %s126, 1
    %p130 = scmp.eq.s32.totalorder %s19, 1
    %p131 = scmp.ne.s32.totalorder %s126, %s128
    %p132 = scmp.eq.s32.totalorder %s19, 0
    %p133 = por %p131, %p132
    %p134 = scmp.ne.s32.totalorder %s126, %s128
    %p135 = scmp.eq.s32.totalorder %s24, 1
    %p136 = por %p134, %p135
    %p137 = scmp.ne.s32.totalorder %s128, %s129
    %p138 = scmp.eq.s32.totalorder %s24, 0
    %p139 = por %p137, %p138
    %p140 = scmp.ne.s32.totalorder %s128, %s129
    %p141 = scmp.eq.s32.totalorder %s25, 1
    %p142 = por %p140, %p141
    %p144 = scmp.ne.s32.totalorder %s129, %s143
    %p145 = scmp.eq.s32.totalorder %s25, 0
    %p146 = por %p144, %p145
    %s148 = sadd.s32 %s147, 1
    %p151 = scmp.eq.s32.totalorder %s19, 1
    %p152 = scmp.ne.s32.totalorder %s147, %s149
    %p153 = scmp.eq.s32.totalorder %s19, 0
    %p154 = por %p152, %p153
    %p155 = scmp.ne.s32.totalorder %s147, %s149
    %p156 = scmp.eq.s32.totalorder %s24, 1
    %p157 = por %p155, %p156
    %p158 = scmp.ne.s32.totalorder %s149, %s150
    %p159 = scmp.eq.s32.totalorder %s24, 0
    %p160 = por %p158, %p159
    %p161 = scmp.ne.s32.totalorder %s149, %s150
    %p162 = scmp.eq.s32.totalorder %s25, 1
    %p163 = por %p161, %p162
    %p165 = scmp.ne.s32.totalorder %s150, %s164
    %p166 = scmp.eq.s32.totalorder %s25, 0
    %p167 = por %p165, %p166
    %s169 = sadd.s32 %s168, 1
    %p172 = scmp.eq.s32.totalorder %s19, 1
    %p173 = scmp.ne.s32.totalorder %s168, %s170
    %p174 = scmp.eq.s32.totalorder %s19, 0
    %p175 = por %p173, %p174
    %p176 = scmp.ne.s32.totalorder %s168, %s170
    %p177 = scmp.eq.s32.totalorder %s24, 1
    %p178 = por %p176, %p177
    %p179 = scmp.ne.s32.totalorder %s170, %s171
    %p180 = scmp.eq.s32.totalorder %s24, 0
    %p181 = por %p179, %p180
    %p182 = scmp.ne.s32.totalorder %s170, %s171
    %p183 = scmp.eq.s32.totalorder %s25, 1
    %p184 = por %p182, %p183
    %p186 = scmp.ne.s32.totalorder %s171, %s185
    %p187 = scmp.eq.s32.totalorder %s25, 0
    %p188 = por %p186, %p187
    %s190 = sadd.s32 %s189, 1
    %p193 = scmp.eq.s32.totalorder %s19, 1
    %p194 = scmp.ne.s32.totalorder %s189, %s191
    %p195 = scmp.eq.s32.totalorder %s19, 0
    %p196 = por %p194, %p195
    %p197 = scmp.ne.s32.totalorder %s189, %s191
    %p198 = scmp.eq.s32.totalorder %s24, 1
    %p199 = por %p197, %p198
    %p200 = scmp.ne.s32.totalorder %s191, %s192
    %p201 = scmp.eq.s32.totalorder %s24, 0
    %p202 = por %p200, %p201
    %p203 = scmp.ne.s32.totalorder %s191, %s192
    %p204 = scmp.eq.s32.totalorder %s25, 1
    %p205 = por %p203, %p204
    %p207 = scmp.ne.s32.totalorder %s192, %s206
    %p208 = scmp.eq.s32.totalorder %s25, 0
    %p209 = por %p207, %p208
    %s211 = sadd.s32 %s210, 1
    %p214 = scmp.eq.s32.totalorder %s19, 1
    %p215 = scmp.ne.s32.totalorder %s210, %s212
    %p216 = scmp.eq.s32.totalorder %s19, 0
    %p217 = por %p215, %p216
    %p218 = scmp.ne.s32.totalorder %s210, %s212
    %p219 = scmp.eq.s32.totalorder %s24, 1
    %p220 = por %p218, %p219
    %p221 = scmp.ne.s32.totalorder %s212, %s213
    %p222 = scmp.eq.s32.totalorder %s24, 0
    %p223 = por %p221, %p222
    %p224 = scmp.ne.s32.totalorder %s212, %s213
    %p225 = scmp.eq.s32.totalorder %s25, 1
    %p226 = por %p224, %p225
    %p228 = scmp.ne.s32.totalorder %s213, %s227
    %p229 = scmp.eq.s32.totalorder %s25, 0
    %p230 = por %p228, %p229
    %s232 = sadd.s32 %s231, 1
    %p235 = scmp.eq.s32.totalorder %s19, 1
    %p236 = scmp.ne.s32.totalorder %s231, %s233
    %p237 = scmp.eq.s32.totalorder %s19, 0
    %p238 = por %p236, %p237
    %p239 = scmp.ne.s32.totalorder %s231, %s233
    %p240 = scmp.eq.s32.totalorder %s24, 1
    %p241 = por %p239, %p240
    %p242 = scmp.ne.s32.totalorder %s233, %s234
    %p243 = scmp.eq.s32.totalorder %s24, 0
    %p244 = por %p242, %p243
    %p245 = scmp.ne.s32.totalorder %s233, %s234
    %p246 = scmp.eq.s32.totalorder %s25, 1
    %p247 = por %p245, %p246
    %p249 = scmp.ne.s32.totalorder %s234, %s248
    %p250 = scmp.eq.s32.totalorder %s25, 0
    %p251 = por %p249, %p250
    %s253 = sadd.s32 %s252, 1
    %p256 = scmp.eq.s32.totalorder %s19, 1
    %p257 = scmp.ne.s32.totalorder %s252, %s254
    %p258 = scmp.eq.s32.totalorder %s19, 0
    %p259 = por %p257, %p258
    %p260 = scmp.ne.s32.totalorder %s252, %s254
    %p261 = scmp.eq.s32.totalorder %s24, 1
    %p262 = por %p260, %p261
    %p263 = scmp.ne.s32.totalorder %s254, %s255
    %p264 = scmp.eq.s32.totalorder %s24, 0
    %p265 = por %p263, %p264
    %p266 = scmp.ne.s32.totalorder %s254, %s255
    %p267 = scmp.eq.s32.totalorder %s25, 1
    %p268 = por %p266, %p267
    %p270 = scmp.ne.s32.totalorder %s255, %s269
    %p271 = scmp.eq.s32.totalorder %s25, 0
    %p272 = por %p270, %p271
    %s274 = sadd.s32 %s273, 1
    %p277 = scmp.eq.s32.totalorder %s19, 1
    %p278 = scmp.ne.s32.totalorder %s273, %s275
    %p279 = scmp.eq.s32.totalorder %s19, 0
    %p280 = por %p278, %p279
    %p281 = scmp.ne.s32.totalorder %s273, %s275
    %p282 = scmp.eq.s32.totalorder %s24, 1
    %p283 = por %p281, %p282
    %p284 = scmp.ne.s32.totalorder %s275, %s276
    %p285 = scmp.eq.s32.totalorder %s24, 0
    %p286 = por %p284, %p285
    %p287 = scmp.ne.s32.totalorder %s275, %s276
    %p288 = scmp.eq.s32.totalorder %s25, 1
    %p289 = por %p287, %p288
    %p291 = scmp.ne.s32.totalorder %s276, %s290
    %p292 = scmp.eq.s32.totalorder %s25, 0
    %p293 = por %p291, %p292
    %s295 = sadd.s32 %s294, 1
    %p298 = scmp.eq.s32.totalorder %s19, 1
    %p299 = scmp.ne.s32.totalorder %s294, %s296
    %p300 = scmp.eq.s32.totalorder %s19, 0
    %p301 = por %p299, %p300
    %p302 = scmp.ne.s32.totalorder %s294, %s296
    %p303 = scmp.eq.s32.totalorder %s24, 1
    %p304 = por %p302, %p303
    %p305 = scmp.ne.s32.totalorder %s296, %s297
    %p306 = scmp.eq.s32.totalorder %s24, 0
    %p307 = por %p305, %p306
    %p308 = scmp.ne.s32.totalorder %s296, %s297
    %p309 = scmp.eq.s32.totalorder %s25, 1
    %p310 = por %p308, %p309
    %p312 = scmp.ne.s32.totalorder %s297, %s311
    %p313 = scmp.eq.s32.totalorder %s25, 0
    %p314 = por %p312, %p313
    %s315 = ssub.s32 %s19, %s26
    %p316 = scmp.eq.s32.totalorder %s315, 0
    %s318 = sadd.s32 %s317, 1
    %s319 = scalar_select %p316, %s317, %s318
    %p322 = pneg %p316
    %p323 = scmp.eq.s32.totalorder %s19, 1
    %p324 = por %p322, %p323
    %p325 = scmp.ne.s32.totalorder %s317, %s320
    %p326 = scmp.eq.s32.totalorder %s19, 0
    %p327 = por %p325, %p326
    %p328 = scmp.ne.s32.totalorder %s317, %s320
    %p329 = scmp.eq.s32.totalorder %s24, 1
    %p330 = por %p328, %p329
    %p331 = scmp.ne.s32.totalorder %s320, %s321
    %p332 = scmp.eq.s32.totalorder %s24, 0
    %p333 = por %p331, %p332
    %p334 = scmp.ne.s32.totalorder %s320, %s321
    %p335 = scmp.eq.s32.totalorder %s25, 1
    %p336 = por %p334, %p335
    %p338 = scmp.ne.s32.totalorder %s321, %s337
    %p339 = scmp.eq.s32.totalorder %s25, 0
    %p340 = por %p338, %p339
    %p341 = scmp.le.s32.totalorder 1, %s19
    %p342 = scmp.lt.s32.totalorder %s19, 3
    %p343 = pnand %p341, %p342
    %p344 = pneg %p343
    // Predicated region
    $region9: #{atnet_forward.7} parent=5 // pred_check
      _
    $region10: #{atnet_forward.7} parent=5 // pred_check_branch
      %346 = sbr.rel (%p343) target = $region12
    $region11: #{atnet_forward.7} parent=5 // pred_region
      %s347 = ssub.s32 %s19, 1
      // Predicated region
      $region13: #{atnet_forward.7} parent=11 // pred_check
        %p348 = pneg %p118
      $region14: #{atnet_forward.7} parent=11 // pred_check_branch
        %350 = sbr.rel (%p348) target = $region16
      $region15: #{atnet_forward.7} parent=11 // pred_region
        _
      $region16: #{atnet_forward.7} parent=11 // pred_fallthru
        _
      // Predicated region
      $region17: #{atnet_forward.7} parent=11 // pred_check
        %p351 = pneg %p139
      $region18: #{atnet_forward.7} parent=11 // pred_check_branch
        %353 = sbr.rel (%p351) target = $region20
      $region19: #{atnet_forward.7} parent=11 // pred_region
        _
      $region20: #{atnet_forward.7} parent=11 // pred_fallthru
        _
      // Predicated region
      $region21: #{atnet_forward.7} parent=11 // pred_check
        %p354 = pneg %p160
      $region22: #{atnet_forward.7} parent=11 // pred_check_branch
        %356 = sbr.rel (%p354) target = $region24
      $region23: #{atnet_forward.7} parent=11 // pred_region
        _
      $region24: #{atnet_forward.7} parent=11 // pred_fallthru
        _
      // Predicated region
      $region25: #{atnet_forward.7} parent=11 // pred_check
        %p357 = pneg %p181
      $region26: #{atnet_forward.7} parent=11 // pred_check_branch
        %359 = sbr.rel (%p357) target = $region28
      $region27: #{atnet_forward.7} parent=11 // pred_region
        _
      $region28: #{atnet_forward.7} parent=11 // pred_fallthru
        _
      // Predicated region
      $region29: #{atnet_forward.7} parent=11 // pred_check
        %p360 = pneg %p202
      $region30: #{atnet_forward.7} parent=11 // pred_check_branch
        %362 = sbr.rel (%p360) target = $region32
      $region31: #{atnet_forward.7} parent=11 // pred_region
        _
      $region32: #{atnet_forward.7} parent=11 // pred_fallthru
        _
      // Predicated region
      $region33: #{atnet_forward.7} parent=11 // pred_check
        %p363 = pneg %p223
      $region34: #{atnet_forward.7} parent=11 // pred_check_branch
        %365 = sbr.rel (%p363) target = $region36
      $region35: #{atnet_forward.7} parent=11 // pred_region
        _
      $region36: #{atnet_forward.7} parent=11 // pred_fallthru
        _
      // Predicated region
      $region37: #{atnet_forward.7} parent=11 // pred_check
        %p366 = pneg %p244
      $region38: #{atnet_forward.7} parent=11 // pred_check_branch
        %368 = sbr.rel (%p366) target = $region40
      $region39: #{atnet_forward.7} parent=11 // pred_region
        _
      $region40: #{atnet_forward.7} parent=11 // pred_fallthru
        _
      // Predicated region
      $region41: #{atnet_forward.7} parent=11 // pred_check
        %p369 = pneg %p265
      $region42: #{atnet_forward.7} parent=11 // pred_check_branch
        %371 = sbr.rel (%p369) target = $region44
      $region43: #{atnet_forward.7} parent=11 // pred_region
        _
      $region44: #{atnet_forward.7} parent=11 // pred_fallthru
        _
      // Predicated region
      $region45: #{atnet_forward.7} parent=11 // pred_check
        %p372 = pneg %p286
      $region46: #{atnet_forward.7} parent=11 // pred_check_branch
        %374 = sbr.rel (%p372) target = $region48
      $region47: #{atnet_forward.7} parent=11 // pred_region
        _
      $region48: #{atnet_forward.7} parent=11 // pred_fallthru
        _
      // Predicated region
      $region49: #{atnet_forward.7} parent=11 // pred_check
        %p375 = pneg %p307
      $region50: #{atnet_forward.7} parent=11 // pred_check_branch
        %377 = sbr.rel (%p375) target = $region52
      $region51: #{atnet_forward.7} parent=11 // pred_region
        _
      $region52: #{atnet_forward.7} parent=11 // pred_fallthru
        _
    $region12: #{atnet_forward.7} parent=5 // pred_fallthru
      _
    %p378 = scmp.lt.s32.totalorder %s19, 2
    // Predicated region
    $region53: #{atnet_forward.7} parent=5 // pred_check
      %p379 = pneg %p378
    $region54: #{atnet_forward.7} parent=5 // pred_check_branch
      %381 = sbr.rel (%p379) target = $region56
    $region55: #{atnet_forward.7} parent=5 // pred_region
      // Predicated region
      $region57: #{atnet_forward.7} parent=55 // pred_check
        %p382 = pneg %p39
      $region58: #{atnet_forward.7} parent=55 // pred_check_branch
        %384 = sbr.rel (%p382) target = $region60
      $region59: #{atnet_forward.7} parent=55 // pred_region
        %p385 = scmp.lt.s32.totalorder %s19, 1
        %s386 = scalar_select %p385, %s19, 1
        %s387 = smul.addr %s386, 8
        %s388 = scalar_lea.vmem %s0, %s387
      $region60: #{atnet_forward.7} parent=55 // pred_fallthru
        _
      // Predicated region
      $region61: #{atnet_forward.7} parent=55 // pred_check
        %p389 = pneg %p65
      $region62: #{atnet_forward.7} parent=55 // pred_check_branch
        %391 = sbr.rel (%p389) target = $region64
      $region63: #{atnet_forward.7} parent=55 // pred_region
        %p392 = scmp.lt.s32.totalorder %s19, 1
        %s393 = scalar_select %p392, %s19, 1
        %s394 = smul.addr %s393, 8
        %s395 = scalar_lea.vmem %s1, %s394
      $region64: #{atnet_forward.7} parent=55 // pred_fallthru
        _
      // Predicated region
      $region65: #{atnet_forward.7} parent=55 // pred_check
        %p396 = pneg %p91
      $region66: #{atnet_forward.7} parent=55 // pred_check_branch
        %398 = sbr.rel (%p396) target = $region68
      $region67: #{atnet_forward.7} parent=55 // pred_region
        %p399 = scmp.lt.s32.totalorder %s19, 1
        %s400 = scalar_select %p399, %s19, 1
        %s401 = scalar_lea.vmem %s2, %s400
      $region68: #{atnet_forward.7} parent=55 // pred_fallthru
        _
    $region56: #{atnet_forward.7} parent=5 // pred_fallthru
      _
    %p402 = scmp.le.s32.totalorder 1, %s19
    %p403 = scmp.lt.s32.totalorder %s19, 3
    %p404 = pnand %p402, %p403
    %p405 = pneg %p404
    // Predicated region
    $region69: #{atnet_forward.7} parent=5 // pred_check
      _
    $region70: #{atnet_forward.7} parent=5 // pred_check_branch
      %407 = sbr.rel (%p404) target = $region72
    $region71: #{atnet_forward.7} parent=5 // pred_region
      %s408 = ssub.s32 %s19, 1
      %p409 = scmp.lt.s32.totalorder %s24, 1
      %s410 = scalar_select %p409, %s24, 1
      %s411 = smul.addr %s410, 8
      %s412 = scalar_lea.vmem %s0, %s411
      %p413 = pneg %p45
      %p414 = pneg %p42
      %p415 = scmp.lt.s32.totalorder %s24, 1
      %s416 = scalar_select %p415, %s24, 1
      %s417 = smul.addr %s416, 8
      %s418 = scalar_lea.vmem %s1, %s417
      %p419 = pneg %p71
      %p420 = pneg %p68
      %p421 = scmp.lt.s32.totalorder %s24, 1
      %s422 = scalar_select %p421, %s24, 1
      %s423 = scalar_lea.vmem %s2, %s422
      %p424 = pneg %p97
      %p425 = pneg %p94
      %p426 = pneg %p118
      %p427 = pneg %p115
      %p428 = pneg %p139
      %p429 = pneg %p136
      %p430 = pneg %p160
      %p431 = pneg %p157
      %p432 = pneg %p181
      %p433 = pneg %p178
      %p434 = pneg %p202
      %p435 = pneg %p199
      %p436 = pneg %p223
      %p437 = pneg %p220
      %p438 = pneg %p244
      %p439 = pneg %p241
      %p440 = pneg %p265
      %p441 = pneg %p262
      %p442 = pneg %p286
      %p443 = pneg %p283
      %p444 = pneg %p307
      %p445 = pneg %p304
      %p446 = pneg %p333
      %p447 = pneg %p330
      %p448 = scmp.lt.s32.totalorder %s24, 1
      %s449 = scalar_select %p448, %s24, 1
      %s450 = smul.addr %s449, 8
      %s451 = scalar_lea.vmem %s13, %s450
      %p452 = scmp.lt.s32.totalorder %s24, 1
      %s453 = scalar_select %p452, %s24, 1
      %s454 = smul.addr %s453, 8
      %s455 = scalar_lea.vmem %s0, %s454
      %p456 = scmp.lt.s32.totalorder %s24, 1
      %s457 = scalar_select %p456, %s24, 1
      %s458 = smul.addr %s457, 8
      %s459 = scalar_lea.vmem %s1, %s458
      %p460 = scmp.lt.s32.totalorder %s24, 1
      %s461 = scalar_select %p460, %s24, 1
      %s462 = scalar_lea.vmem %s2, %s461
      %p463 = scmp.lt.s32.totalorder %s24, 1
      %s464 = scalar_select %p463, %s24, 1
      %s465 = smul.addr %s464, 8
      %s466 = scalar_lea.vmem %s13, %s465
      %v468 = vld [vmem:[%s455] sm:$0xff]
      %v469 = vld [vmem:[%s3] sm:$0x1]
      %v470 = vld [vmem:[%s4] sm:$0x1]
      %471 = vadd.xlane.f32.xlu0 %v468
      %v472 = vpop.xlane.xlu0 %471
      %v473 = vrcp.pop 128.0
      %v474 = vmul.f32 %v472, %v473
      %v475 = vsub.f32 %v468, %v474
      %v476 = vmul.f32 %v475, %v475
      %477 = vadd.xlane.f32.xlu0 %v476
      %v478 = vpop.xlane.xlu0 %477
      %v479 = vmul.f32 %v478, 0.007874016
      %v480 = vrsqrt.pop %v479
      %v481 = vmul.f32 %v479, %v480
      %vm482 = vcmp.eq.f32.partialorder %v479, inf
      %v483 = vsel %vm482, %v479, %v481
      %vm484 = vcmp.eq.f32.partialorder %v479, 0.0
      %v485 = vand.u32 %v479, 2147483648
      %v486 = vsel %vm484, %v485, %v483
      %v487 = vadd.f32 %v486, 1e-06
      %v488 = vrcp.pop %v487
      %v490 = vlaneseq
      %v491 = vshrl.u32 %v490, 7
      %v492 = vsub.s32 0, %v491
      %v493 = vrot.slane %v469, %v492
      %v495 = vmul.f32 %v493, %v475
      %v496 = vmul.f32 %v495, %v488
      %v498 = vlaneseq
      %v499 = vshrl.u32 %v498, 7
      %v500 = vsub.s32 0, %v499
      %v501 = vrot.slane %v470, %v500
      %v503 = vadd.f32 %v496, %v501
      %v504 = vld [vmem:[%s5] sm:$0xf]
      %v505 = vld [vmem:[%s5 + $0x4] sm:$0xf]
      %v506 = vld [vmem:[%s5 + $0x8] sm:$0xf]
      %v507 = vld [vmem:[%s5 + $0xc] sm:$0xf]
      %v508 = vld [vmem:[%s5 + $0x10] sm:$0xf]
      %v509 = vld [vmem:[%s5 + $0x14] sm:$0xf]
      %v510 = vld [vmem:[%s5 + $0x18] sm:$0xf]
      %v511 = vld [vmem:[%s5 + $0x1c] sm:$0xf]
      %v512 = vld [vmem:[%s5 + $0x20] sm:$0xf]
      %v513 = vld [vmem:[%s5 + $0x24] sm:$0xf]
      %v514 = vld [vmem:[%s5 + $0x28] sm:$0xf]
      %v515 = vld [vmem:[%s5 + $0x2c] sm:$0xf]
      %v516 = vld [vmem:[%s5 + $0x30] sm:$0xf]
      %v517 = vld [vmem:[%s5 + $0x34] sm:$0xf]
      %v518 = vld [vmem:[%s5 + $0x38] sm:$0xf]
      %v519 = vld [vmem:[%s5 + $0x3c] sm:$0xf]
      %v520 = vpack.c.bf16 %v503, %v503
      %v521 = vld [vmem:[%s6] sm:$0x1]
      %v523 = vlaneseq
      %v524 = vshrl.u32 %v523, 7
      %v525 = vsub.s32 0, %v524
      %v526 = vrot.slane %v521, %v525
      %v544 = vunpack.c.l.b16 %v504
      %v545 = vunpack.c.l.b16 %v505
      %v546 = vunpack.c.l.b16 %v506
      %v547 = vunpack.c.l.b16 %v507
      %v548 = vunpack.c.l.b16 %v508
      %v549 = vunpack.c.l.b16 %v509
      %v550 = vunpack.c.l.b16 %v510
      %v551 = vunpack.c.l.b16 %v511
      %v552 = vunpack.c.l.b16 %v512
      %v553 = vunpack.c.l.b16 %v513
      %v554 = vunpack.c.l.b16 %v514
      %v555 = vunpack.c.l.b16 %v515
      %v556 = vunpack.c.l.b16 %v516
      %v557 = vunpack.c.l.b16 %v517
      %v558 = vunpack.c.l.b16 %v518
      %v559 = vunpack.c.l.b16 %v519
      %v560 = vpack.c.b16 %v545, %v544
      %v561 = vpack.c.b16 %v547, %v546
      %v562 = vpack.c.b16 %v549, %v548
      %v563 = vpack.c.b16 %v551, %v550
      %v564 = vpack.c.b16 %v553, %v552
      %v565 = vpack.c.b16 %v555, %v554
      %v566 = vpack.c.b16 %v557, %v556
      %v567 = vpack.c.b16 %v559, %v558
      %576 = vmatprep.subr.bf16.mxu0 0
      %577 = vmatpush1.bf16.msra.mxu0 %v560
      %578 = vmatprep.subr.bf16.mxu0 0
      %579 = vmatpush1.bf16.msra.mxu0 %v561
      %580 = vmatprep.subr.bf16.mxu0 0
      %581 = vmatpush1.bf16.msra.mxu0 %v562
      %582 = vmatprep.subr.bf16.mxu0 0
      %583 = vmatpush1.bf16.msra.mxu0 %v563
      %584 = vmatprep.subr.bf16.mxu0 0
      %585 = vmatpush1.bf16.msra.mxu0 %v564
      %586 = vmatprep.subr.bf16.mxu0 0
      %587 = vmatpush1.bf16.msra.mxu0 %v565
      %588 = vmatprep.subr.bf16.mxu0 0
      %589 = vmatpush1.bf16.msra.mxu0 %v566
      %590 = vmatprep.subr.bf16.mxu0 0
      %591 = vmatpush1.bf16.msra.mxu0 %v567
      %592 = vmatprep.subr.bf16.mxu0 0
      %593 = vmatpush1.bf16.msra.mxu0 0
      %594 = vmatprep.subr.bf16.mxu0 0
      %595 = vmatpush1.bf16.msra.mxu0 0
      %596 = vmatprep.subr.bf16.mxu0 0
      %597 = vmatpush1.bf16.msra.mxu0 0
      %598 = vmatprep.subr.bf16.mxu0 0
      %599 = vmatpush1.bf16.msra.mxu0 0
      %600 = vmatprep.subr.bf16.mxu0 0
      %601 = vmatpush1.bf16.msra.mxu0 0
      %602 = vmatprep.subr.bf16.mxu0 0
      %603 = vmatpush1.bf16.msra.mxu0 0
      %604 = vmatprep.subr.bf16.mxu0 0
      %605 = vmatpush1.bf16.msra.mxu0 0
      %606 = vmatprep.subr.bf16.mxu0 0
      %607 = vmatpush1.bf16.msra.mxu0 0
      %608 = vmatprep.mubr.bf16.mxu0 0
      %609 = vmatmul.mubr.bf16.gmra.mrb[0].mxu0 %v520
      %v610 = vpop.f32.mrb[0].mxu0
      %v611 = vadd.f32 %v526, %v610
      %v612 = vpop.f32.mrb[0].mxu0
      %v613 = vpop.f32.mrb[0].mxu0
      %v614 = vpop.f32.mrb[0].mxu0
      %615 = vdwg.mxu0
      %v616 = vld [vmem:[%s7] sm:$0xf]
      %v617 = vld [vmem:[%s7 + $0x4] sm:$0xf]
      %v618 = vld [vmem:[%s7 + $0x8] sm:$0xf]
      %v619 = vld [vmem:[%s7 + $0xc] sm:$0xf]
      %v620 = vld [vmem:[%s7 + $0x10] sm:$0xf]
      %v621 = vld [vmem:[%s7 + $0x14] sm:$0xf]
      %v622 = vld [vmem:[%s7 + $0x18] sm:$0xf]
      %v623 = vld [vmem:[%s7 + $0x1c] sm:$0xf]
      %v624 = vld [vmem:[%s7 + $0x20] sm:$0xf]
      %v625 = vld [vmem:[%s7 + $0x24] sm:$0xf]
      %v626 = vld [vmem:[%s7 + $0x28] sm:$0xf]
      %v627 = vld [vmem:[%s7 + $0x2c] sm:$0xf]
      %v628 = vld [vmem:[%s7 + $0x30] sm:$0xf]
      %v629 = vld [vmem:[%s7 + $0x34] sm:$0xf]
      %v630 = vld [vmem:[%s7 + $0x38] sm:$0xf]
      %v631 = vld [vmem:[%s7 + $0x3c] sm:$0xf]
      %v632 = vld [vmem:[%s8] sm:$0x1]
      %v634 = vlaneseq
      %v635 = vshrl.u32 %v634, 7
      %v636 = vsub.s32 0, %v635
      %v637 = vrot.slane %v632, %v636
      %v655 = vunpack.c.l.b16 %v616
      %v656 = vunpack.c.l.b16 %v617
      %v657 = vunpack.c.l.b16 %v618
      %v658 = vunpack.c.l.b16 %v619
      %v659 = vunpack.c.l.b16 %v620
      %v660 = vunpack.c.l.b16 %v621
      %v661 = vunpack.c.l.b16 %v622
      %v662 = vunpack.c.l.b16 %v623
      %v663 = vunpack.c.l.b16 %v624
      %v664 = vunpack.c.l.b16 %v625
      %v665 = vunpack.c.l.b16 %v626
      %v666 = vunpack.c.l.b16 %v627
      %v667 = vunpack.c.l.b16 %v628
      %v668 = vunpack.c.l.b16 %v629
      %v669 = vunpack.c.l.b16 %v630
      %v670 = vunpack.c.l.b16 %v631
      %v671 = vpack.c.b16 %v656, %v655
      %v672 = vpack.c.b16 %v658, %v657
      %v673 = vpack.c.b16 %v660, %v659
      %v674 = vpack.c.b16 %v662, %v661
      %v675 = vpack.c.b16 %v664, %v663
      %v676 = vpack.c.b16 %v666, %v665
      %v677 = vpack.c.b16 %v668, %v667
      %v678 = vpack.c.b16 %v670, %v669
      %687 = vmatprep.subr.bf16.mxu0 0
      %688 = vmatpush1.bf16.msra.mxu0 %v671
      %689 = vmatprep.subr.bf16.mxu0 0
      %690 = vmatpush1.bf16.msra.mxu0 %v672
      %691 = vmatprep.subr.bf16.mxu0 0
      %692 = vmatpush1.bf16.msra.mxu0 %v673
      %693 = vmatprep.subr.bf16.mxu0 0
      %694 = vmatpush1.bf16.msra.mxu0 %v674
      %695 = vmatprep.subr.bf16.mxu0 0
      %696 = vmatpush1.bf16.msra.mxu0 %v675
      %697 = vmatprep.subr.bf16.mxu0 0
      %698 = vmatpush1.bf16.msra.mxu0 %v676
      %699 = vmatprep.subr.bf16.mxu0 0
      %700 = vmatpush1.bf16.msra.mxu0 %v677
      %701 = vmatprep.subr.bf16.mxu0 0
      %702 = vmatpush1.bf16.msra.mxu0 %v678
      %703 = vmatprep.subr.bf16.mxu0 0
      %704 = vmatpush1.bf16.msra.mxu0 0
      %705 = vmatprep.subr.bf16.mxu0 0
      %706 = vmatpush1.bf16.msra.mxu0 0
      %707 = vmatprep.subr.bf16.mxu0 0
      %708 = vmatpush1.bf16.msra.mxu0 0
      %709 = vmatprep.subr.bf16.mxu0 0
      %710 = vmatpush1.bf16.msra.mxu0 0
      %711 = vmatprep.subr.bf16.mxu0 0
      %712 = vmatpush1.bf16.msra.mxu0 0
      %713 = vmatprep.subr.bf16.mxu0 0
      %714 = vmatpush1.bf16.msra.mxu0 0
      %715 = vmatprep.subr.bf16.mxu0 0
      %716 = vmatpush1.bf16.msra.mxu0 0
      %717 = vmatprep.subr.bf16.mxu0 0
      %718 = vmatpush1.bf16.msra.mxu0 0
      %719 = vmatprep.mubr.bf16.mxu0 0
      %720 = vmatmul.mubr.bf16.gmra.mrb[0].mxu0 %v520
      %v721 = vpop.f32.mrb[0].mxu0
      %v722 = vadd.f32 %v637, %v721
      %v723 = vpop.f32.mrb[0].mxu0
      %v724 = vpop.f32.mrb[0].mxu0
      %v725 = vpop.f32.mrb[0].mxu0
      %726 = vdwg.mxu0
      %v727 = vld [vmem:[%s9] sm:$0xf]
      %v728 = vld [vmem:[%s9 + $0x4] sm:$0xf]
      %v729 = vld [vmem:[%s9 + $0x8] sm:$0xf]
      %v730 = vld [vmem:[%s9 + $0xc] sm:$0xf]
      %v731 = vld [vmem:[%s9 + $0x10] sm:$0xf]
      %v732 = vld [vmem:[%s9 + $0x14] sm:$0xf]
      %v733 = vld [vmem:[%s9 + $0x18] sm:$0xf]
      %v734 = vld [vmem:[%s9 + $0x1c] sm:$0xf]
      %v735 = vld [vmem:[%s9 + $0x20] sm:$0xf]
      %v736 = vld [vmem:[%s9 + $0x24] sm:$0xf]
      %v737 = vld [vmem:[%s9 + $0x28] sm:$0xf]
      %v738 = vld [vmem:[%s9 + $0x2c] sm:$0xf]
      %v739 = vld [vmem:[%s9 + $0x30] sm:$0xf]
      %v740 = vld [vmem:[%s9 + $0x34] sm:$0xf]
      %v741 = vld [vmem:[%s9 + $0x38] sm:$0xf]
      %v742 = vld [vmem:[%s9 + $0x3c] sm:$0xf]
      %v743 = vld [vmem:[%s10] sm:$0x1]
      %v745 = vlaneseq
      %v746 = vshrl.u32 %v745, 7
      %v747 = vsub.s32 0, %v746
      %v748 = vrot.slane %v743, %v747
      %v766 = vunpack.c.l.b16 %v727
      %v767 = vunpack.c.l.b16 %v728
      %v768 = vunpack.c.l.b16 %v729
      %v769 = vunpack.c.l.b16 %v730
      %v770 = vunpack.c.l.b16 %v731
      %v771 = vunpack.c.l.b16 %v732
      %v772 = vunpack.c.l.b16 %v733
      %v773 = vunpack.c.l.b16 %v734
      %v774 = vunpack.c.l.b16 %v735
      %v775 = vunpack.c.l.b16 %v736
      %v776 = vunpack.c.l.b16 %v737
      %v777 = vunpack.c.l.b16 %v738
      %v778 = vunpack.c.l.b16 %v739
      %v779 = vunpack.c.l.b16 %v740
      %v780 = vunpack.c.l.b16 %v741
      %v781 = vunpack.c.l.b16 %v742
      %v782 = vpack.c.b16 %v767, %v766
      %v783 = vpack.c.b16 %v769, %v768
      %v784 = vpack.c.b16 %v771, %v770
      %v785 = vpack.c.b16 %v773, %v772
      %v786 = vpack.c.b16 %v775, %v774
      %v787 = vpack.c.b16 %v777, %v776
      %v788 = vpack.c.b16 %v779, %v778
      %v789 = vpack.c.b16 %v781, %v780
      %798 = vmatprep.subr.bf16.mxu0 0
      %799 = vmatpush1.bf16.msra.mxu0 %v782
      %800 = vmatprep.subr.bf16.mxu0 0
      %801 = vmatpush1.bf16.msra.mxu0 %v783
      %802 = vmatprep.subr.bf16.mxu0 0
      %803 = vmatpush1.bf16.msra.mxu0 %v784
      %804 = vmatprep.subr.bf16.mxu0 0
      %805 = vmatpush1.bf16.msra.mxu0 %v785
      %806 = vmatprep.subr.bf16.mxu0 0
      %807 = vmatpush1.bf16.msra.mxu0 %v786
      %808 = vmatprep.subr.bf16.mxu0 0
      %809 = vmatpush1.bf16.msra.mxu0 %v787
      %810 = vmatprep.subr.bf16.mxu0 0
      %811 = vmatpush1.bf16.msra.mxu0 %v788
      %812 = vmatprep.subr.bf16.mxu0 0
      %813 = vmatpush1.bf16.msra.mxu0 %v789
      %814 = vmatprep.subr.bf16.mxu0 0
      %815 = vmatpush1.bf16.msra.mxu0 0
      %816 = vmatprep.subr.bf16.mxu0 0
      %817 = vmatpush1.bf16.msra.mxu0 0
      %818 = vmatprep.subr.bf16.mxu0 0
      %819 = vmatpush1.bf16.msra.mxu0 0
      %820 = vmatprep.subr.bf16.mxu0 0
      %821 = vmatpush1.bf16.msra.mxu0 0
      %822 = vmatprep.subr.bf16.mxu0 0
      %823 = vmatpush1.bf16.msra.mxu0 0
      %824 = vmatprep.subr.bf16.mxu0 0
      %825 = vmatpush1.bf16.msra.mxu0 0
      %826 = vmatprep.subr.bf16.mxu0 0
      %827 = vmatpush1.bf16.msra.mxu0 0
      %828 = vmatprep.subr.bf16.mxu0 0
      %829 = vmatpush1.bf16.msra.mxu0 0
      %830 = vmatprep.mubr.bf16.mxu0 0
      %831 = vmatmul.mubr.bf16.gmra.mrb[0].mxu0 %v520
      %v832 = vpop.f32.mrb[0].mxu0
      %v833 = vadd.f32 %v748, %v832
      %v834 = vpop.f32.mrb[0].mxu0
      %v835 = vpop.f32.mrb[0].mxu0
      %v836 = vpop.f32.mrb[0].mxu0
      %837 = vdwg.mxu0
      %v838 = vld [vmem:[%s462] sm:$0x1]
      %v839 = vpack.c.bf16 %v611, %v611
      %v840 = vpack.c.bf16 %v722, %v722
      %v841 = vpack.c.bf16 %v833, %v833
      %vm842 = vcmask 261120
      %v844 = vsel %vm842, %v839, 0
      %v847 = vsel %vm842, %v840, 0
      %849 = vmatprep.subr.bf16.mxu0 0
      %850 = vmatpush1.bf16.xpose.msra.mxu0 %v847
      %851 = vmatprep.subr.bf16.mxu0 0
      %852 = vmatpush1.bf16.xpose.msra.mxu0 0
      %853 = vmatprep.subr.bf16.mxu0 0
      %854 = vmatpush1.bf16.xpose.msra.mxu0 0
      %855 = vmatprep.subr.bf16.mxu0 0
      %856 = vmatpush1.bf16.xpose.msra.mxu0 0
      %857 = vmatprep.subr.bf16.mxu0 0
      %858 = vmatpush1.bf16.xpose.msra.mxu0 0
      %859 = vmatprep.subr.bf16.mxu0 0
      %860 = vmatpush1.bf16.xpose.msra.mxu0 0
      %861 = vmatprep.subr.bf16.mxu0 0
      %862 = vmatpush1.bf16.xpose.msra.mxu0 0
      %863 = vmatprep.subr.bf16.mxu0 0
      %864 = vmatpush1.bf16.xpose.msra.mxu0 0
      %865 = vmatprep.subr.bf16.mxu0 0
      %866 = vmatpush1.bf16.xpose.msra.mxu0 0
      %867 = vmatprep.subr.bf16.mxu0 0
      %868 = vmatpush1.bf16.xpose.msra.mxu0 0
      %869 = vmatprep.subr.bf16.mxu0 0
      %870 = vmatpush1.bf16.xpose.msra.mxu0 0
      %871 = vmatprep.subr.bf16.mxu0 0
      %872 = vmatpush1.bf16.xpose.msra.mxu0 0
      %873 = vmatprep.subr.bf16.mxu0 0
      %874 = vmatpush1.bf16.xpose.msra.mxu0 0
      %875 = vmatprep.subr.bf16.mxu0 0
      %876 = vmatpush1.bf16.xpose.msra.mxu0 0
      %877 = vmatprep.subr.bf16.mxu0 0
      %878 = vmatpush1.bf16.xpose.msra.mxu0 0
      %879 = vmatprep.subr.bf16.mxu0 0
      %880 = vmatpush1.bf16.xpose.msra.mxu0 0
      %881 = vmatprep.mubr.bf16.mxu0 0
      %882 = vmatmul.mubr.bf16.gmra.mrb[0].mxu0 %v844
      %v883 = vpop.f32.mrb[0].mxu0
      %v884 = vadd.f32 0.0, %v883
      %v885 = vpop.f32.mrb[0].mxu0
      %v886 = vpop.f32.mrb[0].mxu0
      %v887 = vpop.f32.mrb[0].mxu0
      %888 = vdwg.mxu0
      %v889 = vmul.f32 %v884, 0.17677669
      %vm890 = vcmp.eq.f32.partialorder %v838, 0.0
      %v891 = vsel %vm890, 1, 0
      %v892 = vlaneseq
      %v893 = vshrl.u32 %v892, 7
      %v894 = vsub.s32 0, %v893
      %v895 = vrot.slane %v891, %v894
      %vm896 = vcmp.eq.s32.totalorder %v895, 1
      %v897 = vsel %vm896, -1e+09, %v889
      %vm898 = vcmask 64512
      %v899 = vsel %vm898, %v897, -inf
      %900 = vmax.xlane.f32.xlu0 %v899
      %v901 = vpop.xlane.xlu0 %900
      %v902 = vsub.f32 %v897, %v901
      %v903 = vmul.f32 %v902, 1.442695
      %v904 = vpow.pop %v903
      %v905 = vsel %vm898, %v904, 0.0
      %906 = vadd.xlane.f32.xlu0 %v905
      %v907 = vpop.xlane.xlu0 %906
      %v908 = vrcp.pop %v907
      %v909 = vmul.f32 %v904, %v908
      %v910 = vpack.c.bf16 %v909, %v909
      %v912 = vsel %vm898, %v910, 0
      %vm914 = vcmask 1043456
      %v916 = vsel %vm914, %v841, 0
      %918 = vmatprep.subr.bf16.mxu0 0
      %919 = vmatpush1.bf16.msra.mxu0 %v916
      %920 = vmatprep.subr.bf16.mxu0 0
      %921 = vmatpush1.bf16.msra.mxu0 0
      %922 = vmatprep.subr.bf16.mxu0 0
      %923 = vmatpush1.bf16.msra.mxu0 0
      %924 = vmatprep.subr.bf16.mxu0 0
      %925 = vmatpush1.bf16.msra.mxu0 0
      %926 = vmatprep.subr.bf16.mxu0 0
      %927 = vmatpush1.bf16.msra.mxu0 0
      %928 = vmatprep.subr.bf16.mxu0 0
      %929 = vmatpush1.bf16.msra.mxu0 0
      %930 = vmatprep.subr.bf16.mxu0 0
      %931 = vmatpush1.bf16.msra.mxu0 0
      %932 = vmatprep.subr.bf16.mxu0 0
      %933 = vmatpush1.bf16.msra.mxu0 0
      %934 = vmatprep.subr.bf16.mxu0 0
      %935 = vmatpush1.bf16.msra.mxu0 0
      %936 = vmatprep.subr.bf16.mxu0 0
      %937 = vmatpush1.bf16.msra.mxu0 0
      %938 = vmatprep.subr.bf16.mxu0 0
      %939 = vmatpush1.bf16.msra.mxu0 0
      %940 = vmatprep.subr.bf16.mxu0 0
      %941 = vmatpush1.bf16.msra.mxu0 0
      %942 = vmatprep.subr.bf16.mxu0 0
      %943 = vmatpush1.bf16.msra.mxu0 0
      %944 = vmatprep.subr.bf16.mxu0 0
      %945 = vmatpush1.bf16.msra.mxu0 0
      %946 = vmatprep.subr.bf16.mxu0 0
      %947 = vmatpush1.bf16.msra.mxu0 0
      %948 = vmatprep.subr.bf16.mxu0 0
      %949 = vmatpush1.bf16.msra.mxu0 0
      %950 = vmatprep.mubr.bf16.mxu0 0
      %951 = vmatmul.mubr.bf16.gmra.mrb[0].mxu0 %v912
      %v952 = vpop.f32.mrb[0].mxu0
      %v953 = vadd.f32 0.0, %v952
      %v954 = vpop.f32.mrb[0].mxu0
      %v955 = vpop.f32.mrb[0].mxu0
      %v956 = vpop.f32.mrb[0].mxu0
      %957 = vdwg.mxu0
      %959 = vrot.lane.b32.xlu0 %v839, 96
      %v960 = vpop.permute.xlu0 %959
      %962 = vrot.lane.b32.xlu0 %v840, 96
      %v963 = vpop.permute.xlu0 %962
      %v965 = vsel %vm842, %v960, 0
      %v968 = vsel %vm842, %v963, 0
      %970 = vmatprep.subr.bf16.mxu0 0
      %971 = vmatpush1.bf16.xpose.msra.mxu0 %v968
      %972 = vmatprep.subr.bf16.mxu0 0
      %973 = vmatpush1.bf16.xpose.msra.mxu0 0
      %974 = vmatprep.subr.bf16.mxu0 0
      %975 = vmatpush1.bf16.xpose.msra.mxu0 0
      %976 = vmatprep.subr.bf16.mxu0 0
      %977 = vmatpush1.bf16.xpose.msra.mxu0 0
      %978 = vmatprep.subr.bf16.mxu0 0
      %979 = vmatpush1.bf16.xpose.msra.mxu0 0
      %980 = vmatprep.subr.bf16.mxu0 0
      %981 = vmatpush1.bf16.xpose.msra.mxu0 0
      %982 = vmatprep.subr.bf16.mxu0 0
      %983 = vmatpush1.bf16.xpose.msra.mxu0 0
      %984 = vmatprep.subr.bf16.mxu0 0
      %985 = vmatpush1.bf16.xpose.msra.mxu0 0
      %986 = vmatprep.subr.bf16.mxu0 0
      %987 = vmatpush1.bf16.xpose.msra.mxu0 0
      %988 = vmatprep.subr.bf16.mxu0 0
      %989 = vmatpush1.bf16.xpose.msra.mxu0 0
      %990 = vmatprep.subr.bf16.mxu0 0
      %991 = vmatpush1.bf16.xpose.msra.mxu0 0
      %992 = vmatprep.subr.bf16.mxu0 0
      %993 = vmatpush1.bf16.xpose.msra.mxu0 0
      %994 = vmatprep.subr.bf16.mxu0 0
      %995 = vmatpush1.bf16.xpose.msra.mxu0 0
      %996 = vmatprep.subr.bf16.mxu0 0
      %997 = vmatpush1.bf16.xpose.msra.mxu0 0
      %998 = vmatprep.subr.bf16.mxu0 0
      %999 = vmatpush1.bf16.xpose.msra.mxu0 0
      %1000 = vmatprep.subr.bf16.mxu0 0
      %1001 = vmatpush1.bf16.xpose.msra.mxu0 0
      %1002 = vmatprep.mubr.bf16.mxu0 0
      %1003 = vmatmul.mubr.bf16.gmra.mrb[0].mxu0 %v965
      %v1004 = vpop.f32.mrb[0].mxu0
      %v1005 = vadd.f32 0.0, %v1004
      %v1006 = vpop.f32.mrb[0].mxu0
      %v1007 = vpop.f32.mrb[0].mxu0
      %v1008 = vpop.f32.mrb[0].mxu0
      %1009 = vdwg.mxu0
      %v1010 = vmul.f32 %v1005, 0.17677669
      %v1011 = vsel %vm896, -1e+09, %v1010
      %v1012 = vsel %vm898, %v1011, -inf
      %1013 = vmax.xlane.f32.xlu0 %v1012
      %v1014 = vpop.xlane.xlu0 %1013
      %v1015 = vsub.f32 %v1011, %v1014
      %v1016 = vmul.f32 %v1015, 1.442695
      %v1017 = vpow.pop %v1016
      %v1018 = vsel %vm898, %v1017, 0.0
      %1019 = vadd.xlane.f32.xlu0 %v1018
      %v1020 = vpop.xlane.xlu0 %1019
      %v1021 = vrcp.pop %v1020
      %v1022 = vmul.f32 %v1017, %v1021
      %v1023 = vpack.c.bf16 %v1022, %v1022
      %1025 = vrot.lane.b32.xlu0 %v841, 96
      %v1026 = vpop.permute.xlu0 %1025
      %v1028 = vsel %vm898, %v1023, 0
      %v1031 = vsel %vm914, %v1026, 0
      %1033 = vmatprep.subr.bf16.mxu0 0
      %1034 = vmatpush1.bf16.msra.mxu0 %v1031
      %1035 = vmatprep.subr.bf16.mxu0 0
      %1036 = vmatpush1.bf16.msra.mxu0 0
      %1037 = vmatprep.subr.bf16.mxu0 0
      %1038 = vmatpush1.bf16.msra.mxu0 0
      %1039 = vmatprep.subr.bf16.mxu0 0
      %1040 = vmatpush1.bf16.msra.mxu0 0
      %1041 = vmatprep.subr.bf16.mxu0 0
      %1042 = vmatpush1.bf16.msra.mxu0 0
      %1043 = vmatprep.subr.bf16.mxu0 0
      %1044 = vmatpush1.bf16.msra.mxu0 0
      %1045 = vmatprep.subr.bf16.mxu0 0
      %1046 = vmatpush1.bf16.msra.mxu0 0
      %1047 = vmatprep.subr.bf16.mxu0 0
      %1048 = vmatpush1.bf16.msra.mxu0 0
      %1049 = vmatprep.subr.bf16.mxu0 0
      %1050 = vmatpush1.bf16.msra.mxu0 0
      %1051 = vmatprep.subr.bf16.mxu0 0
      %1052 = vmatpush1.bf16.msra.mxu0 0
      %1053 = vmatprep.subr.bf16.mxu0 0
      %1054 = vmatpush1.bf16.msra.mxu0 0
      %1055 = vmatprep.subr.bf16.mxu0 0
      %1056 = vmatpush1.bf16.msra.mxu0 0
      %1057 = vmatprep.subr.bf16.mxu0 0
      %1058 = vmatpush1.bf16.msra.mxu0 0
      %1059 = vmatprep.subr.bf16.mxu0 0
      %1060 = vmatpush1.bf16.msra.mxu0 0
      %1061 = vmatprep.subr.bf16.mxu0 0
      %1062 = vmatpush1.bf16.msra.mxu0 0
      %1063 = vmatprep.subr.bf16.mxu0 0
      %1064 = vmatpush1.bf16.msra.mxu0 0
      %1065 = vmatprep.mubr.bf16.mxu0 0
      %1066 = vmatmul.mubr.bf16.gmra.mrb[0].mxu0 %v1028
      %v1067 = vpop.f32.mrb[0].mxu0
      %v1068 = vadd.f32 0.0, %v1067
      %v1069 = vpop.f32.mrb[0].mxu0
      %v1070 = vpop.f32.mrb[0].mxu0
      %v1071 = vpop.f32.mrb[0].mxu0
      %1072 = vdwg.mxu0
      %1073 = vrot.lane.b32.xlu0 %v839, 64
      %v1074 = vpop.permute.xlu0 %1073
      %1075 = vrot.lane.b32.xlu0 %v840, 64
      %v1076 = vpop.permute.xlu0 %1075
      %v1078 = vsel %vm842, %v1074, 0
      %v1081 = vsel %vm842, %v1076, 0
      %1083 = vmatprep.subr.bf16.mxu0 0
      %1084 = vmatpush1.bf16.xpose.msra.mxu0 %v1081
      %1085 = vmatprep.subr.bf16.mxu0 0
      %1086 = vmatpush1.bf16.xpose.msra.mxu0 0
      %1087 = vmatprep.subr.bf16.mxu0 0
      %1088 = vmatpush1.bf16.xpose.msra.mxu0 0
      %1089 = vmatprep.subr.bf16.mxu0 0
      %1090 = vmatpush1.bf16.xpose.msra.mxu0 0
      %1091 = vmatprep.subr.bf16.mxu0 0
      %1092 = vmatpush1.bf16.xpose.msra.mxu0 0
      %1093 = vmatprep.subr.bf16.mxu0 0
      %1094 = vmatpush1.bf16.xpose.msra.mxu0 0
      %1095 = vmatprep.subr.bf16.mxu0 0
      %1096 = vmatpush1.bf16.xpose.msra.mxu0 0
      %1097 = vmatprep.subr.bf16.mxu0 0
      %1098 = vmatpush1.bf16.xpose.msra.mxu0 0
      %1099 = vmatprep.subr.bf16.mxu0 0
      %1100 = vmatpush1.bf16.xpose.msra.mxu0 0
      %1101 = vmatprep.subr.bf16.mxu0 0
      %1102 = vmatpush1.bf16.xpose.msra.mxu0 0
      %1103 = vmatprep.subr.bf16.mxu0 0
      %1104 = vmatpush1.bf16.xpose.msra.mxu0 0
      %1105 = vmatprep.subr.bf16.mxu0 0
      %1106 = vmatpush1.bf16.xpose.msra.mxu0 0
      %1107 = vmatprep.subr.bf16.mxu0 0
      %1108 = vmatpush1.bf16.xpose.msra.mxu0 0
      %1109 = vmatprep.subr.bf16.mxu0 0
      %1110 = vmatpush1.bf16.xpose.msra.mxu0 0
      %1111 = vmatprep.subr.bf16.mxu0 0
      %1112 = vmatpush1.bf16.xpose.msra.mxu0 0
      %1113 = vmatprep.subr.bf16.mxu0 0
      %1114 = vmatpush1.bf16.xpose.msra.mxu0 0
      %1115 = vmatprep.mubr.bf16.mxu0 0
      %1116 = vmatmul.mubr.bf16.gmra.mrb[0].mxu0 %v1078
      %v1117 = vpop.f32.mrb[0].mxu0
      %v1118 = vadd.f32 0.0, %v1117
      %v1119 = vpop.f32.mrb[0].mxu0
      %v1120 = vpop.f32.mrb[0].mxu0
      %v1121 = vpop.f32.mrb[0].mxu0
      %1122 = vdwg.mxu0
      %v1123 = vmul.f32 %v1118, 0.17677669
      %v1124 = vsel %vm896, -1e+09, %v1123
      %v1125 = vsel %vm898, %v1124, -inf
      %1126 = vmax.xlane.f32.xlu0 %v1125
      %v1127 = vpop.xlane.xlu0 %1126
      %v1128 = vsub.f32 %v1124, %v1127
      %v1129 = vmul.f32 %v1128, 1.442695
      %v1130 = vpow.pop %v1129
      %v1131 = vsel %vm898, %v1130, 0.0
      %1132 = vadd.xlane.f32.xlu0 %v1131
      %v1133 = vpop.xlane.xlu0 %1132
      %v1134 = vrcp.pop %v1133
      %v1135 = vmul.f32 %v1130, %v1134
      %v1136 = vpack.c.bf16 %v1135, %v1135
      %1137 = vrot.lane.b32.xlu0 %v841, 64
      %v1138 = vpop.permute.xlu0 %1137
      %v1140 = vsel %vm898, %v1136, 0
      %v1143 = vsel %vm914, %v1138, 0
      %1145 = vmatprep.subr.bf16.mxu0 0
      %1146 = vmatpush1.bf16.msra.mxu0 %v1143
      %1147 = vmatprep.subr.bf16.mxu0 0
      %1148 = vmatpush1.bf16.msra.mxu0 0
      %1149 = vmatprep.subr.bf16.mxu0 0
      %1150 = vmatpush1.bf16.msra.mxu0 0
      %1151 = vmatprep.subr.bf16.mxu0 0
      %1152 = vmatpush1.bf16.msra.mxu0 0
      %1153 = vmatprep.subr.bf16.mxu0 0
      %1154 = vmatpush1.bf16.msra.mxu0 0
      %1155 = vmatprep.subr.bf16.mxu0 0
      %1156 = vmatpush1.bf16.msra.mxu0 0
      %1157 = vmatprep.subr.bf16.mxu0 0
      %1158 = vmatpush1.bf16.msra.mxu0 0
      %1159 = vmatprep.subr.bf16.mxu0 0
      %1160 = vmatpush1.bf16.msra.mxu0 0
      %1161 = vmatprep.subr.bf16.mxu0 0
      %1162 = vmatpush1.bf16.msra.mxu0 0
      %1163 = vmatprep.subr.bf16.mxu0 0
      %1164 = vmatpush1.bf16.msra.mxu0 0
      %1165 = vmatprep.subr.bf16.mxu0 0
      %1166 = vmatpush1.bf16.msra.mxu0 0
      %1167 = vmatprep.subr.bf16.mxu0 0
      %1168 = vmatpush1.bf16.msra.mxu0 0
      %1169 = vmatprep.subr.bf16.mxu0 0
      %1170 = vmatpush1.bf16.msra.mxu0 0
      %1171 = vmatprep.subr.bf16.mxu0 0
      %1172 = vmatpush1.bf16.msra.mxu0 0
      %1173 = vmatprep.subr.bf16.mxu0 0
      %1174 = vmatpush1.bf16.msra.mxu0 0
      %1175 = vmatprep.subr.bf16.mxu0 0
      %1176 = vmatpush1.bf16.msra.mxu0 0
      %1177 = vmatprep.mubr.bf16.mxu0 0
      %1178 = vmatmul.mubr.bf16.gmra.mrb[0].mxu0 %v1140
      %v1179 = vpop.f32.mrb[0].mxu0
      %v1180 = vadd.f32 0.0, %v1179
      %v1181 = vpop.f32.mrb[0].mxu0
      %v1182 = vpop.f32.mrb[0].mxu0
      %v1183 = vpop.f32.mrb[0].mxu0
      %1184 = vdwg.mxu0
      %1185 = vrot.lane.b32.xlu0 %v839, 32
      %v1186 = vpop.permute.xlu0 %1185
      %1187 = vrot.lane.b32.xlu0 %v840, 32
      %v1188 = vpop.permute.xlu0 %1187
      %v1190 = vsel %vm842, %v1186, 0
      %v1193 = vsel %vm842, %v1188, 0
      %1195 = vmatprep.subr.bf16.mxu0 0
      %1196 = vmatpush1.bf16.xpose.msra.mxu0 %v1193
      %1197 = vmatprep.subr.bf16.mxu0 0
      %1198 = vmatpush1.bf16.xpose.msra.mxu0 0
      %1199 = vmatprep.subr.bf16.mxu0 0
      %1200 = vmatpush1.bf16.xpose.msra.mxu0 0
      %1201 = vmatprep.subr.bf16.mxu0 0
      %1202 = vmatpush1.bf16.xpose.msra.mxu0 0
      %1203 = vmatprep.subr.bf16.mxu0 0
      %1204 = vmatpush1.bf16.xpose.msra.mxu0 0
      %1205 = vmatprep.subr.bf16.mxu0 0
      %1206 = vmatpush1.bf16.xpose.msra.mxu0 0
      %1207 = vmatprep.subr.bf16.mxu0 0
      %1208 = vmatpush1.bf16.xpose.msra.mxu0 0
      %1209 = vmatprep.subr.bf16.mxu0 0
      %1210 = vmatpush1.bf16.xpose.msra.mxu0 0
      %1211 = vmatprep.subr.bf16.mxu0 0
      %1212 = vmatpush1.bf16.xpose.msra.mxu0 0
      %1213 = vmatprep.subr.bf16.mxu0 0
      %1214 = vmatpush1.bf16.xpose.msra.mxu0 0
      %1215 = vmatprep.subr.bf16.mxu0 0
      %1216 = vmatpush1.bf16.xpose.msra.mxu0 0
      %1217 = vmatprep.subr.bf16.mxu0 0
      %1218 = vmatpush1.bf16.xpose.msra.mxu0 0
      %1219 = vmatprep.subr.bf16.mxu0 0
      %1220 = vmatpush1.bf16.xpose.msra.mxu0 0
      %1221 = vmatprep.subr.bf16.mxu0 0
      %1222 = vmatpush1.bf16.xpose.msra.mxu0 0
      %1223 = vmatprep.subr.bf16.mxu0 0
      %1224 = vmatpush1.bf16.xpose.msra.mxu0 0
      %1225 = vmatprep.subr.bf16.mxu0 0
      %1226 = vmatpush1.bf16.xpose.msra.mxu0 0
      %1227 = vmatprep.mubr.bf16.mxu0 0
      %1228 = vmatmul.mubr.bf16.gmra.mrb[0].mxu0 %v1190
      %v1229 = vpop.f32.mrb[0].mxu0
      %v1230 = vadd.f32 0.0, %v1229
      %v1231 = vpop.f32.mrb[0].mxu0
      %v1232 = vpop.f32.mrb[0].mxu0
      %v1233 = vpop.f32.mrb[0].mxu0
      %1234 = vdwg.mxu0
      %v1235 = vmul.f32 %v1230, 0.17677669
      %v1236 = vsel %vm896, -1e+09, %v1235
      %v1237 = vsel %vm898, %v1236, -inf
      %1238 = vmax.xlane.f32.xlu0 %v1237
      %v1239 = vpop.xlane.xlu0 %1238
      %v1240 = vsub.f32 %v1236, %v1239
      %v1241 = vmul.f32 %v1240, 1.442695
      %v1242 = vpow.pop %v1241
      %v1243 = vsel %vm898, %v1242, 0.0
      %1244 = vadd.xlane.f32.xlu0 %v1243
      %v1245 = vpop.xlane.xlu0 %1244
      %v1246 = vrcp.pop %v1245
      %v1247 = vmul.f32 %v1242, %v1246
      %v1248 = vpack.c.bf16 %v1247, %v1247
      %1249 = vrot.lane.b32.xlu0 %v841, 32
      %v1250 = vpop.permute.xlu0 %1249
      %v1252 = vsel %vm898, %v1248, 0
      %v1255 = vsel %vm914, %v1250, 0
      %1257 = vmatprep.subr.bf16.mxu0 0
      %1258 = vmatpush1.bf16.msra.mxu0 %v1255
      %1259 = vmatprep.subr.bf16.mxu0 0
      %1260 = vmatpush1.bf16.msra.mxu0 0
      %1261 = vmatprep.subr.bf16.mxu0 0
      %1262 = vmatpush1.bf16.msra.mxu0 0
      %1263 = vmatprep.subr.bf16.mxu0 0
      %1264 = vmatpush1.bf16.msra.mxu0 0
      %1265 = vmatprep.subr.bf16.mxu0 0
      %1266 = vmatpush1.bf16.msra.mxu0 0
      %1267 = vmatprep.subr.bf16.mxu0 0
      %1268 = vmatpush1.bf16.msra.mxu0 0
      %1269 = vmatprep.subr.bf16.mxu0 0
      %1270 = vmatpush1.bf16.msra.mxu0 0
      %1271 = vmatprep.subr.bf16.mxu0 0
      %1272 = vmatpush1.bf16.msra.mxu0 0
      %1273 = vmatprep.subr.bf16.mxu0 0
      %1274 = vmatpush1.bf16.msra.mxu0 0
      %1275 = vmatprep.subr.bf16.mxu0 0
      %1276 = vmatpush1.bf16.msra.mxu0 0
      %1277 = vmatprep.subr.bf16.mxu0 0
      %1278 = vmatpush1.bf16.msra.mxu0 0
      %1279 = vmatprep.subr.bf16.mxu0 0
      %1280 = vmatpush1.bf16.msra.mxu0 0
      %1281 = vmatprep.subr.bf16.mxu0 0
      %1282 = vmatpush1.bf16.msra.mxu0 0
      %1283 = vmatprep.subr.bf16.mxu0 0
      %1284 = vmatpush1.bf16.msra.mxu0 0
      %1285 = vmatprep.subr.bf16.mxu0 0
      %1286 = vmatpush1.bf16.msra.mxu0 0
      %1287 = vmatprep.subr.bf16.mxu0 0
      %1288 = vmatpush1.bf16.msra.mxu0 0
      %1289 = vmatprep.mubr.bf16.mxu0 0
      %1290 = vmatmul.mubr.bf16.gmra.mrb[0].mxu0 %v1252
      %v1291 = vpop.f32.mrb[0].mxu0
      %v1292 = vadd.f32 0.0, %v1291
      %v1293 = vpop.f32.mrb[0].mxu0
      %v1294 = vpop.f32.mrb[0].mxu0
      %v1295 = vpop.f32.mrb[0].mxu0
      %1296 = vdwg.mxu0
      %1298 = vrot.lane.b32.xlu0 %v1068, 32
      %v1299 = vpop.permute.xlu0 %1298
      %1302 = vrot.lane.b32.xlu0 %v1180, 64
      %v1303 = vpop.permute.xlu0 %1302
      %1306 = vrot.lane.b32.xlu0 %v1292, 96
      %v1307 = vpop.permute.xlu0 %1306
      %v1309 = vsel %vm842, %v953, %v1299
      %vm1310 = vcmask 523264
      %v1311 = vsel %vm1310, %v1309, %v1303
      %vm1312 = vcmask 785408
      %v1313 = vsel %vm1312, %v1311, %v1307
      %v1314 = vld [vmem:[%s11] sm:$0xf]
      %v1315 = vld [vmem:[%s11 + $0x4] sm:$0xf]
      %v1316 = vld [vmem:[%s11 + $0x8] sm:$0xf]
      %v1317 = vld [vmem:[%s11 + $0xc] sm:$0xf]
      %v1318 = vld [vmem:[%s11 + $0x10] sm:$0xf]
      %v1319 = vld [vmem:[%s11 + $0x14] sm:$0xf]
      %v1320 = vld [vmem:[%s11 + $0x18] sm:$0xf]
      %v1321 = vld [vmem:[%s11 + $0x1c] sm:$0xf]
      %v1322 = vld [vmem:[%s11 + $0x20] sm:$0xf]
      %v1323 = vld [vmem:[%s11 + $0x24] sm:$0xf]
      %v1324 = vld [vmem:[%s11 + $0x28] sm:$0xf]
      %v1325 = vld [vmem:[%s11 + $0x2c] sm:$0xf]
      %v1326 = vld [vmem:[%s11 + $0x30] sm:$0xf]
      %v1327 = vld [vmem:[%s11 + $0x34] sm:$0xf]
      %v1328 = vld [vmem:[%s11 + $0x38] sm:$0xf]
      %v1329 = vld [vmem:[%s11 + $0x3c] sm:$0xf]
      %v1330 = vpack.c.bf16 %v1313, %v1313
      %v1347 = vunpack.c.l.b16 %v1314
      %v1348 = vunpack.c.l.b16 %v1315
      %v1349 = vunpack.c.l.b16 %v1316
      %v1350 = vunpack.c.l.b16 %v1317
      %v1351 = vunpack.c.l.b16 %v1318
      %v1352 = vunpack.c.l.b16 %v1319
      %v1353 = vunpack.c.l.b16 %v1320
      %v1354 = vunpack.c.l.b16 %v1321
      %v1355 = vunpack.c.l.b16 %v1322
      %v1356 = vunpack.c.l.b16 %v1323
      %v1357 = vunpack.c.l.b16 %v1324
      %v1358 = vunpack.c.l.b16 %v1325
      %v1359 = vunpack.c.l.b16 %v1326
      %v1360 = vunpack.c.l.b16 %v1327
      %v1361 = vunpack.c.l.b16 %v1328
      %v1362 = vunpack.c.l.b16 %v1329
      %v1363 = vpack.c.b16 %v1348, %v1347
      %v1364 = vpack.c.b16 %v1350, %v1349
      %v1365 = vpack.c.b16 %v1352, %v1351
      %v1366 = vpack.c.b16 %v1354, %v1353
      %v1367 = vpack.c.b16 %v1356, %v1355
      %v1368 = vpack.c.b16 %v1358, %v1357
      %v1369 = vpack.c.b16 %v1360, %v1359
      %v1370 = vpack.c.b16 %v1362, %v1361
      %1379 = vmatprep.subr.bf16.mxu0 0
      %1380 = vmatpush1.bf16.msra.mxu0 %v1363
      %1381 = vmatprep.subr.bf16.mxu0 0
      %1382 = vmatpush1.bf16.msra.mxu0 %v1364
      %1383 = vmatprep.subr.bf16.mxu0 0
      %1384 = vmatpush1.bf16.msra.mxu0 %v1365
      %1385 = vmatprep.subr.bf16.mxu0 0
      %1386 = vmatpush1.bf16.msra.mxu0 %v1366
      %1387 = vmatprep.subr.bf16.mxu0 0
      %1388 = vmatpush1.bf16.msra.mxu0 %v1367
      %1389 = vmatprep.subr.bf16.mxu0 0
      %1390 = vmatpush1.bf16.msra.mxu0 %v1368
      %1391 = vmatprep.subr.bf16.mxu0 0
      %1392 = vmatpush1.bf16.msra.mxu0 %v1369
      %1393 = vmatprep.subr.bf16.mxu0 0
      %1394 = vmatpush1.bf16.msra.mxu0 %v1370
      %1395 = vmatprep.subr.bf16.mxu0 0
      %1396 = vmatpush1.bf16.msra.mxu0 0
      %1397 = vmatprep.subr.bf16.mxu0 0
      %1398 = vmatpush1.bf16.msra.mxu0 0
      %1399 = vmatprep.subr.bf16.mxu0 0
      %1400 = vmatpush1.bf16.msra.mxu0 0
      %1401 = vmatprep.subr.bf16.mxu0 0
      %1402 = vmatpush1.bf16.msra.mxu0 0
      %1403 = vmatprep.subr.bf16.mxu0 0
      %1404 = vmatpush1.bf16.msra.mxu0 0
      %1405 = vmatprep.subr.bf16.mxu0 0
      %1406 = vmatpush1.bf16.msra.mxu0 0
      %1407 = vmatprep.subr.bf16.mxu0 0
      %1408 = vmatpush1.bf16.msra.mxu0 0
      %1409 = vmatprep.subr.bf16.mxu0 0
      %1410 = vmatpush1.bf16.msra.mxu0 0
      %1411 = vmatprep.mubr.bf16.mxu0 0
      %1412 = vmatmul.mubr.bf16.gmra.mrb[0].mxu0 %v1330
      %v1413 = vpop.f32.mrb[0].mxu0
      %v1414 = vadd.f32 0.0, %v1413
      %v1415 = vpop.f32.mrb[0].mxu0
      %v1416 = vpop.f32.mrb[0].mxu0
      %v1417 = vpop.f32.mrb[0].mxu0
      %1418 = vdwg.mxu0
      %v1419 = vadd.f32 %v468, %v1414
      %v1420 = vld [vmem:[%s12] sm:$0x1]
      %v1422 = vlaneseq
      %v1423 = vshrl.u32 %v1422, 7
      %v1424 = vsub.s32 0, %v1423
      %v1425 = vrot.slane %v1420, %v1424
      %v1427 = vadd.f32 %v1419, %v1425
      %1428 = vst [vmem:[%s466] sm:$0xff] %v1427
      %p1429 = scmp.lt.s32.totalorder %s24, 1
      %s1430 = scalar_select %p1429, %s24, 1
      %s1431 = smul.addr %s1430, 8
      %s1432 = scalar_lea.vmem %s13, %s1431
      // Predicated region
      $region73: #{atnet_forward.7} parent=71 // pred_check
        %p1433 = pneg %p330
      $region74: #{atnet_forward.7} parent=71 // pred_check_branch
        %1435 = sbr.rel (%p1433) target = $region76
      $region75: #{atnet_forward.7} parent=71 // pred_region
        _
      $region76: #{atnet_forward.7} parent=71 // pred_fallthru
        _
    $region72: #{atnet_forward.7} parent=5 // pred_fallthru
      _
    %p1436 = scmp.le.s32.totalorder 2, %s19
    // Predicated region
    $region77: #{atnet_forward.7} parent=5 // pred_check
      %p1437 = pneg %p1436
    $region78: #{atnet_forward.7} parent=5 // pred_check_branch
      %1439 = sbr.rel (%p1437) target = $region80
    $region79: #{atnet_forward.7} parent=5 // pred_region
      %s1440 = ssub.s32 %s19, 2
      // Predicated region
      $region81: #{atnet_forward.7} parent=79 // pred_check
        %p1441 = pneg %p336
      $region82: #{atnet_forward.7} parent=79 // pred_check_branch
        %1443 = sbr.rel (%p1441) target = $region84
      $region83: #{atnet_forward.7} parent=79 // pred_region
        %p1444 = scmp.lt.s32.totalorder %s25, 1
        %s1445 = scalar_select %p1444, %s25, 1
        %s1446 = smul.addr %s1445, 8
        %s1447 = scalar_lea.vmem %s13, %s1446
      $region84: #{atnet_forward.7} parent=79 // pred_fallthru
        _
    $region80: #{atnet_forward.7} parent=5 // pred_fallthru
      _
  $region6: #{atnet_forward.7} parent=0 // loop_footer
    %s23 = sadd.s32 1, %s19
  $region7: #{atnet_forward.7} parent=0 // loop_footer_branch
    %18 = sbr.rel target = $region3
  $region8: #{atnet_forward.7} parent=0 // loop_exit
    _

// kernel: atnet_forward.13
$region0: #{atnet_forward.13}
  #allocation0 [shape = 'u32[]', space=smem, size = 0x4, offset = 0x4, fixed_abs, tag = 'smem constant byte address 0x4 - core index']
  #allocation1 [shape = 'u32[144,128]{1,0:T(1,128)}', space=vmem, size = 0x12000, scoped, tag = 'internal scratch']
  %s0 = inlined_call_operand.vmem [shape: f32[2,8,128], index: 0, kind: input, shape index: {}]
  %s1 = inlined_call_operand.vmem [shape: f32[1,128], index: 1, kind: input, shape index: {}]
  %s2 = inlined_call_operand.vmem [shape: f32[1,128], index: 2, kind: input, shape index: {}]
  %s3 = inlined_call_operand.hbm [shape: f32[2,8,128], index: 3, kind: output, shape index: {}]
  %s4 = sld [smem:[#allocation0]]
  $region45: #{atnet_forward.13} parent=0
    _
  %s6 = ssub.s32 1, %s4
  %s7 = scalar_select 0, %s6, %s4
  $region1: #{atnet_forward.13} parent=0
    #allocation2 [shape = 'u8[8192]{0}', space=vmem, size = 0x2000, scoped, tag = 'output window, operand 0']
    #allocation3 [shape = 's32[2]{0}', space=sflag, size = 0x8, scoped, tag = 'scoped memory for atnet_forward.13']
    %8 = vsyncpa [#allocation3], 0
    %s9 = scalar_lea.sflag [#allocation3], 1
    %10 = vsyncpa %s9, 0
    loop: start=0, step=1, limit=4
    $region2: #{atnet_forward.13} parent=1 // loop_pre_header
      _
    $region3: #{atnet_forward.13} parent=1 // loop_header
      %s12 = sphi 0, %s16
      %p13 = scmp.ge.s32.totalorder %s12, 4
      %s22 = sphi 0, %s24
      %s25 = sphi 0, %s22
      %s26 = sphi 0, %s25
      %s42 = sphi 0, %s26
      %s46 = sphi 0, %s46
      %s48 = sphi 0, %s46
      %s49 = sphi 0, %s48
      %s63 = sphi 0, %s49
      %s67 = sphi 0, %s67
      %s69 = sphi 0, %s67
      %s70 = sphi 0, %s69
      %s84 = sphi 0, %s70
      %s90 = sphi 0, %s92
      %s93 = sphi 0, %s90
      %s94 = sphi 0, %s93
      %s110 = sphi 0, %s94
    $region4: #{atnet_forward.13} parent=1 // loop_header_branch
      %15 = sbr.rel (%p13) target = $region8
    $region5: #{atnet_forward.13} parent=1 // loop_body
      %s17 = ssub.s32 %s12, 1
      %s18 = ssub.s32 %s12, 2
      %s19 = sadd.s32 %s12, 1
      %s20 = ssub.s32 %s12, %s19
      %p21 = scmp.eq.s32.totalorder %s20, 0
      %s23 = sadd.s32 %s22, 1
      %s24 = scalar_select %p21, %s22, %s23
      %p27 = pneg %p21
      %p28 = scmp.eq.s32.totalorder %s12, 1
      %p29 = por %p27, %p28
      %p30 = scmp.ne.s32.totalorder %s22, %s25
      %p31 = scmp.eq.s32.totalorder %s12, 0
      %p32 = por %p30, %p31
      %p33 = scmp.ne.s32.totalorder %s22, %s25
      %p34 = scmp.eq.s32.totalorder %s17, 1
      %p35 = por %p33, %p34
      %p36 = scmp.ne.s32.totalorder %s25, %s26
      %p37 = scmp.eq.s32.totalorder %s17, 0
      %p38 = por %p36, %p37
      %p39 = scmp.ne.s32.totalorder %s25, %s26
      %p40 = scmp.eq.s32.totalorder %s18, 1
      %p41 = por %p39, %p40
      %p43 = scmp.ne.s32.totalorder %s26, %s42
      %p44 = scmp.eq.s32.totalorder %s18, 0
      %p45 = por %p43, %p44
      %s47 = sadd.s32 %s46, 1
      %p50 = scmp.eq.s32.totalorder %s12, 1
      %p51 = scmp.ne.s32.totalorder %s46, %s48
      %p52 = scmp.eq.s32.totalorder %s12, 0
      %p53 = por %p51, %p52
      %p54 = scmp.ne.s32.totalorder %s46, %s48
      %p55 = scmp.eq.s32.totalorder %s17, 1
      %p56 = por %p54, %p55
      %p57 = scmp.ne.s32.totalorder %s48, %s49
      %p58 = scmp.eq.s32.totalorder %s17, 0
      %p59 = por %p57, %p58
      %p60 = scmp.ne.s32.totalorder %s48, %s49
      %p61 = scmp.eq.s32.totalorder %s18, 1
      %p62 = por %p60, %p61
      %p64 = scmp.ne.s32.totalorder %s49, %s63
      %p65 = scmp.eq.s32.totalorder %s18, 0
      %p66 = por %p64, %p65
      %s68 = sadd.s32 %s67, 1
      %p71 = scmp.eq.s32.totalorder %s12, 1
      %p72 = scmp.ne.s32.totalorder %s67, %s69
      %p73 = scmp.eq.s32.totalorder %s12, 0
      %p74 = por %p72, %p73
      %p75 = scmp.ne.s32.totalorder %s67, %s69
      %p76 = scmp.eq.s32.totalorder %s17, 1
      %p77 = por %p75, %p76
      %p78 = scmp.ne.s32.totalorder %s69, %s70
      %p79 = scmp.eq.s32.totalorder %s17, 0
      %p80 = por %p78, %p79
      %p81 = scmp.ne.s32.totalorder %s69, %s70
      %p82 = scmp.eq.s32.totalorder %s18, 1
      %p83 = por %p81, %p82
      %p85 = scmp.ne.s32.totalorder %s70, %s84
      %p86 = scmp.eq.s32.totalorder %s18, 0
      %p87 = por %p85, %p86
      %s88 = ssub.s32 %s12, %s19
      %p89 = scmp.eq.s32.totalorder %s88, 0
      %s91 = sadd.s32 %s90, 1
      %s92 = scalar_select %p89, %s90, %s91
      %p95 = pneg %p89
      %p96 = scmp.eq.s32.totalorder %s12, 1
      %p97 = por %p95, %p96
      %p98 = scmp.ne.s32.totalorder %s90, %s93
      %p99 = scmp.eq.s32.totalorder %s12, 0
      %p100 = por %p98, %p99
      %p101 = scmp.ne.s32.totalorder %s90, %s93
      %p102 = scmp.eq.s32.totalorder %s17, 1
      %p103 = por %p101, %p102
      %p104 = scmp.ne.s32.totalorder %s93, %s94
      %p105 = scmp.eq.s32.totalorder %s17, 0
      %p106 = por %p104, %p105
      %p107 = scmp.ne.s32.totalorder %s93, %s94
      %p108 = scmp.eq.s32.totalorder %s18, 1
      %p109 = por %p107, %p108
      %p111 = scmp.ne.s32.totalorder %s94, %s110
      %p112 = scmp.eq.s32.totalorder %s18, 0
      %p113 = por %p111, %p112
      %p114 = scmp.le.s32.totalorder 1, %s12
      %p115 = scmp.lt.s32.totalorder %s12, 3
      %p116 = pnand %p114, %p115
      %p117 = pneg %p116
      // Predicated region
      $region9: #{atnet_forward.13} parent=5 // pred_check
        _
      $region10: #{atnet_forward.13} parent=5 // pred_check_branch
        %119 = sbr.rel (%p116) target = $region12
      $region11: #{atnet_forward.13} parent=5 // pred_region
        %s120 = ssub.s32 %s12, 1
        // Predicated region
        $region13: #{atnet_forward.13} parent=11 // pred_check
          %p121 = pneg %p59
        $region14: #{atnet_forward.13} parent=11 // pred_check_branch
          %123 = sbr.rel (%p121) target = $region16
        $region15: #{atnet_forward.13} parent=11 // pred_region
          _
        $region16: #{atnet_forward.13} parent=11 // pred_fallthru
          _
        // Predicated region
        $region17: #{atnet_forward.13} parent=11 // pred_check
          %p124 = pneg %p80
        $region18: #{atnet_forward.13} parent=11 // pred_check_branch
          %126 = sbr.rel (%p124) target = $region20
        $region19: #{atnet_forward.13} parent=11 // pred_region
          _
        $region20: #{atnet_forward.13} parent=11 // pred_fallthru
          _
      $region12: #{atnet_forward.13} parent=5 // pred_fallthru
        _
      %p127 = scmp.lt.s32.totalorder %s12, 2
      // Predicated region
      $region21: #{atnet_forward.13} parent=5 // pred_check
        %p128 = pneg %p127
      $region22: #{atnet_forward.13} parent=5 // pred_check_branch
        %130 = sbr.rel (%p128) target = $region24
      $region23: #{atnet_forward.13} parent=5 // pred_region
        // Predicated region
        $region25: #{atnet_forward.13} parent=23 // pred_check
          %p131 = pneg %p32
        $region26: #{atnet_forward.13} parent=23 // pred_check_branch
          %133 = sbr.rel (%p131) target = $region28
        $region27: #{atnet_forward.13} parent=23 // pred_region
          %p134 = scmp.lt.s32.totalorder %s12, 1
          %s135 = scalar_select %p134, %s12, 1
          %s136 = smul.addr %s135, 8
          %s137 = scalar_lea.vmem %s0, %s136
        $region28: #{atnet_forward.13} parent=23 // pred_fallthru
          _
      $region24: #{atnet_forward.13} parent=5 // pred_fallthru
        _
      %p138 = scmp.le.s32.totalorder 1, %s12
      %p139 = scmp.lt.s32.totalorder %s12, 3
      %p140 = pnand %p138, %p139
      %p141 = pneg %p140
      // Predicated region
      $region29: #{atnet_forward.13} parent=5 // pred_check
        _
      $region30: #{atnet_forward.13} parent=5 // pred_check_branch
        %143 = sbr.rel (%p140) target = $region32
      $region31: #{atnet_forward.13} parent=5 // pred_region
        %s144 = ssub.s32 %s12, 1
        %p145 = scmp.lt.s32.totalorder %s17, 1
        %s146 = scalar_select %p145, %s17, 1
        %s147 = smul.addr %s146, 8
        %s148 = scalar_lea.vmem %s0, %s147
        %p149 = pneg %p38
        %p150 = pneg %p35
        %p151 = pneg %p59
        %p152 = pneg %p56
        %p153 = pneg %p80
        %p154 = pneg %p77
        %p155 = pneg %p106
        %p156 = pneg %p103
        %s157 = sand.u32 %s93, 1
        %s158 = scalar_lea.sflag [#allocation3], %s157
        %s159 = sand.u32 %s93, 1
        %s160 = smul.addr %s159, 8
        %s161 = scalar_lea.vmem [#allocation2], %s160
        %p162 = scmp.lt.s32.totalorder %s17, 1
        %s163 = scalar_select %p162, %s17, 1
        %s164 = smul.addr %s163, 8
        %s165 = scalar_lea.vmem %s0, %s164
        %v166 = vld [vmem:[%s165] sm:$0xff]
        %v167 = vld [vmem:[%s1] sm:$0x1]
        %v168 = vld [vmem:[%s2] sm:$0x1]
        %169 = vadd.xlane.f32.xlu0 %v166
        %v170 = vpop.xlane.xlu0 %169
        %v171 = vrcp.pop 128.0
        %v172 = vmul.f32 %v170, %v171
        %v173 = vsub.f32 %v166, %v172
        %v174 = vmul.f32 %v173, %v173
        %175 = vadd.xlane.f32.xlu0 %v174
        %v176 = vpop.xlane.xlu0 %175
        %v177 = vmul.f32 %v176, 0.007874016
        %v178 = vrsqrt.pop %v177
        %v179 = vmul.f32 %v177, %v178
        %vm180 = vcmp.eq.f32.partialorder %v177, inf
        %v181 = vsel %vm180, %v177, %v179
        %vm182 = vcmp.eq.f32.partialorder %v177, 0.0
        %v183 = vand.u32 %v177, 2147483648
        %v184 = vsel %vm182, %v183, %v181
        %v185 = vadd.f32 %v184, 1e-06
        %v186 = vrcp.pop %v185
        %v188 = vlaneseq
        %v189 = vshrl.u32 %v188, 7
        %v190 = vsub.s32 0, %v189
        %v191 = vrot.slane %v167, %v190
        %v193 = vmul.f32 %v191, %v173
        %v194 = vmul.f32 %v193, %v186
        %v196 = vlaneseq
        %v197 = vshrl.u32 %v196, 7
        %v198 = vsub.s32 0, %v197
        %v199 = vrot.slane %v168, %v198
        %v201 = vadd.f32 %v194, %v199
        %202 = vst [vmem:[%s161] sm:$0xff] %v201
        %s203 = sand.u32 %s93, 1
        %s204 = scalar_lea.sflag [#allocation3], %s203
        %s205 = sand.u32 %s93, 1
        %s206 = smul.addr %s205, 8
        %s207 = scalar_lea.vmem [#allocation2], %s206
        // Predicated region
        $region33: #{atnet_forward.13} parent=31 // pred_check
          %p208 = pneg %p103
        $region34: #{atnet_forward.13} parent=31 // pred_check_branch
          %210 = sbr.rel (%p208) target = $region36
        $region35: #{atnet_forward.13} parent=31 // pred_region
          %s212 = ssub.s32 128, 128
          %213 = vsyncadd %s204, %s212
          %s214 = smul.addr %s17, 128
          %s215 = scalar_lea.hbm %s3, %s214
          %s217 = sshll.u32 %s207, 4
          %s218 = int_to_ptr.vmem [resolvable:$true] %s217
          %220 = dma.vmem_to_hbm [thread:$0]  %s218, 128, %s215, %s204
        $region36: #{atnet_forward.13} parent=31 // pred_fallthru
          _
      $region32: #{atnet_forward.13} parent=5 // pred_fallthru
        _
      %p221 = scmp.le.s32.totalorder 2, %s12
      // Predicated region
      $region37: #{atnet_forward.13} parent=5 // pred_check
        %p222 = pneg %p221
      $region38: #{atnet_forward.13} parent=5 // pred_check_branch
        %224 = sbr.rel (%p222) target = $region40
      $region39: #{atnet_forward.13} parent=5 // pred_region
        %s225 = ssub.s32 %s12, 2
        // Predicated region
        $region41: #{atnet_forward.13} parent=39 // pred_check
          %p226 = pneg %p109
        $region42: #{atnet_forward.13} parent=39 // pred_check_branch
          %228 = sbr.rel (%p226) target = $region44
        $region43: #{atnet_forward.13} parent=39 // pred_region
          %s229 = sand.u32 %s94, 1
          %s230 = scalar_lea.sflag [#allocation3], %s229
          %s231 = sand.u32 %s94, 1
          %s232 = smul.addr %s231, 8
          %s233 = scalar_lea.vmem [#allocation2], %s232
          %234 = dma.done %s230, 128
        $region44: #{atnet_forward.13} parent=39 // pred_fallthru
          _
      $region40: #{atnet_forward.13} parent=5 // pred_fallthru
        _
    $region6: #{atnet_forward.13} parent=1 // loop_footer
      %s16 = sadd.s32 1, %s12
    $region7: #{atnet_forward.13} parent=1 // loop_footer_branch
      %11 = sbr.rel target = $region3
    $region8: #{atnet_forward.13} parent=1 // loop_exit
      _
    %235 = vsyncpa [#allocation3], 1
    %s236 = scalar_lea.sflag [#allocation3], 1
    %237 = vsyncpa %s236, 1

// kernel: atnet_forward.11
$region0: #{atnet_forward.11}
  #allocation0 [shape = 'u32[]', space=smem, size = 0x4, offset = 0x4, fixed_abs, tag = 'smem constant byte address 0x4 - core index']
  #allocation1 [shape = 'u32[144,128]{1,0:T(1,128)}', space=vmem, size = 0x12000, scoped, tag = 'internal scratch']
  %s0 = inlined_call_operand.vmem [shape: f32[2,8,128], index: 0, kind: input, shape index: {}]
  %s1 = inlined_call_operand.vmem [shape: f32[2,8,128], index: 1, kind: input, shape index: {}]
  %s2 = inlined_call_operand.vmem [shape: f32[2,1,8], index: 2, kind: input, shape index: {}]
  %s3 = inlined_call_operand.vmem [shape: f32[1,128], index: 3, kind: input, shape index: {}]
  %s4 = inlined_call_operand.vmem [shape: f32[1,128], index: 4, kind: input, shape index: {}]
  %s5 = inlined_call_operand.vmem [shape: bf16[128,128], index: 5, kind: input, shape index: {}]
  %s6 = inlined_call_operand.vmem [shape: f32[1,128], index: 6, kind: input, shape index: {}]
  %s7 = inlined_call_operand.vmem [shape: bf16[128,128], index: 7, kind: input, shape index: {}]
  %s8 = inlined_call_operand.vmem [shape: f32[1,128], index: 8, kind: input, shape index: {}]
  %s9 = inlined_call_operand.vmem [shape: bf16[128,128], index: 9, kind: input, shape index: {}]
  %s10 = inlined_call_operand.vmem [shape: f32[1,128], index: 10, kind: input, shape index: {}]
  %s11 = inlined_call_operand.vmem [shape: bf16[128,128], index: 11, kind: input, shape index: {}]
  %s12 = inlined_call_operand.vmem [shape: f32[1,128], index: 12, kind: input, shape index: {}]
  %s13 = inlined_call_operand.vmem [shape: f32[2,8,128], index: 13, kind: output, shape index: {}]
  %s14 = sld [smem:[#allocation0]]
  $region85: #{atnet_forward.11} parent=0
    _
  %s16 = ssub.s32 1, %s14
  %s17 = scalar_select 0, %s16, %s14
  loop: start=0, step=1, limit=4
  $region2: #{atnet_forward.11} parent=0 // loop_pre_header
    _
  $region3: #{atnet_forward.11} parent=0 // loop_header
    %s19 = sphi 0, %s23
    %p20 = scmp.ge.s32.totalorder %s19, 4
    %s29 = sphi 0, %s31
    %s32 = sphi 0, %s29
    %s33 = sphi 0, %s32
    %s49 = sphi 0, %s33
    %s55 = sphi 0, %s57
    %s58 = sphi 0, %s55
    %s59 = sphi 0, %s58
    %s75 = sphi 0, %s59
    %s81 = sphi 0, %s83
    %s84 = sphi 0, %s81
    %s85 = sphi 0, %s84
    %s101 = sphi 0, %s85
    %s105 = sphi 0, %s105
    %s107 = sphi 0, %s105
    %s108 = sphi 0, %s107
    %s122 = sphi 0, %s108
    %s126 = sphi 0, %s126
    %s128 = sphi 0, %s126
    %s129 = sphi 0, %s128
    %s143 = sphi 0, %s129
    %s147 = sphi 0, %s147
    %s149 = sphi 0, %s147
    %s150 = sphi 0, %s149
    %s164 = sphi 0, %s150
    %s168 = sphi 0, %s168
    %s170 = sphi 0, %s168
    %s171 = sphi 0, %s170
    %s185 = sphi 0, %s171
    %s189 = sphi 0, %s189
    %s191 = sphi 0, %s189
    %s192 = sphi 0, %s191
    %s206 = sphi 0, %s192
    %s210 = sphi 0, %s210
    %s212 = sphi 0, %s210
    %s213 = sphi 0, %s212
    %s227 = sphi 0, %s213
    %s231 = sphi 0, %s231
    %s233 = sphi 0, %s231
    %s234 = sphi 0, %s233
    %s248 = sphi 0, %s234
    %s252 = sphi 0, %s252
    %s254 = sphi 0, %s252
    %s255 = sphi 0, %s254
    %s269 = sphi 0, %s255
    %s273 = sphi 0, %s273
    %s275 = sphi 0, %s273
    %s276 = sphi 0, %s275
    %s290 = sphi 0, %s276
    %s294 = sphi 0, %s294
    %s296 = sphi 0, %s294
    %s297 = sphi 0, %s296
    %s311 = sphi 0, %s297
    %s317 = sphi 0, %s319
    %s320 = sphi 0, %s317
    %s321 = sphi 0, %s320
    %s337 = sphi 0, %s321
  $region4: #{atnet_forward.11} parent=0 // loop_header_branch
    %22 = sbr.rel (%p20) target = $region8
  $region5: #{atnet_forward.11} parent=0 // loop_body
    %s24 = ssub.s32 %s19, 1
    %s25 = ssub.s32 %s19, 2
    %s26 = sadd.s32 %s19, 1
    %s27 = ssub.s32 %s19, %s26
    %p28 = scmp.eq.s32.totalorder %s27, 0
    %s30 = sadd.s32 %s29, 1
    %s31 = scalar_select %p28, %s29, %s30
    %p34 = pneg %p28
    %p35 = scmp.eq.s32.totalorder %s19, 1
    %p36 = por %p34, %p35
    %p37 = scmp.ne.s32.totalorder %s29, %s32
    %p38 = scmp.eq.s32.totalorder %s19, 0
    %p39 = por %p37, %p38
    %p40 = scmp.ne.s32.totalorder %s29, %s32
    %p41 = scmp.eq.s32.totalorder %s24, 1
    %p42 = por %p40, %p41
    %p43 = scmp.ne.s32.totalorder %s32, %s33
    %p44 = scmp.eq.s32.totalorder %s24, 0
    %p45 = por %p43, %p44
    %p46 = scmp.ne.s32.totalorder %s32, %s33
    %p47 = scmp.eq.s32.totalorder %s25, 1
    %p48 = por %p46, %p47
    %p50 = scmp.ne.s32.totalorder %s33, %s49
    %p51 = scmp.eq.s32.totalorder %s25, 0
    %p52 = por %p50, %p51
    %s53 = ssub.s32 %s19, %s26
    %p54 = scmp.eq.s32.totalorder %s53, 0
    %s56 = sadd.s32 %s55, 1
    %s57 = scalar_select %p54, %s55, %s56
    %p60 = pneg %p54
    %p61 = scmp.eq.s32.totalorder %s19, 1
    %p62 = por %p60, %p61
    %p63 = scmp.ne.s32.totalorder %s55, %s58
    %p64 = scmp.eq.s32.totalorder %s19, 0
    %p65 = por %p63, %p64
    %p66 = scmp.ne.s32.totalorder %s55, %s58
    %p67 = scmp.eq.s32.totalorder %s24, 1
    %p68 = por %p66, %p67
    %p69 = scmp.ne.s32.totalorder %s58, %s59
    %p70 = scmp.eq.s32.totalorder %s24, 0
    %p71 = por %p69, %p70
    %p72 = scmp.ne.s32.totalorder %s58, %s59
    %p73 = scmp.eq.s32.totalorder %s25, 1
    %p74 = por %p72, %p73
    %p76 = scmp.ne.s32.totalorder %s59, %s75
    %p77 = scmp.eq.s32.totalorder %s25, 0
    %p78 = por %p76, %p77
    %s79 = ssub.s32 %s19, %s26
    %p80 = scmp.eq.s32.totalorder %s79, 0
    %s82 = sadd.s32 %s81, 1
    %s83 = scalar_select %p80, %s81, %s82
    %p86 = pneg %p80
    %p87 = scmp.eq.s32.totalorder %s19, 1
    %p88 = por %p86, %p87
    %p89 = scmp.ne.s32.totalorder %s81, %s84
    %p90 = scmp.eq.s32.totalorder %s19, 0
    %p91 = por %p89, %p90
    %p92 = scmp.ne.s32.totalorder %s81, %s84
    %p93 = scmp.eq.s32.totalorder %s24, 1
    %p94 = por %p92, %p93
    %p95 = scmp.ne.s32.totalorder %s84, %s85
    %p96 = scmp.eq.s32.totalorder %s24, 0
    %p97 = por %p95, %p96
    %p98 = scmp.ne.s32.totalorder %s84, %s85
    %p99 = scmp.eq.s32.totalorder %s25, 1
    %p100 = por %p98, %p99
    %p102 = scmp.ne.s32.totalorder %s85, %s101
    %p103 = scmp.eq.s32.totalorder %s25, 0
    %p104 = por %p102, %p103
    %s106 = sadd.s32 %s105, 1
    %p109 = scmp.eq.s32.totalorder %s19, 1
    %p110 = scmp.ne.s32.totalorder %s105, %s107
    %p111 = scmp.eq.s32.totalorder %s19, 0
    %p112 = por %p110, %p111
    %p113 = scmp.ne.s32.totalorder %s105, %s107
    %p114 = scmp.eq.s32.totalorder %s24, 1
    %p115 = por %p113, %p114
    %p116 = scmp.ne.s32.totalorder %s107, %s108
    %p117 = scmp.eq.s32.totalorder %s24, 0
    %p118 = por %p116, %p117
    %p119 = scmp.ne.s32.totalorder %s107, %s108
    %p120 = scmp.eq.s32.totalorder %s25, 1
    %p121 = por %p119, %p120
    %p123 = scmp.ne.s32.totalorder %s108, %s122
    %p124 = scmp.eq.s32.totalorder %s25, 0
    %p125 = por %p123, %p124
    %s127 = sadd.s32 %s126, 1
    %p130 = scmp.eq.s32.totalorder %s19, 1
    %p131 = scmp.ne.s32.totalorder %s126, %s128
    %p132 = scmp.eq.s32.totalorder %s19, 0
    %p133 = por %p131, %p132
    %p134 = scmp.ne.s32.totalorder %s126, %s128
    %p135 = scmp.eq.s32.totalorder %s24, 1
    %p136 = por %p134, %p135
    %p137 = scmp.ne.s32.totalorder %s128, %s129
    %p138 = scmp.eq.s32.totalorder %s24, 0
    %p139 = por %p137, %p138
    %p140 = scmp.ne.s32.totalorder %s128, %s129
    %p141 = scmp.eq.s32.totalorder %s25, 1
    %p142 = por %p140, %p141
    %p144 = scmp.ne.s32.totalorder %s129, %s143
    %p145 = scmp.eq.s32.totalorder %s25, 0
    %p146 = por %p144, %p145
    %s148 = sadd.s32 %s147, 1
    %p151 = scmp.eq.s32.totalorder %s19, 1
    %p152 = scmp.ne.s32.totalorder %s147, %s149
    %p153 = scmp.eq.s32.totalorder %s19, 0
    %p154 = por %p152, %p153
    %p155 = scmp.ne.s32.totalorder %s147, %s149
    %p156 = scmp.eq.s32.totalorder %s24, 1
    %p157 = por %p155, %p156
    %p158 = scmp.ne.s32.totalorder %s149, %s150
    %p159 = scmp.eq.s32.totalorder %s24, 0
    %p160 = por %p158, %p159
    %p161 = scmp.ne.s32.totalorder %s149, %s150
    %p162 = scmp.eq.s32.totalorder %s25, 1
    %p163 = por %p161, %p162
    %p165 = scmp.ne.s32.totalorder %s150, %s164
    %p166 = scmp.eq.s32.totalorder %s25, 0
    %p167 = por %p165, %p166
    %s169 = sadd.s32 %s168, 1
    %p172 = scmp.eq.s32.totalorder %s19, 1
    %p173 = scmp.ne.s32.totalorder %s168, %s170
    %p174 = scmp.eq.s32.totalorder %s19, 0
    %p175 = por %p173, %p174
    %p176 = scmp.ne.s32.totalorder %s168, %s170
    %p177 = scmp.eq.s32.totalorder %s24, 1
    %p178 = por %p176, %p177
    %p179 = scmp.ne.s32.totalorder %s170, %s171
    %p180 = scmp.eq.s32.totalorder %s24, 0
    %p181 = por %p179, %p180
    %p182 = scmp.ne.s32.totalorder %s170, %s171
    %p183 = scmp.eq.s32.totalorder %s25, 1
    %p184 = por %p182, %p183
    %p186 = scmp.ne.s32.totalorder %s171, %s185
    %p187 = scmp.eq.s32.totalorder %s25, 0
    %p188 = por %p186, %p187
    %s190 = sadd.s32 %s189, 1
    %p193 = scmp.eq.s32.totalorder %s19, 1
    %p194 = scmp.ne.s32.totalorder %s189, %s191
    %p195 = scmp.eq.s32.totalorder %s19, 0
    %p196 = por %p194, %p195
    %p197 = scmp.ne.s32.totalorder %s189, %s191
    %p198 = scmp.eq.s32.totalorder %s24, 1
    %p199 = por %p197, %p198
    %p200 = scmp.ne.s32.totalorder %s191, %s192
    %p201 = scmp.eq.s32.totalorder %s24, 0
    %p202 = por %p200, %p201
    %p203 = scmp.ne.s32.totalorder %s191, %s192
    %p204 = scmp.eq.s32.totalorder %s25, 1
    %p205 = por %p203, %p204
    %p207 = scmp.ne.s32.totalorder %s192, %s206
    %p208 = scmp.eq.s32.totalorder %s25, 0
    %p209 = por %p207, %p208
    %s211 = sadd.s32 %s210, 1
    %p214 = scmp.eq.s32.totalorder %s19, 1
    %p215 = scmp.ne.s32.totalorder %s210, %s212
    %p216 = scmp.eq.s32.totalorder %s19, 0
    %p217 = por %p215, %p216
    %p218 = scmp.ne.s32.totalorder %s210, %s212
    %p219 = scmp.eq.s32.totalorder %s24, 1
    %p220 = por %p218, %p219
    %p221 = scmp.ne.s32.totalorder %s212, %s213
    %p222 = scmp.eq.s32.totalorder %s24, 0
    %p223 = por %p221, %p222
    %p224 = scmp.ne.s32.totalorder %s212, %s213
    %p225 = scmp.eq.s32.totalorder %s25, 1
    %p226 = por %p224, %p225
    %p228 = scmp.ne.s32.totalorder %s213, %s227
    %p229 = scmp.eq.s32.totalorder %s25, 0
    %p230 = por %p228, %p229
    %s232 = sadd.s32 %s231, 1
    %p235 = scmp.eq.s32.totalorder %s19, 1
    %p236 = scmp.ne.s32.totalorder %s231, %s233
    %p237 = scmp.eq.s32.totalorder %s19, 0
    %p238 = por %p236, %p237
    %p239 = scmp.ne.s32.totalorder %s231, %s233
    %p240 = scmp.eq.s32.totalorder %s24, 1
    %p241 = por %p239, %p240
    %p242 = scmp.ne.s32.totalorder %s233, %s234
    %p243 = scmp.eq.s32.totalorder %s24, 0
    %p244 = por %p242, %p243
    %p245 = scmp.ne.s32.totalorder %s233, %s234
    %p246 = scmp.eq.s32.totalorder %s25, 1
    %p247 = por %p245, %p246
    %p249 = scmp.ne.s32.totalorder %s234, %s248
    %p250 = scmp.eq.s32.totalorder %s25, 0
    %p251 = por %p249, %p250
    %s253 = sadd.s32 %s252, 1
    %p256 = scmp.eq.s32.totalorder %s19, 1
    %p257 = scmp.ne.s32.totalorder %s252, %s254
    %p258 = scmp.eq.s32.totalorder %s19, 0
    %p259 = por %p257, %p258
    %p260 = scmp.ne.s32.totalorder %s252, %s254
    %p261 = scmp.eq.s32.totalorder %s24, 1
    %p262 = por %p260, %p261
    %p263 = scmp.ne.s32.totalorder %s254, %s255
    %p264 = scmp.eq.s32.totalorder %s24, 0
    %p265 = por %p263, %p264
    %p266 = scmp.ne.s32.totalorder %s254, %s255
    %p267 = scmp.eq.s32.totalorder %s25, 1
    %p268 = por %p266, %p267
    %p270 = scmp.ne.s32.totalorder %s255, %s269
    %p271 = scmp.eq.s32.totalorder %s25, 0
    %p272 = por %p270, %p271
    %s274 = sadd.s32 %s273, 1
    %p277 = scmp.eq.s32.totalorder %s19, 1
    %p278 = scmp.ne.s32.totalorder %s273, %s275
    %p279 = scmp.eq.s32.totalorder %s19, 0
    %p280 = por %p278, %p279
    %p281 = scmp.ne.s32.totalorder %s273, %s275
    %p282 = scmp.eq.s32.totalorder %s24, 1
    %p283 = por %p281, %p282
    %p284 = scmp.ne.s32.totalorder %s275, %s276
    %p285 = scmp.eq.s32.totalorder %s24, 0
    %p286 = por %p284, %p285
    %p287 = scmp.ne.s32.totalorder %s275, %s276
    %p288 = scmp.eq.s32.totalorder %s25, 1
    %p289 = por %p287, %p288
    %p291 = scmp.ne.s32.totalorder %s276, %s290
    %p292 = scmp.eq.s32.totalorder %s25, 0
    %p293 = por %p291, %p292
    %s295 = sadd.s32 %s294, 1
    %p298 = scmp.eq.s32.totalorder %s19, 1
    %p299 = scmp.ne.s32.totalorder %s294, %s296
    %p300 = scmp.eq.s32.totalorder %s19, 0
    %p301 = por %p299, %p300
    %p302 = scmp.ne.s32.totalorder %s294, %s296
    %p303 = scmp.eq.s32.totalorder %s24, 1
    %p304 = por %p302, %p303
    %p305 = scmp.ne.s32.totalorder %s296, %s297
    %p306 = scmp.eq.s32.totalorder %s24, 0
    %p307 = por %p305, %p306
    %p308 = scmp.ne.s32.totalorder %s296, %s297
    %p309 = scmp.eq.s32.totalorder %s25, 1
    %p310 = por %p308, %p309
    %p312 = scmp.ne.s32.totalorder %s297, %s311
    %p313 = scmp.eq.s32.totalorder %s25, 0
    %p314 = por %p312, %p313
    %s315 = ssub.s32 %s19, %s26
    %p316 = scmp.eq.s32.totalorder %s315, 0
    %s318 = sadd.s32 %s317, 1
    %s319 = scalar_select %p316, %s317, %s318
    %p322 = pneg %p316
    %p323 = scmp.eq.s32.totalorder %s19, 1
    %p324 = por %p322, %p323
    %p325 = scmp.ne.s32.totalorder %s317, %s320
    %p326 = scmp.eq.s32.totalorder %s19, 0
    %p327 = por %p325, %p326
    %p328 = scmp.ne.s32.totalorder %s317, %s320
    %p329 = scmp.eq.s32.totalorder %s24, 1
    %p330 = por %p328, %p329
    %p331 = scmp.ne.s32.totalorder %s320, %s321
    %p332 = scmp.eq.s32.totalorder %s24, 0
    %p333 = por %p331, %p332
    %p334 = scmp.ne.s32.totalorder %s320, %s321
    %p335 = scmp.eq.s32.totalorder %s25, 1
    %p336 = por %p334, %p335
    %p338 = scmp.ne.s32.totalorder %s321, %s337
    %p339 = scmp.eq.s32.totalorder %s25, 0
    %p340 = por %p338, %p339
    %p341 = scmp.le.s32.totalorder 1, %s19
    %p342 = scmp.lt.s32.totalorder %s19, 3
    %p343 = pnand %p341, %p342
    %p344 = pneg %p343
    // Predicated region
    $region9: #{atnet_forward.11} parent=5 // pred_check
      _
    $region10: #{atnet_forward.11} parent=5 // pred_check_branch
      %346 = sbr.rel (%p343) target = $region12
    $region11: #{atnet_forward.11} parent=5 // pred_region
      %s347 = ssub.s32 %s19, 1
      // Predicated region
      $region13: #{atnet_forward.11} parent=11 // pred_check
        %p348 = pneg %p118
      $region14: #{atnet_forward.11} parent=11 // pred_check_branch
        %350 = sbr.rel (%p348) target = $region16
      $region15: #{atnet_forward.11} parent=11 // pred_region
        _
      $region16: #{atnet_forward.11} parent=11 // pred_fallthru
        _
      // Predicated region
      $region17: #{atnet_forward.11} parent=11 // pred_check
        %p351 = pneg %p139
      $region18: #{atnet_forward.11} parent=11 // pred_check_branch
        %353 = sbr.rel (%p351) target = $region20
      $region19: #{atnet_forward.11} parent=11 // pred_region
        _
      $region20: #{atnet_forward.11} parent=11 // pred_fallthru
        _
      // Predicated region
      $region21: #{atnet_forward.11} parent=11 // pred_check
        %p354 = pneg %p160
      $region22: #{atnet_forward.11} parent=11 // pred_check_branch
        %356 = sbr.rel (%p354) target = $region24
      $region23: #{atnet_forward.11} parent=11 // pred_region
        _
      $region24: #{atnet_forward.11} parent=11 // pred_fallthru
        _
      // Predicated region
      $region25: #{atnet_forward.11} parent=11 // pred_check
        %p357 = pneg %p181
      $region26: #{atnet_forward.11} parent=11 // pred_check_branch
        %359 = sbr.rel (%p357) target = $region28
      $region27: #{atnet_forward.11} parent=11 // pred_region
        _
      $region28: #{atnet_forward.11} parent=11 // pred_fallthru
        _
      // Predicated region
      $region29: #{atnet_forward.11} parent=11 // pred_check
        %p360 = pneg %p202
      $region30: #{atnet_forward.11} parent=11 // pred_check_branch
        %362 = sbr.rel (%p360) target = $region32
      $region31: #{atnet_forward.11} parent=11 // pred_region
        _
      $region32: #{atnet_forward.11} parent=11 // pred_fallthru
        _
      // Predicated region
      $region33: #{atnet_forward.11} parent=11 // pred_check
        %p363 = pneg %p223
      $region34: #{atnet_forward.11} parent=11 // pred_check_branch
        %365 = sbr.rel (%p363) target = $region36
      $region35: #{atnet_forward.11} parent=11 // pred_region
        _
      $region36: #{atnet_forward.11} parent=11 // pred_fallthru
        _
      // Predicated region
      $region37: #{atnet_forward.11} parent=11 // pred_check
        %p366 = pneg %p244
      $region38: #{atnet_forward.11} parent=11 // pred_check_branch
        %368 = sbr.rel (%p366) target = $region40
      $region39: #{atnet_forward.11} parent=11 // pred_region
        _
      $region40: #{atnet_forward.11} parent=11 // pred_fallthru
        _
      // Predicated region
      $region41: #{atnet_forward.11} parent=11 // pred_check
        %p369 = pneg %p265
      $region42: #{atnet_forward.11} parent=11 // pred_check_branch
        %371 = sbr.rel (%p369) target = $region44
      $region43: #{atnet_forward.11} parent=11 // pred_region
        _
      $region44: #{atnet_forward.11} parent=11 // pred_fallthru
        _
      // Predicated region
      $region45: #{atnet_forward.11} parent=11 // pred_check
        %p372 = pneg %p286
      $region46: #{atnet_forward.11} parent=11 // pred_check_branch
        %374 = sbr.rel (%p372) target = $region48
      $region47: #{atnet_forward.11} parent=11 // pred_region
        _
      $region48: #{atnet_forward.11} parent=11 // pred_fallthru
        _
      // Predicated region
      $region49: #{atnet_forward.11} parent=11 // pred_check
        %p375 = pneg %p307
      $region50: #{atnet_forward.11} parent=11 // pred_check_branch
        %377 = sbr.rel (%p375) target = $region52
      $region51: #{atnet_forward.11} parent=11 // pred_region
        _
      $region52: #{atnet_forward.11} parent=11 // pred_fallthru
        _
    $region12: #{atnet_forward.11} parent=5 // pred_fallthru
      _
    %p378 = scmp.lt.s32.totalorder %s19, 2
    // Predicated region
    $region53: #{atnet_forward.11} parent=5 // pred_check
      %p379 = pneg %p378
    $region54: #{atnet_forward.11} parent=5 // pred_check_branch
      %381 = sbr.rel (%p379) target = $region56
    $region55: #{atnet_forward.11} parent=5 // pred_region
      // Predicated region
      $region57: #{atnet_forward.11} parent=55 // pred_check
        %p382 = pneg %p39
      $region58: #{atnet_forward.11} parent=55 // pred_check_branch
        %384 = sbr.rel (%p382) target = $region60
      $region59: #{atnet_forward.11} parent=55 // pred_region
        %p385 = scmp.lt.s32.totalorder %s19, 1
        %s386 = scalar_select %p385, %s19, 1
        %s387 = smul.addr %s386, 8
        %s388 = scalar_lea.vmem %s0, %s387
      $region60: #{atnet_forward.11} parent=55 // pred_fallthru
        _
      // Predicated region
      $region61: #{atnet_forward.11} parent=55 // pred_check
        %p389 = pneg %p65
      $region62: #{atnet_forward.11} parent=55 // pred_check_branch
        %391 = sbr.rel (%p389) target = $region64
      $region63: #{atnet_forward.11} parent=55 // pred_region
        %p392 = scmp.lt.s32.totalorder %s19, 1
        %s393 = scalar_select %p392, %s19, 1
        %s394 = smul.addr %s393, 8
        %s395 = scalar_lea.vmem %s1, %s394
      $region64: #{atnet_forward.11} parent=55 // pred_fallthru
        _
      // Predicated region
      $region65: #{atnet_forward.11} parent=55 // pred_check
        %p396 = pneg %p91
      $region66: #{atnet_forward.11} parent=55 // pred_check_branch
        %398 = sbr.rel (%p396) target = $region68
      $region67: #{atnet_forward.11} parent=55 // pred_region
        %p399 = scmp.lt.s32.totalorder %s19, 1
        %s400 = scalar_select %p399, %s19, 1
        %s401 = scalar_lea.vmem %s2, %s400
      $region68: #{atnet_forward.11} parent=55 // pred_fallthru
        _
    $region56: #{atnet_forward.11} parent=5 // pred_fallthru
      _
    %p402 = scmp.le.s32.totalorder 1, %s19
    %p403 = scmp.lt.s32.totalorder %s19, 3
    %p404 = pnand %p402, %p403
    %p405 = pneg %p404
    // Predicated region
    $region69: #{atnet_forward.11} parent=5 // pred_check
      _
    $region70: #{atnet_forward.11} parent=5 // pred_check_branch
      %407 = sbr.rel (%p404) target = $region72
    $region71: #{atnet_forward.11} parent=5 // pred_region
      %s408 = ssub.s32 %s19, 1
      %p409 = scmp.lt.s32.totalorder %s24, 1
      %s410 = scalar_select %p409, %s24, 1
      %s411 = smul.addr %s410, 8
      %s412 = scalar_lea.vmem %s0, %s411
      %p413 = pneg %p45
      %p414 = pneg %p42
      %p415 = scmp.lt.s32.totalorder %s24, 1
      %s416 = scalar_select %p415, %s24, 1
      %s417 = smul.addr %s416, 8
      %s418 = scalar_lea.vmem %s1, %s417
      %p419 = pneg %p71
      %p420 = pneg %p68
      %p421 = scmp.lt.s32.totalorder %s24, 1
      %s422 = scalar_select %p421, %s24, 1
      %s423 = scalar_lea.vmem %s2, %s422
      %p424 = pneg %p97
      %p425 = pneg %p94
      %p426 = pneg %p118
      %p427 = pneg %p115
      %p428 = pneg %p139
      %p429 = pneg %p136
      %p430 = pneg %p160
      %p431 = pneg %p157
      %p432 = pneg %p181
      %p433 = pneg %p178
      %p434 = pneg %p202
      %p435 = pneg %p199
      %p436 = pneg %p223
      %p437 = pneg %p220
      %p438 = pneg %p244
      %p439 = pneg %p241
      %p440 = pneg %p265
      %p441 = pneg %p262
      %p442 = pneg %p286
      %p443 = pneg %p283
      %p444 = pneg %p307
      %p445 = pneg %p304
      %p446 = pneg %p333
      %p447 = pneg %p330
      %p448 = scmp.lt.s32.totalorder %s24, 1
      %s449 = scalar_select %p448, %s24, 1
      %s450 = smul.addr %s449, 8
      %s451 = scalar_lea.vmem %s13, %s450
      %p452 = scmp.lt.s32.totalorder %s24, 1
      %s453 = scalar_select %p452, %s24, 1
      %s454 = smul.addr %s453, 8
      %s455 = scalar_lea.vmem %s0, %s454
      %p456 = scmp.lt.s32.totalorder %s24, 1
      %s457 = scalar_select %p456, %s24, 1
      %s458 = smul.addr %s457, 8
      %s459 = scalar_lea.vmem %s1, %s458
      %p460 = scmp.lt.s32.totalorder %s24, 1
      %s461 = scalar_select %p460, %s24, 1
      %s462 = scalar_lea.vmem %s2, %s461
      %p463 = scmp.lt.s32.totalorder %s24, 1
      %s464 = scalar_select %p463, %s24, 1
      %s465 = smul.addr %s464, 8
      %s466 = scalar_lea.vmem %s13, %s465
      %v468 = vld [vmem:[%s455] sm:$0xff]
      %v469 = vld [vmem:[%s3] sm:$0x1]
      %v470 = vld [vmem:[%s4] sm:$0x1]
      %471 = vadd.xlane.f32.xlu0 %v468
      %v472 = vpop.xlane.xlu0 %471
      %v473 = vrcp.pop 128.0
      %v474 = vmul.f32 %v472, %v473
      %v475 = vsub.f32 %v468, %v474
      %v476 = vmul.f32 %v475, %v475
      %477 = vadd.xlane.f32.xlu0 %v476
      %v478 = vpop.xlane.xlu0 %477
      %v479 = vmul.f32 %v478, 0.007874016
      %v480 = vrsqrt.pop %v479
      %v481 = vmul.f32 %v479, %v480
      %vm482 = vcmp.eq.f32.partialorder %v479, inf
      %v483 = vsel %vm482, %v479, %v481
      %vm484 = vcmp.eq.f32.partialorder %v479, 0.0
      %v485 = vand.u32 %v479, 2147483648
      %v486 = vsel %vm484, %v485, %v483
      %v487 = vadd.f32 %v486, 1e-06
      %v488 = vrcp.pop %v487
      %v490 = vlaneseq
      %v491 = vshrl.u32 %v490, 7
      %v492 = vsub.s32 0, %v491
      %v493 = vrot.slane %v469, %v492
      %v495 = vmul.f32 %v493, %v475
      %v496 = vmul.f32 %v495, %v488
      %v498 = vlaneseq
      %v499 = vshrl.u32 %v498, 7
      %v500 = vsub.s32 0, %v499
      %v501 = vrot.slane %v470, %v500
      %v503 = vadd.f32 %v496, %v501
      %v504 = vld [vmem:[%s459] sm:$0xff]
      %v505 = vld [vmem:[%s5] sm:$0xf]
      %v506 = vld [vmem:[%s5 + $0x4] sm:$0xf]
      %v507 = vld [vmem:[%s5 + $0x8] sm:$0xf]
      %v508 = vld [vmem:[%s5 + $0xc] sm:$0xf]
      %v509 = vld [vmem:[%s5 + $0x10] sm:$0xf]
      %v510 = vld [vmem:[%s5 + $0x14] sm:$0xf]
      %v511 = vld [vmem:[%s5 + $0x18] sm:$0xf]
      %v512 = vld [vmem:[%s5 + $0x1c] sm:$0xf]
      %v513 = vld [vmem:[%s5 + $0x20] sm:$0xf]
      %v514 = vld [vmem:[%s5 + $0x24] sm:$0xf]
      %v515 = vld [vmem:[%s5 + $0x28] sm:$0xf]
      %v516 = vld [vmem:[%s5 + $0x2c] sm:$0xf]
      %v517 = vld [vmem:[%s5 + $0x30] sm:$0xf]
      %v518 = vld [vmem:[%s5 + $0x34] sm:$0xf]
      %v519 = vld [vmem:[%s5 + $0x38] sm:$0xf]
      %v520 = vld [vmem:[%s5 + $0x3c] sm:$0xf]
      %v521 = vpack.c.bf16 %v503, %v503
      %v522 = vld [vmem:[%s6] sm:$0x1]
      %v524 = vlaneseq
      %v525 = vshrl.u32 %v524, 7
      %v526 = vsub.s32 0, %v525
      %v527 = vrot.slane %v522, %v526
      %v545 = vunpack.c.l.b16 %v505
      %v546 = vunpack.c.l.b16 %v506
      %v547 = vunpack.c.l.b16 %v507
      %v548 = vunpack.c.l.b16 %v508
      %v549 = vunpack.c.l.b16 %v509
      %v550 = vunpack.c.l.b16 %v510
      %v551 = vunpack.c.l.b16 %v511
      %v552 = vunpack.c.l.b16 %v512
      %v553 = vunpack.c.l.b16 %v513
      %v554 = vunpack.c.l.b16 %v514
      %v555 = vunpack.c.l.b16 %v515
      %v556 = vunpack.c.l.b16 %v516
      %v557 = vunpack.c.l.b16 %v517
      %v558 = vunpack.c.l.b16 %v518
      %v559 = vunpack.c.l.b16 %v519
      %v560 = vunpack.c.l.b16 %v520
      %v561 = vpack.c.b16 %v546, %v545
      %v562 = vpack.c.b16 %v548, %v547
      %v563 = vpack.c.b16 %v550, %v549
      %v564 = vpack.c.b16 %v552, %v551
      %v565 = vpack.c.b16 %v554, %v553
      %v566 = vpack.c.b16 %v556, %v555
      %v567 = vpack.c.b16 %v558, %v557
      %v568 = vpack.c.b16 %v560, %v559
      %577 = vmatprep.subr.bf16.mxu0 0
      %578 = vmatpush1.bf16.msra.mxu0 %v561
      %579 = vmatprep.subr.bf16.mxu0 0
      %580 = vmatpush1.bf16.msra.mxu0 %v562
      %581 = vmatprep.subr.bf16.mxu0 0
      %582 = vmatpush1.bf16.msra.mxu0 %v563
      %583 = vmatprep.subr.bf16.mxu0 0
      %584 = vmatpush1.bf16.msra.mxu0 %v564
      %585 = vmatprep.subr.bf16.mxu0 0
      %586 = vmatpush1.bf16.msra.mxu0 %v565
      %587 = vmatprep.subr.bf16.mxu0 0
      %588 = vmatpush1.bf16.msra.mxu0 %v566
      %589 = vmatprep.subr.bf16.mxu0 0
      %590 = vmatpush1.bf16.msra.mxu0 %v567
      %591 = vmatprep.subr.bf16.mxu0 0
      %592 = vmatpush1.bf16.msra.mxu0 %v568
      %593 = vmatprep.subr.bf16.mxu0 0
      %594 = vmatpush1.bf16.msra.mxu0 0
      %595 = vmatprep.subr.bf16.mxu0 0
      %596 = vmatpush1.bf16.msra.mxu0 0
      %597 = vmatprep.subr.bf16.mxu0 0
      %598 = vmatpush1.bf16.msra.mxu0 0
      %599 = vmatprep.subr.bf16.mxu0 0
      %600 = vmatpush1.bf16.msra.mxu0 0
      %601 = vmatprep.subr.bf16.mxu0 0
      %602 = vmatpush1.bf16.msra.mxu0 0
      %603 = vmatprep.subr.bf16.mxu0 0
      %604 = vmatpush1.bf16.msra.mxu0 0
      %605 = vmatprep.subr.bf16.mxu0 0
      %606 = vmatpush1.bf16.msra.mxu0 0
      %607 = vmatprep.subr.bf16.mxu0 0
      %608 = vmatpush1.bf16.msra.mxu0 0
      %609 = vmatprep.mubr.bf16.mxu0 0
      %610 = vmatmul.mubr.bf16.gmra.mrb[0].mxu0 %v521
      %v611 = vpop.f32.mrb[0].mxu0
      %v612 = vadd.f32 %v527, %v611
      %v613 = vpop.f32.mrb[0].mxu0
      %v614 = vpop.f32.mrb[0].mxu0
      %v615 = vpop.f32.mrb[0].mxu0
      %616 = vdwg.mxu0
      %v617 = vld [vmem:[%s7] sm:$0xf]
      %v618 = vld [vmem:[%s7 + $0x4] sm:$0xf]
      %v619 = vld [vmem:[%s7 + $0x8] sm:$0xf]
      %v620 = vld [vmem:[%s7 + $0xc] sm:$0xf]
      %v621 = vld [vmem:[%s7 + $0x10] sm:$0xf]
      %v622 = vld [vmem:[%s7 + $0x14] sm:$0xf]
      %v623 = vld [vmem:[%s7 + $0x18] sm:$0xf]
      %v624 = vld [vmem:[%s7 + $0x1c] sm:$0xf]
      %v625 = vld [vmem:[%s7 + $0x20] sm:$0xf]
      %v626 = vld [vmem:[%s7 + $0x24] sm:$0xf]
      %v627 = vld [vmem:[%s7 + $0x28] sm:$0xf]
      %v628 = vld [vmem:[%s7 + $0x2c] sm:$0xf]
      %v629 = vld [vmem:[%s7 + $0x30] sm:$0xf]
      %v630 = vld [vmem:[%s7 + $0x34] sm:$0xf]
      %v631 = vld [vmem:[%s7 + $0x38] sm:$0xf]
      %v632 = vld [vmem:[%s7 + $0x3c] sm:$0xf]
      %v633 = vpack.c.bf16 %v504, %v504
      %v634 = vld [vmem:[%s8] sm:$0x1]
      %v636 = vlaneseq
      %v637 = vshrl.u32 %v636, 7
      %v638 = vsub.s32 0, %v637
      %v639 = vrot.slane %v634, %v638
      %v657 = vunpack.c.l.b16 %v617
      %v658 = vunpack.c.l.b16 %v618
      %v659 = vunpack.c.l.b16 %v619
      %v660 = vunpack.c.l.b16 %v620
      %v661 = vunpack.c.l.b16 %v621
      %v662 = vunpack.c.l.b16 %v622
      %v663 = vunpack.c.l.b16 %v623
      %v664 = vunpack.c.l.b16 %v624
      %v665 = vunpack.c.l.b16 %v625
      %v666 = vunpack.c.l.b16 %v626
      %v667 = vunpack.c.l.b16 %v627
      %v668 = vunpack.c.l.b16 %v628
      %v669 = vunpack.c.l.b16 %v629
      %v670 = vunpack.c.l.b16 %v630
      %v671 = vunpack.c.l.b16 %v631
      %v672 = vunpack.c.l.b16 %v632
      %v673 = vpack.c.b16 %v658, %v657
      %v674 = vpack.c.b16 %v660, %v659
      %v675 = vpack.c.b16 %v662, %v661
      %v676 = vpack.c.b16 %v664, %v663
      %v677 = vpack.c.b16 %v666, %v665
      %v678 = vpack.c.b16 %v668, %v667
      %v679 = vpack.c.b16 %v670, %v669
      %v680 = vpack.c.b16 %v672, %v671
      %689 = vmatprep.subr.bf16.mxu0 0
      %690 = vmatpush1.bf16.msra.mxu0 %v673
      %691 = vmatprep.subr.bf16.mxu0 0
      %692 = vmatpush1.bf16.msra.mxu0 %v674
      %693 = vmatprep.subr.bf16.mxu0 0
      %694 = vmatpush1.bf16.msra.mxu0 %v675
      %695 = vmatprep.subr.bf16.mxu0 0
      %696 = vmatpush1.bf16.msra.mxu0 %v676
      %697 = vmatprep.subr.bf16.mxu0 0
      %698 = vmatpush1.bf16.msra.mxu0 %v677
      %699 = vmatprep.subr.bf16.mxu0 0
      %700 = vmatpush1.bf16.msra.mxu0 %v678
      %701 = vmatprep.subr.bf16.mxu0 0
      %702 = vmatpush1.bf16.msra.mxu0 %v679
      %703 = vmatprep.subr.bf16.mxu0 0
      %704 = vmatpush1.bf16.msra.mxu0 %v680
      %705 = vmatprep.subr.bf16.mxu0 0
      %706 = vmatpush1.bf16.msra.mxu0 0
      %707 = vmatprep.subr.bf16.mxu0 0
      %708 = vmatpush1.bf16.msra.mxu0 0
      %709 = vmatprep.subr.bf16.mxu0 0
      %710 = vmatpush1.bf16.msra.mxu0 0
      %711 = vmatprep.subr.bf16.mxu0 0
      %712 = vmatpush1.bf16.msra.mxu0 0
      %713 = vmatprep.subr.bf16.mxu0 0
      %714 = vmatpush1.bf16.msra.mxu0 0
      %715 = vmatprep.subr.bf16.mxu0 0
      %716 = vmatpush1.bf16.msra.mxu0 0
      %717 = vmatprep.subr.bf16.mxu0 0
      %718 = vmatpush1.bf16.msra.mxu0 0
      %719 = vmatprep.subr.bf16.mxu0 0
      %720 = vmatpush1.bf16.msra.mxu0 0
      %721 = vmatprep.mubr.bf16.mxu0 0
      %722 = vmatmul.mubr.bf16.gmra.mrb[0].mxu0 %v633
      %v723 = vpop.f32.mrb[0].mxu0
      %v724 = vadd.f32 %v639, %v723
      %v725 = vpop.f32.mrb[0].mxu0
      %v726 = vpop.f32.mrb[0].mxu0
      %v727 = vpop.f32.mrb[0].mxu0
      %728 = vdwg.mxu0
      %v729 = vld [vmem:[%s9] sm:$0xf]
      %v730 = vld [vmem:[%s9 + $0x4] sm:$0xf]
      %v731 = vld [vmem:[%s9 + $0x8] sm:$0xf]
      %v732 = vld [vmem:[%s9 + $0xc] sm:$0xf]
      %v733 = vld [vmem:[%s9 + $0x10] sm:$0xf]
      %v734 = vld [vmem:[%s9 + $0x14] sm:$0xf]
      %v735 = vld [vmem:[%s9 + $0x18] sm:$0xf]
      %v736 = vld [vmem:[%s9 + $0x1c] sm:$0xf]
      %v737 = vld [vmem:[%s9 + $0x20] sm:$0xf]
      %v738 = vld [vmem:[%s9 + $0x24] sm:$0xf]
      %v739 = vld [vmem:[%s9 + $0x28] sm:$0xf]
      %v740 = vld [vmem:[%s9 + $0x2c] sm:$0xf]
      %v741 = vld [vmem:[%s9 + $0x30] sm:$0xf]
      %v742 = vld [vmem:[%s9 + $0x34] sm:$0xf]
      %v743 = vld [vmem:[%s9 + $0x38] sm:$0xf]
      %v744 = vld [vmem:[%s9 + $0x3c] sm:$0xf]
      %v745 = vld [vmem:[%s10] sm:$0x1]
      %v747 = vlaneseq
      %v748 = vshrl.u32 %v747, 7
      %v749 = vsub.s32 0, %v748
      %v750 = vrot.slane %v745, %v749
      %v768 = vunpack.c.l.b16 %v729
      %v769 = vunpack.c.l.b16 %v730
      %v770 = vunpack.c.l.b16 %v731
      %v771 = vunpack.c.l.b16 %v732
      %v772 = vunpack.c.l.b16 %v733
      %v773 = vunpack.c.l.b16 %v734
      %v774 = vunpack.c.l.b16 %v735
      %v775 = vunpack.c.l.b16 %v736
      %v776 = vunpack.c.l.b16 %v737
      %v777 = vunpack.c.l.b16 %v738
      %v778 = vunpack.c.l.b16 %v739
      %v779 = vunpack.c.l.b16 %v740
      %v780 = vunpack.c.l.b16 %v741
      %v781 = vunpack.c.l.b16 %v742
      %v782 = vunpack.c.l.b16 %v743
      %v783 = vunpack.c.l.b16 %v744
      %v784 = vpack.c.b16 %v769, %v768
      %v785 = vpack.c.b16 %v771, %v770
      %v786 = vpack.c.b16 %v773, %v772
      %v787 = vpack.c.b16 %v775, %v774
      %v788 = vpack.c.b16 %v777, %v776
      %v789 = vpack.c.b16 %v779, %v778
      %v790 = vpack.c.b16 %v781, %v780
      %v791 = vpack.c.b16 %v783, %v782
      %800 = vmatprep.subr.bf16.mxu0 0
      %801 = vmatpush1.bf16.msra.mxu0 %v784
      %802 = vmatprep.subr.bf16.mxu0 0
      %803 = vmatpush1.bf16.msra.mxu0 %v785
      %804 = vmatprep.subr.bf16.mxu0 0
      %805 = vmatpush1.bf16.msra.mxu0 %v786
      %806 = vmatprep.subr.bf16.mxu0 0
      %807 = vmatpush1.bf16.msra.mxu0 %v787
      %808 = vmatprep.subr.bf16.mxu0 0
      %809 = vmatpush1.bf16.msra.mxu0 %v788
      %810 = vmatprep.subr.bf16.mxu0 0
      %811 = vmatpush1.bf16.msra.mxu0 %v789
      %812 = vmatprep.subr.bf16.mxu0 0
      %813 = vmatpush1.bf16.msra.mxu0 %v790
      %814 = vmatprep.subr.bf16.mxu0 0
      %815 = vmatpush1.bf16.msra.mxu0 %v791
      %816 = vmatprep.subr.bf16.mxu0 0
      %817 = vmatpush1.bf16.msra.mxu0 0
      %818 = vmatprep.subr.bf16.mxu0 0
      %819 = vmatpush1.bf16.msra.mxu0 0
      %820 = vmatprep.subr.bf16.mxu0 0
      %821 = vmatpush1.bf16.msra.mxu0 0
      %822 = vmatprep.subr.bf16.mxu0 0
      %823 = vmatpush1.bf16.msra.mxu0 0
      %824 = vmatprep.subr.bf16.mxu0 0
      %825 = vmatpush1.bf16.msra.mxu0 0
      %826 = vmatprep.subr.bf16.mxu0 0
      %827 = vmatpush1.bf16.msra.mxu0 0
      %828 = vmatprep.subr.bf16.mxu0 0
      %829 = vmatpush1.bf16.msra.mxu0 0
      %830 = vmatprep.subr.bf16.mxu0 0
      %831 = vmatpush1.bf16.msra.mxu0 0
      %832 = vmatprep.mubr.bf16.mxu0 0
      %833 = vmatmul.mubr.bf16.gmra.mrb[0].mxu0 %v633
      %v834 = vpop.f32.mrb[0].mxu0
      %v835 = vadd.f32 %v750, %v834
      %v836 = vpop.f32.mrb[0].mxu0
      %v837 = vpop.f32.mrb[0].mxu0
      %v838 = vpop.f32.mrb[0].mxu0
      %839 = vdwg.mxu0
      %v840 = vld [vmem:[%s462] sm:$0x1]
      %v841 = vpack.c.bf16 %v612, %v612
      %v842 = vpack.c.bf16 %v724, %v724
      %v843 = vpack.c.bf16 %v835, %v835
      %vm844 = vcmask 261120
      %v846 = vsel %vm844, %v841, 0
      %v849 = vsel %vm844, %v842, 0
      %851 = vmatprep.subr.bf16.mxu0 0
      %852 = vmatpush1.bf16.xpose.msra.mxu0 %v849
      %853 = vmatprep.subr.bf16.mxu0 0
      %854 = vmatpush1.bf16.xpose.msra.mxu0 0
      %855 = vmatprep.subr.bf16.mxu0 0
      %856 = vmatpush1.bf16.xpose.msra.mxu0 0
      %857 = vmatprep.subr.bf16.mxu0 0
      %858 = vmatpush1.bf16.xpose.msra.mxu0 0
      %859 = vmatprep.subr.bf16.mxu0 0
      %860 = vmatpush1.bf16.xpose.msra.mxu0 0
      %861 = vmatprep.subr.bf16.mxu0 0
      %862 = vmatpush1.bf16.xpose.msra.mxu0 0
      %863 = vmatprep.subr.bf16.mxu0 0
      %864 = vmatpush1.bf16.xpose.msra.mxu0 0
      %865 = vmatprep.subr.bf16.mxu0 0
      %866 = vmatpush1.bf16.xpose.msra.mxu0 0
      %867 = vmatprep.subr.bf16.mxu0 0
      %868 = vmatpush1.bf16.xpose.msra.mxu0 0
      %869 = vmatprep.subr.bf16.mxu0 0
      %870 = vmatpush1.bf16.xpose.msra.mxu0 0
      %871 = vmatprep.subr.bf16.mxu0 0
      %872 = vmatpush1.bf16.xpose.msra.mxu0 0
      %873 = vmatprep.subr.bf16.mxu0 0
      %874 = vmatpush1.bf16.xpose.msra.mxu0 0
      %875 = vmatprep.subr.bf16.mxu0 0
      %876 = vmatpush1.bf16.xpose.msra.mxu0 0
      %877 = vmatprep.subr.bf16.mxu0 0
      %878 = vmatpush1.bf16.xpose.msra.mxu0 0
      %879 = vmatprep.subr.bf16.mxu0 0
      %880 = vmatpush1.bf16.xpose.msra.mxu0 0
      %881 = vmatprep.subr.bf16.mxu0 0
      %882 = vmatpush1.bf16.xpose.msra.mxu0 0
      %883 = vmatprep.mubr.bf16.mxu0 0
      %884 = vmatmul.mubr.bf16.gmra.mrb[0].mxu0 %v846
      %v885 = vpop.f32.mrb[0].mxu0
      %v886 = vadd.f32 0.0, %v885
      %v887 = vpop.f32.mrb[0].mxu0
      %v888 = vpop.f32.mrb[0].mxu0
      %v889 = vpop.f32.mrb[0].mxu0
      %890 = vdwg.mxu0
      %v891 = vmul.f32 %v886, 0.17677669
      %vm892 = vcmp.eq.f32.partialorder %v840, 0.0
      %v893 = vsel %vm892, 1, 0
      %v894 = vlaneseq
      %v895 = vshrl.u32 %v894, 7
      %v896 = vsub.s32 0, %v895
      %v897 = vrot.slane %v893, %v896
      %vm898 = vcmp.eq.s32.totalorder %v897, 1
      %v899 = vsel %vm898, -1e+09, %v891
      %vm900 = vcmask 64512
      %v901 = vsel %vm900, %v899, -inf
      %902 = vmax.xlane.f32.xlu0 %v901
      %v903 = vpop.xlane.xlu0 %902
      %v904 = vsub.f32 %v899, %v903
      %v905 = vmul.f32 %v904, 1.442695
      %v906 = vpow.pop %v905
      %v907 = vsel %vm900, %v906, 0.0
      %908 = vadd.xlane.f32.xlu0 %v907
      %v909 = vpop.xlane.xlu0 %908
      %v910 = vrcp.pop %v909
      %v911 = vmul.f32 %v906, %v910
      %v912 = vpack.c.bf16 %v911, %v911
      %v914 = vsel %vm900, %v912, 0
      %vm916 = vcmask 1043456
      %v918 = vsel %vm916, %v843, 0
      %920 = vmatprep.subr.bf16.mxu0 0
      %921 = vmatpush1.bf16.msra.mxu0 %v918
      %922 = vmatprep.subr.bf16.mxu0 0
      %923 = vmatpush1.bf16.msra.mxu0 0
      %924 = vmatprep.subr.bf16.mxu0 0
      %925 = vmatpush1.bf16.msra.mxu0 0
      %926 = vmatprep.subr.bf16.mxu0 0
      %927 = vmatpush1.bf16.msra.mxu0 0
      %928 = vmatprep.subr.bf16.mxu0 0
      %929 = vmatpush1.bf16.msra.mxu0 0
      %930 = vmatprep.subr.bf16.mxu0 0
      %931 = vmatpush1.bf16.msra.mxu0 0
      %932 = vmatprep.subr.bf16.mxu0 0
      %933 = vmatpush1.bf16.msra.mxu0 0
      %934 = vmatprep.subr.bf16.mxu0 0
      %935 = vmatpush1.bf16.msra.mxu0 0
      %936 = vmatprep.subr.bf16.mxu0 0
      %937 = vmatpush1.bf16.msra.mxu0 0
      %938 = vmatprep.subr.bf16.mxu0 0
      %939 = vmatpush1.bf16.msra.mxu0 0
      %940 = vmatprep.subr.bf16.mxu0 0
      %941 = vmatpush1.bf16.msra.mxu0 0
      %942 = vmatprep.subr.bf16.mxu0 0
      %943 = vmatpush1.bf16.msra.mxu0 0
      %944 = vmatprep.subr.bf16.mxu0 0
      %945 = vmatpush1.bf16.msra.mxu0 0
      %946 = vmatprep.subr.bf16.mxu0 0
      %947 = vmatpush1.bf16.msra.mxu0 0
      %948 = vmatprep.subr.bf16.mxu0 0
      %949 = vmatpush1.bf16.msra.mxu0 0
      %950 = vmatprep.subr.bf16.mxu0 0
      %951 = vmatpush1.bf16.msra.mxu0 0
      %952 = vmatprep.mubr.bf16.mxu0 0
      %953 = vmatmul.mubr.bf16.gmra.mrb[0].mxu0 %v914
      %v954 = vpop.f32.mrb[0].mxu0
      %v955 = vadd.f32 0.0, %v954
      %v956 = vpop.f32.mrb[0].mxu0
      %v957 = vpop.f32.mrb[0].mxu0
      %v958 = vpop.f32.mrb[0].mxu0
      %959 = vdwg.mxu0
      %961 = vrot.lane.b32.xlu0 %v841, 96
      %v962 = vpop.permute.xlu0 %961
      %964 = vrot.lane.b32.xlu0 %v842, 96
      %v965 = vpop.permute.xlu0 %964
      %v967 = vsel %vm844, %v962, 0
      %v970 = vsel %vm844, %v965, 0
      %972 = vmatprep.subr.bf16.mxu0 0
      %973 = vmatpush1.bf16.xpose.msra.mxu0 %v970
      %974 = vmatprep.subr.bf16.mxu0 0
      %975 = vmatpush1.bf16.xpose.msra.mxu0 0
      %976 = vmatprep.subr.bf16.mxu0 0
      %977 = vmatpush1.bf16.xpose.msra.mxu0 0
      %978 = vmatprep.subr.bf16.mxu0 0
      %979 = vmatpush1.bf16.xpose.msra.mxu0 0
      %980 = vmatprep.subr.bf16.mxu0 0
      %981 = vmatpush1.bf16.xpose.msra.mxu0 0
      %982 = vmatprep.subr.bf16.mxu0 0
      %983 = vmatpush1.bf16.xpose.msra.mxu0 0
      %984 = vmatprep.subr.bf16.mxu0 0
      %985 = vmatpush1.bf16.xpose.msra.mxu0 0
      %986 = vmatprep.subr.bf16.mxu0 0
      %987 = vmatpush1.bf16.xpose.msra.mxu0 0
      %988 = vmatprep.subr.bf16.mxu0 0
      %989 = vmatpush1.bf16.xpose.msra.mxu0 0
      %990 = vmatprep.subr.bf16.mxu0 0
      %991 = vmatpush1.bf16.xpose.msra.mxu0 0
      %992 = vmatprep.subr.bf16.mxu0 0
      %993 = vmatpush1.bf16.xpose.msra.mxu0 0
      %994 = vmatprep.subr.bf16.mxu0 0
      %995 = vmatpush1.bf16.xpose.msra.mxu0 0
      %996 = vmatprep.subr.bf16.mxu0 0
      %997 = vmatpush1.bf16.xpose.msra.mxu0 0
      %998 = vmatprep.subr.bf16.mxu0 0
      %999 = vmatpush1.bf16.xpose.msra.mxu0 0
      %1000 = vmatprep.subr.bf16.mxu0 0
      %1001 = vmatpush1.bf16.xpose.msra.mxu0 0
      %1002 = vmatprep.subr.bf16.mxu0 0
      %1003 = vmatpush1.bf16.xpose.msra.mxu0 0
      %1004 = vmatprep.mubr.bf16.mxu0 0
      %1005 = vmatmul.mubr.bf16.gmra.mrb[0].mxu0 %v967
      %v1006 = vpop.f32.mrb[0].mxu0
      %v1007 = vadd.f32 0.0, %v1006
      %v1008 = vpop.f32.mrb[0].mxu0
      %v1009 = vpop.f32.mrb[0].mxu0
      %v1010 = vpop.f32.mrb[0].mxu0
      %1011 = vdwg.mxu0
      %v1012 = vmul.f32 %v1007, 0.17677669
      %v1013 = vsel %vm898, -1e+09, %v1012
      %v1014 = vsel %vm900, %v1013, -inf
      %1015 = vmax.xlane.f32.xlu0 %v1014
      %v1016 = vpop.xlane.xlu0 %1015
      %v1017 = vsub.f32 %v1013, %v1016
      %v1018 = vmul.f32 %v1017, 1.442695
      %v1019 = vpow.pop %v1018
      %v1020 = vsel %vm900, %v1019, 0.0
      %1021 = vadd.xlane.f32.xlu0 %v1020
      %v1022 = vpop.xlane.xlu0 %1021
      %v1023 = vrcp.pop %v1022
      %v1024 = vmul.f32 %v1019, %v1023
      %v1025 = vpack.c.bf16 %v1024, %v1024
      %1027 = vrot.lane.b32.xlu0 %v843, 96
      %v1028 = vpop.permute.xlu0 %1027
      %v1030 = vsel %vm900, %v1025, 0
      %v1033 = vsel %vm916, %v1028, 0
      %1035 = vmatprep.subr.bf16.mxu0 0
      %1036 = vmatpush1.bf16.msra.mxu0 %v1033
      %1037 = vmatprep.subr.bf16.mxu0 0
      %1038 = vmatpush1.bf16.msra.mxu0 0
      %1039 = vmatprep.subr.bf16.mxu0 0
      %1040 = vmatpush1.bf16.msra.mxu0 0
      %1041 = vmatprep.subr.bf16.mxu0 0
      %1042 = vmatpush1.bf16.msra.mxu0 0
      %1043 = vmatprep.subr.bf16.mxu0 0
      %1044 = vmatpush1.bf16.msra.mxu0 0
      %1045 = vmatprep.subr.bf16.mxu0 0
      %1046 = vmatpush1.bf16.msra.mxu0 0
      %1047 = vmatprep.subr.bf16.mxu0 0
      %1048 = vmatpush1.bf16.msra.mxu0 0
      %1049 = vmatprep.subr.bf16.mxu0 0
      %1050 = vmatpush1.bf16.msra.mxu0 0
      %1051 = vmatprep.subr.bf16.mxu0 0
      %1052 = vmatpush1.bf16.msra.mxu0 0
      %1053 = vmatprep.subr.bf16.mxu0 0
      %1054 = vmatpush1.bf16.msra.mxu0 0
      %1055 = vmatprep.subr.bf16.mxu0 0
      %1056 = vmatpush1.bf16.msra.mxu0 0
      %1057 = vmatprep.subr.bf16.mxu0 0
      %1058 = vmatpush1.bf16.msra.mxu0 0
      %1059 = vmatprep.subr.bf16.mxu0 0
      %1060 = vmatpush1.bf16.msra.mxu0 0
      %1061 = vmatprep.subr.bf16.mxu0 0
      %1062 = vmatpush1.bf16.msra.mxu0 0
      %1063 = vmatprep.subr.bf16.mxu0 0
      %1064 = vmatpush1.bf16.msra.mxu0 0
      %1065 = vmatprep.subr.bf16.mxu0 0
      %1066 = vmatpush1.bf16.msra.mxu0 0
      %1067 = vmatprep.mubr.bf16.mxu0 0
      %1068 = vmatmul.mubr.bf16.gmra.mrb[0].mxu0 %v1030
      %v1069 = vpop.f32.mrb[0].mxu0
      %v1070 = vadd.f32 0.0, %v1069
      %v1071 = vpop.f32.mrb[0].mxu0
      %v1072 = vpop.f32.mrb[0].mxu0
      %v1073 = vpop.f32.mrb[0].mxu0
      %1074 = vdwg.mxu0
      %1075 = vrot.lane.b32.xlu0 %v841, 64
      %v1076 = vpop.permute.xlu0 %1075
      %1077 = vrot.lane.b32.xlu0 %v842, 64
      %v1078 = vpop.permute.xlu0 %1077
      %v1080 = vsel %vm844, %v1076, 0
      %v1083 = vsel %vm844, %v1078, 0
      %1085 = vmatprep.subr.bf16.mxu0 0
      %1086 = vmatpush1.bf16.xpose.msra.mxu0 %v1083
      %1087 = vmatprep.subr.bf16.mxu0 0
      %1088 = vmatpush1.bf16.xpose.msra.mxu0 0
      %1089 = vmatprep.subr.bf16.mxu0 0
      %1090 = vmatpush1.bf16.xpose.msra.mxu0 0
      %1091 = vmatprep.subr.bf16.mxu0 0
      %1092 = vmatpush1.bf16.xpose.msra.mxu0 0
      %1093 = vmatprep.subr.bf16.mxu0 0
      %1094 = vmatpush1.bf16.xpose.msra.mxu0 0
      %1095 = vmatprep.subr.bf16.mxu0 0
      %1096 = vmatpush1.bf16.xpose.msra.mxu0 0
      %1097 = vmatprep.subr.bf16.mxu0 0
      %1098 = vmatpush1.bf16.xpose.msra.mxu0 0
      %1099 = vmatprep.subr.bf16.mxu0 0
      %1100 = vmatpush1.bf16.xpose.msra.mxu0 0
      %1101 = vmatprep.subr.bf16.mxu0 0
      %1102 = vmatpush1.bf16.xpose.msra.mxu0 0
      %1103 = vmatprep.subr.bf16.mxu0 0
      %1104 = vmatpush1.bf16.xpose.msra.mxu0 0
      %1105 = vmatprep.subr.bf16.mxu0 0
      %1106 = vmatpush1.bf16.xpose.msra.mxu0 0
      %1107 = vmatprep.subr.bf16.mxu0 0
      %1108 = vmatpush1.bf16.xpose.msra.mxu0 0
      %1109 = vmatprep.subr.bf16.mxu0 0
      %1110 = vmatpush1.bf16.xpose.msra.mxu0 0
      %1111 = vmatprep.subr.bf16.mxu0 0
      %1112 = vmatpush1.bf16.xpose.msra.mxu0 0
      %1113 = vmatprep.subr.bf16.mxu0 0
      %1114 = vmatpush1.bf16.xpose.msra.mxu0 0
      %1115 = vmatprep.subr.bf16.mxu0 0
      %1116 = vmatpush1.bf16.xpose.msra.mxu0 0
      %1117 = vmatprep.mubr.bf16.mxu0 0
      %1118 = vmatmul.mubr.bf16.gmra.mrb[0].mxu0 %v1080
      %v1119 = vpop.f32.mrb[0].mxu0
      %v1120 = vadd.f32 0.0, %v1119
      %v1121 = vpop.f32.mrb[0].mxu0
      %v1122 = vpop.f32.mrb[0].mxu0
      %v1123 = vpop.f32.mrb[0].mxu0
      %1124 = vdwg.mxu0
      %v1125 = vmul.f32 %v1120, 0.17677669
      %v1126 = vsel %vm898, -1e+09, %v1125
      %v1127 = vsel %vm900, %v1126, -inf
      %1128 = vmax.xlane.f32.xlu0 %v1127
      %v1129 = vpop.xlane.xlu0 %1128
      %v1130 = vsub.f32 %v1126, %v1129
      %v1131 = vmul.f32 %v1130, 1.442695
      %v1132 = vpow.pop %v1131
      %v1133 = vsel %vm900, %v1132, 0.0
      %1134 = vadd.xlane.f32.xlu0 %v1133
      %v1135 = vpop.xlane.xlu0 %1134
      %v1136 = vrcp.pop %v1135
      %v1137 = vmul.f32 %v1132, %v1136
      %v1138 = vpack.c.bf16 %v1137, %v1137
      %1139 = vrot.lane.b32.xlu0 %v843, 64
      %v1140 = vpop.permute.xlu0 %1139
      %v1142 = vsel %vm900, %v1138, 0
      %v1145 = vsel %vm916, %v1140, 0
      %1147 = vmatprep.subr.bf16.mxu0 0
      %1148 = vmatpush1.bf16.msra.mxu0 %v1145
      %1149 = vmatprep.subr.bf16.mxu0 0
      %1150 = vmatpush1.bf16.msra.mxu0 0
      %1151 = vmatprep.subr.bf16.mxu0 0
      %1152 = vmatpush1.bf16.msra.mxu0 0
      %1153 = vmatprep.subr.bf16.mxu0 0
      %1154 = vmatpush1.bf16.msra.mxu0 0
      %1155 = vmatprep.subr.bf16.mxu0 0
      %1156 = vmatpush1.bf16.msra.mxu0 0
      %1157 = vmatprep.subr.bf16.mxu0 0
      %1158 = vmatpush1.bf16.msra.mxu0 0
      %1159 = vmatprep.subr.bf16.mxu0 0
      %1160 = vmatpush1.bf16.msra.mxu0 0
      %1161 = vmatprep.subr.bf16.mxu0 0
      %1162 = vmatpush1.bf16.msra.mxu0 0
      %1163 = vmatprep.subr.bf16.mxu0 0
      %1164 = vmatpush1.bf16.msra.mxu0 0
      %1165 = vmatprep.subr.bf16.mxu0 0
      %1166 = vmatpush1.bf16.msra.mxu0 0
      %1167 = vmatprep.subr.bf16.mxu0 0
      %1168 = vmatpush1.bf16.msra.mxu0 0
      %1169 = vmatprep.subr.bf16.mxu0 0
      %1170 = vmatpush1.bf16.msra.mxu0 0
      %1171 = vmatprep.subr.bf16.mxu0 0
      %1172 = vmatpush1.bf16.msra.mxu0 0
      %1173 = vmatprep.subr.bf16.mxu0 0
      %1174 = vmatpush1.bf16.msra.mxu0 0
      %1175 = vmatprep.subr.bf16.mxu0 0
      %1176 = vmatpush1.bf16.msra.mxu0 0
      %1177 = vmatprep.subr.bf16.mxu0 0
      %1178 = vmatpush1.bf16.msra.mxu0 0
      %1179 = vmatprep.mubr.bf16.mxu0 0
      %1180 = vmatmul.mubr.bf16.gmra.mrb[0].mxu0 %v1142
      %v1181 = vpop.f32.mrb[0].mxu0
      %v1182 = vadd.f32 0.0, %v1181
      %v1183 = vpop.f32.mrb[0].mxu0
      %v1184 = vpop.f32.mrb[0].mxu0
      %v1185 = vpop.f32.mrb[0].mxu0
      %1186 = vdwg.mxu0
      %1187 = vrot.lane.b32.xlu0 %v841, 32
      %v1188 = vpop.permute.xlu0 %1187
      %1189 = vrot.lane.b32.xlu0 %v842, 32
      %v1190 = vpop.permute.xlu0 %1189
      %v1192 = vsel %vm844, %v1188, 0
      %v1195 = vsel %vm844, %v1190, 0
      %1197 = vmatprep.subr.bf16.mxu0 0
      %1198 = vmatpush1.bf16.xpose.msra.mxu0 %v1195
      %1199 = vmatprep.subr.bf16.mxu0 0
      %1200 = vmatpush1.bf16.xpose.msra.mxu0 0
      %1201 = vmatprep.subr.bf16.mxu0 0
      %1202 = vmatpush1.bf16.xpose.msra.mxu0 0
      %1203 = vmatprep.subr.bf16.mxu0 0
      %1204 = vmatpush1.bf16.xpose.msra.mxu0 0
      %1205 = vmatprep.subr.bf16.mxu0 0
      %1206 = vmatpush1.bf16.xpose.msra.mxu0 0
      %1207 = vmatprep.subr.bf16.mxu0 0
      %1208 = vmatpush1.bf16.xpose.msra.mxu0 0
      %1209 = vmatprep.subr.bf16.mxu0 0
      %1210 = vmatpush1.bf16.xpose.msra.mxu0 0
      %1211 = vmatprep.subr.bf16.mxu0 0
      %1212 = vmatpush1.bf16.xpose.msra.mxu0 0
      %1213 = vmatprep.subr.bf16.mxu0 0
      %1214 = vmatpush1.bf16.xpose.msra.mxu0 0
      %1215 = vmatprep.subr.bf16.mxu0 0
      %1216 = vmatpush1.bf16.xpose.msra.mxu0 0
      %1217 = vmatprep.subr.bf16.mxu0 0
      %1218 = vmatpush1.bf16.xpose.msra.mxu0 0
      %1219 = vmatprep.subr.bf16.mxu0 0
      %1220 = vmatpush1.bf16.xpose.msra.mxu0 0
      %1221 = vmatprep.subr.bf16.mxu0 0
      %1222 = vmatpush1.bf16.xpose.msra.mxu0 0
      %1223 = vmatprep.subr.bf16.mxu0 0
      %1224 = vmatpush1.bf16.xpose.msra.mxu0 0
      %1225 = vmatprep.subr.bf16.mxu0 0
      %1226 = vmatpush1.bf16.xpose.msra.mxu0 0
      %1227 = vmatprep.subr.bf16.mxu0 0
      %1228 = vmatpush1.bf16.xpose.msra.mxu0 0
      %1229 = vmatprep.mubr.bf16.mxu0 0
      %1230 = vmatmul.mubr.bf16.gmra.mrb[0].mxu0 %v1192
      %v1231 = vpop.f32.mrb[0].mxu0
      %v1232 = vadd.f32 0.0, %v1231
      %v1233 = vpop.f32.mrb[0].mxu0
      %v1234 = vpop.f32.mrb[0].mxu0
      %v1235 = vpop.f32.mrb[0].mxu0
      %1236 = vdwg.mxu0
      %v1237 = vmul.f32 %v1232, 0.17677669
      %v1238 = vsel %vm898, -1e+09, %v1237
      %v1239 = vsel %vm900, %v1238, -inf
      %1240 = vmax.xlane.f32.xlu0 %v1239
      %v1241 = vpop.xlane.xlu0 %1240
      %v1242 = vsub.f32 %v1238, %v1241
      %v1243 = vmul.f32 %v1242, 1.442695
      %v1244 = vpow.pop %v1243
      %v1245 = vsel %vm900, %v1244, 0.0
      %1246 = vadd.xlane.f32.xlu0 %v1245
      %v1247 = vpop.xlane.xlu0 %1246
      %v1248 = vrcp.pop %v1247
      %v1249 = vmul.f32 %v1244, %v1248
      %v1250 = vpack.c.bf16 %v1249, %v1249
      %1251 = vrot.lane.b32.xlu0 %v843, 32
      %v1252 = vpop.permute.xlu0 %1251
      %v1254 = vsel %vm900, %v1250, 0
      %v1257 = vsel %vm916, %v1252, 0
      %1259 = vmatprep.subr.bf16.mxu0 0
      %1260 = vmatpush1.bf16.msra.mxu0 %v1257
      %1261 = vmatprep.subr.bf16.mxu0 0
      %1262 = vmatpush1.bf16.msra.mxu0 0
      %1263 = vmatprep.subr.bf16.mxu0 0
      %1264 = vmatpush1.bf16.msra.mxu0 0
      %1265 = vmatprep.subr.bf16.mxu0 0
      %1266 = vmatpush1.bf16.msra.mxu0 0
      %1267 = vmatprep.subr.bf16.mxu0 0
      %1268 = vmatpush1.bf16.msra.mxu0 0
      %1269 = vmatprep.subr.bf16.mxu0 0
      %1270 = vmatpush1.bf16.msra.mxu0 0
      %1271 = vmatprep.subr.bf16.mxu0 0
      %1272 = vmatpush1.bf16.msra.mxu0 0
      %1273 = vmatprep.subr.bf16.mxu0 0
      %1274 = vmatpush1.bf16.msra.mxu0 0
      %1275 = vmatprep.subr.bf16.mxu0 0
      %1276 = vmatpush1.bf16.msra.mxu0 0
      %1277 = vmatprep.subr.bf16.mxu0 0
      %1278 = vmatpush1.bf16.msra.mxu0 0
      %1279 = vmatprep.subr.bf16.mxu0 0
      %1280 = vmatpush1.bf16.msra.mxu0 0
      %1281 = vmatprep.subr.bf16.mxu0 0
      %1282 = vmatpush1.bf16.msra.mxu0 0
      %1283 = vmatprep.subr.bf16.mxu0 0
      %1284 = vmatpush1.bf16.msra.mxu0 0
      %1285 = vmatprep.subr.bf16.mxu0 0
      %1286 = vmatpush1.bf16.msra.mxu0 0
      %1287 = vmatprep.subr.bf16.mxu0 0
      %1288 = vmatpush1.bf16.msra.mxu0 0
      %1289 = vmatprep.subr.bf16.mxu0 0
      %1290 = vmatpush1.bf16.msra.mxu0 0
      %1291 = vmatprep.mubr.bf16.mxu0 0
      %1292 = vmatmul.mubr.bf16.gmra.mrb[0].mxu0 %v1254
      %v1293 = vpop.f32.mrb[0].mxu0
      %v1294 = vadd.f32 0.0, %v1293
      %v1295 = vpop.f32.mrb[0].mxu0
      %v1296 = vpop.f32.mrb[0].mxu0
      %v1297 = vpop.f32.mrb[0].mxu0
      %1298 = vdwg.mxu0
      %1300 = vrot.lane.b32.xlu0 %v1070, 32
      %v1301 = vpop.permute.xlu0 %1300
      %1304 = vrot.lane.b32.xlu0 %v1182, 64
      %v1305 = vpop.permute.xlu0 %1304
      %1308 = vrot.lane.b32.xlu0 %v1294, 96
      %v1309 = vpop.permute.xlu0 %1308
      %v1311 = vsel %vm844, %v955, %v1301
      %vm1312 = vcmask 523264
      %v1313 = vsel %vm1312, %v1311, %v1305
      %vm1314 = vcmask 785408
      %v1315 = vsel %vm1314, %v1313, %v1309
      %v1316 = vld [vmem:[%s11] sm:$0xf]
      %v1317 = vld [vmem:[%s11 + $0x4] sm:$0xf]
      %v1318 = vld [vmem:[%s11 + $0x8] sm:$0xf]
      %v1319 = vld [vmem:[%s11 + $0xc] sm:$0xf]
      %v1320 = vld [vmem:[%s11 + $0x10] sm:$0xf]
      %v1321 = vld [vmem:[%s11 + $0x14] sm:$0xf]
      %v1322 = vld [vmem:[%s11 + $0x18] sm:$0xf]
      %v1323 = vld [vmem:[%s11 + $0x1c] sm:$0xf]
      %v1324 = vld [vmem:[%s11 + $0x20] sm:$0xf]
      %v1325 = vld [vmem:[%s11 + $0x24] sm:$0xf]
      %v1326 = vld [vmem:[%s11 + $0x28] sm:$0xf]
      %v1327 = vld [vmem:[%s11 + $0x2c] sm:$0xf]
      %v1328 = vld [vmem:[%s11 + $0x30] sm:$0xf]
      %v1329 = vld [vmem:[%s11 + $0x34] sm:$0xf]
      %v1330 = vld [vmem:[%s11 + $0x38] sm:$0xf]
      %v1331 = vld [vmem:[%s11 + $0x3c] sm:$0xf]
      %v1332 = vpack.c.bf16 %v1315, %v1315
      %v1349 = vunpack.c.l.b16 %v1316
      %v1350 = vunpack.c.l.b16 %v1317
      %v1351 = vunpack.c.l.b16 %v1318
      %v1352 = vunpack.c.l.b16 %v1319
      %v1353 = vunpack.c.l.b16 %v1320
      %v1354 = vunpack.c.l.b16 %v1321
      %v1355 = vunpack.c.l.b16 %v1322
      %v1356 = vunpack.c.l.b16 %v1323
      %v1357 = vunpack.c.l.b16 %v1324
      %v1358 = vunpack.c.l.b16 %v1325
      %v1359 = vunpack.c.l.b16 %v1326
      %v1360 = vunpack.c.l.b16 %v1327
      %v1361 = vunpack.c.l.b16 %v1328
      %v1362 = vunpack.c.l.b16 %v1329
      %v1363 = vunpack.c.l.b16 %v1330
      %v1364 = vunpack.c.l.b16 %v1331
      %v1365 = vpack.c.b16 %v1350, %v1349
      %v1366 = vpack.c.b16 %v1352, %v1351
      %v1367 = vpack.c.b16 %v1354, %v1353
      %v1368 = vpack.c.b16 %v1356, %v1355
      %v1369 = vpack.c.b16 %v1358, %v1357
      %v1370 = vpack.c.b16 %v1360, %v1359
      %v1371 = vpack.c.b16 %v1362, %v1361
      %v1372 = vpack.c.b16 %v1364, %v1363
      %1381 = vmatprep.subr.bf16.mxu0 0
      %1382 = vmatpush1.bf16.msra.mxu0 %v1365
      %1383 = vmatprep.subr.bf16.mxu0 0
      %1384 = vmatpush1.bf16.msra.mxu0 %v1366
      %1385 = vmatprep.subr.bf16.mxu0 0
      %1386 = vmatpush1.bf16.msra.mxu0 %v1367
      %1387 = vmatprep.subr.bf16.mxu0 0
      %1388 = vmatpush1.bf16.msra.mxu0 %v1368
      %1389 = vmatprep.subr.bf16.mxu0 0
      %1390 = vmatpush1.bf16.msra.mxu0 %v1369
      %1391 = vmatprep.subr.bf16.mxu0 0
      %1392 = vmatpush1.bf16.msra.mxu0 %v1370
      %1393 = vmatprep.subr.bf16.mxu0 0
      %1394 = vmatpush1.bf16.msra.mxu0 %v1371
      %1395 = vmatprep.subr.bf16.mxu0 0
      %1396 = vmatpush1.bf16.msra.mxu0 %v1372
      %1397 = vmatprep.subr.bf16.mxu0 0
      %1398 = vmatpush1.bf16.msra.mxu0 0
      %1399 = vmatprep.subr.bf16.mxu0 0
      %1400 = vmatpush1.bf16.msra.mxu0 0
      %1401 = vmatprep.subr.bf16.mxu0 0
      %1402 = vmatpush1.bf16.msra.mxu0 0
      %1403 = vmatprep.subr.bf16.mxu0 0
      %1404 = vmatpush1.bf16.msra.mxu0 0
      %1405 = vmatprep.subr.bf16.mxu0 0
      %1406 = vmatpush1.bf16.msra.mxu0 0
      %1407 = vmatprep.subr.bf16.mxu0 0
      %1408 = vmatpush1.bf16.msra.mxu0 0
      %1409 = vmatprep.subr.bf16.mxu0 0
      %1410 = vmatpush1.bf16.msra.mxu0 0
      %1411 = vmatprep.subr.bf16.mxu0 0
      %1412 = vmatpush1.bf16.msra.mxu0 0
      %1413 = vmatprep.mubr.bf16.mxu0 0
      %1414 = vmatmul.mubr.bf16.gmra.mrb[0].mxu0 %v1332
      %v1415 = vpop.f32.mrb[0].mxu0
      %v1416 = vadd.f32 0.0, %v1415
      %v1417 = vpop.f32.mrb[0].mxu0
      %v1418 = vpop.f32.mrb[0].mxu0
      %v1419 = vpop.f32.mrb[0].mxu0
      %1420 = vdwg.mxu0
      %v1421 = vadd.f32 %v468, %v1416
      %v1422 = vld [vmem:[%s12] sm:$0x1]
      %v1424 = vlaneseq
      %v1425 = vshrl.u32 %v1424, 7
      %v1426 = vsub.s32 0, %v1425
      %v1427 = vrot.slane %v1422, %v1426
      %v1429 = vadd.f32 %v1421, %v1427
      %1430 = vst [vmem:[%s466] sm:$0xff] %v1429
      %p1431 = scmp.lt.s32.totalorder %s24, 1
      %s1432 = scalar_select %p1431, %s24, 1
      %s1433 = smul.addr %s1432, 8
      %s1434 = scalar_lea.vmem %s13, %s1433
      // Predicated region
      $region73: #{atnet_forward.11} parent=71 // pred_check
        %p1435 = pneg %p330
      $region74: #{atnet_forward.11} parent=71 // pred_check_branch
        %1437 = sbr.rel (%p1435) target = $region76
      $region75: #{atnet_forward.11} parent=71 // pred_region
        _
      $region76: #{atnet_forward.11} parent=71 // pred_fallthru
        _
    $region72: #{atnet_forward.11} parent=5 // pred_fallthru
      _
    %p1438 = scmp.le.s32.totalorder 2, %s19
    // Predicated region
    $region77: #{atnet_forward.11} parent=5 // pred_check
      %p1439 = pneg %p1438
    $region78: #{atnet_forward.11} parent=5 // pred_check_branch
      %1441 = sbr.rel (%p1439) target = $region80
    $region79: #{atnet_forward.11} parent=5 // pred_region
      %s1442 = ssub.s32 %s19, 2
      // Predicated region
      $region81: #{atnet_forward.11} parent=79 // pred_check
        %p1443 = pneg %p336
      $region82: #{atnet_forward.11} parent=79 // pred_check_branch
        %1445 = sbr.rel (%p1443) target = $region84
      $region83: #{atnet_forward.11} parent=79 // pred_region
        %p1446 = scmp.lt.s32.totalorder %s25, 1
        %s1447 = scalar_select %p1446, %s25, 1
        %s1448 = smul.addr %s1447, 8
        %s1449 = scalar_lea.vmem %s13, %s1448
      $region84: #{atnet_forward.11} parent=79 // pred_fallthru
        _
    $region80: #{atnet_forward.11} parent=5 // pred_fallthru
      _
  $region6: #{atnet_forward.11} parent=0 // loop_footer
    %s23 = sadd.s32 1, %s19
  $region7: #{atnet_forward.11} parent=0 // loop_footer_branch
    %18 = sbr.rel target = $region3
  $region8: #{atnet_forward.11} parent=0 // loop_exit
    _

// kernel: atnet_forward.12
$region0: #{atnet_forward.12}
  #allocation0 [shape = 'u32[]', space=smem, size = 0x4, offset = 0x4, fixed_abs, tag = 'smem constant byte address 0x4 - core index']
  #allocation1 [shape = 'u32[144,128]{1,0:T(1,128)}', space=vmem, size = 0x12000, scoped, tag = 'internal scratch']
  %s0 = inlined_call_operand.vmem [shape: f32[2,8,128], index: 0, kind: input, shape index: {}]
  %s1 = inlined_call_operand.hbm [shape: f32[1,128], index: 1, kind: input, shape index: {}]
  %s2 = inlined_call_operand.hbm [shape: f32[1,128], index: 2, kind: input, shape index: {}]
  %s3 = inlined_call_operand.vmem [shape: bf16[128,512], index: 3, kind: input, shape index: {}]
  %s4 = inlined_call_operand.vmem [shape: f32[1,512], index: 4, kind: input, shape index: {}]
  %s5 = inlined_call_operand.vmem [shape: bf16[512,128], index: 5, kind: input, shape index: {}]
  %s6 = inlined_call_operand.hbm [shape: f32[1,128], index: 6, kind: input, shape index: {}]
  %s7 = inlined_call_operand.vmem [shape: f32[2,8,128], index: 7, kind: output, shape index: {}]
  %s8 = sld [smem:[#allocation0]]
  $region73: #{atnet_forward.12} parent=0
    _
  %s10 = ssub.s32 1, %s8
  %s11 = scalar_select 0, %s10, %s8
  $region1: #{atnet_forward.12} parent=0
    #allocation2 [shape = 'u8[512]{0}', space=vmem, size = 0x400, scoped, tag = 'input window, operand 1, single buffered']
    #allocation3 [shape = 's32[2]{0}', space=sflag, size = 0x8, scoped, tag = 'scoped memory for atnet_forward.12']
    #allocation4 [shape = 'u8[512]{0}', space=vmem, size = 0x400, scoped, tag = 'input window, operand 2, single buffered']
    #allocation5 [shape = 's32[1]{0}', space=sflag, size = 0x4, scoped, tag = 'scoped memory for atnet_forward.12']
    #allocation6 [shape = 'u8[512]{0}', space=vmem, size = 0x400, scoped, tag = 'input window, operand 6, single buffered']
    %12 = vsyncpa [#allocation3], 0
    %13 = vsyncpa [#allocation5], 0
    loop: start=0, step=1, limit=4
    $region2: #{atnet_forward.12} parent=1 // loop_pre_header
      _
    $region3: #{atnet_forward.12} parent=1 // loop_header
      %s15 = sphi 0, %s19
      %p16 = scmp.ge.s32.totalorder %s15, 4
      %s25 = sphi 0, %s27
      %s28 = sphi 0, %s25
      %s29 = sphi 0, %s28
      %s45 = sphi 0, %s29
      %s49 = sphi 0, %s49
      %s51 = sphi 0, %s49
      %s52 = sphi 0, %s51
      %s66 = sphi 0, %s52
      %s70 = sphi 0, %s70
      %s72 = sphi 0, %s70
      %s73 = sphi 0, %s72
      %s87 = sphi 0, %s73
      %s91 = sphi 0, %s91
      %s93 = sphi 0, %s91
      %s94 = sphi 0, %s93
      %s108 = sphi 0, %s94
      %s112 = sphi 0, %s112
      %s114 = sphi 0, %s112
      %s115 = sphi 0, %s114
      %s129 = sphi 0, %s115
      %s133 = sphi 0, %s133
      %s135 = sphi 0, %s133
      %s136 = sphi 0, %s135
      %s150 = sphi 0, %s136
      %s154 = sphi 0, %s154
      %s156 = sphi 0, %s154
      %s157 = sphi 0, %s156
      %s171 = sphi 0, %s157
      %s177 = sphi 0, %s179
      %s180 = sphi 0, %s177
      %s181 = sphi 0, %s180
      %s197 = sphi 0, %s181
    $region4: #{atnet_forward.12} parent=1 // loop_header_branch
      %18 = sbr.rel (%p16) target = $region8
    $region5: #{atnet_forward.12} parent=1 // loop_body
      %s20 = ssub.s32 %s15, 1
      %s21 = ssub.s32 %s15, 2
      %s22 = sadd.s32 %s15, 1
      %s23 = ssub.s32 %s15, %s22
      %p24 = scmp.eq.s32.totalorder %s23, 0
      %s26 = sadd.s32 %s25, 1
      %s27 = scalar_select %p24, %s25, %s26
      %p30 = pneg %p24
      %p31 = scmp.eq.s32.totalorder %s15, 1
      %p32 = por %p30, %p31
      %p33 = scmp.ne.s32.totalorder %s25, %s28
      %p34 = scmp.eq.s32.totalorder %s15, 0
      %p35 = por %p33, %p34
      %p36 = scmp.ne.s32.totalorder %s25, %s28
      %p37 = scmp.eq.s32.totalorder %s20, 1
      %p38 = por %p36, %p37
      %p39 = scmp.ne.s32.totalorder %s28, %s29
      %p40 = scmp.eq.s32.totalorder %s20, 0
      %p41 = por %p39, %p40
      %p42 = scmp.ne.s32.totalorder %s28, %s29
      %p43 = scmp.eq.s32.totalorder %s21, 1
      %p44 = por %p42, %p43
      %p46 = scmp.ne.s32.totalorder %s29, %s45
      %p47 = scmp.eq.s32.totalorder %s21, 0
      %p48 = por %p46, %p47
      %s50 = sadd.s32 %s49, 1
      %p53 = scmp.eq.s32.totalorder %s15, 1
      %p54 = scmp.ne.s32.totalorder %s49, %s51
      %p55 = scmp.eq.s32.totalorder %s15, 0
      %p56 = por %p54, %p55
      %p57 = scmp.ne.s32.totalorder %s49, %s51
      %p58 = scmp.eq.s32.totalorder %s20, 1
      %p59 = por %p57, %p58
      %p60 = scmp.ne.s32.totalorder %s51, %s52
      %p61 = scmp.eq.s32.totalorder %s20, 0
      %p62 = por %p60, %p61
      %p63 = scmp.ne.s32.totalorder %s51, %s52
      %p64 = scmp.eq.s32.totalorder %s21, 1
      %p65 = por %p63, %p64
      %p67 = scmp.ne.s32.totalorder %s52, %s66
      %p68 = scmp.eq.s32.totalorder %s21, 0
      %p69 = por %p67, %p68
      %s71 = sadd.s32 %s70, 1
      %p74 = scmp.eq.s32.totalorder %s15, 1
      %p75 = scmp.ne.s32.totalorder %s70, %s72
      %p76 = scmp.eq.s32.totalorder %s15, 0
      %p77 = por %p75, %p76
      %p78 = scmp.ne.s32.totalorder %s70, %s72
      %p79 = scmp.eq.s32.totalorder %s20, 1
      %p80 = por %p78, %p79
      %p81 = scmp.ne.s32.totalorder %s72, %s73
      %p82 = scmp.eq.s32.totalorder %s20, 0
      %p83 = por %p81, %p82
      %p84 = scmp.ne.s32.totalorder %s72, %s73
      %p85 = scmp.eq.s32.totalorder %s21, 1
      %p86 = por %p84, %p85
      %p88 = scmp.ne.s32.totalorder %s73, %s87
      %p89 = scmp.eq.s32.totalorder %s21, 0
      %p90 = por %p88, %p89
      %s92 = sadd.s32 %s91, 1
      %p95 = scmp.eq.s32.totalorder %s15, 1
      %p96 = scmp.ne.s32.totalorder %s91, %s93
      %p97 = scmp.eq.s32.totalorder %s15, 0
      %p98 = por %p96, %p97
      %p99 = scmp.ne.s32.totalorder %s91, %s93
      %p100 = scmp.eq.s32.totalorder %s20, 1
      %p101 = por %p99, %p100
      %p102 = scmp.ne.s32.totalorder %s93, %s94
      %p103 = scmp.eq.s32.totalorder %s20, 0
      %p104 = por %p102, %p103
      %p105 = scmp.ne.s32.totalorder %s93, %s94
      %p106 = scmp.eq.s32.totalorder %s21, 1
      %p107 = por %p105, %p106
      %p109 = scmp.ne.s32.totalorder %s94, %s108
      %p110 = scmp.eq.s32.totalorder %s21, 0
      %p111 = por %p109, %p110
      %s113 = sadd.s32 %s112, 1
      %p116 = scmp.eq.s32.totalorder %s15, 1
      %p117 = scmp.ne.s32.totalorder %s112, %s114
      %p118 = scmp.eq.s32.totalorder %s15, 0
      %p119 = por %p117, %p118
      %p120 = scmp.ne.s32.totalorder %s112, %s114
      %p121 = scmp.eq.s32.totalorder %s20, 1
      %p122 = por %p120, %p121
      %p123 = scmp.ne.s32.totalorder %s114, %s115
      %p124 = scmp.eq.s32.totalorder %s20, 0
      %p125 = por %p123, %p124
      %p126 = scmp.ne.s32.totalorder %s114, %s115
      %p127 = scmp.eq.s32.totalorder %s21, 1
      %p128 = por %p126, %p127
      %p130 = scmp.ne.s32.totalorder %s115, %s129
      %p131 = scmp.eq.s32.totalorder %s21, 0
      %p132 = por %p130, %p131
      %s134 = sadd.s32 %s133, 1
      %p137 = scmp.eq.s32.totalorder %s15, 1
      %p138 = scmp.ne.s32.totalorder %s133, %s135
      %p139 = scmp.eq.s32.totalorder %s15, 0
      %p140 = por %p138, %p139
      %p141 = scmp.ne.s32.totalorder %s133, %s135
      %p142 = scmp.eq.s32.totalorder %s20, 1
      %p143 = por %p141, %p142
      %p144 = scmp.ne.s32.totalorder %s135, %s136
      %p145 = scmp.eq.s32.totalorder %s20, 0
      %p146 = por %p144, %p145
      %p147 = scmp.ne.s32.totalorder %s135, %s136
      %p148 = scmp.eq.s32.totalorder %s21, 1
      %p149 = por %p147, %p148
      %p151 = scmp.ne.s32.totalorder %s136, %s150
      %p152 = scmp.eq.s32.totalorder %s21, 0
      %p153 = por %p151, %p152
      %s155 = sadd.s32 %s154, 1
      %p158 = scmp.eq.s32.totalorder %s15, 1
      %p159 = scmp.ne.s32.totalorder %s154, %s156
      %p160 = scmp.eq.s32.totalorder %s15, 0
      %p161 = por %p159, %p160
      %p162 = scmp.ne.s32.totalorder %s154, %s156
      %p163 = scmp.eq.s32.totalorder %s20, 1
      %p164 = por %p162, %p163
      %p165 = scmp.ne.s32.totalorder %s156, %s157
      %p166 = scmp.eq.s32.totalorder %s20, 0
      %p167 = por %p165, %p166
      %p168 = scmp.ne.s32.totalorder %s156, %s157
      %p169 = scmp.eq.s32.totalorder %s21, 1
      %p170 = por %p168, %p169
      %p172 = scmp.ne.s32.totalorder %s157, %s171
      %p173 = scmp.eq.s32.totalorder %s21, 0
      %p174 = por %p172, %p173
      %s175 = ssub.s32 %s15, %s22
      %p176 = scmp.eq.s32.totalorder %s175, 0
      %s178 = sadd.s32 %s177, 1
      %s179 = scalar_select %p176, %s177, %s178
      %p182 = pneg %p176
      %p183 = scmp.eq.s32.totalorder %s15, 1
      %p184 = por %p182, %p183
      %p185 = scmp.ne.s32.totalorder %s177, %s180
      %p186 = scmp.eq.s32.totalorder %s15, 0
      %p187 = por %p185, %p186
      %p188 = scmp.ne.s32.totalorder %s177, %s180
      %p189 = scmp.eq.s32.totalorder %s20, 1
      %p190 = por %p188, %p189
      %p191 = scmp.ne.s32.totalorder %s180, %s181
      %p192 = scmp.eq.s32.totalorder %s20, 0
      %p193 = por %p191, %p192
      %p194 = scmp.ne.s32.totalorder %s180, %s181
      %p195 = scmp.eq.s32.totalorder %s21, 1
      %p196 = por %p194, %p195
      %p198 = scmp.ne.s32.totalorder %s181, %s197
      %p199 = scmp.eq.s32.totalorder %s21, 0
      %p200 = por %p198, %p199
      %p201 = scmp.le.s32.totalorder 1, %s15
      %p202 = scmp.lt.s32.totalorder %s15, 3
      %p203 = pnand %p201, %p202
      %p204 = pneg %p203
      // Predicated region
      $region9: #{atnet_forward.12} parent=5 // pred_check
        _
      $region10: #{atnet_forward.12} parent=5 // pred_check_branch
        %206 = sbr.rel (%p203) target = $region12
      $region11: #{atnet_forward.12} parent=5 // pred_region
        %s207 = ssub.s32 %s15, 1
        // Predicated region
        $region13: #{atnet_forward.12} parent=11 // pred_check
          %p208 = pneg %p62
        $region14: #{atnet_forward.12} parent=11 // pred_check_branch
          %210 = sbr.rel (%p208) target = $region16
        $region15: #{atnet_forward.12} parent=11 // pred_region
          %s212 = ssub.s32 16, 16
          %213 = vsyncadd [#allocation3], %s212
          %s215 = sshll.u32 [#allocation2], 4
          %s216 = int_to_ptr.vmem [resolvable:$true] %s215
          %218 = dma.hbm_to_vmem [thread:$0]  %s1, 16, %s216, [#allocation3]
        $region16: #{atnet_forward.12} parent=11 // pred_fallthru
          _
        // Predicated region
        $region17: #{atnet_forward.12} parent=11 // pred_check
          %p219 = pneg %p83
        $region18: #{atnet_forward.12} parent=11 // pred_check_branch
          %221 = sbr.rel (%p219) target = $region20
        $region19: #{atnet_forward.12} parent=11 // pred_region
          %s223 = ssub.s32 16, 16
          %224 = vsyncadd [#allocation5], %s223
          %s226 = sshll.u32 [#allocation4], 4
          %s227 = int_to_ptr.vmem [resolvable:$true] %s226
          %229 = dma.hbm_to_vmem [thread:$0]  %s2, 16, %s227, [#allocation5]
        $region20: #{atnet_forward.12} parent=11 // pred_fallthru
          _
        // Predicated region
        $region21: #{atnet_forward.12} parent=11 // pred_check
          %p230 = pneg %p104
        $region22: #{atnet_forward.12} parent=11 // pred_check_branch
          %232 = sbr.rel (%p230) target = $region24
        $region23: #{atnet_forward.12} parent=11 // pred_region
          _
        $region24: #{atnet_forward.12} parent=11 // pred_fallthru
          _
        // Predicated region
        $region25: #{atnet_forward.12} parent=11 // pred_check
          %p233 = pneg %p125
        $region26: #{atnet_forward.12} parent=11 // pred_check_branch
          %235 = sbr.rel (%p233) target = $region28
        $region27: #{atnet_forward.12} parent=11 // pred_region
          _
        $region28: #{atnet_forward.12} parent=11 // pred_fallthru
          _
        // Predicated region
        $region29: #{atnet_forward.12} parent=11 // pred_check
          %p236 = pneg %p146
        $region30: #{atnet_forward.12} parent=11 // pred_check_branch
          %238 = sbr.rel (%p236) target = $region32
        $region31: #{atnet_forward.12} parent=11 // pred_region
          _
        $region32: #{atnet_forward.12} parent=11 // pred_fallthru
          _
        // Predicated region
        $region33: #{atnet_forward.12} parent=11 // pred_check
          %p239 = pneg %p167
        $region34: #{atnet_forward.12} parent=11 // pred_check_branch
          %241 = sbr.rel (%p239) target = $region36
        $region35: #{atnet_forward.12} parent=11 // pred_region
          %s243 = ssub.s32 16, 16
          %244 = vsyncadd [#allocation5], %s243
          %s246 = sshll.u32 [#allocation6], 4
          %s247 = int_to_ptr.vmem [resolvable:$true] %s246
          %249 = dma.hbm_to_vmem [thread:$0]  %s6, 16, %s247, [#allocation5]
        $region36: #{atnet_forward.12} parent=11 // pred_fallthru
          _
      $region12: #{atnet_forward.12} parent=5 // pred_fallthru
        _
      %p250 = scmp.lt.s32.totalorder %s15, 2
      // Predicated region
      $region37: #{atnet_forward.12} parent=5 // pred_check
        %p251 = pneg %p250
      $region38: #{atnet_forward.12} parent=5 // pred_check_branch
        %253 = sbr.rel (%p251) target = $region40
      $region39: #{atnet_forward.12} parent=5 // pred_region
        // Predicated region
        $region41: #{atnet_forward.12} parent=39 // pred_check
          %p254 = pneg %p35
        $region42: #{atnet_forward.12} parent=39 // pred_check_branch
          %256 = sbr.rel (%p254) target = $region44
        $region43: #{atnet_forward.12} parent=39 // pred_region
          %p257 = scmp.lt.s32.totalorder %s15, 1
          %s258 = scalar_select %p257, %s15, 1
          %s259 = smul.addr %s258, 8
          %s260 = scalar_lea.vmem %s0, %s259
        $region44: #{atnet_forward.12} parent=39 // pred_fallthru
          _
      $region40: #{atnet_forward.12} parent=5 // pred_fallthru
        _
      %p261 = scmp.le.s32.totalorder 1, %s15
      %p262 = scmp.lt.s32.totalorder %s15, 3
      %p263 = pnand %p261, %p262
      %p264 = pneg %p263
      // Predicated region
      $region45: #{atnet_forward.12} parent=5 // pred_check
        _
      $region46: #{atnet_forward.12} parent=5 // pred_check_branch
        %266 = sbr.rel (%p263) target = $region48
      $region47: #{atnet_forward.12} parent=5 // pred_region
        %s267 = ssub.s32 %s15, 1
        // Predicated region
        $region49: #{atnet_forward.12} parent=47 // pred_check
          %p268 = pneg %p62
        $region50: #{atnet_forward.12} parent=47 // pred_check_branch
          %270 = sbr.rel (%p268) target = $region52
        $region51: #{atnet_forward.12} parent=47 // pred_region
          %271 = dma.done [#allocation3], 16
        $region52: #{atnet_forward.12} parent=47 // pred_fallthru
          _
        // Predicated region
        $region53: #{atnet_forward.12} parent=47 // pred_check
          %p272 = pneg %p83
        $region54: #{atnet_forward.12} parent=47 // pred_check_branch
          %274 = sbr.rel (%p272) target = $region56
        $region55: #{atnet_forward.12} parent=47 // pred_region
          %275 = dma.done [#allocation5], 16
        $region56: #{atnet_forward.12} parent=47 // pred_fallthru
          _
        // Predicated region
        $region57: #{atnet_forward.12} parent=47 // pred_check
          %p276 = pneg %p167
        $region58: #{atnet_forward.12} parent=47 // pred_check_branch
          %278 = sbr.rel (%p276) target = $region60
        $region59: #{atnet_forward.12} parent=47 // pred_region
          %279 = dma.done [#allocation5], 16
        $region60: #{atnet_forward.12} parent=47 // pred_fallthru
          _
        %p280 = scmp.lt.s32.totalorder %s20, 1
        %s281 = scalar_select %p280, %s20, 1
        %s282 = smul.addr %s281, 8
        %s283 = scalar_lea.vmem %s0, %s282
        %p284 = pneg %p41
        %p285 = pneg %p38
        %p286 = pneg %p62
        %p287 = pneg %p59
        %p288 = pneg %p83
        %p289 = pneg %p80
        %p290 = pneg %p104
        %p291 = pneg %p101
        %p292 = pneg %p125
        %p293 = pneg %p122
        %p294 = pneg %p146
        %p295 = pneg %p143
        %p296 = pneg %p167
        %p297 = pneg %p164
        %p298 = pneg %p193
        %p299 = pneg %p190
        %p300 = scmp.lt.s32.totalorder %s20, 1
        %s301 = scalar_select %p300, %s20, 1
        %s302 = smul.addr %s301, 8
        %s303 = scalar_lea.vmem %s7, %s302
        %p304 = scmp.lt.s32.totalorder %s20, 1
        %s305 = scalar_select %p304, %s20, 1
        %s306 = smul.addr %s305, 8
        %s307 = scalar_lea.vmem %s0, %s306
        %p308 = scmp.lt.s32.totalorder %s20, 1
        %s309 = scalar_select %p308, %s20, 1
        %s310 = smul.addr %s309, 8
        %s311 = scalar_lea.vmem %s7, %s310
        %v313 = vld [vmem:[%s307] sm:$0xff]
        %v314 = vld [vmem:[#allocation2] sm:$0x1]
        %v315 = vld [vmem:[#allocation4] sm:$0x1]
        %316 = vadd.xlane.f32.xlu0 %v313
        %v317 = vpop.xlane.xlu0 %316
        %v318 = vrcp.pop 128.0
        %v319 = vmul.f32 %v317, %v318
        %v320 = vsub.f32 %v313, %v319
        %v321 = vmul.f32 %v320, %v320
        %322 = vadd.xlane.f32.xlu0 %v321
        %v323 = vpop.xlane.xlu0 %322
        %v324 = vmul.f32 %v323, 0.007874016
        %v325 = vrsqrt.pop %v324
        %v326 = vmul.f32 %v324, %v325
        %vm327 = vcmp.eq.f32.partialorder %v324, inf
        %v328 = vsel %vm327, %v324, %v326
        %vm329 = vcmp.eq.f32.partialorder %v324, 0.0
        %v330 = vand.u32 %v324, 2147483648
        %v331 = vsel %vm329, %v330, %v328
        %v332 = vadd.f32 %v331, 1e-06
        %v333 = vrcp.pop %v332
        %v335 = vlaneseq
        %v336 = vshrl.u32 %v335, 7
        %v337 = vsub.s32 0, %v336
        %v338 = vrot.slane %v314, %v337
        %v340 = vmul.f32 %v338, %v320
        %v341 = vmul.f32 %v340, %v333
        %v343 = vlaneseq
        %v344 = vshrl.u32 %v343, 7
        %v345 = vsub.s32 0, %v344
        %v346 = vrot.slane %v315, %v345
        %v348 = vadd.f32 %v341, %v346
        %v349 = vld [vmem:[%s3] sm:$0xff]
        %v350 = vld [vmem:[%s3 + $0x8] sm:$0xff]
        %v351 = vld [vmem:[%s3 + $0x10] sm:$0xff]
        %v352 = vld [vmem:[%s3 + $0x18] sm:$0xff]
        %v353 = vld [vmem:[%s3 + $0x20] sm:$0xff]
        %v354 = vld [vmem:[%s3 + $0x28] sm:$0xff]
        %v355 = vld [vmem:[%s3 + $0x30] sm:$0xff]
        %v356 = vld [vmem:[%s3 + $0x38] sm:$0xff]
        %v357 = vld [vmem:[%s3 + $0x40] sm:$0xff]
        %v358 = vld [vmem:[%s3 + $0x48] sm:$0xff]
        %v359 = vld [vmem:[%s3 + $0x50] sm:$0xff]
        %v360 = vld [vmem:[%s3 + $0x58] sm:$0xff]
        %v361 = vld [vmem:[%s3 + $0x60] sm:$0xff]
        %v362 = vld [vmem:[%s3 + $0x68] sm:$0xff]
        %v363 = vld [vmem:[%s3 + $0x70] sm:$0xff]
        %v364 = vld [vmem:[%s3 + $0x78] sm:$0xff]
        %v365 = vld [vmem:[%s3 + $0x80] sm:$0xff]
        %v366 = vld [vmem:[%s3 + $0x88] sm:$0xff]
        %v367 = vld [vmem:[%s3 + $0x90] sm:$0xff]
        %v368 = vld [vmem:[%s3 + $0x98] sm:$0xff]
        %v369 = vld [vmem:[%s3 + $0xa0] sm:$0xff]
        %v370 = vld [vmem:[%s3 + $0xa8] sm:$0xff]
        %v371 = vld [vmem:[%s3 + $0xb0] sm:$0xff]
        %v372 = vld [vmem:[%s3 + $0xb8] sm:$0xff]
        %v373 = vld [vmem:[%s3 + $0xc0] sm:$0xff]
        %v374 = vld [vmem:[%s3 + $0xc8] sm:$0xff]
        %v375 = vld [vmem:[%s3 + $0xd0] sm:$0xff]
        %v376 = vld [vmem:[%s3 + $0xd8] sm:$0xff]
        %v377 = vld [vmem:[%s3 + $0xe0] sm:$0xff]
        %v378 = vld [vmem:[%s3 + $0xe8] sm:$0xff]
        %v379 = vld [vmem:[%s3 + $0xf0] sm:$0xff]
        %v380 = vld [vmem:[%s3 + $0xf8] sm:$0xff]
        %v381 = vpack.c.bf16 %v348, %v348
        %v382 = vld [vmem:[%s4] sm:$0xf]
        %v384 = vlaneseq
        %v385 = vshrl.u32 %v384, 7
        %v386 = vsub.s32 0, %v385
        %v387 = vrot.slane %v382, %v386
        %v388 = vlaneseq
        %v389 = vshrl.u32 %v388, 7
        %v390 = vsub.s32 1, %v389
        %v391 = vrot.slane %v382, %v390
        %v392 = vlaneseq
        %v393 = vshrl.u32 %v392, 7
        %v394 = vsub.s32 2, %v393
        %v395 = vrot.slane %v382, %v394
        %v396 = vlaneseq
        %v397 = vshrl.u32 %v396, 7
        %v398 = vsub.s32 3, %v397
        %v399 = vrot.slane %v382, %v398
        %v436 = vunpack.c.l.b16 %v349
        %v437 = vunpack.c.h.b16 %v349
        %v438 = vunpack.c.l.b16 %v350
        %v439 = vunpack.c.h.b16 %v350
        %v440 = vunpack.c.l.b16 %v351
        %v441 = vunpack.c.h.b16 %v351
        %v442 = vunpack.c.l.b16 %v352
        %v443 = vunpack.c.h.b16 %v352
        %v444 = vunpack.c.l.b16 %v353
        %v445 = vunpack.c.h.b16 %v353
        %v446 = vunpack.c.l.b16 %v354
        %v447 = vunpack.c.h.b16 %v354
        %v448 = vunpack.c.l.b16 %v355
        %v449 = vunpack.c.h.b16 %v355
        %v450 = vunpack.c.l.b16 %v356
        %v451 = vunpack.c.h.b16 %v356
        %v452 = vunpack.c.l.b16 %v357
        %v453 = vunpack.c.h.b16 %v357
        %v454 = vunpack.c.l.b16 %v358
        %v455 = vunpack.c.h.b16 %v358
        %v456 = vunpack.c.l.b16 %v359
        %v457 = vunpack.c.h.b16 %v359
        %v458 = vunpack.c.l.b16 %v360
        %v459 = vunpack.c.h.b16 %v360
        %v460 = vunpack.c.l.b16 %v361
        %v461 = vunpack.c.h.b16 %v361
        %v462 = vunpack.c.l.b16 %v362
        %v463 = vunpack.c.h.b16 %v362
        %v464 = vunpack.c.l.b16 %v363
        %v465 = vunpack.c.h.b16 %v363
        %v466 = vunpack.c.l.b16 %v364
        %v467 = vunpack.c.h.b16 %v364
        %v468 = vunpack.c.l.b16 %v365
        %v469 = vunpack.c.h.b16 %v365
        %v470 = vunpack.c.l.b16 %v366
        %v471 = vunpack.c.h.b16 %v366
        %v472 = vunpack.c.l.b16 %v367
        %v473 = vunpack.c.h.b16 %v367
        %v474 = vunpack.c.l.b16 %v368
        %v475 = vunpack.c.h.b16 %v368
        %v476 = vunpack.c.l.b16 %v369
        %v477 = vunpack.c.h.b16 %v369
        %v478 = vunpack.c.l.b16 %v370
        %v479 = vunpack.c.h.b16 %v370
        %v480 = vunpack.c.l.b16 %v371
        %v481 = vunpack.c.h.b16 %v371
        %v482 = vunpack.c.l.b16 %v372
        %v483 = vunpack.c.h.b16 %v372
        %v484 = vunpack.c.l.b16 %v373
        %v485 = vunpack.c.h.b16 %v373
        %v486 = vunpack.c.l.b16 %v374
        %v487 = vunpack.c.h.b16 %v374
        %v488 = vunpack.c.l.b16 %v375
        %v489 = vunpack.c.h.b16 %v375
        %v490 = vunpack.c.l.b16 %v376
        %v491 = vunpack.c.h.b16 %v376
        %v492 = vunpack.c.l.b16 %v377
        %v493 = vunpack.c.h.b16 %v377
        %v494 = vunpack.c.l.b16 %v378
        %v495 = vunpack.c.h.b16 %v378
        %v496 = vunpack.c.l.b16 %v379
        %v497 = vunpack.c.h.b16 %v379
        %v498 = vunpack.c.l.b16 %v380
        %v499 = vunpack.c.h.b16 %v380
        %v500 = vpack.c.b16 %v440, %v436
        %v501 = vpack.c.b16 %v441, %v437
        %v502 = vpack.c.b16 %v442, %v438
        %v503 = vpack.c.b16 %v443, %v439
        %v504 = vpack.c.b16 %v448, %v444
        %v505 = vpack.c.b16 %v449, %v445
        %v506 = vpack.c.b16 %v450, %v446
        %v507 = vpack.c.b16 %v451, %v447
        %v508 = vpack.c.b16 %v456, %v452
        %v509 = vpack.c.b16 %v457, %v453
        %v510 = vpack.c.b16 %v458, %v454
        %v511 = vpack.c.b16 %v459, %v455
        %v512 = vpack.c.b16 %v464, %v460
        %v513 = vpack.c.b16 %v465, %v461
        %v514 = vpack.c.b16 %v466, %v462
        %v515 = vpack.c.b16 %v467, %v463
        %v516 = vpack.c.b16 %v472, %v468
        %v517 = vpack.c.b16 %v473, %v469
        %v518 = vpack.c.b16 %v474, %v470
        %v519 = vpack.c.b16 %v475, %v471
        %v520 = vpack.c.b16 %v480, %v476
        %v521 = vpack.c.b16 %v481, %v477
        %v522 = vpack.c.b16 %v482, %v478
        %v523 = vpack.c.b16 %v483, %v479
        %v524 = vpack.c.b16 %v488, %v484
        %v525 = vpack.c.b16 %v489, %v485
        %v526 = vpack.c.b16 %v490, %v486
        %v527 = vpack.c.b16 %v491, %v487
        %v528 = vpack.c.b16 %v496, %v492
        %v529 = vpack.c.b16 %v497, %v493
        %v530 = vpack.c.b16 %v498, %v494
        %v531 = vpack.c.b16 %v499, %v495
        %564 = vmatprep.subr.bf16.mxu0 %v501
        %565 = vmatpush1.bf16.msra.mxu0 %v500
        %566 = vmatprep.subr.bf16.mxu0 %v505
        %567 = vmatpush1.bf16.msra.mxu0 %v504
        %568 = vmatprep.subr.bf16.mxu0 %v509
        %569 = vmatpush1.bf16.msra.mxu0 %v508
        %570 = vmatprep.subr.bf16.mxu0 %v513
        %571 = vmatpush1.bf16.msra.mxu0 %v512
        %572 = vmatprep.subr.bf16.mxu0 %v517
        %573 = vmatpush1.bf16.msra.mxu0 %v516
        %574 = vmatprep.subr.bf16.mxu0 %v521
        %575 = vmatpush1.bf16.msra.mxu0 %v520
        %576 = vmatprep.subr.bf16.mxu0 %v525
        %577 = vmatpush1.bf16.msra.mxu0 %v524
        %578 = vmatprep.subr.bf16.mxu0 %v529
        %579 = vmatpush1.bf16.msra.mxu0 %v528
        %580 = vmatprep.subr.bf16.mxu0 0
        %581 = vmatpush1.bf16.msra.mxu0 0
        %582 = vmatprep.subr.bf16.mxu0 0
        %583 = vmatpush1.bf16.msra.mxu0 0
        %584 = vmatprep.subr.bf16.mxu0 0
        %585 = vmatpush1.bf16.msra.mxu0 0
        %586 = vmatprep.subr.bf16.mxu0 0
        %587 = vmatpush1.bf16.msra.mxu0 0
        %588 = vmatprep.subr.bf16.mxu0 0
        %589 = vmatpush1.bf16.msra.mxu0 0
        %590 = vmatprep.subr.bf16.mxu0 0
        %591 = vmatpush1.bf16.msra.mxu0 0
        %592 = vmatprep.subr.bf16.mxu0 0
        %593 = vmatpush1.bf16.msra.mxu0 0
        %594 = vmatprep.subr.bf16.mxu0 0
        %595 = vmatpush1.bf16.msra.mxu0 0
        %596 = vmatprep.mubr.bf16.mxu0 0
        %597 = vmatmul.mubr.bf16.gmra.mrb[0].mxu0 %v381
        %v598 = vpop.f32.mrb[0].mxu0
        %v599 = vadd.f32 %v387, %v598
        %v600 = vpop.f32.mrb[0].mxu0
        %v601 = vadd.f32 %v391, %v600
        %v602 = vpop.f32.mrb[0].mxu0
        %v603 = vpop.f32.mrb[0].mxu0
        %604 = vdwg.mxu0
        %605 = vmatprep.subr.bf16.mxu0 %v503
        %606 = vmatpush1.bf16.msra.mxu0 %v502
        %607 = vmatprep.subr.bf16.mxu0 %v507
        %608 = vmatpush1.bf16.msra.mxu0 %v506
        %609 = vmatprep.subr.bf16.mxu0 %v511
        %610 = vmatpush1.bf16.msra.mxu0 %v510
        %611 = vmatprep.subr.bf16.mxu0 %v515
        %612 = vmatpush1.bf16.msra.mxu0 %v514
        %613 = vmatprep.subr.bf16.mxu0 %v519
        %614 = vmatpush1.bf16.msra.mxu0 %v518
        %615 = vmatprep.subr.bf16.mxu0 %v523
        %616 = vmatpush1.bf16.msra.mxu0 %v522
        %617 = vmatprep.subr.bf16.mxu0 %v527
        %618 = vmatpush1.bf16.msra.mxu0 %v526
        %619 = vmatprep.subr.bf16.mxu0 %v531
        %620 = vmatpush1.bf16.msra.mxu0 %v530
        %621 = vmatprep.subr.bf16.mxu0 0
        %622 = vmatpush1.bf16.msra.mxu0 0
        %623 = vmatprep.subr.bf16.mxu0 0
        %624 = vmatpush1.bf16.msra.mxu0 0
        %625 = vmatprep.subr.bf16.mxu0 0
        %626 = vmatpush1.bf16.msra.mxu0 0
        %627 = vmatprep.subr.bf16.mxu0 0
        %628 = vmatpush1.bf16.msra.mxu0 0
        %629 = vmatprep.subr.bf16.mxu0 0
        %630 = vmatpush1.bf16.msra.mxu0 0
        %631 = vmatprep.subr.bf16.mxu0 0
        %632 = vmatpush1.bf16.msra.mxu0 0
        %633 = vmatprep.subr.bf16.mxu0 0
        %634 = vmatpush1.bf16.msra.mxu0 0
        %635 = vmatprep.subr.bf16.mxu0 0
        %636 = vmatpush1.bf16.msra.mxu0 0
        %637 = vmatprep.mubr.bf16.mxu0 0
        %638 = vmatmul.mubr.bf16.gmra.mrb[0].mxu0 %v381
        %v639 = vpop.f32.mrb[0].mxu0
        %v640 = vadd.f32 %v395, %v639
        %v641 = vpop.f32.mrb[0].mxu0
        %v642 = vadd.f32 %v399, %v641
        %v643 = vpop.f32.mrb[0].mxu0
        %v644 = vpop.f32.mrb[0].mxu0
        %645 = vdwg.mxu0
        %v646 = vmax.f32 %v599, 0.0
        %v647 = vmax.f32 %v601, 0.0
        %v648 = vmax.f32 %v640, 0.0
        %v649 = vmax.f32 %v642, 0.0
        %v650 = vld [vmem:[%s5] sm:$0xf]
        %v651 = vld [vmem:[%s5 + $0x4] sm:$0xf]
        %v652 = vld [vmem:[%s5 + $0x8] sm:$0xf]
        %v653 = vld [vmem:[%s5 + $0xc] sm:$0xf]
        %v654 = vld [vmem:[%s5 + $0x10] sm:$0xf]
        %v655 = vld [vmem:[%s5 + $0x14] sm:$0xf]
        %v656 = vld [vmem:[%s5 + $0x18] sm:$0xf]
        %v657 = vld [vmem:[%s5 + $0x1c] sm:$0xf]
        %v658 = vld [vmem:[%s5 + $0x20] sm:$0xf]
        %v659 = vld [vmem:[%s5 + $0x24] sm:$0xf]
        %v660 = vld [vmem:[%s5 + $0x28] sm:$0xf]
        %v661 = vld [vmem:[%s5 + $0x2c] sm:$0xf]
        %v662 = vld [vmem:[%s5 + $0x30] sm:$0xf]
        %v663 = vld [vmem:[%s5 + $0x34] sm:$0xf]
        %v664 = vld [vmem:[%s5 + $0x38] sm:$0xf]
        %v665 = vld [vmem:[%s5 + $0x3c] sm:$0xf]
        %v666 = vld [vmem:[%s5 + $0x40] sm:$0xf]
        %v667 = vld [vmem:[%s5 + $0x44] sm:$0xf]
        %v668 = vld [vmem:[%s5 + $0x48] sm:$0xf]
        %v669 = vld [vmem:[%s5 + $0x4c] sm:$0xf]
        %v670 = vld [vmem:[%s5 + $0x50] sm:$0xf]
        %v671 = vld [vmem:[%s5 + $0x54] sm:$0xf]
        %v672 = vld [vmem:[%s5 + $0x58] sm:$0xf]
        %v673 = vld [vmem:[%s5 + $0x5c] sm:$0xf]
        %v674 = vld [vmem:[%s5 + $0x60] sm:$0xf]
        %v675 = vld [vmem:[%s5 + $0x64] sm:$0xf]
        %v676 = vld [vmem:[%s5 + $0x68] sm:$0xf]
        %v677 = vld [vmem:[%s5 + $0x6c] sm:$0xf]
        %v678 = vld [vmem:[%s5 + $0x70] sm:$0xf]
        %v679 = vld [vmem:[%s5 + $0x74] sm:$0xf]
        %v680 = vld [vmem:[%s5 + $0x78] sm:$0xf]
        %v681 = vld [vmem:[%s5 + $0x7c] sm:$0xf]
        %v682 = vld [vmem:[%s5 + $0x80] sm:$0xf]
        %v683 = vld [vmem:[%s5 + $0x84] sm:$0xf]
        %v684 = vld [vmem:[%s5 + $0x88] sm:$0xf]
        %v685 = vld [vmem:[%s5 + $0x8c] sm:$0xf]
        %v686 = vld [vmem:[%s5 + $0x90] sm:$0xf]
        %v687 = vld [vmem:[%s5 + $0x94] sm:$0xf]
        %v688 = vld [vmem:[%s5 + $0x98] sm:$0xf]
        %v689 = vld [vmem:[%s5 + $0x9c] sm:$0xf]
        %v690 = vld [vmem:[%s5 + $0xa0] sm:$0xf]
        %v691 = vld [vmem:[%s5 + $0xa4] sm:$0xf]
        %v692 = vld [vmem:[%s5 + $0xa8] sm:$0xf]
        %v693 = vld [vmem:[%s5 + $0xac] sm:$0xf]
        %v694 = vld [vmem:[%s5 + $0xb0] sm:$0xf]
        %v695 = vld [vmem:[%s5 + $0xb4] sm:$0xf]
        %v696 = vld [vmem:[%s5 + $0xb8] sm:$0xf]
        %v697 = vld [vmem:[%s5 + $0xbc] sm:$0xf]
        %v698 = vld [vmem:[%s5 + $0xc0] sm:$0xf]
        %v699 = vld [vmem:[%s5 + $0xc4] sm:$0xf]
        %v700 = vld [vmem:[%s5 + $0xc8] sm:$0xf]
        %v701 = vld [vmem:[%s5 + $0xcc] sm:$0xf]
        %v702 = vld [vmem:[%s5 + $0xd0] sm:$0xf]
        %v703 = vld [vmem:[%s5 + $0xd4] sm:$0xf]
        %v704 = vld [vmem:[%s5 + $0xd8] sm:$0xf]
        %v705 = vld [vmem:[%s5 + $0xdc] sm:$0xf]
        %v706 = vld [vmem:[%s5 + $0xe0] sm:$0xf]
        %v707 = vld [vmem:[%s5 + $0xe4] sm:$0xf]
        %v708 = vld [vmem:[%s5 + $0xe8] sm:$0xf]
        %v709 = vld [vmem:[%s5 + $0xec] sm:$0xf]
        %v710 = vld [vmem:[%s5 + $0xf0] sm:$0xf]
        %v711 = vld [vmem:[%s5 + $0xf4] sm:$0xf]
        %v712 = vld [vmem:[%s5 + $0xf8] sm:$0xf]
        %v713 = vld [vmem:[%s5 + $0xfc] sm:$0xf]
        %v714 = vpack.c.bf16 %v646, %v646
        %v715 = vpack.c.bf16 %v647, %v647
        %v716 = vpack.c.bf16 %v648, %v648
        %v717 = vpack.c.bf16 %v649, %v649
        %v782 = vunpack.c.l.b16 %v650
        %v783 = vunpack.c.l.b16 %v651
        %v784 = vunpack.c.l.b16 %v652
        %v785 = vunpack.c.l.b16 %v653
        %v786 = vunpack.c.l.b16 %v654
        %v787 = vunpack.c.l.b16 %v655
        %v788 = vunpack.c.l.b16 %v656
        %v789 = vunpack.c.l.b16 %v657
        %v790 = vunpack.c.l.b16 %v658
        %v791 = vunpack.c.l.b16 %v659
        %v792 = vunpack.c.l.b16 %v660
        %v793 = vunpack.c.l.b16 %v661
        %v794 = vunpack.c.l.b16 %v662
        %v795 = vunpack.c.l.b16 %v663
        %v796 = vunpack.c.l.b16 %v664
        %v797 = vunpack.c.l.b16 %v665
        %v798 = vunpack.c.l.b16 %v666
        %v799 = vunpack.c.l.b16 %v667
        %v800 = vunpack.c.l.b16 %v668
        %v801 = vunpack.c.l.b16 %v669
        %v802 = vunpack.c.l.b16 %v670
        %v803 = vunpack.c.l.b16 %v671
        %v804 = vunpack.c.l.b16 %v672
        %v805 = vunpack.c.l.b16 %v673
        %v806 = vunpack.c.l.b16 %v674
        %v807 = vunpack.c.l.b16 %v675
        %v808 = vunpack.c.l.b16 %v676
        %v809 = vunpack.c.l.b16 %v677
        %v810 = vunpack.c.l.b16 %v678
        %v811 = vunpack.c.l.b16 %v679
        %v812 = vunpack.c.l.b16 %v680
        %v813 = vunpack.c.l.b16 %v681
        %v814 = vunpack.c.l.b16 %v682
        %v815 = vunpack.c.l.b16 %v683
        %v816 = vunpack.c.l.b16 %v684
        %v817 = vunpack.c.l.b16 %v685
        %v818 = vunpack.c.l.b16 %v686
        %v819 = vunpack.c.l.b16 %v687
        %v820 = vunpack.c.l.b16 %v688
        %v821 = vunpack.c.l.b16 %v689
        %v822 = vunpack.c.l.b16 %v690
        %v823 = vunpack.c.l.b16 %v691
        %v824 = vunpack.c.l.b16 %v692
        %v825 = vunpack.c.l.b16 %v693
        %v826 = vunpack.c.l.b16 %v694
        %v827 = vunpack.c.l.b16 %v695
        %v828 = vunpack.c.l.b16 %v696
        %v829 = vunpack.c.l.b16 %v697
        %v830 = vunpack.c.l.b16 %v698
        %v831 = vunpack.c.l.b16 %v699
        %v832 = vunpack.c.l.b16 %v700
        %v833 = vunpack.c.l.b16 %v701
        %v834 = vunpack.c.l.b16 %v702
        %v835 = vunpack.c.l.b16 %v703
        %v836 = vunpack.c.l.b16 %v704
        %v837 = vunpack.c.l.b16 %v705
        %v838 = vunpack.c.l.b16 %v706
        %v839 = vunpack.c.l.b16 %v707
        %v840 = vunpack.c.l.b16 %v708
        %v841 = vunpack.c.l.b16 %v709
        %v842 = vunpack.c.l.b16 %v710
        %v843 = vunpack.c.l.b16 %v711
        %v844 = vunpack.c.l.b16 %v712
        %v845 = vunpack.c.l.b16 %v713
        %v846 = vpack.c.b16 %v783, %v782
        %v847 = vpack.c.b16 %v785, %v784
        %v848 = vpack.c.b16 %v787, %v786
        %v849 = vpack.c.b16 %v789, %v788
        %v850 = vpack.c.b16 %v791, %v790
        %v851 = vpack.c.b16 %v793, %v792
        %v852 = vpack.c.b16 %v795, %v794
        %v853 = vpack.c.b16 %v797, %v796
        %v854 = vpack.c.b16 %v799, %v798
        %v855 = vpack.c.b16 %v801, %v800
        %v856 = vpack.c.b16 %v803, %v802
        %v857 = vpack.c.b16 %v805, %v804
        %v858 = vpack.c.b16 %v807, %v806
        %v859 = vpack.c.b16 %v809, %v808
        %v860 = vpack.c.b16 %v811, %v810
        %v861 = vpack.c.b16 %v813, %v812
        %v862 = vpack.c.b16 %v815, %v814
        %v863 = vpack.c.b16 %v817, %v816
        %v864 = vpack.c.b16 %v819, %v818
        %v865 = vpack.c.b16 %v821, %v820
        %v866 = vpack.c.b16 %v823, %v822
        %v867 = vpack.c.b16 %v825, %v824
        %v868 = vpack.c.b16 %v827, %v826
        %v869 = vpack.c.b16 %v829, %v828
        %v870 = vpack.c.b16 %v831, %v830
        %v871 = vpack.c.b16 %v833, %v832
        %v872 = vpack.c.b16 %v835, %v834
        %v873 = vpack.c.b16 %v837, %v836
        %v874 = vpack.c.b16 %v839, %v838
        %v875 = vpack.c.b16 %v841, %v840
        %v876 = vpack.c.b16 %v843, %v842
        %v877 = vpack.c.b16 %v845, %v844
        %910 = vmatprep.subr.bf16.mxu0 0
        %911 = vmatpush1.bf16.msra.mxu0 %v846
        %912 = vmatprep.subr.bf16.mxu0 0
        %913 = vmatpush1.bf16.msra.mxu0 %v847
        %914 = vmatprep.subr.bf16.mxu0 0
        %915 = vmatpush1.bf16.msra.mxu0 %v848
        %916 = vmatprep.subr.bf16.mxu0 0
        %917 = vmatpush1.bf16.msra.mxu0 %v849
        %918 = vmatprep.subr.bf16.mxu0 0
        %919 = vmatpush1.bf16.msra.mxu0 %v850
        %920 = vmatprep.subr.bf16.mxu0 0
        %921 = vmatpush1.bf16.msra.mxu0 %v851
        %922 = vmatprep.subr.bf16.mxu0 0
        %923 = vmatpush1.bf16.msra.mxu0 %v852
        %924 = vmatprep.subr.bf16.mxu0 0
        %925 = vmatpush1.bf16.msra.mxu0 %v853
        %926 = vmatprep.subr.bf16.mxu0 0
        %927 = vmatpush1.bf16.msra.mxu0 %v854
        %928 = vmatprep.subr.bf16.mxu0 0
        %929 = vmatpush1.bf16.msra.mxu0 %v855
        %930 = vmatprep.subr.bf16.mxu0 0
        %931 = vmatpush1.bf16.msra.mxu0 %v856
        %932 = vmatprep.subr.bf16.mxu0 0
        %933 = vmatpush1.bf16.msra.mxu0 %v857
        %934 = vmatprep.subr.bf16.mxu0 0
        %935 = vmatpush1.bf16.msra.mxu0 %v858
        %936 = vmatprep.subr.bf16.mxu0 0
        %937 = vmatpush1.bf16.msra.mxu0 %v859
        %938 = vmatprep.subr.bf16.mxu0 0
        %939 = vmatpush1.bf16.msra.mxu0 %v860
        %940 = vmatprep.subr.bf16.mxu0 0
        %941 = vmatpush1.bf16.msra.mxu0 %v861
        %942 = vmatprep.mubr.bf16.mxu0 %v715
        %943 = vmatmul.mubr.bf16.gmra.mrb[0].mxu0 %v714
        %v944 = vpop.f32.mrb[0].mxu0
        %v945 = vadd.f32 0.0, %v944
        %v946 = vpop.f32.mrb[0].mxu0
        %v947 = vpop.f32.mrb[0].mxu0
        %v948 = vpop.f32.mrb[0].mxu0
        %949 = vdwg.mxu0
        %950 = vmatprep.subr.bf16.mxu0 0
        %951 = vmatpush1.bf16.msra.mxu0 %v862
        %952 = vmatprep.subr.bf16.mxu0 0
        %953 = vmatpush1.bf16.msra.mxu0 %v863
        %954 = vmatprep.subr.bf16.mxu0 0
        %955 = vmatpush1.bf16.msra.mxu0 %v864
        %956 = vmatprep.subr.bf16.mxu0 0
        %957 = vmatpush1.bf16.msra.mxu0 %v865
        %958 = vmatprep.subr.bf16.mxu0 0
        %959 = vmatpush1.bf16.msra.mxu0 %v866
        %960 = vmatprep.subr.bf16.mxu0 0
        %961 = vmatpush1.bf16.msra.mxu0 %v867
        %962 = vmatprep.subr.bf16.mxu0 0
        %963 = vmatpush1.bf16.msra.mxu0 %v868
        %964 = vmatprep.subr.bf16.mxu0 0
        %965 = vmatpush1.bf16.msra.mxu0 %v869
        %966 = vmatprep.subr.bf16.mxu0 0
        %967 = vmatpush1.bf16.msra.mxu0 %v870
        %968 = vmatprep.subr.bf16.mxu0 0
        %969 = vmatpush1.bf16.msra.mxu0 %v871
        %970 = vmatprep.subr.bf16.mxu0 0
        %971 = vmatpush1.bf16.msra.mxu0 %v872
        %972 = vmatprep.subr.bf16.mxu0 0
        %973 = vmatpush1.bf16.msra.mxu0 %v873
        %974 = vmatprep.subr.bf16.mxu0 0
        %975 = vmatpush1.bf16.msra.mxu0 %v874
        %976 = vmatprep.subr.bf16.mxu0 0
        %977 = vmatpush1.bf16.msra.mxu0 %v875
        %978 = vmatprep.subr.bf16.mxu0 0
        %979 = vmatpush1.bf16.msra.mxu0 %v876
        %980 = vmatprep.subr.bf16.mxu0 0
        %981 = vmatpush1.bf16.msra.mxu0 %v877
        %982 = vmatprep.mubr.bf16.mxu0 %v717
        %983 = vmatmul.mubr.bf16.gmra.mrb[0].mxu0 %v716
        %v984 = vpop.f32.mrb[0].mxu0
        %v985 = vadd.f32 %v945, %v984
        %v986 = vpop.f32.mrb[0].mxu0
        %v987 = vpop.f32.mrb[0].mxu0
        %v988 = vpop.f32.mrb[0].mxu0
        %989 = vdwg.mxu0
        %v990 = vadd.f32 %v313, %v985
        %v991 = vld [vmem:[#allocation6] sm:$0x1]
        %v993 = vlaneseq
        %v994 = vshrl.u32 %v993, 7
        %v995 = vsub.s32 0, %v994
        %v996 = vrot.slane %v991, %v995
        %v998 = vadd.f32 %v990, %v996
        %999 = vst [vmem:[%s311] sm:$0xff] %v998
        %p1000 = scmp.lt.s32.totalorder %s20, 1
        %s1001 = scalar_select %p1000, %s20, 1
        %s1002 = smul.addr %s1001, 8
        %s1003 = scalar_lea.vmem %s7, %s1002
        // Predicated region
        $region61: #{atnet_forward.12} parent=47 // pred_check
          %p1004 = pneg %p190
        $region62: #{atnet_forward.12} parent=47 // pred_check_branch
          %1006 = sbr.rel (%p1004) target = $region64
        $region63: #{atnet_forward.12} parent=47 // pred_region
          _
        $region64: #{atnet_forward.12} parent=47 // pred_fallthru
          _
      $region48: #{atnet_forward.12} parent=5 // pred_fallthru
        _
      %p1007 = scmp.le.s32.totalorder 2, %s15
      // Predicated region
      $region65: #{atnet_forward.12} parent=5 // pred_check
        %p1008 = pneg %p1007
      $region66: #{atnet_forward.12} parent=5 // pred_check_branch
        %1010 = sbr.rel (%p1008) target = $region68
      $region67: #{atnet_forward.12} parent=5 // pred_region
        %s1011 = ssub.s32 %s15, 2
        // Predicated region
        $region69: #{atnet_forward.12} parent=67 // pred_check
          %p1012 = pneg %p196
        $region70: #{atnet_forward.12} parent=67 // pred_check_branch
          %1014 = sbr.rel (%p1012) target = $region72
        $region71: #{atnet_forward.12} parent=67 // pred_region
          %p1015 = scmp.lt.s32.totalorder %s21, 1
          %s1016 = scalar_select %p1015, %s21, 1
          %s1017 = smul.addr %s1016, 8
          %s1018 = scalar_lea.vmem %s7, %s1017
        $region72: #{atnet_forward.12} parent=67 // pred_fallthru
          _
      $region68: #{atnet_forward.12} parent=5 // pred_fallthru
        _
    $region6: #{atnet_forward.12} parent=1 // loop_footer
      %s19 = sadd.s32 1, %s15
    $region7: #{atnet_forward.12} parent=1 // loop_footer_branch
      %14 = sbr.rel target = $region3
    $region8: #{atnet_forward.12} parent=1 // loop_exit
      _
    %1019 = vsyncpa [#allocation3], 1
    %s1020 = scalar_lea.sflag [#allocation3], 1
    %1021 = vsyncpa %s1020, 1
    %1022 = vsyncpa [#allocation5], 1

</llo_original>
